<compile_context>
chip_gen: v6e
topology: v6e:2x2x1
jax: 0.10.0
libtpu: 0.0.40
codegen_flags: <defaults>
</compile_context>

<pallas_src>
import functools

import numpy as np

import jax
import jax.numpy as jnp
from jax.experimental import pallas as pl
from jax.experimental.pallas import tpu as pltpu


# ----------------------------- Pallas kernel -------------------------------


def fused_cnn_kernel(
    x_ref,
    g1_ref, w1_ref, b1_ref,
    g2_ref, w2_ref, b2_ref,
    g3_ref, w3_ref, b3_ref,
    g4_ref, w4_ref, b4_ref,
    pool_ref, lw_ref, lb_ref,
    o_ref,
):
    """Whole SimpleCNN forward; every operand/intermediate lives in VMEM.

    x_ref:    (H0*W0, N*Cin)           input, spatial on sublanes, batch*chan on lanes
    g*_ref:   (9*rows_p, prev_rows_p)  stacked 0/1 gather (zero-padded im2col) operator
    w*_ref:   (9, N*Cin_l, N*Cout_l)   per-tap conv weights (BN scale folded,
                                       block-diagonal over batch)
    b*_ref:   (1, N*Cout_l)            folded BN bias (tiled over batch)
    pool_ref: (1, rows_p4)             avg-pool vector (1/S on valid rows, 0 on pad)
    lw_ref:   (N*128, N*num_classes)   classifier weight (block-diag over batch)
    lb_ref:   (1, N*num_classes)       classifier bias (tiled over batch)
    o_ref:    (1, N*num_classes)       logits, reshaped to (N, num_classes) outside
    """
    x = x_ref[...]
    for g_ref, w_ref, b_ref in (
        (g1_ref, w1_ref, b1_ref),
        (g2_ref, w2_ref, b2_ref),
        (g3_ref, w3_ref, b3_ref),
        (g4_ref, w4_ref, b4_ref),
    ):
        taps, _, ncout = w_ref.shape
        rows_p = g_ref.shape[0] // taps
        # zero-padded stride-2 im2col as a single MXU matmul
        patches = jnp.dot(g_ref[...], x, preferred_element_type=jnp.float32)
        acc = jnp.zeros((rows_p, ncout), jnp.float32)
        for t in range(taps):  # statically unrolled 3x3 taps
            tap = patches[t * rows_p:(t + 1) * rows_p, :]
            acc = acc + jnp.dot(tap, w_ref[t], preferred_element_type=jnp.float32)
        x = jnp.maximum(acc + b_ref[...], 0.0)  # folded BN bias + ReLU

    # adaptive average pool (1/S folded into pool vector) + linear classifier
    pooled = jnp.dot(pool_ref[...], x, preferred_element_type=jnp.float32)
    o_ref[...] = (
        jnp.dot(pooled, lw_ref[...], preferred_element_type=jnp.float32) + lb_ref[...]
    )


# ------------------------------ wrapper ------------------------------------


def _zero_index_map(i, ndim):
    return (0,) * ndim


@jax.jit
def simple_cnn_forward(x_nchw, ops):
    """x_nchw: (N, C, H, W) float32 -> logits (N, num_classes)."""
    N, C, H, W = x_nchw.shape
    num_classes = ops["lin_b"].shape[1] // N
    # NCHW -> (H*W, N*C): spatial on sublanes, batch x channel on lanes.
    x0 = jnp.transpose(x_nchw, (2, 3, 0, 1)).reshape(H * W, N * C)

    flat_in = [x0]
    for g, w, b in ops["layers"]:
        flat_in += [g, w, b]
    flat_in += [ops["pool"], ops["lin_w"], ops["lin_b"]]

    in_specs = [
        pl.BlockSpec(a.shape, functools.partial(_zero_index_map, ndim=a.ndim))
        for a in flat_in
    ]
    out = pl.pallas_call(
        fused_cnn_kernel,
        out_shape=jax.ShapeDtypeStruct((1, N * num_classes), jnp.float32),
        grid=(1,),
        in_specs=in_specs,
        out_specs=pl.BlockSpec((1, N * num_classes), lambda i: (0, 0)),
        compiler_params=pltpu.CompilerParams(dimension_semantics=("arbitrary",)),
    )(*flat_in)
    return out.reshape(N, num_classes)


# --------------------- one-time operand preparation -------------------------


def _ceil_to(n, m):
    return ((n + m - 1) // m) * m


def build_gathers(H0, W0, num_layers=4, k=3, stride=2, pad=2):
    """Per layer: stacked 0/1 gather matrix (9*rows_p, prev_rows_p) implementing
    zero-padded stride-2 im2col as a matmul. Output rows padded to multiples of 8;
    pad rows/columns stay zero so they are ignored downstream."""
    gathers, dims = [], []
    H, W = H0, W0
    prev_rows_p = H0 * W0
    for _ in range(num_layers):
        Ho = (H + 2 * pad - k) // stride + 1
        Wo = (W + 2 * pad - k) // stride + 1
        rows = Ho * Wo
        rows_p = _ceil_to(rows, 8)
        G = np.zeros((k * k, rows_p, prev_rows_p), np.float32)
        for ky in range(k):
            for kx in range(k):
                t = ky * k + kx
                for i in range(Ho):
                    h = stride * i + ky - pad
                    if h < 0 or h >= H:
                        continue
                    for j in range(Wo):
                        w = stride * j + kx - pad
                        if w < 0 or w >= W:
                            continue
                        G[t, i * Wo + j, h * W + w] = 1.0
        gathers.append(G.reshape(k * k * rows_p, prev_rows_p))
        dims.append((Ho, Wo, rows, rows_p))
        H, W, prev_rows_p = Ho, Wo, rows_p
    return gathers, dims


def fold_bn(gamma, beta, mean, var, eps=1e-5):
    scale = gamma / jnp.sqrt(var + eps)
    bias = beta - mean * scale
    return scale.reshape(1, -1), bias.reshape(1, -1)


def prepare_operands(params, x_shape, num_classes):
    """One-time transform of the parameters into kernel operand layout:
    BN scale folded into weights, block-diagonal over batch, gather matrices
    for zero-padded stride-2 im2col-as-matmul, 1/S folded into the pool vector."""
    N, _, H0, W0 = x_shape
    gathers, dims = build_gathers(H0, W0)
    eye = jnp.eye(N, dtype=jnp.float32)
    layers = []
    for li in range(4):
        w = params["conv"][li]                          # (3, 3, Cin, Cout) HWIO
        scale, bias = fold_bn(*params["bn"][li])        # (1, Cout) each
        kh, kw, cin, cout = w.shape
        w_folded = (w * scale.reshape(-1)).reshape(kh * kw, cin, cout)
        w_bd = jax.vmap(lambda a: jnp.kron(eye, a))(w_folded)   # (9, N*Cin, N*Cout)
        b_bd = jnp.tile(bias, (1, N))                           # (1, N*Cout)
        layers.append((jnp.asarray(gathers[li]), w_bd, b_bd))
    _, _, rows4, rows4_p = dims[3]
    pool = np.zeros((1, rows4_p), np.float32)
    pool[0, :rows4] = 1.0 / rows4                       # fold 1/S of the avg-pool
    lin_w_bd = jnp.kron(eye, params["lin_w"])           # (N*128, N*num_classes)
    lin_b = jnp.tile(params["lin_b"], (1, N))           # (1, N*num_classes)
    return {
        "layers": layers,
        "pool": jnp.asarray(pool),
        "lin_w": lin_w_bd,
        "lin_b": lin_b,
    }


# ----------------------- params & pure-JAX reference -----------------------


def init_params(key, in_channels, num_classes):
    """Deterministic parameter init matching the Lazy* shapes of SimpleCNN."""
    channels = [in_channels, 16, 32, 64, 128]
    params = {"conv": [], "bn": []}
    for li in range(4):
        key, kw, kg, kb, km, kv = jax.random.split(key, 6)
        cin, cout = channels[li], channels[li + 1]
        w = 0.1 * jax.random.normal(kw, (3, 3, cin, cout), jnp.float32)  # HWIO
        gamma = 1.0 + 0.1 * jax.random.normal(kg, (cout,), jnp.float32)
        beta = 0.1 * jax.random.normal(kb, (cout,), jnp.float32)
        rmean = 0.1 * jax.random.normal(km, (cout,), jnp.float32)
        rvar = jnp.abs(jax.random.normal(kv, (cout,), jnp.float32)) + 0.5
        params["conv"].append(w)
        params["bn"].append((gamma, beta, rmean, rvar))
    key, kw, kb = jax.random.split(key, 3)
    params["lin_w"] = 0.1 * jax.random.normal(kw, (128, num_classes), jnp.float32)
    params["lin_b"] = 0.1 * jax.random.normal(kb, (1, num_classes), jnp.float32)
    return params


def reference_forward(x_nchw, params):
    """Pure-JAX reference (same inference-mode BN semantics)."""
    x = jnp.transpose(x_nchw, (0, 2, 3, 1))
    for li in range(4):
        w = params["conv"][li]
        scale, bias = fold_bn(*params["bn"][li])
        x = jax.lax.conv_general_dilated(
            x, w, window_strides=(2, 2), padding=[(2, 2), (2, 2)],
            dimension_numbers=("NHWC", "HWIO", "NHWC"),
        )
        x = jnp.maximum(x * scale + bias, 0.0)
    pooled = jnp.mean(x, axis=(1, 2))  # adaptive avg pool to 1x1
    return pooled @ params["lin_w"] + params["lin_b"]


# -------------------------------- main ---------------------------------------

if __name__ == "__main__":
    key = jax.random.PRNGKey(0)
    key, kx, kp = jax.random.split(key, 3)

    batch, in_ch, H, W = 2, 4, 16, 16
    num_classes = 10

    x = jax.random.normal(kx, (batch, in_ch, H, W), jnp.float32)  # NCHW like PyTorch
    params = init_params(kp, in_ch, num_classes)
    ops = prepare_operands(params, x.shape, num_classes)

    out = simple_cnn_forward(x, ops)
    out = jax.block_until_ready(out)

    ref = reference_forward(x, params)
    assert out.shape == (batch, num_classes), out.shape
    assert jnp.allclose(out, ref, rtol=1e-4, atol=1e-4), (
        "Pallas output mismatch vs reference"
    )

    print("KERNEL_OK")
</pallas_src>

<mosaic_0001>
module attributes {stable_mosaic.version = 11 : i64} {
  func.func @fused_cnn_kernel(%arg0: i32, %arg1: memref<256x8xf32, #tpu.memory_space<vmem>>, %arg2: memref<792x256xf32, #tpu.memory_space<vmem>>, %arg3: memref<9x8x32xf32, #tpu.memory_space<vmem>>, %arg4: memref<1x32xf32, #tpu.memory_space<vmem>>, %arg5: memref<360x88xf32, #tpu.memory_space<vmem>>, %arg6: memref<9x32x64xf32, #tpu.memory_space<vmem>>, %arg7: memref<1x64xf32, #tpu.memory_space<vmem>>, %arg8: memref<144x40xf32, #tpu.memory_space<vmem>>, %arg9: memref<9x64x128xf32, #tpu.memory_space<vmem>>, %arg10: memref<1x128xf32, #tpu.memory_space<vmem>>, %arg11: memref<144x16xf32, #tpu.memory_space<vmem>>, %arg12: memref<9x128x256xf32, #tpu.memory_space<vmem>>, %arg13: memref<1x256xf32, #tpu.memory_space<vmem>>, %arg14: memref<1x16xf32, #tpu.memory_space<vmem>>, %arg15: memref<256x20xf32, #tpu.memory_space<vmem>>, %arg16: memref<1x20xf32, #tpu.memory_space<vmem>>, %arg17: memref<1x20xf32, #tpu.memory_space<vmem>>) attributes {dimension_semantics = [#tpu.dimension_semantics<arbitrary>], iteration_bounds = array<i64: 1>, scalar_prefetch = 0 : i64, scratch_operands = 0 : i64, tpu.core_type = #tpu.core_type<tc>, window_params = [{pipeline_mode = #tpu.pipeline_mode<synchronous>, transform_indices = @transform_0, window_bounds = array<i64: 256, 8>}, {pipeline_mode = #tpu.pipeline_mode<synchronous>, transform_indices = @transform_1, window_bounds = array<i64: 792, 256>}, {pipeline_mode = #tpu.pipeline_mode<synchronous>, transform_indices = @transform_2, window_bounds = array<i64: 9, 8, 32>}, {pipeline_mode = #tpu.pipeline_mode<synchronous>, transform_indices = @transform_3, window_bounds = array<i64: 1, 32>}, {pipeline_mode = #tpu.pipeline_mode<synchronous>, transform_indices = @transform_4, window_bounds = array<i64: 360, 88>}, {pipeline_mode = #tpu.pipeline_mode<synchronous>, transform_indices = @transform_5, window_bounds = array<i64: 9, 32, 64>}, {pipeline_mode = #tpu.pipeline_mode<synchronous>, transform_indices = @transform_6, window_bounds = array<i64: 1, 64>}, {pipeline_mode = #tpu.pipeline_mode<synchronous>, transform_indices = @transform_7, window_bounds = array<i64: 144, 40>}, {pipeline_mode = #tpu.pipeline_mode<synchronous>, transform_indices = @transform_8, window_bounds = array<i64: 9, 64, 128>}, {pipeline_mode = #tpu.pipeline_mode<synchronous>, transform_indices = @transform_9, window_bounds = array<i64: 1, 128>}, {pipeline_mode = #tpu.pipeline_mode<synchronous>, transform_indices = @transform_10, window_bounds = array<i64: 144, 16>}, {pipeline_mode = #tpu.pipeline_mode<synchronous>, transform_indices = @transform_11, window_bounds = array<i64: 9, 128, 256>}, {pipeline_mode = #tpu.pipeline_mode<synchronous>, transform_indices = @transform_12, window_bounds = array<i64: 1, 256>}, {pipeline_mode = #tpu.pipeline_mode<synchronous>, transform_indices = @transform_13, window_bounds = array<i64: 1, 16>}, {pipeline_mode = #tpu.pipeline_mode<synchronous>, transform_indices = @transform_14, window_bounds = array<i64: 256, 20>}, {pipeline_mode = #tpu.pipeline_mode<synchronous>, transform_indices = @transform_15, window_bounds = array<i64: 1, 20>}, {pipeline_mode = #tpu.pipeline_mode<synchronous>, transform_indices = @transform_16, window_bounds = array<i64: 1, 20>}]} {
    %c0 = arith.constant 0 : index
    %c0_0 = arith.constant 0 : index
    %0 = vector.load %arg1[%c0, %c0_0] : memref<256x8xf32, #tpu.memory_space<vmem>>, vector<256x8xf32>
    %c0_1 = arith.constant 0 : index
    %c0_2 = arith.constant 0 : index
    %1 = vector.load %arg2[%c0_1, %c0_2] : memref<792x256xf32, #tpu.memory_space<vmem>>, vector<792x256xf32>
    %cst = arith.constant dense<0.000000e+00> : vector<792x8xf32>
    %2 = tpu.matmul %1, %0, %cst {dimension_numbers = #tpu.dot_dimension_numbers<[1], [0], [0], [1], [0, 0, 1, 1], [], []>} : vector<792x256xf32>, vector<256x8xf32>, vector<792x8xf32> -> vector<792x8xf32>
    %cst_3 = arith.constant 0.000000e+00 : f32
    %3 = vector.broadcast %cst_3 : f32 to vector<88x32xf32>
    %4 = vector.extract_strided_slice %2 {offsets = [0, 0], sizes = [88, 8], strides = [1, 1]} : vector<792x8xf32> to vector<88x8xf32>
    %c0_4 = arith.constant 0 : index
    %c0_5 = arith.constant 0 : index
    %c0_6 = arith.constant 0 : index
    %5 = vector.load %arg3[%c0_4, %c0_5, %c0_6] : memref<9x8x32xf32, #tpu.memory_space<vmem>>, vector<1x8x32xf32>
    %6 = vector.shape_cast %5 : vector<1x8x32xf32> to vector<8x32xf32>
    %cst_7 = arith.constant dense<0.000000e+00> : vector<88x32xf32>
    %7 = tpu.matmul %4, %6, %cst_7 {dimension_numbers = #tpu.dot_dimension_numbers<[1], [0], [0], [1], [0, 0, 1, 1], [], []>} : vector<88x8xf32>, vector<8x32xf32>, vector<88x32xf32> -> vector<88x32xf32>
    %8 = arith.addf %3, %7 : vector<88x32xf32>
    %9 = vector.extract_strided_slice %2 {offsets = [88, 0], sizes = [88, 8], strides = [1, 1]} : vector<792x8xf32> to vector<88x8xf32>
    %c1 = arith.constant 1 : index
    %c0_8 = arith.constant 0 : index
    %c0_9 = arith.constant 0 : index
    %10 = vector.load %arg3[%c1, %c0_8, %c0_9] : memref<9x8x32xf32, #tpu.memory_space<vmem>>, vector<1x8x32xf32>
    %11 = vector.shape_cast %10 : vector<1x8x32xf32> to vector<8x32xf32>
    %cst_10 = arith.constant dense<0.000000e+00> : vector<88x32xf32>
    %12 = tpu.matmul %9, %11, %cst_10 {dimension_numbers = #tpu.dot_dimension_numbers<[1], [0], [0], [1], [0, 0, 1, 1], [], []>} : vector<88x8xf32>, vector<8x32xf32>, vector<88x32xf32> -> vector<88x32xf32>
    %13 = arith.addf %8, %12 : vector<88x32xf32>
    %14 = vector.extract_strided_slice %2 {offsets = [176, 0], sizes = [88, 8], strides = [1, 1]} : vector<792x8xf32> to vector<88x8xf32>
    %c2 = arith.constant 2 : index
    %c0_11 = arith.constant 0 : index
    %c0_12 = arith.constant 0 : index
    %15 = vector.load %arg3[%c2, %c0_11, %c0_12] : memref<9x8x32xf32, #tpu.memory_space<vmem>>, vector<1x8x32xf32>
    %16 = vector.shape_cast %15 : vector<1x8x32xf32> to vector<8x32xf32>
    %cst_13 = arith.constant dense<0.000000e+00> : vector<88x32xf32>
    %17 = tpu.matmul %14, %16, %cst_13 {dimension_numbers = #tpu.dot_dimension_numbers<[1], [0], [0], [1], [0, 0, 1, 1], [], []>} : vector<88x8xf32>, vector<8x32xf32>, vector<88x32xf32> -> vector<88x32xf32>
    %18 = arith.addf %13, %17 : vector<88x32xf32>
    %19 = vector.extract_strided_slice %2 {offsets = [264, 0], sizes = [88, 8], strides = [1, 1]} : vector<792x8xf32> to vector<88x8xf32>
    %c3 = arith.constant 3 : index
    %c0_14 = arith.constant 0 : index
    %c0_15 = arith.constant 0 : index
    %20 = vector.load %arg3[%c3, %c0_14, %c0_15] : memref<9x8x32xf32, #tpu.memory_space<vmem>>, vector<1x8x32xf32>
    %21 = vector.shape_cast %20 : vector<1x8x32xf32> to vector<8x32xf32>
    %cst_16 = arith.constant dense<0.000000e+00> : vector<88x32xf32>
    %22 = tpu.matmul %19, %21, %cst_16 {dimension_numbers = #tpu.dot_dimension_numbers<[1], [0], [0], [1], [0, 0, 1, 1], [], []>} : vector<88x8xf32>, vector<8x32xf32>, vector<88x32xf32> -> vector<88x32xf32>
    %23 = arith.addf %18, %22 : vector<88x32xf32>
    %24 = vector.extract_strided_slice %2 {offsets = [352, 0], sizes = [88, 8], strides = [1, 1]} : vector<792x8xf32> to vector<88x8xf32>
    %c4 = arith.constant 4 : index
    %c0_17 = arith.constant 0 : index
    %c0_18 = arith.constant 0 : index
    %25 = vector.load %arg3[%c4, %c0_17, %c0_18] : memref<9x8x32xf32, #tpu.memory_space<vmem>>, vector<1x8x32xf32>
    %26 = vector.shape_cast %25 : vector<1x8x32xf32> to vector<8x32xf32>
    %cst_19 = arith.constant dense<0.000000e+00> : vector<88x32xf32>
    %27 = tpu.matmul %24, %26, %cst_19 {dimension_numbers = #tpu.dot_dimension_numbers<[1], [0], [0], [1], [0, 0, 1, 1], [], []>} : vector<88x8xf32>, vector<8x32xf32>, vector<88x32xf32> -> vector<88x32xf32>
    %28 = arith.addf %23, %27 : vector<88x32xf32>
    %29 = vector.extract_strided_slice %2 {offsets = [440, 0], sizes = [88, 8], strides = [1, 1]} : vector<792x8xf32> to vector<88x8xf32>
    %c5 = arith.constant 5 : index
    %c0_20 = arith.constant 0 : index
    %c0_21 = arith.constant 0 : index
    %30 = vector.load %arg3[%c5, %c0_20, %c0_21] : memref<9x8x32xf32, #tpu.memory_space<vmem>>, vector<1x8x32xf32>
    %31 = vector.shape_cast %30 : vector<1x8x32xf32> to vector<8x32xf32>
    %cst_22 = arith.constant dense<0.000000e+00> : vector<88x32xf32>
    %32 = tpu.matmul %29, %31, %cst_22 {dimension_numbers = #tpu.dot_dimension_numbers<[1], [0], [0], [1], [0, 0, 1, 1], [], []>} : vector<88x8xf32>, vector<8x32xf32>, vector<88x32xf32> -> vector<88x32xf32>
    %33 = arith.addf %28, %32 : vector<88x32xf32>
    %34 = vector.extract_strided_slice %2 {offsets = [528, 0], sizes = [88, 8], strides = [1, 1]} : vector<792x8xf32> to vector<88x8xf32>
    %c6 = arith.constant 6 : index
    %c0_23 = arith.constant 0 : index
    %c0_24 = arith.constant 0 : index
    %35 = vector.load %arg3[%c6, %c0_23, %c0_24] : memref<9x8x32xf32, #tpu.memory_space<vmem>>, vector<1x8x32xf32>
    %36 = vector.shape_cast %35 : vector<1x8x32xf32> to vector<8x32xf32>
    %cst_25 = arith.constant dense<0.000000e+00> : vector<88x32xf32>
    %37 = tpu.matmul %34, %36, %cst_25 {dimension_numbers = #tpu.dot_dimension_numbers<[1], [0], [0], [1], [0, 0, 1, 1], [], []>} : vector<88x8xf32>, vector<8x32xf32>, vector<88x32xf32> -> vector<88x32xf32>
    %38 = arith.addf %33, %37 : vector<88x32xf32>
    %39 = vector.extract_strided_slice %2 {offsets = [616, 0], sizes = [88, 8], strides = [1, 1]} : vector<792x8xf32> to vector<88x8xf32>
    %c7 = arith.constant 7 : index
    %c0_26 = arith.constant 0 : index
    %c0_27 = arith.constant 0 : index
    %40 = vector.load %arg3[%c7, %c0_26, %c0_27] : memref<9x8x32xf32, #tpu.memory_space<vmem>>, vector<1x8x32xf32>
    %41 = vector.shape_cast %40 : vector<1x8x32xf32> to vector<8x32xf32>
    %cst_28 = arith.constant dense<0.000000e+00> : vector<88x32xf32>
    %42 = tpu.matmul %39, %41, %cst_28 {dimension_numbers = #tpu.dot_dimension_numbers<[1], [0], [0], [1], [0, 0, 1, 1], [], []>} : vector<88x8xf32>, vector<8x32xf32>, vector<88x32xf32> -> vector<88x32xf32>
    %43 = arith.addf %38, %42 : vector<88x32xf32>
    %44 = vector.extract_strided_slice %2 {offsets = [704, 0], sizes = [88, 8], strides = [1, 1]} : vector<792x8xf32> to vector<88x8xf32>
    %c8 = arith.constant 8 : index
    %c0_29 = arith.constant 0 : index
    %c0_30 = arith.constant 0 : index
    %45 = vector.load %arg3[%c8, %c0_29, %c0_30] : memref<9x8x32xf32, #tpu.memory_space<vmem>>, vector<1x8x32xf32>
    %46 = vector.shape_cast %45 : vector<1x8x32xf32> to vector<8x32xf32>
    %cst_31 = arith.constant dense<0.000000e+00> : vector<88x32xf32>
    %47 = tpu.matmul %44, %46, %cst_31 {dimension_numbers = #tpu.dot_dimension_numbers<[1], [0], [0], [1], [0, 0, 1, 1], [], []>} : vector<88x8xf32>, vector<8x32xf32>, vector<88x32xf32> -> vector<88x32xf32>
    %48 = arith.addf %43, %47 : vector<88x32xf32>
    %c0_32 = arith.constant 0 : index
    %c0_33 = arith.constant 0 : index
    %49 = vector.load %arg4[%c0_32, %c0_33] : memref<1x32xf32, #tpu.memory_space<vmem>>, vector<1x32xf32>
    %50 = vector.broadcast %49 : vector<1x32xf32> to vector<88x32xf32>
    %51 = arith.addf %48, %50 : vector<88x32xf32>
    %cst_34 = arith.constant 0.000000e+00 : f32
    %52 = vector.broadcast %cst_34 : f32 to vector<88x32xf32>
    %53 = arith.maximumf %51, %52 : vector<88x32xf32>
    %c0_35 = arith.constant 0 : index
    %c0_36 = arith.constant 0 : index
    %54 = vector.load %arg5[%c0_35, %c0_36] : memref<360x88xf32, #tpu.memory_space<vmem>>, vector<360x88xf32>
    %cst_37 = arith.constant dense<0.000000e+00> : vector<360x32xf32>
    %55 = tpu.matmul %54, %53, %cst_37 {dimension_numbers = #tpu.dot_dimension_numbers<[1], [0], [0], [1], [0, 0, 1, 1], [], []>} : vector<360x88xf32>, vector<88x32xf32>, vector<360x32xf32> -> vector<360x32xf32>
    %cst_38 = arith.constant 0.000000e+00 : f32
    %56 = vector.broadcast %cst_38 : f32 to vector<40x64xf32>
    %57 = vector.extract_strided_slice %55 {offsets = [0, 0], sizes = [40, 32], strides = [1, 1]} : vector<360x32xf32> to vector<40x32xf32>
    %c0_39 = arith.constant 0 : index
    %c0_40 = arith.constant 0 : index
    %c0_41 = arith.constant 0 : index
    %58 = vector.load %arg6[%c0_39, %c0_40, %c0_41] : memref<9x32x64xf32, #tpu.memory_space<vmem>>, vector<1x32x64xf32>
    %59 = vector.shape_cast %58 : vector<1x32x64xf32> to vector<32x64xf32>
    %cst_42 = arith.constant dense<0.000000e+00> : vector<40x64xf32>
    %60 = tpu.matmul %57, %59, %cst_42 {dimension_numbers = #tpu.dot_dimension_numbers<[1], [0], [0], [1], [0, 0, 1, 1], [], []>} : vector<40x32xf32>, vector<32x64xf32>, vector<40x64xf32> -> vector<40x64xf32>
    %61 = arith.addf %56, %60 : vector<40x64xf32>
    %62 = vector.extract_strided_slice %55 {offsets = [40, 0], sizes = [40, 32], strides = [1, 1]} : vector<360x32xf32> to vector<40x32xf32>
    %c1_43 = arith.constant 1 : index
    %c0_44 = arith.constant 0 : index
    %c0_45 = arith.constant 0 : index
    %63 = vector.load %arg6[%c1_43, %c0_44, %c0_45] : memref<9x32x64xf32, #tpu.memory_space<vmem>>, vector<1x32x64xf32>
    %64 = vector.shape_cast %63 : vector<1x32x64xf32> to vector<32x64xf32>
    %cst_46 = arith.constant dense<0.000000e+00> : vector<40x64xf32>
    %65 = tpu.matmul %62, %64, %cst_46 {dimension_numbers = #tpu.dot_dimension_numbers<[1], [0], [0], [1], [0, 0, 1, 1], [], []>} : vector<40x32xf32>, vector<32x64xf32>, vector<40x64xf32> -> vector<40x64xf32>
    %66 = arith.addf %61, %65 : vector<40x64xf32>
    %67 = vector.extract_strided_slice %55 {offsets = [80, 0], sizes = [40, 32], strides = [1, 1]} : vector<360x32xf32> to vector<40x32xf32>
    %c2_47 = arith.constant 2 : index
    %c0_48 = arith.constant 0 : index
    %c0_49 = arith.constant 0 : index
    %68 = vector.load %arg6[%c2_47, %c0_48, %c0_49] : memref<9x32x64xf32, #tpu.memory_space<vmem>>, vector<1x32x64xf32>
    %69 = vector.shape_cast %68 : vector<1x32x64xf32> to vector<32x64xf32>
    %cst_50 = arith.constant dense<0.000000e+00> : vector<40x64xf32>
    %70 = tpu.matmul %67, %69, %cst_50 {dimension_numbers = #tpu.dot_dimension_numbers<[1], [0], [0], [1], [0, 0, 1, 1], [], []>} : vector<40x32xf32>, vector<32x64xf32>, vector<40x64xf32> -> vector<40x64xf32>
    %71 = arith.addf %66, %70 : vector<40x64xf32>
    %72 = vector.extract_strided_slice %55 {offsets = [120, 0], sizes = [40, 32], strides = [1, 1]} : vector<360x32xf32> to vector<40x32xf32>
    %c3_51 = arith.constant 3 : index
    %c0_52 = arith.constant 0 : index
    %c0_53 = arith.constant 0 : index
    %73 = vector.load %arg6[%c3_51, %c0_52, %c0_53] : memref<9x32x64xf32, #tpu.memory_space<vmem>>, vector<1x32x64xf32>
    %74 = vector.shape_cast %73 : vector<1x32x64xf32> to vector<32x64xf32>
    %cst_54 = arith.constant dense<0.000000e+00> : vector<40x64xf32>
    %75 = tpu.matmul %72, %74, %cst_54 {dimension_numbers = #tpu.dot_dimension_numbers<[1], [0], [0], [1], [0, 0, 1, 1], [], []>} : vector<40x32xf32>, vector<32x64xf32>, vector<40x64xf32> -> vector<40x64xf32>
    %76 = arith.addf %71, %75 : vector<40x64xf32>
    %77 = vector.extract_strided_slice %55 {offsets = [160, 0], sizes = [40, 32], strides = [1, 1]} : vector<360x32xf32> to vector<40x32xf32>
    %c4_55 = arith.constant 4 : index
    %c0_56 = arith.constant 0 : index
    %c0_57 = arith.constant 0 : index
    %78 = vector.load %arg6[%c4_55, %c0_56, %c0_57] : memref<9x32x64xf32, #tpu.memory_space<vmem>>, vector<1x32x64xf32>
    %79 = vector.shape_cast %78 : vector<1x32x64xf32> to vector<32x64xf32>
    %cst_58 = arith.constant dense<0.000000e+00> : vector<40x64xf32>
    %80 = tpu.matmul %77, %79, %cst_58 {dimension_numbers = #tpu.dot_dimension_numbers<[1], [0], [0], [1], [0, 0, 1, 1], [], []>} : vector<40x32xf32>, vector<32x64xf32>, vector<40x64xf32> -> vector<40x64xf32>
    %81 = arith.addf %76, %80 : vector<40x64xf32>
    %82 = vector.extract_strided_slice %55 {offsets = [200, 0], sizes = [40, 32], strides = [1, 1]} : vector<360x32xf32> to vector<40x32xf32>
    %c5_59 = arith.constant 5 : index
    %c0_60 = arith.constant 0 : index
    %c0_61 = arith.constant 0 : index
    %83 = vector.load %arg6[%c5_59, %c0_60, %c0_61] : memref<9x32x64xf32, #tpu.memory_space<vmem>>, vector<1x32x64xf32>
    %84 = vector.shape_cast %83 : vector<1x32x64xf32> to vector<32x64xf32>
    %cst_62 = arith.constant dense<0.000000e+00> : vector<40x64xf32>
    %85 = tpu.matmul %82, %84, %cst_62 {dimension_numbers = #tpu.dot_dimension_numbers<[1], [0], [0], [1], [0, 0, 1, 1], [], []>} : vector<40x32xf32>, vector<32x64xf32>, vector<40x64xf32> -> vector<40x64xf32>
    %86 = arith.addf %81, %85 : vector<40x64xf32>
    %87 = vector.extract_strided_slice %55 {offsets = [240, 0], sizes = [40, 32], strides = [1, 1]} : vector<360x32xf32> to vector<40x32xf32>
    %c6_63 = arith.constant 6 : index
    %c0_64 = arith.constant 0 : index
    %c0_65 = arith.constant 0 : index
    %88 = vector.load %arg6[%c6_63, %c0_64, %c0_65] : memref<9x32x64xf32, #tpu.memory_space<vmem>>, vector<1x32x64xf32>
    %89 = vector.shape_cast %88 : vector<1x32x64xf32> to vector<32x64xf32>
    %cst_66 = arith.constant dense<0.000000e+00> : vector<40x64xf32>
    %90 = tpu.matmul %87, %89, %cst_66 {dimension_numbers = #tpu.dot_dimension_numbers<[1], [0], [0], [1], [0, 0, 1, 1], [], []>} : vector<40x32xf32>, vector<32x64xf32>, vector<40x64xf32> -> vector<40x64xf32>
    %91 = arith.addf %86, %90 : vector<40x64xf32>
    %92 = vector.extract_strided_slice %55 {offsets = [280, 0], sizes = [40, 32], strides = [1, 1]} : vector<360x32xf32> to vector<40x32xf32>
    %c7_67 = arith.constant 7 : index
    %c0_68 = arith.constant 0 : index
    %c0_69 = arith.constant 0 : index
    %93 = vector.load %arg6[%c7_67, %c0_68, %c0_69] : memref<9x32x64xf32, #tpu.memory_space<vmem>>, vector<1x32x64xf32>
    %94 = vector.shape_cast %93 : vector<1x32x64xf32> to vector<32x64xf32>
    %cst_70 = arith.constant dense<0.000000e+00> : vector<40x64xf32>
    %95 = tpu.matmul %92, %94, %cst_70 {dimension_numbers = #tpu.dot_dimension_numbers<[1], [0], [0], [1], [0, 0, 1, 1], [], []>} : vector<40x32xf32>, vector<32x64xf32>, vector<40x64xf32> -> vector<40x64xf32>
    %96 = arith.addf %91, %95 : vector<40x64xf32>
    %97 = vector.extract_strided_slice %55 {offsets = [320, 0], sizes = [40, 32], strides = [1, 1]} : vector<360x32xf32> to vector<40x32xf32>
    %c8_71 = arith.constant 8 : index
    %c0_72 = arith.constant 0 : index
    %c0_73 = arith.constant 0 : index
    %98 = vector.load %arg6[%c8_71, %c0_72, %c0_73] : memref<9x32x64xf32, #tpu.memory_space<vmem>>, vector<1x32x64xf32>
    %99 = vector.shape_cast %98 : vector<1x32x64xf32> to vector<32x64xf32>
    %cst_74 = arith.constant dense<0.000000e+00> : vector<40x64xf32>
    %100 = tpu.matmul %97, %99, %cst_74 {dimension_numbers = #tpu.dot_dimension_numbers<[1], [0], [0], [1], [0, 0, 1, 1], [], []>} : vector<40x32xf32>, vector<32x64xf32>, vector<40x64xf32> -> vector<40x64xf32>
    %101 = arith.addf %96, %100 : vector<40x64xf32>
    %c0_75 = arith.constant 0 : index
    %c0_76 = arith.constant 0 : index
    %102 = vector.load %arg7[%c0_75, %c0_76] : memref<1x64xf32, #tpu.memory_space<vmem>>, vector<1x64xf32>
    %103 = vector.broadcast %102 : vector<1x64xf32> to vector<40x64xf32>
    %104 = arith.addf %101, %103 : vector<40x64xf32>
    %cst_77 = arith.constant 0.000000e+00 : f32
    %105 = vector.broadcast %cst_77 : f32 to vector<40x64xf32>
    %106 = arith.maximumf %104, %105 : vector<40x64xf32>
    %c0_78 = arith.constant 0 : index
    %c0_79 = arith.constant 0 : index
    %107 = vector.load %arg8[%c0_78, %c0_79] : memref<144x40xf32, #tpu.memory_space<vmem>>, vector<144x40xf32>
    %cst_80 = arith.constant dense<0.000000e+00> : vector<144x64xf32>
    %108 = tpu.matmul %107, %106, %cst_80 {dimension_numbers = #tpu.dot_dimension_numbers<[1], [0], [0], [1], [0, 0, 1, 1], [], []>} : vector<144x40xf32>, vector<40x64xf32>, vector<144x64xf32> -> vector<144x64xf32>
    %cst_81 = arith.constant 0.000000e+00 : f32
    %109 = vector.broadcast %cst_81 : f32 to vector<16x128xf32>
    %110 = vector.extract_strided_slice %108 {offsets = [0, 0], sizes = [16, 64], strides = [1, 1]} : vector<144x64xf32> to vector<16x64xf32>
    %c0_82 = arith.constant 0 : index
    %c0_83 = arith.constant 0 : index
    %c0_84 = arith.constant 0 : index
    %111 = vector.load %arg9[%c0_82, %c0_83, %c0_84] : memref<9x64x128xf32, #tpu.memory_space<vmem>>, vector<1x64x128xf32>
    %112 = vector.shape_cast %111 : vector<1x64x128xf32> to vector<64x128xf32>
    %cst_85 = arith.constant dense<0.000000e+00> : vector<16x128xf32>
    %113 = tpu.matmul %110, %112, %cst_85 {dimension_numbers = #tpu.dot_dimension_numbers<[1], [0], [0], [1], [0, 0, 1, 1], [], []>} : vector<16x64xf32>, vector<64x128xf32>, vector<16x128xf32> -> vector<16x128xf32>
    %114 = arith.addf %109, %113 : vector<16x128xf32>
    %115 = vector.extract_strided_slice %108 {offsets = [16, 0], sizes = [16, 64], strides = [1, 1]} : vector<144x64xf32> to vector<16x64xf32>
    %c1_86 = arith.constant 1 : index
    %c0_87 = arith.constant 0 : index
    %c0_88 = arith.constant 0 : index
    %116 = vector.load %arg9[%c1_86, %c0_87, %c0_88] : memref<9x64x128xf32, #tpu.memory_space<vmem>>, vector<1x64x128xf32>
    %117 = vector.shape_cast %116 : vector<1x64x128xf32> to vector<64x128xf32>
    %cst_89 = arith.constant dense<0.000000e+00> : vector<16x128xf32>
    %118 = tpu.matmul %115, %117, %cst_89 {dimension_numbers = #tpu.dot_dimension_numbers<[1], [0], [0], [1], [0, 0, 1, 1], [], []>} : vector<16x64xf32>, vector<64x128xf32>, vector<16x128xf32> -> vector<16x128xf32>
    %119 = arith.addf %114, %118 : vector<16x128xf32>
    %120 = vector.extract_strided_slice %108 {offsets = [32, 0], sizes = [16, 64], strides = [1, 1]} : vector<144x64xf32> to vector<16x64xf32>
    %c2_90 = arith.constant 2 : index
    %c0_91 = arith.constant 0 : index
    %c0_92 = arith.constant 0 : index
    %121 = vector.load %arg9[%c2_90, %c0_91, %c0_92] : memref<9x64x128xf32, #tpu.memory_space<vmem>>, vector<1x64x128xf32>
    %122 = vector.shape_cast %121 : vector<1x64x128xf32> to vector<64x128xf32>
    %cst_93 = arith.constant dense<0.000000e+00> : vector<16x128xf32>
    %123 = tpu.matmul %120, %122, %cst_93 {dimension_numbers = #tpu.dot_dimension_numbers<[1], [0], [0], [1], [0, 0, 1, 1], [], []>} : vector<16x64xf32>, vector<64x128xf32>, vector<16x128xf32> -> vector<16x128xf32>
    %124 = arith.addf %119, %123 : vector<16x128xf32>
    %125 = vector.extract_strided_slice %108 {offsets = [48, 0], sizes = [16, 64], strides = [1, 1]} : vector<144x64xf32> to vector<16x64xf32>
    %c3_94 = arith.constant 3 : index
    %c0_95 = arith.constant 0 : index
    %c0_96 = arith.constant 0 : index
    %126 = vector.load %arg9[%c3_94, %c0_95, %c0_96] : memref<9x64x128xf32, #tpu.memory_space<vmem>>, vector<1x64x128xf32>
    %127 = vector.shape_cast %126 : vector<1x64x128xf32> to vector<64x128xf32>
    %cst_97 = arith.constant dense<0.000000e+00> : vector<16x128xf32>
    %128 = tpu.matmul %125, %127, %cst_97 {dimension_numbers = #tpu.dot_dimension_numbers<[1], [0], [0], [1], [0, 0, 1, 1], [], []>} : vector<16x64xf32>, vector<64x128xf32>, vector<16x128xf32> -> vector<16x128xf32>
    %129 = arith.addf %124, %128 : vector<16x128xf32>
    %130 = vector.extract_strided_slice %108 {offsets = [64, 0], sizes = [16, 64], strides = [1, 1]} : vector<144x64xf32> to vector<16x64xf32>
    %c4_98 = arith.constant 4 : index
    %c0_99 = arith.constant 0 : index
    %c0_100 = arith.constant 0 : index
    %131 = vector.load %arg9[%c4_98, %c0_99, %c0_100] : memref<9x64x128xf32, #tpu.memory_space<vmem>>, vector<1x64x128xf32>
    %132 = vector.shape_cast %131 : vector<1x64x128xf32> to vector<64x128xf32>
    %cst_101 = arith.constant dense<0.000000e+00> : vector<16x128xf32>
    %133 = tpu.matmul %130, %132, %cst_101 {dimension_numbers = #tpu.dot_dimension_numbers<[1], [0], [0], [1], [0, 0, 1, 1], [], []>} : vector<16x64xf32>, vector<64x128xf32>, vector<16x128xf32> -> vector<16x128xf32>
    %134 = arith.addf %129, %133 : vector<16x128xf32>
    %135 = vector.extract_strided_slice %108 {offsets = [80, 0], sizes = [16, 64], strides = [1, 1]} : vector<144x64xf32> to vector<16x64xf32>
    %c5_102 = arith.constant 5 : index
    %c0_103 = arith.constant 0 : index
    %c0_104 = arith.constant 0 : index
    %136 = vector.load %arg9[%c5_102, %c0_103, %c0_104] : memref<9x64x128xf32, #tpu.memory_space<vmem>>, vector<1x64x128xf32>
    %137 = vector.shape_cast %136 : vector<1x64x128xf32> to vector<64x128xf32>
    %cst_105 = arith.constant dense<0.000000e+00> : vector<16x128xf32>
    %138 = tpu.matmul %135, %137, %cst_105 {dimension_numbers = #tpu.dot_dimension_numbers<[1], [0], [0], [1], [0, 0, 1, 1], [], []>} : vector<16x64xf32>, vector<64x128xf32>, vector<16x128xf32> -> vector<16x128xf32>
    %139 = arith.addf %134, %138 : vector<16x128xf32>
    %140 = vector.extract_strided_slice %108 {offsets = [96, 0], sizes = [16, 64], strides = [1, 1]} : vector<144x64xf32> to vector<16x64xf32>
    %c6_106 = arith.constant 6 : index
    %c0_107 = arith.constant 0 : index
    %c0_108 = arith.constant 0 : index
    %141 = vector.load %arg9[%c6_106, %c0_107, %c0_108] : memref<9x64x128xf32, #tpu.memory_space<vmem>>, vector<1x64x128xf32>
    %142 = vector.shape_cast %141 : vector<1x64x128xf32> to vector<64x128xf32>
    %cst_109 = arith.constant dense<0.000000e+00> : vector<16x128xf32>
    %143 = tpu.matmul %140, %142, %cst_109 {dimension_numbers = #tpu.dot_dimension_numbers<[1], [0], [0], [1], [0, 0, 1, 1], [], []>} : vector<16x64xf32>, vector<64x128xf32>, vector<16x128xf32> -> vector<16x128xf32>
    %144 = arith.addf %139, %143 : vector<16x128xf32>
    %145 = vector.extract_strided_slice %108 {offsets = [112, 0], sizes = [16, 64], strides = [1, 1]} : vector<144x64xf32> to vector<16x64xf32>
    %c7_110 = arith.constant 7 : index
    %c0_111 = arith.constant 0 : index
    %c0_112 = arith.constant 0 : index
    %146 = vector.load %arg9[%c7_110, %c0_111, %c0_112] : memref<9x64x128xf32, #tpu.memory_space<vmem>>, vector<1x64x128xf32>
    %147 = vector.shape_cast %146 : vector<1x64x128xf32> to vector<64x128xf32>
    %cst_113 = arith.constant dense<0.000000e+00> : vector<16x128xf32>
    %148 = tpu.matmul %145, %147, %cst_113 {dimension_numbers = #tpu.dot_dimension_numbers<[1], [0], [0], [1], [0, 0, 1, 1], [], []>} : vector<16x64xf32>, vector<64x128xf32>, vector<16x128xf32> -> vector<16x128xf32>
    %149 = arith.addf %144, %148 : vector<16x128xf32>
    %150 = vector.extract_strided_slice %108 {offsets = [128, 0], sizes = [16, 64], strides = [1, 1]} : vector<144x64xf32> to vector<16x64xf32>
    %c8_114 = arith.constant 8 : index
    %c0_115 = arith.constant 0 : index
    %c0_116 = arith.constant 0 : index
    %151 = vector.load %arg9[%c8_114, %c0_115, %c0_116] : memref<9x64x128xf32, #tpu.memory_space<vmem>>, vector<1x64x128xf32>
    %152 = vector.shape_cast %151 : vector<1x64x128xf32> to vector<64x128xf32>
    %cst_117 = arith.constant dense<0.000000e+00> : vector<16x128xf32>
    %153 = tpu.matmul %150, %152, %cst_117 {dimension_numbers = #tpu.dot_dimension_numbers<[1], [0], [0], [1], [0, 0, 1, 1], [], []>} : vector<16x64xf32>, vector<64x128xf32>, vector<16x128xf32> -> vector<16x128xf32>
    %154 = arith.addf %149, %153 : vector<16x128xf32>
    %c0_118 = arith.constant 0 : index
    %c0_119 = arith.constant 0 : index
    %155 = vector.load %arg10[%c0_118, %c0_119] : memref<1x128xf32, #tpu.memory_space<vmem>>, vector<1x128xf32>
    %156 = vector.broadcast %155 : vector<1x128xf32> to vector<16x128xf32>
    %157 = arith.addf %154, %156 : vector<16x128xf32>
    %cst_120 = arith.constant 0.000000e+00 : f32
    %158 = vector.broadcast %cst_120 : f32 to vector<16x128xf32>
    %159 = arith.maximumf %157, %158 : vector<16x128xf32>
    %c0_121 = arith.constant 0 : index
    %c0_122 = arith.constant 0 : index
    %160 = vector.load %arg11[%c0_121, %c0_122] : memref<144x16xf32, #tpu.memory_space<vmem>>, vector<144x16xf32>
    %cst_123 = arith.constant dense<0.000000e+00> : vector<144x128xf32>
    %161 = tpu.matmul %160, %159, %cst_123 {dimension_numbers = #tpu.dot_dimension_numbers<[1], [0], [0], [1], [0, 0, 1, 1], [], []>} : vector<144x16xf32>, vector<16x128xf32>, vector<144x128xf32> -> vector<144x128xf32>
    %cst_124 = arith.constant 0.000000e+00 : f32
    %162 = vector.broadcast %cst_124 : f32 to vector<16x256xf32>
    %163 = vector.extract_strided_slice %161 {offsets = [0, 0], sizes = [16, 128], strides = [1, 1]} : vector<144x128xf32> to vector<16x128xf32>
    %c0_125 = arith.constant 0 : index
    %c0_126 = arith.constant 0 : index
    %c0_127 = arith.constant 0 : index
    %164 = vector.load %arg12[%c0_125, %c0_126, %c0_127] : memref<9x128x256xf32, #tpu.memory_space<vmem>>, vector<1x128x256xf32>
    %165 = vector.shape_cast %164 : vector<1x128x256xf32> to vector<128x256xf32>
    %cst_128 = arith.constant dense<0.000000e+00> : vector<16x256xf32>
    %166 = tpu.matmul %163, %165, %cst_128 {dimension_numbers = #tpu.dot_dimension_numbers<[1], [0], [0], [1], [0, 0, 1, 1], [], []>} : vector<16x128xf32>, vector<128x256xf32>, vector<16x256xf32> -> vector<16x256xf32>
    %167 = arith.addf %162, %166 : vector<16x256xf32>
    %168 = vector.extract_strided_slice %161 {offsets = [16, 0], sizes = [16, 128], strides = [1, 1]} : vector<144x128xf32> to vector<16x128xf32>
    %c1_129 = arith.constant 1 : index
    %c0_130 = arith.constant 0 : index
    %c0_131 = arith.constant 0 : index
    %169 = vector.load %arg12[%c1_129, %c0_130, %c0_131] : memref<9x128x256xf32, #tpu.memory_space<vmem>>, vector<1x128x256xf32>
    %170 = vector.shape_cast %169 : vector<1x128x256xf32> to vector<128x256xf32>
    %cst_132 = arith.constant dense<0.000000e+00> : vector<16x256xf32>
    %171 = tpu.matmul %168, %170, %cst_132 {dimension_numbers = #tpu.dot_dimension_numbers<[1], [0], [0], [1], [0, 0, 1, 1], [], []>} : vector<16x128xf32>, vector<128x256xf32>, vector<16x256xf32> -> vector<16x256xf32>
    %172 = arith.addf %167, %171 : vector<16x256xf32>
    %173 = vector.extract_strided_slice %161 {offsets = [32, 0], sizes = [16, 128], strides = [1, 1]} : vector<144x128xf32> to vector<16x128xf32>
    %c2_133 = arith.constant 2 : index
    %c0_134 = arith.constant 0 : index
    %c0_135 = arith.constant 0 : index
    %174 = vector.load %arg12[%c2_133, %c0_134, %c0_135] : memref<9x128x256xf32, #tpu.memory_space<vmem>>, vector<1x128x256xf32>
    %175 = vector.shape_cast %174 : vector<1x128x256xf32> to vector<128x256xf32>
    %cst_136 = arith.constant dense<0.000000e+00> : vector<16x256xf32>
    %176 = tpu.matmul %173, %175, %cst_136 {dimension_numbers = #tpu.dot_dimension_numbers<[1], [0], [0], [1], [0, 0, 1, 1], [], []>} : vector<16x128xf32>, vector<128x256xf32>, vector<16x256xf32> -> vector<16x256xf32>
    %177 = arith.addf %172, %176 : vector<16x256xf32>
    %178 = vector.extract_strided_slice %161 {offsets = [48, 0], sizes = [16, 128], strides = [1, 1]} : vector<144x128xf32> to vector<16x128xf32>
    %c3_137 = arith.constant 3 : index
    %c0_138 = arith.constant 0 : index
    %c0_139 = arith.constant 0 : index
    %179 = vector.load %arg12[%c3_137, %c0_138, %c0_139] : memref<9x128x256xf32, #tpu.memory_space<vmem>>, vector<1x128x256xf32>
    %180 = vector.shape_cast %179 : vector<1x128x256xf32> to vector<128x256xf32>
    %cst_140 = arith.constant dense<0.000000e+00> : vector<16x256xf32>
    %181 = tpu.matmul %178, %180, %cst_140 {dimension_numbers = #tpu.dot_dimension_numbers<[1], [0], [0], [1], [0, 0, 1, 1], [], []>} : vector<16x128xf32>, vector<128x256xf32>, vector<16x256xf32> -> vector<16x256xf32>
    %182 = arith.addf %177, %181 : vector<16x256xf32>
    %183 = vector.extract_strided_slice %161 {offsets = [64, 0], sizes = [16, 128], strides = [1, 1]} : vector<144x128xf32> to vector<16x128xf32>
    %c4_141 = arith.constant 4 : index
    %c0_142 = arith.constant 0 : index
    %c0_143 = arith.constant 0 : index
    %184 = vector.load %arg12[%c4_141, %c0_142, %c0_143] : memref<9x128x256xf32, #tpu.memory_space<vmem>>, vector<1x128x256xf32>
    %185 = vector.shape_cast %184 : vector<1x128x256xf32> to vector<128x256xf32>
    %cst_144 = arith.constant dense<0.000000e+00> : vector<16x256xf32>
    %186 = tpu.matmul %183, %185, %cst_144 {dimension_numbers = #tpu.dot_dimension_numbers<[1], [0], [0], [1], [0, 0, 1, 1], [], []>} : vector<16x128xf32>, vector<128x256xf32>, vector<16x256xf32> -> vector<16x256xf32>
    %187 = arith.addf %182, %186 : vector<16x256xf32>
    %188 = vector.extract_strided_slice %161 {offsets = [80, 0], sizes = [16, 128], strides = [1, 1]} : vector<144x128xf32> to vector<16x128xf32>
    %c5_145 = arith.constant 5 : index
    %c0_146 = arith.constant 0 : index
    %c0_147 = arith.constant 0 : index
    %189 = vector.load %arg12[%c5_145, %c0_146, %c0_147] : memref<9x128x256xf32, #tpu.memory_space<vmem>>, vector<1x128x256xf32>
    %190 = vector.shape_cast %189 : vector<1x128x256xf32> to vector<128x256xf32>
    %cst_148 = arith.constant dense<0.000000e+00> : vector<16x256xf32>
    %191 = tpu.matmul %188, %190, %cst_148 {dimension_numbers = #tpu.dot_dimension_numbers<[1], [0], [0], [1], [0, 0, 1, 1], [], []>} : vector<16x128xf32>, vector<128x256xf32>, vector<16x256xf32> -> vector<16x256xf32>
    %192 = arith.addf %187, %191 : vector<16x256xf32>
    %193 = vector.extract_strided_slice %161 {offsets = [96, 0], sizes = [16, 128], strides = [1, 1]} : vector<144x128xf32> to vector<16x128xf32>
    %c6_149 = arith.constant 6 : index
    %c0_150 = arith.constant 0 : index
    %c0_151 = arith.constant 0 : index
    %194 = vector.load %arg12[%c6_149, %c0_150, %c0_151] : memref<9x128x256xf32, #tpu.memory_space<vmem>>, vector<1x128x256xf32>
    %195 = vector.shape_cast %194 : vector<1x128x256xf32> to vector<128x256xf32>
    %cst_152 = arith.constant dense<0.000000e+00> : vector<16x256xf32>
    %196 = tpu.matmul %193, %195, %cst_152 {dimension_numbers = #tpu.dot_dimension_numbers<[1], [0], [0], [1], [0, 0, 1, 1], [], []>} : vector<16x128xf32>, vector<128x256xf32>, vector<16x256xf32> -> vector<16x256xf32>
    %197 = arith.addf %192, %196 : vector<16x256xf32>
    %198 = vector.extract_strided_slice %161 {offsets = [112, 0], sizes = [16, 128], strides = [1, 1]} : vector<144x128xf32> to vector<16x128xf32>
    %c7_153 = arith.constant 7 : index
    %c0_154 = arith.constant 0 : index
    %c0_155 = arith.constant 0 : index
    %199 = vector.load %arg12[%c7_153, %c0_154, %c0_155] : memref<9x128x256xf32, #tpu.memory_space<vmem>>, vector<1x128x256xf32>
    %200 = vector.shape_cast %199 : vector<1x128x256xf32> to vector<128x256xf32>
    %cst_156 = arith.constant dense<0.000000e+00> : vector<16x256xf32>
    %201 = tpu.matmul %198, %200, %cst_156 {dimension_numbers = #tpu.dot_dimension_numbers<[1], [0], [0], [1], [0, 0, 1, 1], [], []>} : vector<16x128xf32>, vector<128x256xf32>, vector<16x256xf32> -> vector<16x256xf32>
    %202 = arith.addf %197, %201 : vector<16x256xf32>
    %203 = vector.extract_strided_slice %161 {offsets = [128, 0], sizes = [16, 128], strides = [1, 1]} : vector<144x128xf32> to vector<16x128xf32>
    %c8_157 = arith.constant 8 : index
    %c0_158 = arith.constant 0 : index
    %c0_159 = arith.constant 0 : index
    %204 = vector.load %arg12[%c8_157, %c0_158, %c0_159] : memref<9x128x256xf32, #tpu.memory_space<vmem>>, vector<1x128x256xf32>
    %205 = vector.shape_cast %204 : vector<1x128x256xf32> to vector<128x256xf32>
    %cst_160 = arith.constant dense<0.000000e+00> : vector<16x256xf32>
    %206 = tpu.matmul %203, %205, %cst_160 {dimension_numbers = #tpu.dot_dimension_numbers<[1], [0], [0], [1], [0, 0, 1, 1], [], []>} : vector<16x128xf32>, vector<128x256xf32>, vector<16x256xf32> -> vector<16x256xf32>
    %207 = arith.addf %202, %206 : vector<16x256xf32>
    %c0_161 = arith.constant 0 : index
    %c0_162 = arith.constant 0 : index
    %208 = vector.load %arg13[%c0_161, %c0_162] : memref<1x256xf32, #tpu.memory_space<vmem>>, vector<1x256xf32>
    %209 = vector.broadcast %208 : vector<1x256xf32> to vector<16x256xf32>
    %210 = arith.addf %207, %209 : vector<16x256xf32>
    %cst_163 = arith.constant 0.000000e+00 : f32
    %211 = vector.broadcast %cst_163 : f32 to vector<16x256xf32>
    %212 = arith.maximumf %210, %211 : vector<16x256xf32>
    %c0_164 = arith.constant 0 : index
    %c0_165 = arith.constant 0 : index
    %213 = vector.load %arg14[%c0_164, %c0_165] : memref<1x16xf32, #tpu.memory_space<vmem>>, vector<1x16xf32>
    %cst_166 = arith.constant dense<0.000000e+00> : vector<1x256xf32>
    %214 = tpu.matmul %213, %212, %cst_166 {dimension_numbers = #tpu.dot_dimension_numbers<[1], [0], [0], [1], [0, 0, 1, 1], [], []>} : vector<1x16xf32>, vector<16x256xf32>, vector<1x256xf32> -> vector<1x256xf32>
    %c0_167 = arith.constant 0 : index
    %c0_168 = arith.constant 0 : index
    %215 = vector.load %arg15[%c0_167, %c0_168] : memref<256x20xf32, #tpu.memory_space<vmem>>, vector<256x20xf32>
    %cst_169 = arith.constant dense<0.000000e+00> : vector<1x20xf32>
    %216 = tpu.matmul %214, %215, %cst_169 {dimension_numbers = #tpu.dot_dimension_numbers<[1], [0], [0], [1], [0, 0, 1, 1], [], []>} : vector<1x256xf32>, vector<256x20xf32>, vector<1x20xf32> -> vector<1x20xf32>
    %c0_170 = arith.constant 0 : index
    %c0_171 = arith.constant 0 : index
    %217 = vector.load %arg16[%c0_170, %c0_171] : memref<1x20xf32, #tpu.memory_space<vmem>>, vector<1x20xf32>
    %218 = arith.addf %216, %217 : vector<1x20xf32>
    %c0_172 = arith.constant 0 : index
    %c0_173 = arith.constant 0 : index
    %219 = vector.load %arg17[%c0_172, %c0_173] : memref<1x20xf32, #tpu.memory_space<vmem>>, vector<1x20xf32>
    tpu.vector_store %arg17[%c0_172, %c0_173], %218 {strides = array<i32>} : memref<1x20xf32, #tpu.memory_space<vmem>>, vector<1x20xf32>,
    return
  }
  func.func @transform_0(%arg0: i32) -> (i32, i32) {
    %c0_i32 = arith.constant 0 : i32
    %c0_i32_0 = arith.constant 0 : i32
    %c0_i32_1 = arith.constant 0 : i32
    return %c0_i32, %c0_i32_0 : i32, i32
  }
  func.func @transform_1(%arg0: i32) -> (i32, i32) {
    %c0_i32 = arith.constant 0 : i32
    %c0_i32_0 = arith.constant 0 : i32
    %c0_i32_1 = arith.constant 0 : i32
    return %c0_i32, %c0_i32_0 : i32, i32
  }
  func.func @transform_2(%arg0: i32) -> (i32, i32, i32) {
    %c0_i32 = arith.constant 0 : i32
    %c0_i32_0 = arith.constant 0 : i32
    %c0_i32_1 = arith.constant 0 : i32
    %c0_i32_2 = arith.constant 0 : i32
    return %c0_i32, %c0_i32_0, %c0_i32_1 : i32, i32, i32
  }
  func.func @transform_3(%arg0: i32) -> (i32, i32) {
    %c0_i32 = arith.constant 0 : i32
    %c0_i32_0 = arith.constant 0 : i32
    %c0_i32_1 = arith.constant 0 : i32
    return %c0_i32, %c0_i32_0 : i32, i32
  }
  func.func @transform_4(%arg0: i32) -> (i32, i32) {
    %c0_i32 = arith.constant 0 : i32
    %c0_i32_0 = arith.constant 0 : i32
    %c0_i32_1 = arith.constant 0 : i32
    return %c0_i32, %c0_i32_0 : i32, i32
  }
  func.func @transform_5(%arg0: i32) -> (i32, i32, i32) {
    %c0_i32 = arith.constant 0 : i32
    %c0_i32_0 = arith.constant 0 : i32
    %c0_i32_1 = arith.constant 0 : i32
    %c0_i32_2 = arith.constant 0 : i32
    return %c0_i32, %c0_i32_0, %c0_i32_1 : i32, i32, i32
  }
  func.func @transform_6(%arg0: i32) -> (i32, i32) {
    %c0_i32 = arith.constant 0 : i32
    %c0_i32_0 = arith.constant 0 : i32
    %c0_i32_1 = arith.constant 0 : i32
    return %c0_i32, %c0_i32_0 : i32, i32
  }
  func.func @transform_7(%arg0: i32) -> (i32, i32) {
    %c0_i32 = arith.constant 0 : i32
    %c0_i32_0 = arith.constant 0 : i32
    %c0_i32_1 = arith.constant 0 : i32
    return %c0_i32, %c0_i32_0 : i32, i32
  }
  func.func @transform_8(%arg0: i32) -> (i32, i32, i32) {
    %c0_i32 = arith.constant 0 : i32
    %c0_i32_0 = arith.constant 0 : i32
    %c0_i32_1 = arith.constant 0 : i32
    %c0_i32_2 = arith.constant 0 : i32
    return %c0_i32, %c0_i32_0, %c0_i32_1 : i32, i32, i32
  }
  func.func @transform_9(%arg0: i32) -> (i32, i32) {
    %c0_i32 = arith.constant 0 : i32
    %c0_i32_0 = arith.constant 0 : i32
    %c0_i32_1 = arith.constant 0 : i32
    return %c0_i32, %c0_i32_0 : i32, i32
  }
  func.func @transform_10(%arg0: i32) -> (i32, i32) {
    %c0_i32 = arith.constant 0 : i32
    %c0_i32_0 = arith.constant 0 : i32
    %c0_i32_1 = arith.constant 0 : i32
    return %c0_i32, %c0_i32_0 : i32, i32
  }
  func.func @transform_11(%arg0: i32) -> (i32, i32, i32) {
    %c0_i32 = arith.constant 0 : i32
    %c0_i32_0 = arith.constant 0 : i32
    %c0_i32_1 = arith.constant 0 : i32
    %c0_i32_2 = arith.constant 0 : i32
    return %c0_i32, %c0_i32_0, %c0_i32_1 : i32, i32, i32
  }
  func.func @transform_12(%arg0: i32) -> (i32, i32) {
    %c0_i32 = arith.constant 0 : i32
    %c0_i32_0 = arith.constant 0 : i32
    %c0_i32_1 = arith.constant 0 : i32
    return %c0_i32, %c0_i32_0 : i32, i32
  }
  func.func @transform_13(%arg0: i32) -> (i32, i32) {
    %c0_i32 = arith.constant 0 : i32
    %c0_i32_0 = arith.constant 0 : i32
    %c0_i32_1 = arith.constant 0 : i32
    return %c0_i32, %c0_i32_0 : i32, i32
  }
  func.func @transform_14(%arg0: i32) -> (i32, i32) {
    %c0_i32 = arith.constant 0 : i32
    %c0_i32_0 = arith.constant 0 : i32
    %c0_i32_1 = arith.constant 0 : i32
    return %c0_i32, %c0_i32_0 : i32, i32
  }
  func.func @transform_15(%arg0: i32) -> (i32, i32) {
    %c0_i32 = arith.constant 0 : i32
    %c0_i32_0 = arith.constant 0 : i32
    %c0_i32_1 = arith.constant 0 : i32
    return %c0_i32, %c0_i32_0 : i32, i32
  }
  func.func @transform_16(%arg0: i32) -> (i32, i32) {
    %c0_i32 = arith.constant 0 : i32
    %c0_i32_0 = arith.constant 0 : i32
    %c0_i32_1 = arith.constant 0 : i32
    return %c0_i32, %c0_i32_0 : i32, i32
  }
}

</mosaic_0001>

<llo_original>
// kernel: simple_cnn_forward.1
$region0: #{simple_cnn_forward.1}
  #allocation0 [shape = 'u32[]', space=smem, size = 0x4, offset = 0x4, fixed_abs, tag = 'smem constant byte address 0x4 - core index']
  #allocation1 [shape = 'u32[144,128]{1,0:T(1,128)}', space=vmem, size = 0x12000, scoped, tag = 'internal scratch']
  %s0 = inlined_call_operand.vmem [shape: f32[256,8], index: 0, kind: input, shape index: {}]
  %s1 = inlined_call_operand.vmem [shape: f32[792,256], index: 1, kind: input, shape index: {}]
  %s2 = inlined_call_operand.hbm [shape: f32[9,8,32], index: 2, kind: input, shape index: {}]
  %s3 = inlined_call_operand.hbm [shape: f32[1,32], index: 3, kind: input, shape index: {}]
  %s4 = inlined_call_operand.vmem [shape: f32[360,88], index: 4, kind: input, shape index: {}]
  %s5 = inlined_call_operand.hbm [shape: f32[9,32,64], index: 5, kind: input, shape index: {}]
  %s6 = inlined_call_operand.hbm [shape: f32[1,64], index: 6, kind: input, shape index: {}]
  %s7 = inlined_call_operand.vmem [shape: f32[144,40], index: 7, kind: input, shape index: {}]
  %s8 = inlined_call_operand.hbm [shape: f32[9,64,128], index: 8, kind: input, shape index: {}]
  %s9 = inlined_call_operand.hbm [shape: f32[1,128], index: 9, kind: input, shape index: {}]
  %s10 = inlined_call_operand.vmem [shape: f32[144,16], index: 10, kind: input, shape index: {}]
  %s11 = inlined_call_operand.hbm [shape: f32[9,128,256], index: 11, kind: input, shape index: {}]
  %s12 = inlined_call_operand.hbm [shape: f32[1,256], index: 12, kind: input, shape index: {}]
  %s13 = inlined_call_operand.hbm [shape: f32[1,16], index: 13, kind: input, shape index: {}]
  %s14 = inlined_call_operand.vmem [shape: f32[256,20], index: 14, kind: input, shape index: {}]
  %s15 = inlined_call_operand.hbm [shape: f32[1,20], index: 15, kind: input, shape index: {}]
  %s16 = inlined_call_operand.vmem [shape: f32[1,20], index: 16, kind: output, shape index: {}]
  %s17 = sld [smem:[#allocation0]]
  $region114: #{simple_cnn_forward.1} parent=0
    _
  %s19 = ssub.s32 1, %s17
  %s20 = scalar_select 0, %s19, %s17
  $region1: #{simple_cnn_forward.1} parent=0
    #allocation2 [shape = 'u8[36864]{0}', space=vmem, size = 0x9000, scoped, tag = 'input window, operand 2, single buffered']
    #allocation3 [shape = 's32[1]{0}', space=sflag, size = 0x4, scoped, tag = 'scoped memory for simple_cnn_forward.1']
    #allocation4 [shape = 'u8[512]{0}', space=vmem, size = 0x400, scoped, tag = 'input window, operand 3, single buffered']
    #allocation5 [shape = 's32[1]{0}', space=sflag, size = 0x4, scoped, tag = 'scoped memory for simple_cnn_forward.1']
    #allocation6 [shape = 'u8[147456]{0}', space=vmem, size = 0x24000, scoped, tag = 'input window, operand 5, single buffered']
    #allocation7 [shape = 'u8[512]{0}', space=vmem, size = 0x400, scoped, tag = 'input window, operand 6, single buffered']
    #allocation8 [shape = 's32[1]{0}', space=sflag, size = 0x4, scoped, tag = 'scoped memory for simple_cnn_forward.1']
    #allocation9 [shape = 'u8[294912]{0}', space=vmem, size = 0x48000, scoped, tag = 'input window, operand 8, single buffered']
    #allocation10 [shape = 'u8[512]{0}', space=vmem, size = 0x400, scoped, tag = 'input window, operand 9, single buffered']
    #allocation11 [shape = 's32[1]{0}', space=sflag, size = 0x4, scoped, tag = 'scoped memory for simple_cnn_forward.1']
    #allocation12 [shape = 'u8[1179648]{0}', space=vmem, size = 0x120000, scoped, tag = 'input window, operand 11, single buffered']
    #allocation13 [shape = 'u8[1024]{0}', space=vmem, size = 0x400, scoped, tag = 'input window, operand 12, single buffered']
    #allocation14 [shape = 's32[1]{0}', space=sflag, size = 0x4, scoped, tag = 'scoped memory for simple_cnn_forward.1']
    #allocation15 [shape = 'u8[512]{0}', space=vmem, size = 0x400, scoped, tag = 'input window, operand 13, single buffered']
    #allocation16 [shape = 'u8[512]{0}', space=vmem, size = 0x400, scoped, tag = 'input window, operand 15, single buffered']
    #allocation17 [shape = 's32[1]{0}', space=sflag, size = 0x4, scoped, tag = 'scoped memory for simple_cnn_forward.1']
    %21 = vsyncpa [#allocation3], 0
    %22 = vsyncpa [#allocation5], 0
    %23 = vsyncpa [#allocation8], 0
    %24 = vsyncpa [#allocation11], 0
    %25 = vsyncpa [#allocation14], 0
    %26 = vsyncpa [#allocation17], 0
    // Predicated region
    $region2: #{simple_cnn_forward.1} parent=1 // pred_check
      _
    $region3: #{simple_cnn_forward.1} parent=1 // pred_check_branch
      %28 = sbr.rel (0) target = $region5
    $region4: #{simple_cnn_forward.1} parent=1 // pred_region
      _
    $region5: #{simple_cnn_forward.1} parent=1 // pred_fallthru
      _
    // Predicated region
    $region6: #{simple_cnn_forward.1} parent=1 // pred_check
      _
    $region7: #{simple_cnn_forward.1} parent=1 // pred_check_branch
      %30 = sbr.rel (0) target = $region9
    $region8: #{simple_cnn_forward.1} parent=1 // pred_region
      _
    $region9: #{simple_cnn_forward.1} parent=1 // pred_fallthru
      _
    // Predicated region
    $region10: #{simple_cnn_forward.1} parent=1 // pred_check
      _
    $region11: #{simple_cnn_forward.1} parent=1 // pred_check_branch
      %32 = sbr.rel (0) target = $region13
    $region12: #{simple_cnn_forward.1} parent=1 // pred_region
      %s34 = ssub.s32 1152, 1152
      %35 = vsyncadd [#allocation3], %s34
      %s36 = sshll.u32 [#allocation2], 4
      %s37 = int_to_ptr.vmem [resolvable:$true] %s36
      %42 = dma.hbm_to_vmem [thread:$0]  %s2, 1152, %s37, [#allocation3], 128, 128, 8
    $region13: #{simple_cnn_forward.1} parent=1 // pred_fallthru
      _
    // Predicated region
    $region14: #{simple_cnn_forward.1} parent=1 // pred_check
      _
    $region15: #{simple_cnn_forward.1} parent=1 // pred_check_branch
      %44 = sbr.rel (0) target = $region17
    $region16: #{simple_cnn_forward.1} parent=1 // pred_region
      %s46 = ssub.s32 16, 16
      %47 = vsyncadd [#allocation5], %s46
      %s49 = sshll.u32 [#allocation4], 4
      %s50 = int_to_ptr.vmem [resolvable:$true] %s49
      %52 = dma.hbm_to_vmem [thread:$0]  %s3, 16, %s50, [#allocation5]
    $region17: #{simple_cnn_forward.1} parent=1 // pred_fallthru
      _
    // Predicated region
    $region18: #{simple_cnn_forward.1} parent=1 // pred_check
      _
    $region19: #{simple_cnn_forward.1} parent=1 // pred_check_branch
      %54 = sbr.rel (0) target = $region21
    $region20: #{simple_cnn_forward.1} parent=1 // pred_region
      _
    $region21: #{simple_cnn_forward.1} parent=1 // pred_fallthru
      _
    // Predicated region
    $region22: #{simple_cnn_forward.1} parent=1 // pred_check
      _
    $region23: #{simple_cnn_forward.1} parent=1 // pred_check_branch
      %56 = sbr.rel (0) target = $region25
    $region24: #{simple_cnn_forward.1} parent=1 // pred_region
      %s58 = ssub.s32 4608, 4608
      %59 = vsyncadd [#allocation5], %s58
      %s60 = sshll.u32 [#allocation6], 4
      %s61 = int_to_ptr.vmem [resolvable:$true] %s60
      %66 = dma.hbm_to_vmem [thread:$0]  %s5, 4608, %s61, [#allocation5], 128, 128, 8
    $region25: #{simple_cnn_forward.1} parent=1 // pred_fallthru
      _
    // Predicated region
    $region26: #{simple_cnn_forward.1} parent=1 // pred_check
      _
    $region27: #{simple_cnn_forward.1} parent=1 // pred_check_branch
      %68 = sbr.rel (0) target = $region29
    $region28: #{simple_cnn_forward.1} parent=1 // pred_region
      %s70 = ssub.s32 16, 16
      %71 = vsyncadd [#allocation8], %s70
      %s73 = sshll.u32 [#allocation7], 4
      %s74 = int_to_ptr.vmem [resolvable:$true] %s73
      %76 = dma.hbm_to_vmem [thread:$0]  %s6, 16, %s74, [#allocation8]
    $region29: #{simple_cnn_forward.1} parent=1 // pred_fallthru
      _
    // Predicated region
    $region30: #{simple_cnn_forward.1} parent=1 // pred_check
      _
    $region31: #{simple_cnn_forward.1} parent=1 // pred_check_branch
      %78 = sbr.rel (0) target = $region33
    $region32: #{simple_cnn_forward.1} parent=1 // pred_region
      _
    $region33: #{simple_cnn_forward.1} parent=1 // pred_fallthru
      _
    // Predicated region
    $region34: #{simple_cnn_forward.1} parent=1 // pred_check
      _
    $region35: #{simple_cnn_forward.1} parent=1 // pred_check_branch
      %80 = sbr.rel (0) target = $region37
    $region36: #{simple_cnn_forward.1} parent=1 // pred_region
      %s82 = ssub.s32 9216, 9216
      %83 = vsyncadd [#allocation8], %s82
      %s84 = sshll.u32 [#allocation9], 4
      %s85 = int_to_ptr.vmem [resolvable:$true] %s84
      %90 = dma.hbm_to_vmem [thread:$0]  %s8, 9216, %s85, [#allocation8], 128, 128, 8
    $region37: #{simple_cnn_forward.1} parent=1 // pred_fallthru
      _
    // Predicated region
    $region38: #{simple_cnn_forward.1} parent=1 // pred_check
      _
    $region39: #{simple_cnn_forward.1} parent=1 // pred_check_branch
      %92 = sbr.rel (0) target = $region41
    $region40: #{simple_cnn_forward.1} parent=1 // pred_region
      %s94 = ssub.s32 16, 16
      %95 = vsyncadd [#allocation11], %s94
      %s97 = sshll.u32 [#allocation10], 4
      %s98 = int_to_ptr.vmem [resolvable:$true] %s97
      %100 = dma.hbm_to_vmem [thread:$0]  %s9, 16, %s98, [#allocation11]
    $region41: #{simple_cnn_forward.1} parent=1 // pred_fallthru
      _
    // Predicated region
    $region42: #{simple_cnn_forward.1} parent=1 // pred_check
      _
    $region43: #{simple_cnn_forward.1} parent=1 // pred_check_branch
      %102 = sbr.rel (0) target = $region45
    $region44: #{simple_cnn_forward.1} parent=1 // pred_region
      _
    $region45: #{simple_cnn_forward.1} parent=1 // pred_fallthru
      _
    // Predicated region
    $region46: #{simple_cnn_forward.1} parent=1 // pred_check
      _
    $region47: #{simple_cnn_forward.1} parent=1 // pred_check_branch
      %104 = sbr.rel (0) target = $region49
    $region48: #{simple_cnn_forward.1} parent=1 // pred_region
      %s106 = ssub.s32 36864, 36864
      %107 = vsyncadd [#allocation11], %s106
      %s108 = sshll.u32 [#allocation12], 4
      %s109 = int_to_ptr.vmem [resolvable:$true] %s108
      %114 = dma.hbm_to_vmem [thread:$0]  %s11, 36864, %s109, [#allocation11], 256, 256, 16
    $region49: #{simple_cnn_forward.1} parent=1 // pred_fallthru
      _
    // Predicated region
    $region50: #{simple_cnn_forward.1} parent=1 // pred_check
      _
    $region51: #{simple_cnn_forward.1} parent=1 // pred_check_branch
      %116 = sbr.rel (0) target = $region53
    $region52: #{simple_cnn_forward.1} parent=1 // pred_region
      %s118 = ssub.s32 32, 32
      %119 = vsyncadd [#allocation14], %s118
      %s121 = sshll.u32 [#allocation13], 4
      %s122 = int_to_ptr.vmem [resolvable:$true] %s121
      %124 = dma.hbm_to_vmem [thread:$0]  %s12, 32, %s122, [#allocation14]
    $region53: #{simple_cnn_forward.1} parent=1 // pred_fallthru
      _
    // Predicated region
    $region54: #{simple_cnn_forward.1} parent=1 // pred_check
      _
    $region55: #{simple_cnn_forward.1} parent=1 // pred_check_branch
      %126 = sbr.rel (0) target = $region57
    $region56: #{simple_cnn_forward.1} parent=1 // pred_region
      %s128 = ssub.s32 16, 16
      %129 = vsyncadd [#allocation14], %s128
      %s131 = sshll.u32 [#allocation15], 4
      %s132 = int_to_ptr.vmem [resolvable:$true] %s131
      %134 = dma.hbm_to_vmem [thread:$0]  %s13, 16, %s132, [#allocation14]
    $region57: #{simple_cnn_forward.1} parent=1 // pred_fallthru
      _
    // Predicated region
    $region58: #{simple_cnn_forward.1} parent=1 // pred_check
      _
    $region59: #{simple_cnn_forward.1} parent=1 // pred_check_branch
      %136 = sbr.rel (0) target = $region61
    $region60: #{simple_cnn_forward.1} parent=1 // pred_region
      _
    $region61: #{simple_cnn_forward.1} parent=1 // pred_fallthru
      _
    // Predicated region
    $region62: #{simple_cnn_forward.1} parent=1 // pred_check
      _
    $region63: #{simple_cnn_forward.1} parent=1 // pred_check_branch
      %138 = sbr.rel (0) target = $region65
    $region64: #{simple_cnn_forward.1} parent=1 // pred_region
      %s140 = ssub.s32 16, 16
      %141 = vsyncadd [#allocation17], %s140
      %s143 = sshll.u32 [#allocation16], 4
      %s144 = int_to_ptr.vmem [resolvable:$true] %s143
      %146 = dma.hbm_to_vmem [thread:$0]  %s15, 16, %s144, [#allocation17]
    $region65: #{simple_cnn_forward.1} parent=1 // pred_fallthru
      _
    // Predicated region
    $region66: #{simple_cnn_forward.1} parent=1 // pred_check
      _
    $region67: #{simple_cnn_forward.1} parent=1 // pred_check_branch
      %148 = sbr.rel (0) target = $region69
    $region68: #{simple_cnn_forward.1} parent=1 // pred_region
      %149 = dma.done [#allocation3], 1152
    $region69: #{simple_cnn_forward.1} parent=1 // pred_fallthru
      _
    // Predicated region
    $region70: #{simple_cnn_forward.1} parent=1 // pred_check
      _
    $region71: #{simple_cnn_forward.1} parent=1 // pred_check_branch
      %151 = sbr.rel (0) target = $region73
    $region72: #{simple_cnn_forward.1} parent=1 // pred_region
      %152 = dma.done [#allocation5], 16
    $region73: #{simple_cnn_forward.1} parent=1 // pred_fallthru
      _
    // Predicated region
    $region74: #{simple_cnn_forward.1} parent=1 // pred_check
      _
    $region75: #{simple_cnn_forward.1} parent=1 // pred_check_branch
      %154 = sbr.rel (0) target = $region77
    $region76: #{simple_cnn_forward.1} parent=1 // pred_region
      %155 = dma.done [#allocation5], 4608
    $region77: #{simple_cnn_forward.1} parent=1 // pred_fallthru
      _
    // Predicated region
    $region78: #{simple_cnn_forward.1} parent=1 // pred_check
      _
    $region79: #{simple_cnn_forward.1} parent=1 // pred_check_branch
      %157 = sbr.rel (0) target = $region81
    $region80: #{simple_cnn_forward.1} parent=1 // pred_region
      %158 = dma.done [#allocation8], 16
    $region81: #{simple_cnn_forward.1} parent=1 // pred_fallthru
      _
    // Predicated region
    $region82: #{simple_cnn_forward.1} parent=1 // pred_check
      _
    $region83: #{simple_cnn_forward.1} parent=1 // pred_check_branch
      %160 = sbr.rel (0) target = $region85
    $region84: #{simple_cnn_forward.1} parent=1 // pred_region
      %161 = dma.done [#allocation8], 9216
    $region85: #{simple_cnn_forward.1} parent=1 // pred_fallthru
      _
    // Predicated region
    $region86: #{simple_cnn_forward.1} parent=1 // pred_check
      _
    $region87: #{simple_cnn_forward.1} parent=1 // pred_check_branch
      %163 = sbr.rel (0) target = $region89
    $region88: #{simple_cnn_forward.1} parent=1 // pred_region
      %164 = dma.done [#allocation11], 16
    $region89: #{simple_cnn_forward.1} parent=1 // pred_fallthru
      _
    // Predicated region
    $region90: #{simple_cnn_forward.1} parent=1 // pred_check
      _
    $region91: #{simple_cnn_forward.1} parent=1 // pred_check_branch
      %166 = sbr.rel (0) target = $region93
    $region92: #{simple_cnn_forward.1} parent=1 // pred_region
      %167 = dma.done [#allocation11], 36864
    $region93: #{simple_cnn_forward.1} parent=1 // pred_fallthru
      _
    // Predicated region
    $region94: #{simple_cnn_forward.1} parent=1 // pred_check
      _
    $region95: #{simple_cnn_forward.1} parent=1 // pred_check_branch
      %169 = sbr.rel (0) target = $region97
    $region96: #{simple_cnn_forward.1} parent=1 // pred_region
      %170 = dma.done [#allocation14], 32
    $region97: #{simple_cnn_forward.1} parent=1 // pred_fallthru
      _
    // Predicated region
    $region98: #{simple_cnn_forward.1} parent=1 // pred_check
      _
    $region99: #{simple_cnn_forward.1} parent=1 // pred_check_branch
      %172 = sbr.rel (0) target = $region101
    $region100: #{simple_cnn_forward.1} parent=1 // pred_region
      %173 = dma.done [#allocation14], 16
    $region101: #{simple_cnn_forward.1} parent=1 // pred_fallthru
      _
    // Predicated region
    $region102: #{simple_cnn_forward.1} parent=1 // pred_check
      _
    $region103: #{simple_cnn_forward.1} parent=1 // pred_check_branch
      %175 = sbr.rel (0) target = $region105
    $region104: #{simple_cnn_forward.1} parent=1 // pred_region
      %176 = dma.done [#allocation17], 16
    $region105: #{simple_cnn_forward.1} parent=1 // pred_fallthru
      _
    %v177 = vld [vmem:[%s0] sm:$0xff]
    %v178 = vld [vmem:[%s0 + $0x8] sm:$0xff]
    %v179 = vld [vmem:[%s0 + $0x10] sm:$0xff]
    %v180 = vld [vmem:[%s0 + $0x18] sm:$0xff]
    %v181 = vld [vmem:[%s0 + $0x20] sm:$0xff]
    %v182 = vld [vmem:[%s0 + $0x28] sm:$0xff]
    %v183 = vld [vmem:[%s0 + $0x30] sm:$0xff]
    %v184 = vld [vmem:[%s0 + $0x38] sm:$0xff]
    %v185 = vld [vmem:[%s0 + $0x40] sm:$0xff]
    %v186 = vld [vmem:[%s0 + $0x48] sm:$0xff]
    %v187 = vld [vmem:[%s0 + $0x50] sm:$0xff]
    %v188 = vld [vmem:[%s0 + $0x58] sm:$0xff]
    %v189 = vld [vmem:[%s0 + $0x60] sm:$0xff]
    %v190 = vld [vmem:[%s0 + $0x68] sm:$0xff]
    %v191 = vld [vmem:[%s0 + $0x70] sm:$0xff]
    %v192 = vld [vmem:[%s0 + $0x78] sm:$0xff]
    %v193 = vld [vmem:[%s0 + $0x80] sm:$0xff]
    %v194 = vld [vmem:[%s0 + $0x88] sm:$0xff]
    %v195 = vld [vmem:[%s0 + $0x90] sm:$0xff]
    %v196 = vld [vmem:[%s0 + $0x98] sm:$0xff]
    %v197 = vld [vmem:[%s0 + $0xa0] sm:$0xff]
    %v198 = vld [vmem:[%s0 + $0xa8] sm:$0xff]
    %v199 = vld [vmem:[%s0 + $0xb0] sm:$0xff]
    %v200 = vld [vmem:[%s0 + $0xb8] sm:$0xff]
    %v201 = vld [vmem:[%s0 + $0xc0] sm:$0xff]
    %v202 = vld [vmem:[%s0 + $0xc8] sm:$0xff]
    %v203 = vld [vmem:[%s0 + $0xd0] sm:$0xff]
    %v204 = vld [vmem:[%s0 + $0xd8] sm:$0xff]
    %v205 = vld [vmem:[%s0 + $0xe0] sm:$0xff]
    %v206 = vld [vmem:[%s0 + $0xe8] sm:$0xff]
    %v207 = vld [vmem:[%s0 + $0xf0] sm:$0xff]
    %v208 = vld [vmem:[%s0 + $0xf8] sm:$0xff]
    %v209 = vld [vmem:[%s1] sm:$0xff]
    %v210 = vld [vmem:[%s1 + $0x8] sm:$0xff]
    %v211 = vld [vmem:[%s1 + $0x10] sm:$0xff]
    %v212 = vld [vmem:[%s1 + $0x18] sm:$0xff]
    %v213 = vld [vmem:[%s1 + $0x20] sm:$0xff]
    %v214 = vld [vmem:[%s1 + $0x28] sm:$0xff]
    %v215 = vld [vmem:[%s1 + $0x30] sm:$0xff]
    %v216 = vld [vmem:[%s1 + $0x38] sm:$0xff]
    %v217 = vld [vmem:[%s1 + $0x40] sm:$0xff]
    %v218 = vld [vmem:[%s1 + $0x48] sm:$0xff]
    %v219 = vld [vmem:[%s1 + $0x50] sm:$0xff]
    %v220 = vld [vmem:[%s1 + $0x58] sm:$0xff]
    %v221 = vld [vmem:[%s1 + $0x60] sm:$0xff]
    %v222 = vld [vmem:[%s1 + $0x68] sm:$0xff]
    %v223 = vld [vmem:[%s1 + $0x70] sm:$0xff]
    %v224 = vld [vmem:[%s1 + $0x78] sm:$0xff]
    %v225 = vld [vmem:[%s1 + $0x80] sm:$0xff]
    %v226 = vld [vmem:[%s1 + $0x88] sm:$0xff]
    %v227 = vld [vmem:[%s1 + $0x90] sm:$0xff]
    %v228 = vld [vmem:[%s1 + $0x98] sm:$0xff]
    %v229 = vld [vmem:[%s1 + $0xa0] sm:$0xff]
    %v230 = vld [vmem:[%s1 + $0xa8] sm:$0xff]
    %v231 = vld [vmem:[%s1 + $0xb0] sm:$0xff]
    %v232 = vld [vmem:[%s1 + $0xb8] sm:$0xff]
    %v233 = vld [vmem:[%s1 + $0xc0] sm:$0xff]
    %v234 = vld [vmem:[%s1 + $0xc8] sm:$0xff]
    %v235 = vld [vmem:[%s1 + $0xd0] sm:$0xff]
    %v236 = vld [vmem:[%s1 + $0xd8] sm:$0xff]
    %v237 = vld [vmem:[%s1 + $0xe0] sm:$0xff]
    %v238 = vld [vmem:[%s1 + $0xe8] sm:$0xff]
    %v239 = vld [vmem:[%s1 + $0xf0] sm:$0xff]
    %v240 = vld [vmem:[%s1 + $0xf8] sm:$0xff]
    %v241 = vld [vmem:[%s1 + $0x100] sm:$0xff]
    %v242 = vld [vmem:[%s1 + $0x108] sm:$0xff]
    %v243 = vld [vmem:[%s1 + $0x110] sm:$0xff]
    %v244 = vld [vmem:[%s1 + $0x118] sm:$0xff]
    %v245 = vld [vmem:[%s1 + $0x120] sm:$0xff]
    %v246 = vld [vmem:[%s1 + $0x128] sm:$0xff]
    %v247 = vld [vmem:[%s1 + $0x130] sm:$0xff]
    %v248 = vld [vmem:[%s1 + $0x138] sm:$0xff]
    %v249 = vld [vmem:[%s1 + $0x140] sm:$0xff]
    %v250 = vld [vmem:[%s1 + $0x148] sm:$0xff]
    %v251 = vld [vmem:[%s1 + $0x150] sm:$0xff]
    %v252 = vld [vmem:[%s1 + $0x158] sm:$0xff]
    %v253 = vld [vmem:[%s1 + $0x160] sm:$0xff]
    %v254 = vld [vmem:[%s1 + $0x168] sm:$0xff]
    %v255 = vld [vmem:[%s1 + $0x170] sm:$0xff]
    %v256 = vld [vmem:[%s1 + $0x178] sm:$0xff]
    %v257 = vld [vmem:[%s1 + $0x180] sm:$0xff]
    %v258 = vld [vmem:[%s1 + $0x188] sm:$0xff]
    %v259 = vld [vmem:[%s1 + $0x190] sm:$0xff]
    %v260 = vld [vmem:[%s1 + $0x198] sm:$0xff]
    %v261 = vld [vmem:[%s1 + $0x1a0] sm:$0xff]
    %v262 = vld [vmem:[%s1 + $0x1a8] sm:$0xff]
    %v263 = vld [vmem:[%s1 + $0x1b0] sm:$0xff]
    %v264 = vld [vmem:[%s1 + $0x1b8] sm:$0xff]
    %v265 = vld [vmem:[%s1 + $0x1c0] sm:$0xff]
    %v266 = vld [vmem:[%s1 + $0x1c8] sm:$0xff]
    %v267 = vld [vmem:[%s1 + $0x1d0] sm:$0xff]
    %v268 = vld [vmem:[%s1 + $0x1d8] sm:$0xff]
    %v269 = vld [vmem:[%s1 + $0x1e0] sm:$0xff]
    %v270 = vld [vmem:[%s1 + $0x1e8] sm:$0xff]
    %v271 = vld [vmem:[%s1 + $0x1f0] sm:$0xff]
    %v272 = vld [vmem:[%s1 + $0x1f8] sm:$0xff]
    %v273 = vld [vmem:[%s1 + $0x200] sm:$0xff]
    %v274 = vld [vmem:[%s1 + $0x208] sm:$0xff]
    %v275 = vld [vmem:[%s1 + $0x210] sm:$0xff]
    %v276 = vld [vmem:[%s1 + $0x218] sm:$0xff]
    %v277 = vld [vmem:[%s1 + $0x220] sm:$0xff]
    %v278 = vld [vmem:[%s1 + $0x228] sm:$0xff]
    %v279 = vld [vmem:[%s1 + $0x230] sm:$0xff]
    %v280 = vld [vmem:[%s1 + $0x238] sm:$0xff]
    %v281 = vld [vmem:[%s1 + $0x240] sm:$0xff]
    %v282 = vld [vmem:[%s1 + $0x248] sm:$0xff]
    %v283 = vld [vmem:[%s1 + $0x250] sm:$0xff]
    %v284 = vld [vmem:[%s1 + $0x258] sm:$0xff]
    %v285 = vld [vmem:[%s1 + $0x260] sm:$0xff]
    %v286 = vld [vmem:[%s1 + $0x268] sm:$0xff]
    %v287 = vld [vmem:[%s1 + $0x270] sm:$0xff]
    %v288 = vld [vmem:[%s1 + $0x278] sm:$0xff]
    %v289 = vld [vmem:[%s1 + $0x280] sm:$0xff]
    %v290 = vld [vmem:[%s1 + $0x288] sm:$0xff]
    %v291 = vld [vmem:[%s1 + $0x290] sm:$0xff]
    %v292 = vld [vmem:[%s1 + $0x298] sm:$0xff]
    %v293 = vld [vmem:[%s1 + $0x2a0] sm:$0xff]
    %v294 = vld [vmem:[%s1 + $0x2a8] sm:$0xff]
    %v295 = vld [vmem:[%s1 + $0x2b0] sm:$0xff]
    %v296 = vld [vmem:[%s1 + $0x2b8] sm:$0xff]
    %v297 = vld [vmem:[%s1 + $0x2c0] sm:$0xff]
    %v298 = vld [vmem:[%s1 + $0x2c8] sm:$0xff]
    %v299 = vld [vmem:[%s1 + $0x2d0] sm:$0xff]
    %v300 = vld [vmem:[%s1 + $0x2d8] sm:$0xff]
    %v301 = vld [vmem:[%s1 + $0x2e0] sm:$0xff]
    %v302 = vld [vmem:[%s1 + $0x2e8] sm:$0xff]
    %v303 = vld [vmem:[%s1 + $0x2f0] sm:$0xff]
    %v304 = vld [vmem:[%s1 + $0x2f8] sm:$0xff]
    %v305 = vld [vmem:[%s1 + $0x300] sm:$0xff]
    %v306 = vld [vmem:[%s1 + $0x308] sm:$0xff]
    %v307 = vld [vmem:[%s1 + $0x310] sm:$0xff]
    %v308 = vld [vmem:[%s1 + $0x318] sm:$0xff]
    %v309 = vld [vmem:[%s1 + $0x320] sm:$0xff]
    %v310 = vld [vmem:[%s1 + $0x328] sm:$0xff]
    %v311 = vld [vmem:[%s1 + $0x330] sm:$0xff]
    %v312 = vld [vmem:[%s1 + $0x338] sm:$0xff]
    %v313 = vld [vmem:[%s1 + $0x340] sm:$0xff]
    %v314 = vld [vmem:[%s1 + $0x348] sm:$0xff]
    %v315 = vld [vmem:[%s1 + $0x350] sm:$0xff]
    %v316 = vld [vmem:[%s1 + $0x358] sm:$0xff]
    %v317 = vld [vmem:[%s1 + $0x360] sm:$0xff]
    %v318 = vld [vmem:[%s1 + $0x368] sm:$0xff]
    %v319 = vld [vmem:[%s1 + $0x370] sm:$0xff]
    %v320 = vld [vmem:[%s1 + $0x378] sm:$0xff]
    %v321 = vld [vmem:[%s1 + $0x380] sm:$0xff]
    %v322 = vld [vmem:[%s1 + $0x388] sm:$0xff]
    %v323 = vld [vmem:[%s1 + $0x390] sm:$0xff]
    %v324 = vld [vmem:[%s1 + $0x398] sm:$0xff]
    %v325 = vld [vmem:[%s1 + $0x3a0] sm:$0xff]
    %v326 = vld [vmem:[%s1 + $0x3a8] sm:$0xff]
    %v327 = vld [vmem:[%s1 + $0x3b0] sm:$0xff]
    %v328 = vld [vmem:[%s1 + $0x3b8] sm:$0xff]
    %v329 = vld [vmem:[%s1 + $0x3c0] sm:$0xff]
    %v330 = vld [vmem:[%s1 + $0x3c8] sm:$0xff]
    %v331 = vld [vmem:[%s1 + $0x3d0] sm:$0xff]
    %v332 = vld [vmem:[%s1 + $0x3d8] sm:$0xff]
    %v333 = vld [vmem:[%s1 + $0x3e0] sm:$0xff]
    %v334 = vld [vmem:[%s1 + $0x3e8] sm:$0xff]
    %v335 = vld [vmem:[%s1 + $0x3f0] sm:$0xff]
    %v336 = vld [vmem:[%s1 + $0x3f8] sm:$0xff]
    %v337 = vld [vmem:[%s1 + $0x400] sm:$0xff]
    %v338 = vld [vmem:[%s1 + $0x408] sm:$0xff]
    %v339 = vld [vmem:[%s1 + $0x410] sm:$0xff]
    %v340 = vld [vmem:[%s1 + $0x418] sm:$0xff]
    %v341 = vld [vmem:[%s1 + $0x420] sm:$0xff]
    %v342 = vld [vmem:[%s1 + $0x428] sm:$0xff]
    %v343 = vld [vmem:[%s1 + $0x430] sm:$0xff]
    %v344 = vld [vmem:[%s1 + $0x438] sm:$0xff]
    %v345 = vld [vmem:[%s1 + $0x440] sm:$0xff]
    %v346 = vld [vmem:[%s1 + $0x448] sm:$0xff]
    %v347 = vld [vmem:[%s1 + $0x450] sm:$0xff]
    %v348 = vld [vmem:[%s1 + $0x458] sm:$0xff]
    %v349 = vld [vmem:[%s1 + $0x460] sm:$0xff]
    %v350 = vld [vmem:[%s1 + $0x468] sm:$0xff]
    %v351 = vld [vmem:[%s1 + $0x470] sm:$0xff]
    %v352 = vld [vmem:[%s1 + $0x478] sm:$0xff]
    %v353 = vld [vmem:[%s1 + $0x480] sm:$0xff]
    %v354 = vld [vmem:[%s1 + $0x488] sm:$0xff]
    %v355 = vld [vmem:[%s1 + $0x490] sm:$0xff]
    %v356 = vld [vmem:[%s1 + $0x498] sm:$0xff]
    %v357 = vld [vmem:[%s1 + $0x4a0] sm:$0xff]
    %v358 = vld [vmem:[%s1 + $0x4a8] sm:$0xff]
    %v359 = vld [vmem:[%s1 + $0x4b0] sm:$0xff]
    %v360 = vld [vmem:[%s1 + $0x4b8] sm:$0xff]
    %v361 = vld [vmem:[%s1 + $0x4c0] sm:$0xff]
    %v362 = vld [vmem:[%s1 + $0x4c8] sm:$0xff]
    %v363 = vld [vmem:[%s1 + $0x4d0] sm:$0xff]
    %v364 = vld [vmem:[%s1 + $0x4d8] sm:$0xff]
    %v365 = vld [vmem:[%s1 + $0x4e0] sm:$0xff]
    %v366 = vld [vmem:[%s1 + $0x4e8] sm:$0xff]
    %v367 = vld [vmem:[%s1 + $0x4f0] sm:$0xff]
    %v368 = vld [vmem:[%s1 + $0x4f8] sm:$0xff]
    %v369 = vld [vmem:[%s1 + $0x500] sm:$0xff]
    %v370 = vld [vmem:[%s1 + $0x508] sm:$0xff]
    %v371 = vld [vmem:[%s1 + $0x510] sm:$0xff]
    %v372 = vld [vmem:[%s1 + $0x518] sm:$0xff]
    %v373 = vld [vmem:[%s1 + $0x520] sm:$0xff]
    %v374 = vld [vmem:[%s1 + $0x528] sm:$0xff]
    %v375 = vld [vmem:[%s1 + $0x530] sm:$0xff]
    %v376 = vld [vmem:[%s1 + $0x538] sm:$0xff]
    %v377 = vld [vmem:[%s1 + $0x540] sm:$0xff]
    %v378 = vld [vmem:[%s1 + $0x548] sm:$0xff]
    %v379 = vld [vmem:[%s1 + $0x550] sm:$0xff]
    %v380 = vld [vmem:[%s1 + $0x558] sm:$0xff]
    %v381 = vld [vmem:[%s1 + $0x560] sm:$0xff]
    %v382 = vld [vmem:[%s1 + $0x568] sm:$0xff]
    %v383 = vld [vmem:[%s1 + $0x570] sm:$0xff]
    %v384 = vld [vmem:[%s1 + $0x578] sm:$0xff]
    %v385 = vld [vmem:[%s1 + $0x580] sm:$0xff]
    %v386 = vld [vmem:[%s1 + $0x588] sm:$0xff]
    %v387 = vld [vmem:[%s1 + $0x590] sm:$0xff]
    %v388 = vld [vmem:[%s1 + $0x598] sm:$0xff]
    %v389 = vld [vmem:[%s1 + $0x5a0] sm:$0xff]
    %v390 = vld [vmem:[%s1 + $0x5a8] sm:$0xff]
    %v391 = vld [vmem:[%s1 + $0x5b0] sm:$0xff]
    %v392 = vld [vmem:[%s1 + $0x5b8] sm:$0xff]
    %v393 = vld [vmem:[%s1 + $0x5c0] sm:$0xff]
    %v394 = vld [vmem:[%s1 + $0x5c8] sm:$0xff]
    %v395 = vld [vmem:[%s1 + $0x5d0] sm:$0xff]
    %v396 = vld [vmem:[%s1 + $0x5d8] sm:$0xff]
    %v397 = vld [vmem:[%s1 + $0x5e0] sm:$0xff]
    %v398 = vld [vmem:[%s1 + $0x5e8] sm:$0xff]
    %v399 = vld [vmem:[%s1 + $0x5f0] sm:$0xff]
    %v400 = vld [vmem:[%s1 + $0x5f8] sm:$0xff]
    %v401 = vld [vmem:[%s1 + $0x600] sm:$0xff]
    %v402 = vld [vmem:[%s1 + $0x608] sm:$0xff]
    %v403 = vld [vmem:[%s1 + $0x610] sm:$0xff]
    %v404 = vld [vmem:[%s1 + $0x618] sm:$0xff]
    %v405 = vld [vmem:[%s1 + $0x620] sm:$0xff]
    %v406 = vld [vmem:[%s1 + $0x628] sm:$0xff]
    %407 = vmatprep.subr.mxu0 0.0
    %408 = vmatpush1.msra.mxu0 %v192
    %409 = vmatprep.subr.mxu0 0.0
    %410 = vmatpush1.msra.mxu0 %v191
    %411 = vmatprep.subr.mxu0 0.0
    %412 = vmatpush1.msra.mxu0 %v190
    %413 = vmatprep.subr.mxu0 0.0
    %414 = vmatpush1.msra.mxu0 %v189
    %415 = vmatprep.subr.mxu0 0.0
    %416 = vmatpush1.msra.mxu0 %v188
    %417 = vmatprep.subr.mxu0 0.0
    %418 = vmatpush1.msra.mxu0 %v187
    %419 = vmatprep.subr.mxu0 0.0
    %420 = vmatpush1.msra.mxu0 %v186
    %421 = vmatprep.subr.mxu0 0.0
    %422 = vmatpush1.msra.mxu0 %v185
    %423 = vmatprep.subr.mxu0 0.0
    %424 = vmatpush1.msra.mxu0 %v184
    %425 = vmatprep.subr.mxu0 0.0
    %426 = vmatpush1.msra.mxu0 %v183
    %427 = vmatprep.subr.mxu0 0.0
    %428 = vmatpush1.msra.mxu0 %v182
    %429 = vmatprep.subr.mxu0 0.0
    %430 = vmatpush1.msra.mxu0 %v181
    %431 = vmatprep.subr.mxu0 0.0
    %432 = vmatpush1.msra.mxu0 %v180
    %433 = vmatprep.subr.mxu0 0.0
    %434 = vmatpush1.msra.mxu0 %v179
    %435 = vmatprep.subr.mxu0 0.0
    %436 = vmatpush1.msra.mxu0 %v178
    %437 = vmatprep.subr.mxu0 0.0
    %438 = vmatpush1.msra.mxu0 %v177
    %439 = vmatprep.subr.mxu0 0.0
    %440 = vmatpush2.msra.mxu0 %v208
    %441 = vmatprep.subr.mxu0 0.0
    %442 = vmatpush2.msra.mxu0 %v207
    %443 = vmatprep.subr.mxu0 0.0
    %444 = vmatpush2.msra.mxu0 %v206
    %445 = vmatprep.subr.mxu0 0.0
    %446 = vmatpush2.msra.mxu0 %v205
    %447 = vmatprep.subr.mxu0 0.0
    %448 = vmatpush2.msra.mxu0 %v204
    %449 = vmatprep.subr.mxu0 0.0
    %450 = vmatpush2.msra.mxu0 %v203
    %451 = vmatprep.subr.mxu0 0.0
    %452 = vmatpush2.msra.mxu0 %v202
    %453 = vmatprep.subr.mxu0 0.0
    %454 = vmatpush2.msra.mxu0 %v201
    %455 = vmatprep.subr.mxu0 0.0
    %456 = vmatpush2.msra.mxu0 %v200
    %457 = vmatprep.subr.mxu0 0.0
    %458 = vmatpush2.msra.mxu0 %v199
    %459 = vmatprep.subr.mxu0 0.0
    %460 = vmatpush2.msra.mxu0 %v198
    %461 = vmatprep.subr.mxu0 0.0
    %462 = vmatpush2.msra.mxu0 %v197
    %463 = vmatprep.subr.mxu0 0.0
    %464 = vmatpush2.msra.mxu0 %v196
    %465 = vmatprep.subr.mxu0 0.0
    %466 = vmatpush2.msra.mxu0 %v195
    %467 = vmatprep.subr.mxu0 0.0
    %468 = vmatpush2.msra.mxu0 %v194
    %469 = vmatprep.subr.mxu0 0.0
    %470 = vmatpush2.msra.mxu0 %v193
    %471 = vmatprep.mubr.f32.mxu0 %v210
    %472 = vmatmul.mubr.f32.gmra.mxu0 %v209
    %v473 = vpop.f32.mrf.mxu0
    %v474 = vadd.f32 0.0, %v473
    %v475 = vpop.f32.mrf.mxu0
    %476 = vmatprep.mubr.f32.mxu0 %v212
    %477 = vmatmul.mubr.f32.gmra.mxu0 %v211
    %v478 = vpop.f32.mrf.mxu0
    %v479 = vadd.f32 0.0, %v478
    %v480 = vpop.f32.mrf.mxu0
    %481 = vmatprep.mubr.f32.mxu0 %v214
    %482 = vmatmul.mubr.f32.gmra.mxu0 %v213
    %v483 = vpop.f32.mrf.mxu0
    %v484 = vadd.f32 0.0, %v483
    %v485 = vpop.f32.mrf.mxu0
    %486 = vmatprep.mubr.f32.mxu0 %v216
    %487 = vmatmul.mubr.f32.gmra.mxu0 %v215
    %v488 = vpop.f32.mrf.mxu0
    %v489 = vadd.f32 0.0, %v488
    %v490 = vpop.f32.mrf.mxu0
    %491 = vmatprep.mubr.f32.mxu0 %v218
    %492 = vmatmul.mubr.f32.gmra.mxu0 %v217
    %v493 = vpop.f32.mrf.mxu0
    %v494 = vadd.f32 0.0, %v493
    %v495 = vpop.f32.mrf.mxu0
    %496 = vmatprep.mubr.f32.mxu0 %v220
    %497 = vmatmul.mubr.f32.gmra.mxu0 %v219
    %v498 = vpop.f32.mrf.mxu0
    %v499 = vadd.f32 0.0, %v498
    %v500 = vpop.f32.mrf.mxu0
    %501 = vmatprep.mubr.f32.mxu0 %v222
    %502 = vmatmul.mubr.f32.gmra.mxu0 %v221
    %v503 = vpop.f32.mrf.mxu0
    %v504 = vadd.f32 0.0, %v503
    %v505 = vpop.f32.mrf.mxu0
    %506 = vmatprep.mubr.f32.mxu0 %v224
    %507 = vmatmul.mubr.f32.gmra.mxu0 %v223
    %v508 = vpop.f32.mrf.mxu0
    %v509 = vadd.f32 0.0, %v508
    %v510 = vpop.f32.mrf.mxu0
    %511 = vmatprep.mubr.f32.mxu0 %v226
    %512 = vmatmul.mubr.f32.gmra.mxu0 %v225
    %v513 = vpop.f32.mrf.mxu0
    %v514 = vadd.f32 0.0, %v513
    %v515 = vpop.f32.mrf.mxu0
    %516 = vmatprep.mubr.f32.mxu0 %v228
    %517 = vmatmul.mubr.f32.gmra.mxu0 %v227
    %v518 = vpop.f32.mrf.mxu0
    %v519 = vadd.f32 0.0, %v518
    %v520 = vpop.f32.mrf.mxu0
    %521 = vmatprep.mubr.f32.mxu0 %v230
    %522 = vmatmul.mubr.f32.gmra.mxu0 %v229
    %v523 = vpop.f32.mrf.mxu0
    %v524 = vadd.f32 0.0, %v523
    %v525 = vpop.f32.mrf.mxu0
    %526 = vmatprep.mubr.f32.mxu0 %v232
    %527 = vmatmul.mubr.f32.gmra.mxu0 %v231
    %v528 = vpop.f32.mrf.mxu0
    %v529 = vadd.f32 0.0, %v528
    %v530 = vpop.f32.mrf.mxu0
    %531 = vmatprep.mubr.f32.mxu0 %v234
    %532 = vmatmul.mubr.f32.gmra.mxu0 %v233
    %v533 = vpop.f32.mrf.mxu0
    %v534 = vadd.f32 0.0, %v533
    %v535 = vpop.f32.mrf.mxu0
    %536 = vmatprep.mubr.f32.mxu0 %v236
    %537 = vmatmul.mubr.f32.gmra.mxu0 %v235
    %v538 = vpop.f32.mrf.mxu0
    %v539 = vadd.f32 0.0, %v538
    %v540 = vpop.f32.mrf.mxu0
    %541 = vmatprep.mubr.f32.mxu0 %v238
    %542 = vmatmul.mubr.f32.gmra.mxu0 %v237
    %v543 = vpop.f32.mrf.mxu0
    %v544 = vadd.f32 0.0, %v543
    %v545 = vpop.f32.mrf.mxu0
    %546 = vmatprep.mubr.f32.mxu0 %v240
    %547 = vmatmul.mubr.f32.gmra.mxu0 %v239
    %v548 = vpop.f32.mrf.mxu0
    %v549 = vadd.f32 0.0, %v548
    %v550 = vpop.f32.mrf.mxu0
    %551 = vmatprep.mubr.f32.mxu0 %v242
    %552 = vmatmul.mubr.f32.gmra.mxu0 %v241
    %v553 = vpop.f32.mrf.mxu0
    %v554 = vadd.f32 0.0, %v553
    %v555 = vpop.f32.mrf.mxu0
    %556 = vmatprep.mubr.f32.mxu0 %v244
    %557 = vmatmul.mubr.f32.gmra.mxu0 %v243
    %v558 = vpop.f32.mrf.mxu0
    %v559 = vadd.f32 0.0, %v558
    %v560 = vpop.f32.mrf.mxu0
    %561 = vmatprep.mubr.f32.mxu0 %v246
    %562 = vmatmul.mubr.f32.gmra.mxu0 %v245
    %v563 = vpop.f32.mrf.mxu0
    %v564 = vadd.f32 0.0, %v563
    %v565 = vpop.f32.mrf.mxu0
    %566 = vmatprep.mubr.f32.mxu0 %v248
    %567 = vmatmul.mubr.f32.gmra.mxu0 %v247
    %v568 = vpop.f32.mrf.mxu0
    %v569 = vadd.f32 0.0, %v568
    %v570 = vpop.f32.mrf.mxu0
    %571 = vmatprep.mubr.f32.mxu0 %v250
    %572 = vmatmul.mubr.f32.gmra.mxu0 %v249
    %v573 = vpop.f32.mrf.mxu0
    %v574 = vadd.f32 0.0, %v573
    %v575 = vpop.f32.mrf.mxu0
    %576 = vmatprep.mubr.f32.mxu0 %v252
    %577 = vmatmul.mubr.f32.gmra.mxu0 %v251
    %v578 = vpop.f32.mrf.mxu0
    %v579 = vadd.f32 0.0, %v578
    %v580 = vpop.f32.mrf.mxu0
    %581 = vmatprep.mubr.f32.mxu0 %v254
    %582 = vmatmul.mubr.f32.gmra.mxu0 %v253
    %v583 = vpop.f32.mrf.mxu0
    %v584 = vadd.f32 0.0, %v583
    %v585 = vpop.f32.mrf.mxu0
    %586 = vmatprep.mubr.f32.mxu0 %v256
    %587 = vmatmul.mubr.f32.gmra.mxu0 %v255
    %v588 = vpop.f32.mrf.mxu0
    %v589 = vadd.f32 0.0, %v588
    %v590 = vpop.f32.mrf.mxu0
    %591 = vmatprep.mubr.f32.mxu0 %v258
    %592 = vmatmul.mubr.f32.gmra.mxu0 %v257
    %v593 = vpop.f32.mrf.mxu0
    %v594 = vadd.f32 0.0, %v593
    %v595 = vpop.f32.mrf.mxu0
    %596 = vmatprep.mubr.f32.mxu0 %v260
    %597 = vmatmul.mubr.f32.gmra.mxu0 %v259
    %v598 = vpop.f32.mrf.mxu0
    %v599 = vadd.f32 0.0, %v598
    %v600 = vpop.f32.mrf.mxu0
    %601 = vmatprep.mubr.f32.mxu0 %v262
    %602 = vmatmul.mubr.f32.gmra.mxu0 %v261
    %v603 = vpop.f32.mrf.mxu0
    %v604 = vadd.f32 0.0, %v603
    %v605 = vpop.f32.mrf.mxu0
    %606 = vmatprep.mubr.f32.mxu0 %v264
    %607 = vmatmul.mubr.f32.gmra.mxu0 %v263
    %v608 = vpop.f32.mrf.mxu0
    %v609 = vadd.f32 0.0, %v608
    %v610 = vpop.f32.mrf.mxu0
    %611 = vmatprep.mubr.f32.mxu0 %v266
    %612 = vmatmul.mubr.f32.gmra.mxu0 %v265
    %v613 = vpop.f32.mrf.mxu0
    %v614 = vadd.f32 0.0, %v613
    %v615 = vpop.f32.mrf.mxu0
    %616 = vmatprep.mubr.f32.mxu0 %v268
    %617 = vmatmul.mubr.f32.gmra.mxu0 %v267
    %v618 = vpop.f32.mrf.mxu0
    %v619 = vadd.f32 0.0, %v618
    %v620 = vpop.f32.mrf.mxu0
    %621 = vmatprep.mubr.f32.mxu0 %v270
    %622 = vmatmul.mubr.f32.gmra.mxu0 %v269
    %v623 = vpop.f32.mrf.mxu0
    %v624 = vadd.f32 0.0, %v623
    %v625 = vpop.f32.mrf.mxu0
    %626 = vmatprep.mubr.f32.mxu0 %v272
    %627 = vmatmul.mubr.f32.gmra.mxu0 %v271
    %v628 = vpop.f32.mrf.mxu0
    %v629 = vadd.f32 0.0, %v628
    %v630 = vpop.f32.mrf.mxu0
    %631 = vmatprep.mubr.f32.mxu0 %v274
    %632 = vmatmul.mubr.f32.gmra.mxu0 %v273
    %v633 = vpop.f32.mrf.mxu0
    %v634 = vadd.f32 0.0, %v633
    %v635 = vpop.f32.mrf.mxu0
    %636 = vmatprep.mubr.f32.mxu0 %v276
    %637 = vmatmul.mubr.f32.gmra.mxu0 %v275
    %v638 = vpop.f32.mrf.mxu0
    %v639 = vadd.f32 0.0, %v638
    %v640 = vpop.f32.mrf.mxu0
    %641 = vmatprep.mubr.f32.mxu0 %v278
    %642 = vmatmul.mubr.f32.gmra.mxu0 %v277
    %v643 = vpop.f32.mrf.mxu0
    %v644 = vadd.f32 0.0, %v643
    %v645 = vpop.f32.mrf.mxu0
    %646 = vmatprep.mubr.f32.mxu0 %v280
    %647 = vmatmul.mubr.f32.gmra.mxu0 %v279
    %v648 = vpop.f32.mrf.mxu0
    %v649 = vadd.f32 0.0, %v648
    %v650 = vpop.f32.mrf.mxu0
    %651 = vmatprep.mubr.f32.mxu0 %v282
    %652 = vmatmul.mubr.f32.gmra.mxu0 %v281
    %v653 = vpop.f32.mrf.mxu0
    %v654 = vadd.f32 0.0, %v653
    %v655 = vpop.f32.mrf.mxu0
    %656 = vmatprep.mubr.f32.mxu0 %v284
    %657 = vmatmul.mubr.f32.gmra.mxu0 %v283
    %v658 = vpop.f32.mrf.mxu0
    %v659 = vadd.f32 0.0, %v658
    %v660 = vpop.f32.mrf.mxu0
    %661 = vmatprep.mubr.f32.mxu0 %v286
    %662 = vmatmul.mubr.f32.gmra.mxu0 %v285
    %v663 = vpop.f32.mrf.mxu0
    %v664 = vadd.f32 0.0, %v663
    %v665 = vpop.f32.mrf.mxu0
    %666 = vmatprep.mubr.f32.mxu0 %v288
    %667 = vmatmul.mubr.f32.gmra.mxu0 %v287
    %v668 = vpop.f32.mrf.mxu0
    %v669 = vadd.f32 0.0, %v668
    %v670 = vpop.f32.mrf.mxu0
    %671 = vmatprep.mubr.f32.mxu0 %v290
    %672 = vmatmul.mubr.f32.gmra.mxu0 %v289
    %v673 = vpop.f32.mrf.mxu0
    %v674 = vadd.f32 0.0, %v673
    %v675 = vpop.f32.mrf.mxu0
    %676 = vmatprep.mubr.f32.mxu0 %v292
    %677 = vmatmul.mubr.f32.gmra.mxu0 %v291
    %v678 = vpop.f32.mrf.mxu0
    %v679 = vadd.f32 0.0, %v678
    %v680 = vpop.f32.mrf.mxu0
    %681 = vmatprep.mubr.f32.mxu0 %v294
    %682 = vmatmul.mubr.f32.gmra.mxu0 %v293
    %v683 = vpop.f32.mrf.mxu0
    %v684 = vadd.f32 0.0, %v683
    %v685 = vpop.f32.mrf.mxu0
    %686 = vmatprep.mubr.f32.mxu0 %v296
    %687 = vmatmul.mubr.f32.gmra.mxu0 %v295
    %v688 = vpop.f32.mrf.mxu0
    %v689 = vadd.f32 0.0, %v688
    %v690 = vpop.f32.mrf.mxu0
    %691 = vmatprep.mubr.f32.mxu0 %v298
    %692 = vmatmul.mubr.f32.gmra.mxu0 %v297
    %v693 = vpop.f32.mrf.mxu0
    %v694 = vadd.f32 0.0, %v693
    %v695 = vpop.f32.mrf.mxu0
    %696 = vmatprep.mubr.f32.mxu0 %v300
    %697 = vmatmul.mubr.f32.gmra.mxu0 %v299
    %v698 = vpop.f32.mrf.mxu0
    %v699 = vadd.f32 0.0, %v698
    %v700 = vpop.f32.mrf.mxu0
    %701 = vmatprep.mubr.f32.mxu0 %v302
    %702 = vmatmul.mubr.f32.gmra.mxu0 %v301
    %v703 = vpop.f32.mrf.mxu0
    %v704 = vadd.f32 0.0, %v703
    %v705 = vpop.f32.mrf.mxu0
    %706 = vmatprep.mubr.f32.mxu0 %v304
    %707 = vmatmul.mubr.f32.gmra.mxu0 %v303
    %v708 = vpop.f32.mrf.mxu0
    %v709 = vadd.f32 0.0, %v708
    %v710 = vpop.f32.mrf.mxu0
    %711 = vmatprep.mubr.f32.mxu0 %v306
    %712 = vmatmul.mubr.f32.gmra.mxu0 %v305
    %v713 = vpop.f32.mrf.mxu0
    %v714 = vadd.f32 0.0, %v713
    %v715 = vpop.f32.mrf.mxu0
    %716 = vmatprep.mubr.f32.mxu0 %v308
    %717 = vmatmul.mubr.f32.gmra.mxu0 %v307
    %v718 = vpop.f32.mrf.mxu0
    %v719 = vadd.f32 0.0, %v718
    %v720 = vpop.f32.mrf.mxu0
    %721 = vmatprep.mubr.f32.mxu0 %v310
    %722 = vmatmul.mubr.f32.gmra.mxu0 %v309
    %v723 = vpop.f32.mrf.mxu0
    %v724 = vadd.f32 0.0, %v723
    %v725 = vpop.f32.mrf.mxu0
    %726 = vmatprep.mubr.f32.mxu0 %v312
    %727 = vmatmul.mubr.f32.gmra.mxu0 %v311
    %v728 = vpop.f32.mrf.mxu0
    %v729 = vadd.f32 0.0, %v728
    %v730 = vpop.f32.mrf.mxu0
    %731 = vmatprep.mubr.f32.mxu0 %v314
    %732 = vmatmul.mubr.f32.gmra.mxu0 %v313
    %v733 = vpop.f32.mrf.mxu0
    %v734 = vadd.f32 0.0, %v733
    %v735 = vpop.f32.mrf.mxu0
    %736 = vmatprep.mubr.f32.mxu0 %v316
    %737 = vmatmul.mubr.f32.gmra.mxu0 %v315
    %v738 = vpop.f32.mrf.mxu0
    %v739 = vadd.f32 0.0, %v738
    %v740 = vpop.f32.mrf.mxu0
    %741 = vmatprep.mubr.f32.mxu0 %v318
    %742 = vmatmul.mubr.f32.gmra.mxu0 %v317
    %v743 = vpop.f32.mrf.mxu0
    %v744 = vadd.f32 0.0, %v743
    %v745 = vpop.f32.mrf.mxu0
    %746 = vmatprep.mubr.f32.mxu0 %v320
    %747 = vmatmul.mubr.f32.gmra.mxu0 %v319
    %v748 = vpop.f32.mrf.mxu0
    %v749 = vadd.f32 0.0, %v748
    %v750 = vpop.f32.mrf.mxu0
    %751 = vmatprep.mubr.f32.mxu0 %v322
    %752 = vmatmul.mubr.f32.gmra.mxu0 %v321
    %v753 = vpop.f32.mrf.mxu0
    %v754 = vadd.f32 0.0, %v753
    %v755 = vpop.f32.mrf.mxu0
    %756 = vmatprep.mubr.f32.mxu0 %v324
    %757 = vmatmul.mubr.f32.gmra.mxu0 %v323
    %v758 = vpop.f32.mrf.mxu0
    %v759 = vadd.f32 0.0, %v758
    %v760 = vpop.f32.mrf.mxu0
    %761 = vmatprep.mubr.f32.mxu0 %v326
    %762 = vmatmul.mubr.f32.gmra.mxu0 %v325
    %v763 = vpop.f32.mrf.mxu0
    %v764 = vadd.f32 0.0, %v763
    %v765 = vpop.f32.mrf.mxu0
    %766 = vmatprep.mubr.f32.mxu0 %v328
    %767 = vmatmul.mubr.f32.gmra.mxu0 %v327
    %v768 = vpop.f32.mrf.mxu0
    %v769 = vadd.f32 0.0, %v768
    %v770 = vpop.f32.mrf.mxu0
    %771 = vmatprep.mubr.f32.mxu0 %v330
    %772 = vmatmul.mubr.f32.gmra.mxu0 %v329
    %v773 = vpop.f32.mrf.mxu0
    %v774 = vadd.f32 0.0, %v773
    %v775 = vpop.f32.mrf.mxu0
    %776 = vmatprep.mubr.f32.mxu0 %v332
    %777 = vmatmul.mubr.f32.gmra.mxu0 %v331
    %v778 = vpop.f32.mrf.mxu0
    %v779 = vadd.f32 0.0, %v778
    %v780 = vpop.f32.mrf.mxu0
    %781 = vmatprep.mubr.f32.mxu0 %v334
    %782 = vmatmul.mubr.f32.gmra.mxu0 %v333
    %v783 = vpop.f32.mrf.mxu0
    %v784 = vadd.f32 0.0, %v783
    %v785 = vpop.f32.mrf.mxu0
    %786 = vmatprep.mubr.f32.mxu0 %v336
    %787 = vmatmul.mubr.f32.gmra.mxu0 %v335
    %v788 = vpop.f32.mrf.mxu0
    %v789 = vadd.f32 0.0, %v788
    %v790 = vpop.f32.mrf.mxu0
    %791 = vmatprep.mubr.f32.mxu0 %v338
    %792 = vmatmul.mubr.f32.gmra.mxu0 %v337
    %v793 = vpop.f32.mrf.mxu0
    %v794 = vadd.f32 0.0, %v793
    %v795 = vpop.f32.mrf.mxu0
    %796 = vmatprep.mubr.f32.mxu0 %v340
    %797 = vmatmul.mubr.f32.gmra.mxu0 %v339
    %v798 = vpop.f32.mrf.mxu0
    %v799 = vadd.f32 0.0, %v798
    %v800 = vpop.f32.mrf.mxu0
    %801 = vmatprep.mubr.f32.mxu0 %v342
    %802 = vmatmul.mubr.f32.gmra.mxu0 %v341
    %v803 = vpop.f32.mrf.mxu0
    %v804 = vadd.f32 0.0, %v803
    %v805 = vpop.f32.mrf.mxu0
    %806 = vmatprep.mubr.f32.mxu0 %v344
    %807 = vmatmul.mubr.f32.gmra.mxu0 %v343
    %v808 = vpop.f32.mrf.mxu0
    %v809 = vadd.f32 0.0, %v808
    %v810 = vpop.f32.mrf.mxu0
    %811 = vmatprep.mubr.f32.mxu0 %v346
    %812 = vmatmul.mubr.f32.gmra.mxu0 %v345
    %v813 = vpop.f32.mrf.mxu0
    %v814 = vadd.f32 0.0, %v813
    %v815 = vpop.f32.mrf.mxu0
    %816 = vmatprep.mubr.f32.mxu0 %v348
    %817 = vmatmul.mubr.f32.gmra.mxu0 %v347
    %v818 = vpop.f32.mrf.mxu0
    %v819 = vadd.f32 0.0, %v818
    %v820 = vpop.f32.mrf.mxu0
    %821 = vmatprep.mubr.f32.mxu0 %v350
    %822 = vmatmul.mubr.f32.gmra.mxu0 %v349
    %v823 = vpop.f32.mrf.mxu0
    %v824 = vadd.f32 0.0, %v823
    %v825 = vpop.f32.mrf.mxu0
    %826 = vmatprep.mubr.f32.mxu0 %v352
    %827 = vmatmul.mubr.f32.gmra.mxu0 %v351
    %v828 = vpop.f32.mrf.mxu0
    %v829 = vadd.f32 0.0, %v828
    %v830 = vpop.f32.mrf.mxu0
    %831 = vmatprep.mubr.f32.mxu0 %v354
    %832 = vmatmul.mubr.f32.gmra.mxu0 %v353
    %v833 = vpop.f32.mrf.mxu0
    %v834 = vadd.f32 0.0, %v833
    %v835 = vpop.f32.mrf.mxu0
    %836 = vmatprep.mubr.f32.mxu0 %v356
    %837 = vmatmul.mubr.f32.gmra.mxu0 %v355
    %v838 = vpop.f32.mrf.mxu0
    %v839 = vadd.f32 0.0, %v838
    %v840 = vpop.f32.mrf.mxu0
    %841 = vmatprep.mubr.f32.mxu0 %v358
    %842 = vmatmul.mubr.f32.gmra.mxu0 %v357
    %v843 = vpop.f32.mrf.mxu0
    %v844 = vadd.f32 0.0, %v843
    %v845 = vpop.f32.mrf.mxu0
    %846 = vmatprep.mubr.f32.mxu0 %v360
    %847 = vmatmul.mubr.f32.gmra.mxu0 %v359
    %v848 = vpop.f32.mrf.mxu0
    %v849 = vadd.f32 0.0, %v848
    %v850 = vpop.f32.mrf.mxu0
    %851 = vmatprep.mubr.f32.mxu0 %v362
    %852 = vmatmul.mubr.f32.gmra.mxu0 %v361
    %v853 = vpop.f32.mrf.mxu0
    %v854 = vadd.f32 0.0, %v853
    %v855 = vpop.f32.mrf.mxu0
    %856 = vmatprep.mubr.f32.mxu0 %v364
    %857 = vmatmul.mubr.f32.gmra.mxu0 %v363
    %v858 = vpop.f32.mrf.mxu0
    %v859 = vadd.f32 0.0, %v858
    %v860 = vpop.f32.mrf.mxu0
    %861 = vmatprep.mubr.f32.mxu0 %v366
    %862 = vmatmul.mubr.f32.gmra.mxu0 %v365
    %v863 = vpop.f32.mrf.mxu0
    %v864 = vadd.f32 0.0, %v863
    %v865 = vpop.f32.mrf.mxu0
    %866 = vmatprep.mubr.f32.mxu0 %v368
    %867 = vmatmul.mubr.f32.gmra.mxu0 %v367
    %v868 = vpop.f32.mrf.mxu0
    %v869 = vadd.f32 0.0, %v868
    %v870 = vpop.f32.mrf.mxu0
    %871 = vmatprep.mubr.f32.mxu0 %v370
    %872 = vmatmul.mubr.f32.gmra.mxu0 %v369
    %v873 = vpop.f32.mrf.mxu0
    %v874 = vadd.f32 0.0, %v873
    %v875 = vpop.f32.mrf.mxu0
    %876 = vmatprep.mubr.f32.mxu0 %v372
    %877 = vmatmul.mubr.f32.gmra.mxu0 %v371
    %v878 = vpop.f32.mrf.mxu0
    %v879 = vadd.f32 0.0, %v878
    %v880 = vpop.f32.mrf.mxu0
    %881 = vmatprep.mubr.f32.mxu0 %v374
    %882 = vmatmul.mubr.f32.gmra.mxu0 %v373
    %v883 = vpop.f32.mrf.mxu0
    %v884 = vadd.f32 0.0, %v883
    %v885 = vpop.f32.mrf.mxu0
    %886 = vmatprep.mubr.f32.mxu0 %v376
    %887 = vmatmul.mubr.f32.gmra.mxu0 %v375
    %v888 = vpop.f32.mrf.mxu0
    %v889 = vadd.f32 0.0, %v888
    %v890 = vpop.f32.mrf.mxu0
    %891 = vmatprep.mubr.f32.mxu0 %v378
    %892 = vmatmul.mubr.f32.gmra.mxu0 %v377
    %v893 = vpop.f32.mrf.mxu0
    %v894 = vadd.f32 0.0, %v893
    %v895 = vpop.f32.mrf.mxu0
    %896 = vmatprep.mubr.f32.mxu0 %v380
    %897 = vmatmul.mubr.f32.gmra.mxu0 %v379
    %v898 = vpop.f32.mrf.mxu0
    %v899 = vadd.f32 0.0, %v898
    %v900 = vpop.f32.mrf.mxu0
    %901 = vmatprep.mubr.f32.mxu0 %v382
    %902 = vmatmul.mubr.f32.gmra.mxu0 %v381
    %v903 = vpop.f32.mrf.mxu0
    %v904 = vadd.f32 0.0, %v903
    %v905 = vpop.f32.mrf.mxu0
    %906 = vmatprep.mubr.f32.mxu0 %v384
    %907 = vmatmul.mubr.f32.gmra.mxu0 %v383
    %v908 = vpop.f32.mrf.mxu0
    %v909 = vadd.f32 0.0, %v908
    %v910 = vpop.f32.mrf.mxu0
    %911 = vmatprep.mubr.f32.mxu0 %v386
    %912 = vmatmul.mubr.f32.gmra.mxu0 %v385
    %v913 = vpop.f32.mrf.mxu0
    %v914 = vadd.f32 0.0, %v913
    %v915 = vpop.f32.mrf.mxu0
    %916 = vmatprep.mubr.f32.mxu0 %v388
    %917 = vmatmul.mubr.f32.gmra.mxu0 %v387
    %v918 = vpop.f32.mrf.mxu0
    %v919 = vadd.f32 0.0, %v918
    %v920 = vpop.f32.mrf.mxu0
    %921 = vmatprep.mubr.f32.mxu0 %v390
    %922 = vmatmul.mubr.f32.gmra.mxu0 %v389
    %v923 = vpop.f32.mrf.mxu0
    %v924 = vadd.f32 0.0, %v923
    %v925 = vpop.f32.mrf.mxu0
    %926 = vmatprep.mubr.f32.mxu0 %v392
    %927 = vmatmul.mubr.f32.gmra.mxu0 %v391
    %v928 = vpop.f32.mrf.mxu0
    %v929 = vadd.f32 0.0, %v928
    %v930 = vpop.f32.mrf.mxu0
    %931 = vmatprep.mubr.f32.mxu0 %v394
    %932 = vmatmul.mubr.f32.gmra.mxu0 %v393
    %v933 = vpop.f32.mrf.mxu0
    %v934 = vadd.f32 0.0, %v933
    %v935 = vpop.f32.mrf.mxu0
    %936 = vmatprep.mubr.f32.mxu0 %v396
    %937 = vmatmul.mubr.f32.gmra.mxu0 %v395
    %v938 = vpop.f32.mrf.mxu0
    %v939 = vadd.f32 0.0, %v938
    %v940 = vpop.f32.mrf.mxu0
    %941 = vmatprep.mubr.f32.mxu0 %v398
    %942 = vmatmul.mubr.f32.gmra.mxu0 %v397
    %v943 = vpop.f32.mrf.mxu0
    %v944 = vadd.f32 0.0, %v943
    %v945 = vpop.f32.mrf.mxu0
    %946 = vmatprep.mubr.f32.mxu0 %v400
    %947 = vmatmul.mubr.f32.gmra.mxu0 %v399
    %v948 = vpop.f32.mrf.mxu0
    %v949 = vadd.f32 0.0, %v948
    %v950 = vpop.f32.mrf.mxu0
    %951 = vmatprep.mubr.f32.mxu0 %v402
    %952 = vmatmul.mubr.f32.gmra.mxu0 %v401
    %v953 = vpop.f32.mrf.mxu0
    %v954 = vadd.f32 0.0, %v953
    %v955 = vpop.f32.mrf.mxu0
    %956 = vmatprep.mubr.f32.mxu0 %v404
    %957 = vmatmul.mubr.f32.gmra.mxu0 %v403
    %v958 = vpop.f32.mrf.mxu0
    %v959 = vadd.f32 0.0, %v958
    %v960 = vpop.f32.mrf.mxu0
    %961 = vmatprep.mubr.f32.mxu0 %v406
    %962 = vmatmul.mubr.f32.gmra.mxu0 %v405
    %v963 = vpop.f32.mrf.mxu0
    %v964 = vadd.f32 0.0, %v963
    %v965 = vpop.f32.mrf.mxu0
    %966 = vdwg.mxu0
    %v967 = vld [vmem:[#allocation2] sm:$0xff]
    %s968 = scalar_lea.vmem [#allocation2], 8
    %v969 = vld [vmem:[%s968] sm:$0xff]
    %vm970 = vcmask 64512
    %v972 = vsel %vm970, %v529, 0
    %v975 = vsel %vm970, %v534, 0
    %v978 = vsel %vm970, %v539, 0
    %v981 = vsel %vm970, %v544, 0
    %v984 = vsel %vm970, %v549, 0
    %v987 = vsel %vm970, %v554, 0
    %v990 = vsel %vm970, %v559, 0
    %v993 = vsel %vm970, %v564, 0
    %v996 = vsel %vm970, %v569, 0
    %v999 = vsel %vm970, %v574, 0
    %v1002 = vsel %vm970, %v579, 0
    %1004 = vmatprep.subr.mxu0 0.0
    %1005 = vmatpush1.msra.mxu0 0.0
    %1006 = vmatprep.subr.mxu0 0.0
    %1007 = vmatpush1.msra.mxu0 0.0
    %1008 = vmatprep.subr.mxu0 0.0
    %1009 = vmatpush1.msra.mxu0 0.0
    %1010 = vmatprep.subr.mxu0 0.0
    %1011 = vmatpush1.msra.mxu0 0.0
    %1012 = vmatprep.subr.mxu0 0.0
    %1013 = vmatpush1.msra.mxu0 0.0
    %1014 = vmatprep.subr.mxu0 0.0
    %1015 = vmatpush1.msra.mxu0 0.0
    %1016 = vmatprep.subr.mxu0 0.0
    %1017 = vmatpush1.msra.mxu0 0.0
    %1018 = vmatprep.subr.mxu0 0.0
    %1019 = vmatpush1.msra.mxu0 0.0
    %1020 = vmatprep.subr.mxu0 0.0
    %1021 = vmatpush1.msra.mxu0 0.0
    %1022 = vmatprep.subr.mxu0 0.0
    %1023 = vmatpush1.msra.mxu0 0.0
    %1024 = vmatprep.subr.mxu0 0.0
    %1025 = vmatpush1.msra.mxu0 0.0
    %1026 = vmatprep.subr.mxu0 0.0
    %1027 = vmatpush1.msra.mxu0 0.0
    %1028 = vmatprep.subr.mxu0 0.0
    %1029 = vmatpush1.msra.mxu0 0.0
    %1030 = vmatprep.subr.mxu0 0.0
    %1031 = vmatpush1.msra.mxu0 0.0
    %1032 = vmatprep.subr.mxu0 0.0
    %1033 = vmatpush1.msra.mxu0 0.0
    %1034 = vmatprep.subr.mxu0 0.0
    %1035 = vmatpush1.msra.mxu0 %v969
    %1036 = vmatprep.subr.mxu0 0.0
    %1037 = vmatpush2.msra.mxu0 0.0
    %1038 = vmatprep.subr.mxu0 0.0
    %1039 = vmatpush2.msra.mxu0 0.0
    %1040 = vmatprep.subr.mxu0 0.0
    %1041 = vmatpush2.msra.mxu0 0.0
    %1042 = vmatprep.subr.mxu0 0.0
    %1043 = vmatpush2.msra.mxu0 0.0
    %1044 = vmatprep.subr.mxu0 0.0
    %1045 = vmatpush2.msra.mxu0 0.0
    %1046 = vmatprep.subr.mxu0 0.0
    %1047 = vmatpush2.msra.mxu0 0.0
    %1048 = vmatprep.subr.mxu0 0.0
    %1049 = vmatpush2.msra.mxu0 0.0
    %1050 = vmatprep.subr.mxu0 0.0
    %1051 = vmatpush2.msra.mxu0 0.0
    %1052 = vmatprep.subr.mxu0 0.0
    %1053 = vmatpush2.msra.mxu0 0.0
    %1054 = vmatprep.subr.mxu0 0.0
    %1055 = vmatpush2.msra.mxu0 0.0
    %1056 = vmatprep.subr.mxu0 0.0
    %1057 = vmatpush2.msra.mxu0 0.0
    %1058 = vmatprep.subr.mxu0 0.0
    %1059 = vmatpush2.msra.mxu0 0.0
    %1060 = vmatprep.subr.mxu0 0.0
    %1061 = vmatpush2.msra.mxu0 0.0
    %1062 = vmatprep.subr.mxu0 0.0
    %1063 = vmatpush2.msra.mxu0 0.0
    %1064 = vmatprep.subr.mxu0 0.0
    %1065 = vmatpush2.msra.mxu0 0.0
    %1066 = vmatprep.subr.mxu0 0.0
    %1067 = vmatpush2.msra.mxu0 0.0
    %1068 = vmatprep.mubr.f32.mxu0 0.0
    %1069 = vmatmul.mubr.f32.gmra.mxu0 %v972
    %v1070 = vpop.f32.mrf.mxu0
    %v1071 = vadd.f32 0.0, %v1070
    %v1072 = vpop.f32.mrf.mxu0
    %1073 = vmatprep.mubr.f32.mxu0 0.0
    %1074 = vmatmul.mubr.f32.gmra.mxu0 %v975
    %v1075 = vpop.f32.mrf.mxu0
    %v1076 = vadd.f32 0.0, %v1075
    %v1077 = vpop.f32.mrf.mxu0
    %1078 = vmatprep.mubr.f32.mxu0 0.0
    %1079 = vmatmul.mubr.f32.gmra.mxu0 %v978
    %v1080 = vpop.f32.mrf.mxu0
    %v1081 = vadd.f32 0.0, %v1080
    %v1082 = vpop.f32.mrf.mxu0
    %1083 = vmatprep.mubr.f32.mxu0 0.0
    %1084 = vmatmul.mubr.f32.gmra.mxu0 %v981
    %v1085 = vpop.f32.mrf.mxu0
    %v1086 = vadd.f32 0.0, %v1085
    %v1087 = vpop.f32.mrf.mxu0
    %1088 = vmatprep.mubr.f32.mxu0 0.0
    %1089 = vmatmul.mubr.f32.gmra.mxu0 %v984
    %v1090 = vpop.f32.mrf.mxu0
    %v1091 = vadd.f32 0.0, %v1090
    %v1092 = vpop.f32.mrf.mxu0
    %1093 = vmatprep.mubr.f32.mxu0 0.0
    %1094 = vmatmul.mubr.f32.gmra.mxu0 %v987
    %v1095 = vpop.f32.mrf.mxu0
    %v1096 = vadd.f32 0.0, %v1095
    %v1097 = vpop.f32.mrf.mxu0
    %1098 = vmatprep.mubr.f32.mxu0 0.0
    %1099 = vmatmul.mubr.f32.gmra.mxu0 %v990
    %v1100 = vpop.f32.mrf.mxu0
    %v1101 = vadd.f32 0.0, %v1100
    %v1102 = vpop.f32.mrf.mxu0
    %1103 = vmatprep.mubr.f32.mxu0 0.0
    %1104 = vmatmul.mubr.f32.gmra.mxu0 %v993
    %v1105 = vpop.f32.mrf.mxu0
    %v1106 = vadd.f32 0.0, %v1105
    %v1107 = vpop.f32.mrf.mxu0
    %1108 = vmatprep.mubr.f32.mxu0 0.0
    %1109 = vmatmul.mubr.f32.gmra.mxu0 %v996
    %v1110 = vpop.f32.mrf.mxu0
    %v1111 = vadd.f32 0.0, %v1110
    %v1112 = vpop.f32.mrf.mxu0
    %1113 = vmatprep.mubr.f32.mxu0 0.0
    %1114 = vmatmul.mubr.f32.gmra.mxu0 %v999
    %v1115 = vpop.f32.mrf.mxu0
    %v1116 = vadd.f32 0.0, %v1115
    %v1117 = vpop.f32.mrf.mxu0
    %1118 = vmatprep.mubr.f32.mxu0 0.0
    %1119 = vmatmul.mubr.f32.gmra.mxu0 %v1002
    %v1120 = vpop.f32.mrf.mxu0
    %v1121 = vadd.f32 0.0, %v1120
    %v1122 = vpop.f32.mrf.mxu0
    %1123 = vdwg.mxu0
    %v1125 = vsel %vm970, %v474, 0
    %v1128 = vsel %vm970, %v479, 0
    %v1131 = vsel %vm970, %v484, 0
    %v1134 = vsel %vm970, %v489, 0
    %v1137 = vsel %vm970, %v494, 0
    %v1140 = vsel %vm970, %v499, 0
    %v1143 = vsel %vm970, %v504, 0
    %v1146 = vsel %vm970, %v509, 0
    %v1149 = vsel %vm970, %v514, 0
    %v1152 = vsel %vm970, %v519, 0
    %v1155 = vsel %vm970, %v524, 0
    %1157 = vmatprep.subr.mxu0 0.0
    %1158 = vmatpush1.msra.mxu0 0.0
    %1159 = vmatprep.subr.mxu0 0.0
    %1160 = vmatpush1.msra.mxu0 0.0
    %1161 = vmatprep.subr.mxu0 0.0
    %1162 = vmatpush1.msra.mxu0 0.0
    %1163 = vmatprep.subr.mxu0 0.0
    %1164 = vmatpush1.msra.mxu0 0.0
    %1165 = vmatprep.subr.mxu0 0.0
    %1166 = vmatpush1.msra.mxu0 0.0
    %1167 = vmatprep.subr.mxu0 0.0
    %1168 = vmatpush1.msra.mxu0 0.0
    %1169 = vmatprep.subr.mxu0 0.0
    %1170 = vmatpush1.msra.mxu0 0.0
    %1171 = vmatprep.subr.mxu0 0.0
    %1172 = vmatpush1.msra.mxu0 0.0
    %1173 = vmatprep.subr.mxu0 0.0
    %1174 = vmatpush1.msra.mxu0 0.0
    %1175 = vmatprep.subr.mxu0 0.0
    %1176 = vmatpush1.msra.mxu0 0.0
    %1177 = vmatprep.subr.mxu0 0.0
    %1178 = vmatpush1.msra.mxu0 0.0
    %1179 = vmatprep.subr.mxu0 0.0
    %1180 = vmatpush1.msra.mxu0 0.0
    %1181 = vmatprep.subr.mxu0 0.0
    %1182 = vmatpush1.msra.mxu0 0.0
    %1183 = vmatprep.subr.mxu0 0.0
    %1184 = vmatpush1.msra.mxu0 0.0
    %1185 = vmatprep.subr.mxu0 0.0
    %1186 = vmatpush1.msra.mxu0 0.0
    %1187 = vmatprep.subr.mxu0 0.0
    %1188 = vmatpush1.msra.mxu0 %v967
    %1189 = vmatprep.subr.mxu0 0.0
    %1190 = vmatpush2.msra.mxu0 0.0
    %1191 = vmatprep.subr.mxu0 0.0
    %1192 = vmatpush2.msra.mxu0 0.0
    %1193 = vmatprep.subr.mxu0 0.0
    %1194 = vmatpush2.msra.mxu0 0.0
    %1195 = vmatprep.subr.mxu0 0.0
    %1196 = vmatpush2.msra.mxu0 0.0
    %1197 = vmatprep.subr.mxu0 0.0
    %1198 = vmatpush2.msra.mxu0 0.0
    %1199 = vmatprep.subr.mxu0 0.0
    %1200 = vmatpush2.msra.mxu0 0.0
    %1201 = vmatprep.subr.mxu0 0.0
    %1202 = vmatpush2.msra.mxu0 0.0
    %1203 = vmatprep.subr.mxu0 0.0
    %1204 = vmatpush2.msra.mxu0 0.0
    %1205 = vmatprep.subr.mxu0 0.0
    %1206 = vmatpush2.msra.mxu0 0.0
    %1207 = vmatprep.subr.mxu0 0.0
    %1208 = vmatpush2.msra.mxu0 0.0
    %1209 = vmatprep.subr.mxu0 0.0
    %1210 = vmatpush2.msra.mxu0 0.0
    %1211 = vmatprep.subr.mxu0 0.0
    %1212 = vmatpush2.msra.mxu0 0.0
    %1213 = vmatprep.subr.mxu0 0.0
    %1214 = vmatpush2.msra.mxu0 0.0
    %1215 = vmatprep.subr.mxu0 0.0
    %1216 = vmatpush2.msra.mxu0 0.0
    %1217 = vmatprep.subr.mxu0 0.0
    %1218 = vmatpush2.msra.mxu0 0.0
    %1219 = vmatprep.subr.mxu0 0.0
    %1220 = vmatpush2.msra.mxu0 0.0
    %1221 = vmatprep.mubr.f32.mxu0 0.0
    %1222 = vmatmul.mubr.f32.gmra.mxu0 %v1125
    %v1223 = vpop.f32.mrf.mxu0
    %v1224 = vadd.f32 %v1071, %v1223
    %v1225 = vpop.f32.mrf.mxu0
    %1226 = vmatprep.mubr.f32.mxu0 0.0
    %1227 = vmatmul.mubr.f32.gmra.mxu0 %v1128
    %v1228 = vpop.f32.mrf.mxu0
    %v1229 = vadd.f32 %v1076, %v1228
    %v1230 = vpop.f32.mrf.mxu0
    %1231 = vmatprep.mubr.f32.mxu0 0.0
    %1232 = vmatmul.mubr.f32.gmra.mxu0 %v1131
    %v1233 = vpop.f32.mrf.mxu0
    %v1234 = vadd.f32 %v1081, %v1233
    %v1235 = vpop.f32.mrf.mxu0
    %1236 = vmatprep.mubr.f32.mxu0 0.0
    %1237 = vmatmul.mubr.f32.gmra.mxu0 %v1134
    %v1238 = vpop.f32.mrf.mxu0
    %v1239 = vadd.f32 %v1086, %v1238
    %v1240 = vpop.f32.mrf.mxu0
    %1241 = vmatprep.mubr.f32.mxu0 0.0
    %1242 = vmatmul.mubr.f32.gmra.mxu0 %v1137
    %v1243 = vpop.f32.mrf.mxu0
    %v1244 = vadd.f32 %v1091, %v1243
    %v1245 = vpop.f32.mrf.mxu0
    %1246 = vmatprep.mubr.f32.mxu0 0.0
    %1247 = vmatmul.mubr.f32.gmra.mxu0 %v1140
    %v1248 = vpop.f32.mrf.mxu0
    %v1249 = vadd.f32 %v1096, %v1248
    %v1250 = vpop.f32.mrf.mxu0
    %1251 = vmatprep.mubr.f32.mxu0 0.0
    %1252 = vmatmul.mubr.f32.gmra.mxu0 %v1143
    %v1253 = vpop.f32.mrf.mxu0
    %v1254 = vadd.f32 %v1101, %v1253
    %v1255 = vpop.f32.mrf.mxu0
    %1256 = vmatprep.mubr.f32.mxu0 0.0
    %1257 = vmatmul.mubr.f32.gmra.mxu0 %v1146
    %v1258 = vpop.f32.mrf.mxu0
    %v1259 = vadd.f32 %v1106, %v1258
    %v1260 = vpop.f32.mrf.mxu0
    %1261 = vmatprep.mubr.f32.mxu0 0.0
    %1262 = vmatmul.mubr.f32.gmra.mxu0 %v1149
    %v1263 = vpop.f32.mrf.mxu0
    %v1264 = vadd.f32 %v1111, %v1263
    %v1265 = vpop.f32.mrf.mxu0
    %1266 = vmatprep.mubr.f32.mxu0 0.0
    %1267 = vmatmul.mubr.f32.gmra.mxu0 %v1152
    %v1268 = vpop.f32.mrf.mxu0
    %v1269 = vadd.f32 %v1116, %v1268
    %v1270 = vpop.f32.mrf.mxu0
    %1271 = vmatprep.mubr.f32.mxu0 0.0
    %1272 = vmatmul.mubr.f32.gmra.mxu0 %v1155
    %v1273 = vpop.f32.mrf.mxu0
    %v1274 = vadd.f32 %v1121, %v1273
    %v1275 = vpop.f32.mrf.mxu0
    %1276 = vdwg.mxu0
    %s1277 = scalar_lea.vmem [#allocation2], 16
    %v1278 = vld [vmem:[%s1277] sm:$0xff]
    %v1280 = vsel %vm970, %v584, 0
    %v1283 = vsel %vm970, %v589, 0
    %v1286 = vsel %vm970, %v594, 0
    %v1289 = vsel %vm970, %v599, 0
    %v1292 = vsel %vm970, %v604, 0
    %v1295 = vsel %vm970, %v609, 0
    %v1298 = vsel %vm970, %v614, 0
    %v1301 = vsel %vm970, %v619, 0
    %v1304 = vsel %vm970, %v624, 0
    %v1307 = vsel %vm970, %v629, 0
    %v1310 = vsel %vm970, %v634, 0
    %1312 = vmatprep.subr.mxu0 0.0
    %1313 = vmatpush1.msra.mxu0 0.0
    %1314 = vmatprep.subr.mxu0 0.0
    %1315 = vmatpush1.msra.mxu0 0.0
    %1316 = vmatprep.subr.mxu0 0.0
    %1317 = vmatpush1.msra.mxu0 0.0
    %1318 = vmatprep.subr.mxu0 0.0
    %1319 = vmatpush1.msra.mxu0 0.0
    %1320 = vmatprep.subr.mxu0 0.0
    %1321 = vmatpush1.msra.mxu0 0.0
    %1322 = vmatprep.subr.mxu0 0.0
    %1323 = vmatpush1.msra.mxu0 0.0
    %1324 = vmatprep.subr.mxu0 0.0
    %1325 = vmatpush1.msra.mxu0 0.0
    %1326 = vmatprep.subr.mxu0 0.0
    %1327 = vmatpush1.msra.mxu0 0.0
    %1328 = vmatprep.subr.mxu0 0.0
    %1329 = vmatpush1.msra.mxu0 0.0
    %1330 = vmatprep.subr.mxu0 0.0
    %1331 = vmatpush1.msra.mxu0 0.0
    %1332 = vmatprep.subr.mxu0 0.0
    %1333 = vmatpush1.msra.mxu0 0.0
    %1334 = vmatprep.subr.mxu0 0.0
    %1335 = vmatpush1.msra.mxu0 0.0
    %1336 = vmatprep.subr.mxu0 0.0
    %1337 = vmatpush1.msra.mxu0 0.0
    %1338 = vmatprep.subr.mxu0 0.0
    %1339 = vmatpush1.msra.mxu0 0.0
    %1340 = vmatprep.subr.mxu0 0.0
    %1341 = vmatpush1.msra.mxu0 0.0
    %1342 = vmatprep.subr.mxu0 0.0
    %1343 = vmatpush1.msra.mxu0 %v1278
    %1344 = vmatprep.subr.mxu0 0.0
    %1345 = vmatpush2.msra.mxu0 0.0
    %1346 = vmatprep.subr.mxu0 0.0
    %1347 = vmatpush2.msra.mxu0 0.0
    %1348 = vmatprep.subr.mxu0 0.0
    %1349 = vmatpush2.msra.mxu0 0.0
    %1350 = vmatprep.subr.mxu0 0.0
    %1351 = vmatpush2.msra.mxu0 0.0
    %1352 = vmatprep.subr.mxu0 0.0
    %1353 = vmatpush2.msra.mxu0 0.0
    %1354 = vmatprep.subr.mxu0 0.0
    %1355 = vmatpush2.msra.mxu0 0.0
    %1356 = vmatprep.subr.mxu0 0.0
    %1357 = vmatpush2.msra.mxu0 0.0
    %1358 = vmatprep.subr.mxu0 0.0
    %1359 = vmatpush2.msra.mxu0 0.0
    %1360 = vmatprep.subr.mxu0 0.0
    %1361 = vmatpush2.msra.mxu0 0.0
    %1362 = vmatprep.subr.mxu0 0.0
    %1363 = vmatpush2.msra.mxu0 0.0
    %1364 = vmatprep.subr.mxu0 0.0
    %1365 = vmatpush2.msra.mxu0 0.0
    %1366 = vmatprep.subr.mxu0 0.0
    %1367 = vmatpush2.msra.mxu0 0.0
    %1368 = vmatprep.subr.mxu0 0.0
    %1369 = vmatpush2.msra.mxu0 0.0
    %1370 = vmatprep.subr.mxu0 0.0
    %1371 = vmatpush2.msra.mxu0 0.0
    %1372 = vmatprep.subr.mxu0 0.0
    %1373 = vmatpush2.msra.mxu0 0.0
    %1374 = vmatprep.subr.mxu0 0.0
    %1375 = vmatpush2.msra.mxu0 0.0
    %1376 = vmatprep.mubr.f32.mxu0 0.0
    %1377 = vmatmul.mubr.f32.gmra.mxu0 %v1280
    %v1378 = vpop.f32.mrf.mxu0
    %v1379 = vadd.f32 0.0, %v1378
    %v1380 = vpop.f32.mrf.mxu0
    %1381 = vmatprep.mubr.f32.mxu0 0.0
    %1382 = vmatmul.mubr.f32.gmra.mxu0 %v1283
    %v1383 = vpop.f32.mrf.mxu0
    %v1384 = vadd.f32 0.0, %v1383
    %v1385 = vpop.f32.mrf.mxu0
    %1386 = vmatprep.mubr.f32.mxu0 0.0
    %1387 = vmatmul.mubr.f32.gmra.mxu0 %v1286
    %v1388 = vpop.f32.mrf.mxu0
    %v1389 = vadd.f32 0.0, %v1388
    %v1390 = vpop.f32.mrf.mxu0
    %1391 = vmatprep.mubr.f32.mxu0 0.0
    %1392 = vmatmul.mubr.f32.gmra.mxu0 %v1289
    %v1393 = vpop.f32.mrf.mxu0
    %v1394 = vadd.f32 0.0, %v1393
    %v1395 = vpop.f32.mrf.mxu0
    %1396 = vmatprep.mubr.f32.mxu0 0.0
    %1397 = vmatmul.mubr.f32.gmra.mxu0 %v1292
    %v1398 = vpop.f32.mrf.mxu0
    %v1399 = vadd.f32 0.0, %v1398
    %v1400 = vpop.f32.mrf.mxu0
    %1401 = vmatprep.mubr.f32.mxu0 0.0
    %1402 = vmatmul.mubr.f32.gmra.mxu0 %v1295
    %v1403 = vpop.f32.mrf.mxu0
    %v1404 = vadd.f32 0.0, %v1403
    %v1405 = vpop.f32.mrf.mxu0
    %1406 = vmatprep.mubr.f32.mxu0 0.0
    %1407 = vmatmul.mubr.f32.gmra.mxu0 %v1298
    %v1408 = vpop.f32.mrf.mxu0
    %v1409 = vadd.f32 0.0, %v1408
    %v1410 = vpop.f32.mrf.mxu0
    %1411 = vmatprep.mubr.f32.mxu0 0.0
    %1412 = vmatmul.mubr.f32.gmra.mxu0 %v1301
    %v1413 = vpop.f32.mrf.mxu0
    %v1414 = vadd.f32 0.0, %v1413
    %v1415 = vpop.f32.mrf.mxu0
    %1416 = vmatprep.mubr.f32.mxu0 0.0
    %1417 = vmatmul.mubr.f32.gmra.mxu0 %v1304
    %v1418 = vpop.f32.mrf.mxu0
    %v1419 = vadd.f32 0.0, %v1418
    %v1420 = vpop.f32.mrf.mxu0
    %1421 = vmatprep.mubr.f32.mxu0 0.0
    %1422 = vmatmul.mubr.f32.gmra.mxu0 %v1307
    %v1423 = vpop.f32.mrf.mxu0
    %v1424 = vadd.f32 0.0, %v1423
    %v1425 = vpop.f32.mrf.mxu0
    %1426 = vmatprep.mubr.f32.mxu0 0.0
    %1427 = vmatmul.mubr.f32.gmra.mxu0 %v1310
    %v1428 = vpop.f32.mrf.mxu0
    %v1429 = vadd.f32 0.0, %v1428
    %v1430 = vpop.f32.mrf.mxu0
    %1431 = vdwg.mxu0
    %v1432 = vadd.f32 %v1224, %v1379
    %v1433 = vadd.f32 %v1229, %v1384
    %v1434 = vadd.f32 %v1234, %v1389
    %v1435 = vadd.f32 %v1239, %v1394
    %v1436 = vadd.f32 %v1244, %v1399
    %v1437 = vadd.f32 %v1249, %v1404
    %v1438 = vadd.f32 %v1254, %v1409
    %v1439 = vadd.f32 %v1259, %v1414
    %v1440 = vadd.f32 %v1264, %v1419
    %v1441 = vadd.f32 %v1269, %v1424
    %v1442 = vadd.f32 %v1274, %v1429
    %s1443 = scalar_lea.vmem [#allocation2], 24
    %v1444 = vld [vmem:[%s1443] sm:$0xff]
    %v1446 = vsel %vm970, %v639, 0
    %v1449 = vsel %vm970, %v644, 0
    %v1452 = vsel %vm970, %v649, 0
    %v1455 = vsel %vm970, %v654, 0
    %v1458 = vsel %vm970, %v659, 0
    %v1461 = vsel %vm970, %v664, 0
    %v1464 = vsel %vm970, %v669, 0
    %v1467 = vsel %vm970, %v674, 0
    %v1470 = vsel %vm970, %v679, 0
    %v1473 = vsel %vm970, %v684, 0
    %v1476 = vsel %vm970, %v689, 0
    %1478 = vmatprep.subr.mxu0 0.0
    %1479 = vmatpush1.msra.mxu0 0.0
    %1480 = vmatprep.subr.mxu0 0.0
    %1481 = vmatpush1.msra.mxu0 0.0
    %1482 = vmatprep.subr.mxu0 0.0
    %1483 = vmatpush1.msra.mxu0 0.0
    %1484 = vmatprep.subr.mxu0 0.0
    %1485 = vmatpush1.msra.mxu0 0.0
    %1486 = vmatprep.subr.mxu0 0.0
    %1487 = vmatpush1.msra.mxu0 0.0
    %1488 = vmatprep.subr.mxu0 0.0
    %1489 = vmatpush1.msra.mxu0 0.0
    %1490 = vmatprep.subr.mxu0 0.0
    %1491 = vmatpush1.msra.mxu0 0.0
    %1492 = vmatprep.subr.mxu0 0.0
    %1493 = vmatpush1.msra.mxu0 0.0
    %1494 = vmatprep.subr.mxu0 0.0
    %1495 = vmatpush1.msra.mxu0 0.0
    %1496 = vmatprep.subr.mxu0 0.0
    %1497 = vmatpush1.msra.mxu0 0.0
    %1498 = vmatprep.subr.mxu0 0.0
    %1499 = vmatpush1.msra.mxu0 0.0
    %1500 = vmatprep.subr.mxu0 0.0
    %1501 = vmatpush1.msra.mxu0 0.0
    %1502 = vmatprep.subr.mxu0 0.0
    %1503 = vmatpush1.msra.mxu0 0.0
    %1504 = vmatprep.subr.mxu0 0.0
    %1505 = vmatpush1.msra.mxu0 0.0
    %1506 = vmatprep.subr.mxu0 0.0
    %1507 = vmatpush1.msra.mxu0 0.0
    %1508 = vmatprep.subr.mxu0 0.0
    %1509 = vmatpush1.msra.mxu0 %v1444
    %1510 = vmatprep.subr.mxu0 0.0
    %1511 = vmatpush2.msra.mxu0 0.0
    %1512 = vmatprep.subr.mxu0 0.0
    %1513 = vmatpush2.msra.mxu0 0.0
    %1514 = vmatprep.subr.mxu0 0.0
    %1515 = vmatpush2.msra.mxu0 0.0
    %1516 = vmatprep.subr.mxu0 0.0
    %1517 = vmatpush2.msra.mxu0 0.0
    %1518 = vmatprep.subr.mxu0 0.0
    %1519 = vmatpush2.msra.mxu0 0.0
    %1520 = vmatprep.subr.mxu0 0.0
    %1521 = vmatpush2.msra.mxu0 0.0
    %1522 = vmatprep.subr.mxu0 0.0
    %1523 = vmatpush2.msra.mxu0 0.0
    %1524 = vmatprep.subr.mxu0 0.0
    %1525 = vmatpush2.msra.mxu0 0.0
    %1526 = vmatprep.subr.mxu0 0.0
    %1527 = vmatpush2.msra.mxu0 0.0
    %1528 = vmatprep.subr.mxu0 0.0
    %1529 = vmatpush2.msra.mxu0 0.0
    %1530 = vmatprep.subr.mxu0 0.0
    %1531 = vmatpush2.msra.mxu0 0.0
    %1532 = vmatprep.subr.mxu0 0.0
    %1533 = vmatpush2.msra.mxu0 0.0
    %1534 = vmatprep.subr.mxu0 0.0
    %1535 = vmatpush2.msra.mxu0 0.0
    %1536 = vmatprep.subr.mxu0 0.0
    %1537 = vmatpush2.msra.mxu0 0.0
    %1538 = vmatprep.subr.mxu0 0.0
    %1539 = vmatpush2.msra.mxu0 0.0
    %1540 = vmatprep.subr.mxu0 0.0
    %1541 = vmatpush2.msra.mxu0 0.0
    %1542 = vmatprep.mubr.f32.mxu0 0.0
    %1543 = vmatmul.mubr.f32.gmra.mxu0 %v1446
    %v1544 = vpop.f32.mrf.mxu0
    %v1545 = vadd.f32 0.0, %v1544
    %v1546 = vpop.f32.mrf.mxu0
    %1547 = vmatprep.mubr.f32.mxu0 0.0
    %1548 = vmatmul.mubr.f32.gmra.mxu0 %v1449
    %v1549 = vpop.f32.mrf.mxu0
    %v1550 = vadd.f32 0.0, %v1549
    %v1551 = vpop.f32.mrf.mxu0
    %1552 = vmatprep.mubr.f32.mxu0 0.0
    %1553 = vmatmul.mubr.f32.gmra.mxu0 %v1452
    %v1554 = vpop.f32.mrf.mxu0
    %v1555 = vadd.f32 0.0, %v1554
    %v1556 = vpop.f32.mrf.mxu0
    %1557 = vmatprep.mubr.f32.mxu0 0.0
    %1558 = vmatmul.mubr.f32.gmra.mxu0 %v1455
    %v1559 = vpop.f32.mrf.mxu0
    %v1560 = vadd.f32 0.0, %v1559
    %v1561 = vpop.f32.mrf.mxu0
    %1562 = vmatprep.mubr.f32.mxu0 0.0
    %1563 = vmatmul.mubr.f32.gmra.mxu0 %v1458
    %v1564 = vpop.f32.mrf.mxu0
    %v1565 = vadd.f32 0.0, %v1564
    %v1566 = vpop.f32.mrf.mxu0
    %1567 = vmatprep.mubr.f32.mxu0 0.0
    %1568 = vmatmul.mubr.f32.gmra.mxu0 %v1461
    %v1569 = vpop.f32.mrf.mxu0
    %v1570 = vadd.f32 0.0, %v1569
    %v1571 = vpop.f32.mrf.mxu0
    %1572 = vmatprep.mubr.f32.mxu0 0.0
    %1573 = vmatmul.mubr.f32.gmra.mxu0 %v1464
    %v1574 = vpop.f32.mrf.mxu0
    %v1575 = vadd.f32 0.0, %v1574
    %v1576 = vpop.f32.mrf.mxu0
    %1577 = vmatprep.mubr.f32.mxu0 0.0
    %1578 = vmatmul.mubr.f32.gmra.mxu0 %v1467
    %v1579 = vpop.f32.mrf.mxu0
    %v1580 = vadd.f32 0.0, %v1579
    %v1581 = vpop.f32.mrf.mxu0
    %1582 = vmatprep.mubr.f32.mxu0 0.0
    %1583 = vmatmul.mubr.f32.gmra.mxu0 %v1470
    %v1584 = vpop.f32.mrf.mxu0
    %v1585 = vadd.f32 0.0, %v1584
    %v1586 = vpop.f32.mrf.mxu0
    %1587 = vmatprep.mubr.f32.mxu0 0.0
    %1588 = vmatmul.mubr.f32.gmra.mxu0 %v1473
    %v1589 = vpop.f32.mrf.mxu0
    %v1590 = vadd.f32 0.0, %v1589
    %v1591 = vpop.f32.mrf.mxu0
    %1592 = vmatprep.mubr.f32.mxu0 0.0
    %1593 = vmatmul.mubr.f32.gmra.mxu0 %v1476
    %v1594 = vpop.f32.mrf.mxu0
    %v1595 = vadd.f32 0.0, %v1594
    %v1596 = vpop.f32.mrf.mxu0
    %1597 = vdwg.mxu0
    %v1598 = vadd.f32 %v1432, %v1545
    %v1599 = vadd.f32 %v1433, %v1550
    %v1600 = vadd.f32 %v1434, %v1555
    %v1601 = vadd.f32 %v1435, %v1560
    %v1602 = vadd.f32 %v1436, %v1565
    %v1603 = vadd.f32 %v1437, %v1570
    %v1604 = vadd.f32 %v1438, %v1575
    %v1605 = vadd.f32 %v1439, %v1580
    %v1606 = vadd.f32 %v1440, %v1585
    %v1607 = vadd.f32 %v1441, %v1590
    %v1608 = vadd.f32 %v1442, %v1595
    %s1609 = scalar_lea.vmem [#allocation2], 32
    %v1610 = vld [vmem:[%s1609] sm:$0xff]
    %v1612 = vsel %vm970, %v694, 0
    %v1615 = vsel %vm970, %v699, 0
    %v1618 = vsel %vm970, %v704, 0
    %v1621 = vsel %vm970, %v709, 0
    %v1624 = vsel %vm970, %v714, 0
    %v1627 = vsel %vm970, %v719, 0
    %v1630 = vsel %vm970, %v724, 0
    %v1633 = vsel %vm970, %v729, 0
    %v1636 = vsel %vm970, %v734, 0
    %v1639 = vsel %vm970, %v739, 0
    %v1642 = vsel %vm970, %v744, 0
    %1644 = vmatprep.subr.mxu0 0.0
    %1645 = vmatpush1.msra.mxu0 0.0
    %1646 = vmatprep.subr.mxu0 0.0
    %1647 = vmatpush1.msra.mxu0 0.0
    %1648 = vmatprep.subr.mxu0 0.0
    %1649 = vmatpush1.msra.mxu0 0.0
    %1650 = vmatprep.subr.mxu0 0.0
    %1651 = vmatpush1.msra.mxu0 0.0
    %1652 = vmatprep.subr.mxu0 0.0
    %1653 = vmatpush1.msra.mxu0 0.0
    %1654 = vmatprep.subr.mxu0 0.0
    %1655 = vmatpush1.msra.mxu0 0.0
    %1656 = vmatprep.subr.mxu0 0.0
    %1657 = vmatpush1.msra.mxu0 0.0
    %1658 = vmatprep.subr.mxu0 0.0
    %1659 = vmatpush1.msra.mxu0 0.0
    %1660 = vmatprep.subr.mxu0 0.0
    %1661 = vmatpush1.msra.mxu0 0.0
    %1662 = vmatprep.subr.mxu0 0.0
    %1663 = vmatpush1.msra.mxu0 0.0
    %1664 = vmatprep.subr.mxu0 0.0
    %1665 = vmatpush1.msra.mxu0 0.0
    %1666 = vmatprep.subr.mxu0 0.0
    %1667 = vmatpush1.msra.mxu0 0.0
    %1668 = vmatprep.subr.mxu0 0.0
    %1669 = vmatpush1.msra.mxu0 0.0
    %1670 = vmatprep.subr.mxu0 0.0
    %1671 = vmatpush1.msra.mxu0 0.0
    %1672 = vmatprep.subr.mxu0 0.0
    %1673 = vmatpush1.msra.mxu0 0.0
    %1674 = vmatprep.subr.mxu0 0.0
    %1675 = vmatpush1.msra.mxu0 %v1610
    %1676 = vmatprep.subr.mxu0 0.0
    %1677 = vmatpush2.msra.mxu0 0.0
    %1678 = vmatprep.subr.mxu0 0.0
    %1679 = vmatpush2.msra.mxu0 0.0
    %1680 = vmatprep.subr.mxu0 0.0
    %1681 = vmatpush2.msra.mxu0 0.0
    %1682 = vmatprep.subr.mxu0 0.0
    %1683 = vmatpush2.msra.mxu0 0.0
    %1684 = vmatprep.subr.mxu0 0.0
    %1685 = vmatpush2.msra.mxu0 0.0
    %1686 = vmatprep.subr.mxu0 0.0
    %1687 = vmatpush2.msra.mxu0 0.0
    %1688 = vmatprep.subr.mxu0 0.0
    %1689 = vmatpush2.msra.mxu0 0.0
    %1690 = vmatprep.subr.mxu0 0.0
    %1691 = vmatpush2.msra.mxu0 0.0
    %1692 = vmatprep.subr.mxu0 0.0
    %1693 = vmatpush2.msra.mxu0 0.0
    %1694 = vmatprep.subr.mxu0 0.0
    %1695 = vmatpush2.msra.mxu0 0.0
    %1696 = vmatprep.subr.mxu0 0.0
    %1697 = vmatpush2.msra.mxu0 0.0
    %1698 = vmatprep.subr.mxu0 0.0
    %1699 = vmatpush2.msra.mxu0 0.0
    %1700 = vmatprep.subr.mxu0 0.0
    %1701 = vmatpush2.msra.mxu0 0.0
    %1702 = vmatprep.subr.mxu0 0.0
    %1703 = vmatpush2.msra.mxu0 0.0
    %1704 = vmatprep.subr.mxu0 0.0
    %1705 = vmatpush2.msra.mxu0 0.0
    %1706 = vmatprep.subr.mxu0 0.0
    %1707 = vmatpush2.msra.mxu0 0.0
    %1708 = vmatprep.mubr.f32.mxu0 0.0
    %1709 = vmatmul.mubr.f32.gmra.mxu0 %v1612
    %v1710 = vpop.f32.mrf.mxu0
    %v1711 = vadd.f32 0.0, %v1710
    %v1712 = vpop.f32.mrf.mxu0
    %1713 = vmatprep.mubr.f32.mxu0 0.0
    %1714 = vmatmul.mubr.f32.gmra.mxu0 %v1615
    %v1715 = vpop.f32.mrf.mxu0
    %v1716 = vadd.f32 0.0, %v1715
    %v1717 = vpop.f32.mrf.mxu0
    %1718 = vmatprep.mubr.f32.mxu0 0.0
    %1719 = vmatmul.mubr.f32.gmra.mxu0 %v1618
    %v1720 = vpop.f32.mrf.mxu0
    %v1721 = vadd.f32 0.0, %v1720
    %v1722 = vpop.f32.mrf.mxu0
    %1723 = vmatprep.mubr.f32.mxu0 0.0
    %1724 = vmatmul.mubr.f32.gmra.mxu0 %v1621
    %v1725 = vpop.f32.mrf.mxu0
    %v1726 = vadd.f32 0.0, %v1725
    %v1727 = vpop.f32.mrf.mxu0
    %1728 = vmatprep.mubr.f32.mxu0 0.0
    %1729 = vmatmul.mubr.f32.gmra.mxu0 %v1624
    %v1730 = vpop.f32.mrf.mxu0
    %v1731 = vadd.f32 0.0, %v1730
    %v1732 = vpop.f32.mrf.mxu0
    %1733 = vmatprep.mubr.f32.mxu0 0.0
    %1734 = vmatmul.mubr.f32.gmra.mxu0 %v1627
    %v1735 = vpop.f32.mrf.mxu0
    %v1736 = vadd.f32 0.0, %v1735
    %v1737 = vpop.f32.mrf.mxu0
    %1738 = vmatprep.mubr.f32.mxu0 0.0
    %1739 = vmatmul.mubr.f32.gmra.mxu0 %v1630
    %v1740 = vpop.f32.mrf.mxu0
    %v1741 = vadd.f32 0.0, %v1740
    %v1742 = vpop.f32.mrf.mxu0
    %1743 = vmatprep.mubr.f32.mxu0 0.0
    %1744 = vmatmul.mubr.f32.gmra.mxu0 %v1633
    %v1745 = vpop.f32.mrf.mxu0
    %v1746 = vadd.f32 0.0, %v1745
    %v1747 = vpop.f32.mrf.mxu0
    %1748 = vmatprep.mubr.f32.mxu0 0.0
    %1749 = vmatmul.mubr.f32.gmra.mxu0 %v1636
    %v1750 = vpop.f32.mrf.mxu0
    %v1751 = vadd.f32 0.0, %v1750
    %v1752 = vpop.f32.mrf.mxu0
    %1753 = vmatprep.mubr.f32.mxu0 0.0
    %1754 = vmatmul.mubr.f32.gmra.mxu0 %v1639
    %v1755 = vpop.f32.mrf.mxu0
    %v1756 = vadd.f32 0.0, %v1755
    %v1757 = vpop.f32.mrf.mxu0
    %1758 = vmatprep.mubr.f32.mxu0 0.0
    %1759 = vmatmul.mubr.f32.gmra.mxu0 %v1642
    %v1760 = vpop.f32.mrf.mxu0
    %v1761 = vadd.f32 0.0, %v1760
    %v1762 = vpop.f32.mrf.mxu0
    %1763 = vdwg.mxu0
    %v1764 = vadd.f32 %v1598, %v1711
    %v1765 = vadd.f32 %v1599, %v1716
    %v1766 = vadd.f32 %v1600, %v1721
    %v1767 = vadd.f32 %v1601, %v1726
    %v1768 = vadd.f32 %v1602, %v1731
    %v1769 = vadd.f32 %v1603, %v1736
    %v1770 = vadd.f32 %v1604, %v1741
    %v1771 = vadd.f32 %v1605, %v1746
    %v1772 = vadd.f32 %v1606, %v1751
    %v1773 = vadd.f32 %v1607, %v1756
    %v1774 = vadd.f32 %v1608, %v1761
    %s1775 = scalar_lea.vmem [#allocation2], 40
    %v1776 = vld [vmem:[%s1775] sm:$0xff]
    %v1778 = vsel %vm970, %v749, 0
    %v1781 = vsel %vm970, %v754, 0
    %v1784 = vsel %vm970, %v759, 0
    %v1787 = vsel %vm970, %v764, 0
    %v1790 = vsel %vm970, %v769, 0
    %v1793 = vsel %vm970, %v774, 0
    %v1796 = vsel %vm970, %v779, 0
    %v1799 = vsel %vm970, %v784, 0
    %v1802 = vsel %vm970, %v789, 0
    %v1805 = vsel %vm970, %v794, 0
    %v1808 = vsel %vm970, %v799, 0
    %1810 = vmatprep.subr.mxu0 0.0
    %1811 = vmatpush1.msra.mxu0 0.0
    %1812 = vmatprep.subr.mxu0 0.0
    %1813 = vmatpush1.msra.mxu0 0.0
    %1814 = vmatprep.subr.mxu0 0.0
    %1815 = vmatpush1.msra.mxu0 0.0
    %1816 = vmatprep.subr.mxu0 0.0
    %1817 = vmatpush1.msra.mxu0 0.0
    %1818 = vmatprep.subr.mxu0 0.0
    %1819 = vmatpush1.msra.mxu0 0.0
    %1820 = vmatprep.subr.mxu0 0.0
    %1821 = vmatpush1.msra.mxu0 0.0
    %1822 = vmatprep.subr.mxu0 0.0
    %1823 = vmatpush1.msra.mxu0 0.0
    %1824 = vmatprep.subr.mxu0 0.0
    %1825 = vmatpush1.msra.mxu0 0.0
    %1826 = vmatprep.subr.mxu0 0.0
    %1827 = vmatpush1.msra.mxu0 0.0
    %1828 = vmatprep.subr.mxu0 0.0
    %1829 = vmatpush1.msra.mxu0 0.0
    %1830 = vmatprep.subr.mxu0 0.0
    %1831 = vmatpush1.msra.mxu0 0.0
    %1832 = vmatprep.subr.mxu0 0.0
    %1833 = vmatpush1.msra.mxu0 0.0
    %1834 = vmatprep.subr.mxu0 0.0
    %1835 = vmatpush1.msra.mxu0 0.0
    %1836 = vmatprep.subr.mxu0 0.0
    %1837 = vmatpush1.msra.mxu0 0.0
    %1838 = vmatprep.subr.mxu0 0.0
    %1839 = vmatpush1.msra.mxu0 0.0
    %1840 = vmatprep.subr.mxu0 0.0
    %1841 = vmatpush1.msra.mxu0 %v1776
    %1842 = vmatprep.subr.mxu0 0.0
    %1843 = vmatpush2.msra.mxu0 0.0
    %1844 = vmatprep.subr.mxu0 0.0
    %1845 = vmatpush2.msra.mxu0 0.0
    %1846 = vmatprep.subr.mxu0 0.0
    %1847 = vmatpush2.msra.mxu0 0.0
    %1848 = vmatprep.subr.mxu0 0.0
    %1849 = vmatpush2.msra.mxu0 0.0
    %1850 = vmatprep.subr.mxu0 0.0
    %1851 = vmatpush2.msra.mxu0 0.0
    %1852 = vmatprep.subr.mxu0 0.0
    %1853 = vmatpush2.msra.mxu0 0.0
    %1854 = vmatprep.subr.mxu0 0.0
    %1855 = vmatpush2.msra.mxu0 0.0
    %1856 = vmatprep.subr.mxu0 0.0
    %1857 = vmatpush2.msra.mxu0 0.0
    %1858 = vmatprep.subr.mxu0 0.0
    %1859 = vmatpush2.msra.mxu0 0.0
    %1860 = vmatprep.subr.mxu0 0.0
    %1861 = vmatpush2.msra.mxu0 0.0
    %1862 = vmatprep.subr.mxu0 0.0
    %1863 = vmatpush2.msra.mxu0 0.0
    %1864 = vmatprep.subr.mxu0 0.0
    %1865 = vmatpush2.msra.mxu0 0.0
    %1866 = vmatprep.subr.mxu0 0.0
    %1867 = vmatpush2.msra.mxu0 0.0
    %1868 = vmatprep.subr.mxu0 0.0
    %1869 = vmatpush2.msra.mxu0 0.0
    %1870 = vmatprep.subr.mxu0 0.0
    %1871 = vmatpush2.msra.mxu0 0.0
    %1872 = vmatprep.subr.mxu0 0.0
    %1873 = vmatpush2.msra.mxu0 0.0
    %1874 = vmatprep.mubr.f32.mxu0 0.0
    %1875 = vmatmul.mubr.f32.gmra.mxu0 %v1778
    %v1876 = vpop.f32.mrf.mxu0
    %v1877 = vadd.f32 0.0, %v1876
    %v1878 = vpop.f32.mrf.mxu0
    %1879 = vmatprep.mubr.f32.mxu0 0.0
    %1880 = vmatmul.mubr.f32.gmra.mxu0 %v1781
    %v1881 = vpop.f32.mrf.mxu0
    %v1882 = vadd.f32 0.0, %v1881
    %v1883 = vpop.f32.mrf.mxu0
    %1884 = vmatprep.mubr.f32.mxu0 0.0
    %1885 = vmatmul.mubr.f32.gmra.mxu0 %v1784
    %v1886 = vpop.f32.mrf.mxu0
    %v1887 = vadd.f32 0.0, %v1886
    %v1888 = vpop.f32.mrf.mxu0
    %1889 = vmatprep.mubr.f32.mxu0 0.0
    %1890 = vmatmul.mubr.f32.gmra.mxu0 %v1787
    %v1891 = vpop.f32.mrf.mxu0
    %v1892 = vadd.f32 0.0, %v1891
    %v1893 = vpop.f32.mrf.mxu0
    %1894 = vmatprep.mubr.f32.mxu0 0.0
    %1895 = vmatmul.mubr.f32.gmra.mxu0 %v1790
    %v1896 = vpop.f32.mrf.mxu0
    %v1897 = vadd.f32 0.0, %v1896
    %v1898 = vpop.f32.mrf.mxu0
    %1899 = vmatprep.mubr.f32.mxu0 0.0
    %1900 = vmatmul.mubr.f32.gmra.mxu0 %v1793
    %v1901 = vpop.f32.mrf.mxu0
    %v1902 = vadd.f32 0.0, %v1901
    %v1903 = vpop.f32.mrf.mxu0
    %1904 = vmatprep.mubr.f32.mxu0 0.0
    %1905 = vmatmul.mubr.f32.gmra.mxu0 %v1796
    %v1906 = vpop.f32.mrf.mxu0
    %v1907 = vadd.f32 0.0, %v1906
    %v1908 = vpop.f32.mrf.mxu0
    %1909 = vmatprep.mubr.f32.mxu0 0.0
    %1910 = vmatmul.mubr.f32.gmra.mxu0 %v1799
    %v1911 = vpop.f32.mrf.mxu0
    %v1912 = vadd.f32 0.0, %v1911
    %v1913 = vpop.f32.mrf.mxu0
    %1914 = vmatprep.mubr.f32.mxu0 0.0
    %1915 = vmatmul.mubr.f32.gmra.mxu0 %v1802
    %v1916 = vpop.f32.mrf.mxu0
    %v1917 = vadd.f32 0.0, %v1916
    %v1918 = vpop.f32.mrf.mxu0
    %1919 = vmatprep.mubr.f32.mxu0 0.0
    %1920 = vmatmul.mubr.f32.gmra.mxu0 %v1805
    %v1921 = vpop.f32.mrf.mxu0
    %v1922 = vadd.f32 0.0, %v1921
    %v1923 = vpop.f32.mrf.mxu0
    %1924 = vmatprep.mubr.f32.mxu0 0.0
    %1925 = vmatmul.mubr.f32.gmra.mxu0 %v1808
    %v1926 = vpop.f32.mrf.mxu0
    %v1927 = vadd.f32 0.0, %v1926
    %v1928 = vpop.f32.mrf.mxu0
    %1929 = vdwg.mxu0
    %v1930 = vadd.f32 %v1764, %v1877
    %v1931 = vadd.f32 %v1765, %v1882
    %v1932 = vadd.f32 %v1766, %v1887
    %v1933 = vadd.f32 %v1767, %v1892
    %v1934 = vadd.f32 %v1768, %v1897
    %v1935 = vadd.f32 %v1769, %v1902
    %v1936 = vadd.f32 %v1770, %v1907
    %v1937 = vadd.f32 %v1771, %v1912
    %v1938 = vadd.f32 %v1772, %v1917
    %v1939 = vadd.f32 %v1773, %v1922
    %v1940 = vadd.f32 %v1774, %v1927
    %s1941 = scalar_lea.vmem [#allocation2], 48
    %v1942 = vld [vmem:[%s1941] sm:$0xff]
    %v1944 = vsel %vm970, %v804, 0
    %v1947 = vsel %vm970, %v809, 0
    %v1950 = vsel %vm970, %v814, 0
    %v1953 = vsel %vm970, %v819, 0
    %v1956 = vsel %vm970, %v824, 0
    %v1959 = vsel %vm970, %v829, 0
    %v1962 = vsel %vm970, %v834, 0
    %v1965 = vsel %vm970, %v839, 0
    %v1968 = vsel %vm970, %v844, 0
    %v1971 = vsel %vm970, %v849, 0
    %v1974 = vsel %vm970, %v854, 0
    %1976 = vmatprep.subr.mxu0 0.0
    %1977 = vmatpush1.msra.mxu0 0.0
    %1978 = vmatprep.subr.mxu0 0.0
    %1979 = vmatpush1.msra.mxu0 0.0
    %1980 = vmatprep.subr.mxu0 0.0
    %1981 = vmatpush1.msra.mxu0 0.0
    %1982 = vmatprep.subr.mxu0 0.0
    %1983 = vmatpush1.msra.mxu0 0.0
    %1984 = vmatprep.subr.mxu0 0.0
    %1985 = vmatpush1.msra.mxu0 0.0
    %1986 = vmatprep.subr.mxu0 0.0
    %1987 = vmatpush1.msra.mxu0 0.0
    %1988 = vmatprep.subr.mxu0 0.0
    %1989 = vmatpush1.msra.mxu0 0.0
    %1990 = vmatprep.subr.mxu0 0.0
    %1991 = vmatpush1.msra.mxu0 0.0
    %1992 = vmatprep.subr.mxu0 0.0
    %1993 = vmatpush1.msra.mxu0 0.0
    %1994 = vmatprep.subr.mxu0 0.0
    %1995 = vmatpush1.msra.mxu0 0.0
    %1996 = vmatprep.subr.mxu0 0.0
    %1997 = vmatpush1.msra.mxu0 0.0
    %1998 = vmatprep.subr.mxu0 0.0
    %1999 = vmatpush1.msra.mxu0 0.0
    %2000 = vmatprep.subr.mxu0 0.0
    %2001 = vmatpush1.msra.mxu0 0.0
    %2002 = vmatprep.subr.mxu0 0.0
    %2003 = vmatpush1.msra.mxu0 0.0
    %2004 = vmatprep.subr.mxu0 0.0
    %2005 = vmatpush1.msra.mxu0 0.0
    %2006 = vmatprep.subr.mxu0 0.0
    %2007 = vmatpush1.msra.mxu0 %v1942
    %2008 = vmatprep.subr.mxu0 0.0
    %2009 = vmatpush2.msra.mxu0 0.0
    %2010 = vmatprep.subr.mxu0 0.0
    %2011 = vmatpush2.msra.mxu0 0.0
    %2012 = vmatprep.subr.mxu0 0.0
    %2013 = vmatpush2.msra.mxu0 0.0
    %2014 = vmatprep.subr.mxu0 0.0
    %2015 = vmatpush2.msra.mxu0 0.0
    %2016 = vmatprep.subr.mxu0 0.0
    %2017 = vmatpush2.msra.mxu0 0.0
    %2018 = vmatprep.subr.mxu0 0.0
    %2019 = vmatpush2.msra.mxu0 0.0
    %2020 = vmatprep.subr.mxu0 0.0
    %2021 = vmatpush2.msra.mxu0 0.0
    %2022 = vmatprep.subr.mxu0 0.0
    %2023 = vmatpush2.msra.mxu0 0.0
    %2024 = vmatprep.subr.mxu0 0.0
    %2025 = vmatpush2.msra.mxu0 0.0
    %2026 = vmatprep.subr.mxu0 0.0
    %2027 = vmatpush2.msra.mxu0 0.0
    %2028 = vmatprep.subr.mxu0 0.0
    %2029 = vmatpush2.msra.mxu0 0.0
    %2030 = vmatprep.subr.mxu0 0.0
    %2031 = vmatpush2.msra.mxu0 0.0
    %2032 = vmatprep.subr.mxu0 0.0
    %2033 = vmatpush2.msra.mxu0 0.0
    %2034 = vmatprep.subr.mxu0 0.0
    %2035 = vmatpush2.msra.mxu0 0.0
    %2036 = vmatprep.subr.mxu0 0.0
    %2037 = vmatpush2.msra.mxu0 0.0
    %2038 = vmatprep.subr.mxu0 0.0
    %2039 = vmatpush2.msra.mxu0 0.0
    %2040 = vmatprep.mubr.f32.mxu0 0.0
    %2041 = vmatmul.mubr.f32.gmra.mxu0 %v1944
    %v2042 = vpop.f32.mrf.mxu0
    %v2043 = vadd.f32 0.0, %v2042
    %v2044 = vpop.f32.mrf.mxu0
    %2045 = vmatprep.mubr.f32.mxu0 0.0
    %2046 = vmatmul.mubr.f32.gmra.mxu0 %v1947
    %v2047 = vpop.f32.mrf.mxu0
    %v2048 = vadd.f32 0.0, %v2047
    %v2049 = vpop.f32.mrf.mxu0
    %2050 = vmatprep.mubr.f32.mxu0 0.0
    %2051 = vmatmul.mubr.f32.gmra.mxu0 %v1950
    %v2052 = vpop.f32.mrf.mxu0
    %v2053 = vadd.f32 0.0, %v2052
    %v2054 = vpop.f32.mrf.mxu0
    %2055 = vmatprep.mubr.f32.mxu0 0.0
    %2056 = vmatmul.mubr.f32.gmra.mxu0 %v1953
    %v2057 = vpop.f32.mrf.mxu0
    %v2058 = vadd.f32 0.0, %v2057
    %v2059 = vpop.f32.mrf.mxu0
    %2060 = vmatprep.mubr.f32.mxu0 0.0
    %2061 = vmatmul.mubr.f32.gmra.mxu0 %v1956
    %v2062 = vpop.f32.mrf.mxu0
    %v2063 = vadd.f32 0.0, %v2062
    %v2064 = vpop.f32.mrf.mxu0
    %2065 = vmatprep.mubr.f32.mxu0 0.0
    %2066 = vmatmul.mubr.f32.gmra.mxu0 %v1959
    %v2067 = vpop.f32.mrf.mxu0
    %v2068 = vadd.f32 0.0, %v2067
    %v2069 = vpop.f32.mrf.mxu0
    %2070 = vmatprep.mubr.f32.mxu0 0.0
    %2071 = vmatmul.mubr.f32.gmra.mxu0 %v1962
    %v2072 = vpop.f32.mrf.mxu0
    %v2073 = vadd.f32 0.0, %v2072
    %v2074 = vpop.f32.mrf.mxu0
    %2075 = vmatprep.mubr.f32.mxu0 0.0
    %2076 = vmatmul.mubr.f32.gmra.mxu0 %v1965
    %v2077 = vpop.f32.mrf.mxu0
    %v2078 = vadd.f32 0.0, %v2077
    %v2079 = vpop.f32.mrf.mxu0
    %2080 = vmatprep.mubr.f32.mxu0 0.0
    %2081 = vmatmul.mubr.f32.gmra.mxu0 %v1968
    %v2082 = vpop.f32.mrf.mxu0
    %v2083 = vadd.f32 0.0, %v2082
    %v2084 = vpop.f32.mrf.mxu0
    %2085 = vmatprep.mubr.f32.mxu0 0.0
    %2086 = vmatmul.mubr.f32.gmra.mxu0 %v1971
    %v2087 = vpop.f32.mrf.mxu0
    %v2088 = vadd.f32 0.0, %v2087
    %v2089 = vpop.f32.mrf.mxu0
    %2090 = vmatprep.mubr.f32.mxu0 0.0
    %2091 = vmatmul.mubr.f32.gmra.mxu0 %v1974
    %v2092 = vpop.f32.mrf.mxu0
    %v2093 = vadd.f32 0.0, %v2092
    %v2094 = vpop.f32.mrf.mxu0
    %2095 = vdwg.mxu0
    %v2096 = vadd.f32 %v1930, %v2043
    %v2097 = vadd.f32 %v1931, %v2048
    %v2098 = vadd.f32 %v1932, %v2053
    %v2099 = vadd.f32 %v1933, %v2058
    %v2100 = vadd.f32 %v1934, %v2063
    %v2101 = vadd.f32 %v1935, %v2068
    %v2102 = vadd.f32 %v1936, %v2073
    %v2103 = vadd.f32 %v1937, %v2078
    %v2104 = vadd.f32 %v1938, %v2083
    %v2105 = vadd.f32 %v1939, %v2088
    %v2106 = vadd.f32 %v1940, %v2093
    %s2107 = scalar_lea.vmem [#allocation2], 56
    %v2108 = vld [vmem:[%s2107] sm:$0xff]
    %v2110 = vsel %vm970, %v859, 0
    %v2113 = vsel %vm970, %v864, 0
    %v2116 = vsel %vm970, %v869, 0
    %v2119 = vsel %vm970, %v874, 0
    %v2122 = vsel %vm970, %v879, 0
    %v2125 = vsel %vm970, %v884, 0
    %v2128 = vsel %vm970, %v889, 0
    %v2131 = vsel %vm970, %v894, 0
    %v2134 = vsel %vm970, %v899, 0
    %v2137 = vsel %vm970, %v904, 0
    %v2140 = vsel %vm970, %v909, 0
    %2142 = vmatprep.subr.mxu0 0.0
    %2143 = vmatpush1.msra.mxu0 0.0
    %2144 = vmatprep.subr.mxu0 0.0
    %2145 = vmatpush1.msra.mxu0 0.0
    %2146 = vmatprep.subr.mxu0 0.0
    %2147 = vmatpush1.msra.mxu0 0.0
    %2148 = vmatprep.subr.mxu0 0.0
    %2149 = vmatpush1.msra.mxu0 0.0
    %2150 = vmatprep.subr.mxu0 0.0
    %2151 = vmatpush1.msra.mxu0 0.0
    %2152 = vmatprep.subr.mxu0 0.0
    %2153 = vmatpush1.msra.mxu0 0.0
    %2154 = vmatprep.subr.mxu0 0.0
    %2155 = vmatpush1.msra.mxu0 0.0
    %2156 = vmatprep.subr.mxu0 0.0
    %2157 = vmatpush1.msra.mxu0 0.0
    %2158 = vmatprep.subr.mxu0 0.0
    %2159 = vmatpush1.msra.mxu0 0.0
    %2160 = vmatprep.subr.mxu0 0.0
    %2161 = vmatpush1.msra.mxu0 0.0
    %2162 = vmatprep.subr.mxu0 0.0
    %2163 = vmatpush1.msra.mxu0 0.0
    %2164 = vmatprep.subr.mxu0 0.0
    %2165 = vmatpush1.msra.mxu0 0.0
    %2166 = vmatprep.subr.mxu0 0.0
    %2167 = vmatpush1.msra.mxu0 0.0
    %2168 = vmatprep.subr.mxu0 0.0
    %2169 = vmatpush1.msra.mxu0 0.0
    %2170 = vmatprep.subr.mxu0 0.0
    %2171 = vmatpush1.msra.mxu0 0.0
    %2172 = vmatprep.subr.mxu0 0.0
    %2173 = vmatpush1.msra.mxu0 %v2108
    %2174 = vmatprep.subr.mxu0 0.0
    %2175 = vmatpush2.msra.mxu0 0.0
    %2176 = vmatprep.subr.mxu0 0.0
    %2177 = vmatpush2.msra.mxu0 0.0
    %2178 = vmatprep.subr.mxu0 0.0
    %2179 = vmatpush2.msra.mxu0 0.0
    %2180 = vmatprep.subr.mxu0 0.0
    %2181 = vmatpush2.msra.mxu0 0.0
    %2182 = vmatprep.subr.mxu0 0.0
    %2183 = vmatpush2.msra.mxu0 0.0
    %2184 = vmatprep.subr.mxu0 0.0
    %2185 = vmatpush2.msra.mxu0 0.0
    %2186 = vmatprep.subr.mxu0 0.0
    %2187 = vmatpush2.msra.mxu0 0.0
    %2188 = vmatprep.subr.mxu0 0.0
    %2189 = vmatpush2.msra.mxu0 0.0
    %2190 = vmatprep.subr.mxu0 0.0
    %2191 = vmatpush2.msra.mxu0 0.0
    %2192 = vmatprep.subr.mxu0 0.0
    %2193 = vmatpush2.msra.mxu0 0.0
    %2194 = vmatprep.subr.mxu0 0.0
    %2195 = vmatpush2.msra.mxu0 0.0
    %2196 = vmatprep.subr.mxu0 0.0
    %2197 = vmatpush2.msra.mxu0 0.0
    %2198 = vmatprep.subr.mxu0 0.0
    %2199 = vmatpush2.msra.mxu0 0.0
    %2200 = vmatprep.subr.mxu0 0.0
    %2201 = vmatpush2.msra.mxu0 0.0
    %2202 = vmatprep.subr.mxu0 0.0
    %2203 = vmatpush2.msra.mxu0 0.0
    %2204 = vmatprep.subr.mxu0 0.0
    %2205 = vmatpush2.msra.mxu0 0.0
    %2206 = vmatprep.mubr.f32.mxu0 0.0
    %2207 = vmatmul.mubr.f32.gmra.mxu0 %v2110
    %v2208 = vpop.f32.mrf.mxu0
    %v2209 = vadd.f32 0.0, %v2208
    %v2210 = vpop.f32.mrf.mxu0
    %2211 = vmatprep.mubr.f32.mxu0 0.0
    %2212 = vmatmul.mubr.f32.gmra.mxu0 %v2113
    %v2213 = vpop.f32.mrf.mxu0
    %v2214 = vadd.f32 0.0, %v2213
    %v2215 = vpop.f32.mrf.mxu0
    %2216 = vmatprep.mubr.f32.mxu0 0.0
    %2217 = vmatmul.mubr.f32.gmra.mxu0 %v2116
    %v2218 = vpop.f32.mrf.mxu0
    %v2219 = vadd.f32 0.0, %v2218
    %v2220 = vpop.f32.mrf.mxu0
    %2221 = vmatprep.mubr.f32.mxu0 0.0
    %2222 = vmatmul.mubr.f32.gmra.mxu0 %v2119
    %v2223 = vpop.f32.mrf.mxu0
    %v2224 = vadd.f32 0.0, %v2223
    %v2225 = vpop.f32.mrf.mxu0
    %2226 = vmatprep.mubr.f32.mxu0 0.0
    %2227 = vmatmul.mubr.f32.gmra.mxu0 %v2122
    %v2228 = vpop.f32.mrf.mxu0
    %v2229 = vadd.f32 0.0, %v2228
    %v2230 = vpop.f32.mrf.mxu0
    %2231 = vmatprep.mubr.f32.mxu0 0.0
    %2232 = vmatmul.mubr.f32.gmra.mxu0 %v2125
    %v2233 = vpop.f32.mrf.mxu0
    %v2234 = vadd.f32 0.0, %v2233
    %v2235 = vpop.f32.mrf.mxu0
    %2236 = vmatprep.mubr.f32.mxu0 0.0
    %2237 = vmatmul.mubr.f32.gmra.mxu0 %v2128
    %v2238 = vpop.f32.mrf.mxu0
    %v2239 = vadd.f32 0.0, %v2238
    %v2240 = vpop.f32.mrf.mxu0
    %2241 = vmatprep.mubr.f32.mxu0 0.0
    %2242 = vmatmul.mubr.f32.gmra.mxu0 %v2131
    %v2243 = vpop.f32.mrf.mxu0
    %v2244 = vadd.f32 0.0, %v2243
    %v2245 = vpop.f32.mrf.mxu0
    %2246 = vmatprep.mubr.f32.mxu0 0.0
    %2247 = vmatmul.mubr.f32.gmra.mxu0 %v2134
    %v2248 = vpop.f32.mrf.mxu0
    %v2249 = vadd.f32 0.0, %v2248
    %v2250 = vpop.f32.mrf.mxu0
    %2251 = vmatprep.mubr.f32.mxu0 0.0
    %2252 = vmatmul.mubr.f32.gmra.mxu0 %v2137
    %v2253 = vpop.f32.mrf.mxu0
    %v2254 = vadd.f32 0.0, %v2253
    %v2255 = vpop.f32.mrf.mxu0
    %2256 = vmatprep.mubr.f32.mxu0 0.0
    %2257 = vmatmul.mubr.f32.gmra.mxu0 %v2140
    %v2258 = vpop.f32.mrf.mxu0
    %v2259 = vadd.f32 0.0, %v2258
    %v2260 = vpop.f32.mrf.mxu0
    %2261 = vdwg.mxu0
    %v2262 = vadd.f32 %v2096, %v2209
    %v2263 = vadd.f32 %v2097, %v2214
    %v2264 = vadd.f32 %v2098, %v2219
    %v2265 = vadd.f32 %v2099, %v2224
    %v2266 = vadd.f32 %v2100, %v2229
    %v2267 = vadd.f32 %v2101, %v2234
    %v2268 = vadd.f32 %v2102, %v2239
    %v2269 = vadd.f32 %v2103, %v2244
    %v2270 = vadd.f32 %v2104, %v2249
    %v2271 = vadd.f32 %v2105, %v2254
    %v2272 = vadd.f32 %v2106, %v2259
    %s2273 = scalar_lea.vmem [#allocation2], 64
    %v2274 = vld [vmem:[%s2273] sm:$0xff]
    %v2276 = vsel %vm970, %v914, 0
    %v2279 = vsel %vm970, %v919, 0
    %v2282 = vsel %vm970, %v924, 0
    %v2285 = vsel %vm970, %v929, 0
    %v2288 = vsel %vm970, %v934, 0
    %v2291 = vsel %vm970, %v939, 0
    %v2294 = vsel %vm970, %v944, 0
    %v2297 = vsel %vm970, %v949, 0
    %v2300 = vsel %vm970, %v954, 0
    %v2303 = vsel %vm970, %v959, 0
    %v2306 = vsel %vm970, %v964, 0
    %2308 = vmatprep.subr.mxu0 0.0
    %2309 = vmatpush1.msra.mxu0 0.0
    %2310 = vmatprep.subr.mxu0 0.0
    %2311 = vmatpush1.msra.mxu0 0.0
    %2312 = vmatprep.subr.mxu0 0.0
    %2313 = vmatpush1.msra.mxu0 0.0
    %2314 = vmatprep.subr.mxu0 0.0
    %2315 = vmatpush1.msra.mxu0 0.0
    %2316 = vmatprep.subr.mxu0 0.0
    %2317 = vmatpush1.msra.mxu0 0.0
    %2318 = vmatprep.subr.mxu0 0.0
    %2319 = vmatpush1.msra.mxu0 0.0
    %2320 = vmatprep.subr.mxu0 0.0
    %2321 = vmatpush1.msra.mxu0 0.0
    %2322 = vmatprep.subr.mxu0 0.0
    %2323 = vmatpush1.msra.mxu0 0.0
    %2324 = vmatprep.subr.mxu0 0.0
    %2325 = vmatpush1.msra.mxu0 0.0
    %2326 = vmatprep.subr.mxu0 0.0
    %2327 = vmatpush1.msra.mxu0 0.0
    %2328 = vmatprep.subr.mxu0 0.0
    %2329 = vmatpush1.msra.mxu0 0.0
    %2330 = vmatprep.subr.mxu0 0.0
    %2331 = vmatpush1.msra.mxu0 0.0
    %2332 = vmatprep.subr.mxu0 0.0
    %2333 = vmatpush1.msra.mxu0 0.0
    %2334 = vmatprep.subr.mxu0 0.0
    %2335 = vmatpush1.msra.mxu0 0.0
    %2336 = vmatprep.subr.mxu0 0.0
    %2337 = vmatpush1.msra.mxu0 0.0
    %2338 = vmatprep.subr.mxu0 0.0
    %2339 = vmatpush1.msra.mxu0 %v2274
    %2340 = vmatprep.subr.mxu0 0.0
    %2341 = vmatpush2.msra.mxu0 0.0
    %2342 = vmatprep.subr.mxu0 0.0
    %2343 = vmatpush2.msra.mxu0 0.0
    %2344 = vmatprep.subr.mxu0 0.0
    %2345 = vmatpush2.msra.mxu0 0.0
    %2346 = vmatprep.subr.mxu0 0.0
    %2347 = vmatpush2.msra.mxu0 0.0
    %2348 = vmatprep.subr.mxu0 0.0
    %2349 = vmatpush2.msra.mxu0 0.0
    %2350 = vmatprep.subr.mxu0 0.0
    %2351 = vmatpush2.msra.mxu0 0.0
    %2352 = vmatprep.subr.mxu0 0.0
    %2353 = vmatpush2.msra.mxu0 0.0
    %2354 = vmatprep.subr.mxu0 0.0
    %2355 = vmatpush2.msra.mxu0 0.0
    %2356 = vmatprep.subr.mxu0 0.0
    %2357 = vmatpush2.msra.mxu0 0.0
    %2358 = vmatprep.subr.mxu0 0.0
    %2359 = vmatpush2.msra.mxu0 0.0
    %2360 = vmatprep.subr.mxu0 0.0
    %2361 = vmatpush2.msra.mxu0 0.0
    %2362 = vmatprep.subr.mxu0 0.0
    %2363 = vmatpush2.msra.mxu0 0.0
    %2364 = vmatprep.subr.mxu0 0.0
    %2365 = vmatpush2.msra.mxu0 0.0
    %2366 = vmatprep.subr.mxu0 0.0
    %2367 = vmatpush2.msra.mxu0 0.0
    %2368 = vmatprep.subr.mxu0 0.0
    %2369 = vmatpush2.msra.mxu0 0.0
    %2370 = vmatprep.subr.mxu0 0.0
    %2371 = vmatpush2.msra.mxu0 0.0
    %2372 = vmatprep.mubr.f32.mxu0 0.0
    %2373 = vmatmul.mubr.f32.gmra.mxu0 %v2276
    %v2374 = vpop.f32.mrf.mxu0
    %v2375 = vadd.f32 0.0, %v2374
    %v2376 = vpop.f32.mrf.mxu0
    %2377 = vmatprep.mubr.f32.mxu0 0.0
    %2378 = vmatmul.mubr.f32.gmra.mxu0 %v2279
    %v2379 = vpop.f32.mrf.mxu0
    %v2380 = vadd.f32 0.0, %v2379
    %v2381 = vpop.f32.mrf.mxu0
    %2382 = vmatprep.mubr.f32.mxu0 0.0
    %2383 = vmatmul.mubr.f32.gmra.mxu0 %v2282
    %v2384 = vpop.f32.mrf.mxu0
    %v2385 = vadd.f32 0.0, %v2384
    %v2386 = vpop.f32.mrf.mxu0
    %2387 = vmatprep.mubr.f32.mxu0 0.0
    %2388 = vmatmul.mubr.f32.gmra.mxu0 %v2285
    %v2389 = vpop.f32.mrf.mxu0
    %v2390 = vadd.f32 0.0, %v2389
    %v2391 = vpop.f32.mrf.mxu0
    %2392 = vmatprep.mubr.f32.mxu0 0.0
    %2393 = vmatmul.mubr.f32.gmra.mxu0 %v2288
    %v2394 = vpop.f32.mrf.mxu0
    %v2395 = vadd.f32 0.0, %v2394
    %v2396 = vpop.f32.mrf.mxu0
    %2397 = vmatprep.mubr.f32.mxu0 0.0
    %2398 = vmatmul.mubr.f32.gmra.mxu0 %v2291
    %v2399 = vpop.f32.mrf.mxu0
    %v2400 = vadd.f32 0.0, %v2399
    %v2401 = vpop.f32.mrf.mxu0
    %2402 = vmatprep.mubr.f32.mxu0 0.0
    %2403 = vmatmul.mubr.f32.gmra.mxu0 %v2294
    %v2404 = vpop.f32.mrf.mxu0
    %v2405 = vadd.f32 0.0, %v2404
    %v2406 = vpop.f32.mrf.mxu0
    %2407 = vmatprep.mubr.f32.mxu0 0.0
    %2408 = vmatmul.mubr.f32.gmra.mxu0 %v2297
    %v2409 = vpop.f32.mrf.mxu0
    %v2410 = vadd.f32 0.0, %v2409
    %v2411 = vpop.f32.mrf.mxu0
    %2412 = vmatprep.mubr.f32.mxu0 0.0
    %2413 = vmatmul.mubr.f32.gmra.mxu0 %v2300
    %v2414 = vpop.f32.mrf.mxu0
    %v2415 = vadd.f32 0.0, %v2414
    %v2416 = vpop.f32.mrf.mxu0
    %2417 = vmatprep.mubr.f32.mxu0 0.0
    %2418 = vmatmul.mubr.f32.gmra.mxu0 %v2303
    %v2419 = vpop.f32.mrf.mxu0
    %v2420 = vadd.f32 0.0, %v2419
    %v2421 = vpop.f32.mrf.mxu0
    %2422 = vmatprep.mubr.f32.mxu0 0.0
    %2423 = vmatmul.mubr.f32.gmra.mxu0 %v2306
    %v2424 = vpop.f32.mrf.mxu0
    %v2425 = vadd.f32 0.0, %v2424
    %v2426 = vpop.f32.mrf.mxu0
    %2427 = vdwg.mxu0
    %v2428 = vadd.f32 %v2262, %v2375
    %v2429 = vadd.f32 %v2263, %v2380
    %v2430 = vadd.f32 %v2264, %v2385
    %v2431 = vadd.f32 %v2265, %v2390
    %v2432 = vadd.f32 %v2266, %v2395
    %v2433 = vadd.f32 %v2267, %v2400
    %v2434 = vadd.f32 %v2268, %v2405
    %v2435 = vadd.f32 %v2269, %v2410
    %v2436 = vadd.f32 %v2270, %v2415
    %v2437 = vadd.f32 %v2271, %v2420
    %v2438 = vadd.f32 %v2272, %v2425
    %v2439 = vld [vmem:[#allocation4] sm:$0x1]
    %v2441 = vlaneseq
    %v2442 = vshrl.u32 %v2441, 7
    %v2443 = vsub.s32 0, %v2442
    %v2444 = vrot.slane %v2439, %v2443
    %v2446 = vadd.f32 %v2428, %v2444
    %v2447 = vadd.f32 %v2429, %v2444
    %v2448 = vadd.f32 %v2430, %v2444
    %v2449 = vadd.f32 %v2431, %v2444
    %v2450 = vadd.f32 %v2432, %v2444
    %v2451 = vadd.f32 %v2433, %v2444
    %v2452 = vadd.f32 %v2434, %v2444
    %v2453 = vadd.f32 %v2435, %v2444
    %v2454 = vadd.f32 %v2436, %v2444
    %v2455 = vadd.f32 %v2437, %v2444
    %v2456 = vadd.f32 %v2438, %v2444
    %v2457 = vmax.f32 %v2446, 0.0
    %v2458 = vmax.f32 %v2447, 0.0
    %v2459 = vmax.f32 %v2448, 0.0
    %v2460 = vmax.f32 %v2449, 0.0
    %v2461 = vmax.f32 %v2450, 0.0
    %v2462 = vmax.f32 %v2451, 0.0
    %v2463 = vmax.f32 %v2452, 0.0
    %v2464 = vmax.f32 %v2453, 0.0
    %v2465 = vmax.f32 %v2454, 0.0
    %v2466 = vmax.f32 %v2455, 0.0
    %v2467 = vmax.f32 %v2456, 0.0
    %v2468 = vld [vmem:[%s4] sm:$0xff]
    %v2469 = vld [vmem:[%s4 + $0x8] sm:$0xff]
    %v2470 = vld [vmem:[%s4 + $0x10] sm:$0xff]
    %v2471 = vld [vmem:[%s4 + $0x18] sm:$0xff]
    %v2472 = vld [vmem:[%s4 + $0x20] sm:$0xff]
    %v2473 = vld [vmem:[%s4 + $0x28] sm:$0xff]
    %v2474 = vld [vmem:[%s4 + $0x30] sm:$0xff]
    %v2475 = vld [vmem:[%s4 + $0x38] sm:$0xff]
    %v2476 = vld [vmem:[%s4 + $0x40] sm:$0xff]
    %v2477 = vld [vmem:[%s4 + $0x48] sm:$0xff]
    %v2478 = vld [vmem:[%s4 + $0x50] sm:$0xff]
    %v2479 = vld [vmem:[%s4 + $0x58] sm:$0xff]
    %v2480 = vld [vmem:[%s4 + $0x60] sm:$0xff]
    %v2481 = vld [vmem:[%s4 + $0x68] sm:$0xff]
    %v2482 = vld [vmem:[%s4 + $0x70] sm:$0xff]
    %v2483 = vld [vmem:[%s4 + $0x78] sm:$0xff]
    %v2484 = vld [vmem:[%s4 + $0x80] sm:$0xff]
    %v2485 = vld [vmem:[%s4 + $0x88] sm:$0xff]
    %v2486 = vld [vmem:[%s4 + $0x90] sm:$0xff]
    %v2487 = vld [vmem:[%s4 + $0x98] sm:$0xff]
    %v2488 = vld [vmem:[%s4 + $0xa0] sm:$0xff]
    %v2489 = vld [vmem:[%s4 + $0xa8] sm:$0xff]
    %v2490 = vld [vmem:[%s4 + $0xb0] sm:$0xff]
    %v2491 = vld [vmem:[%s4 + $0xb8] sm:$0xff]
    %v2492 = vld [vmem:[%s4 + $0xc0] sm:$0xff]
    %v2493 = vld [vmem:[%s4 + $0xc8] sm:$0xff]
    %v2494 = vld [vmem:[%s4 + $0xd0] sm:$0xff]
    %v2495 = vld [vmem:[%s4 + $0xd8] sm:$0xff]
    %v2496 = vld [vmem:[%s4 + $0xe0] sm:$0xff]
    %v2497 = vld [vmem:[%s4 + $0xe8] sm:$0xff]
    %v2498 = vld [vmem:[%s4 + $0xf0] sm:$0xff]
    %v2499 = vld [vmem:[%s4 + $0xf8] sm:$0xff]
    %v2500 = vld [vmem:[%s4 + $0x100] sm:$0xff]
    %v2501 = vld [vmem:[%s4 + $0x108] sm:$0xff]
    %v2502 = vld [vmem:[%s4 + $0x110] sm:$0xff]
    %v2503 = vld [vmem:[%s4 + $0x118] sm:$0xff]
    %v2504 = vld [vmem:[%s4 + $0x120] sm:$0xff]
    %v2505 = vld [vmem:[%s4 + $0x128] sm:$0xff]
    %v2506 = vld [vmem:[%s4 + $0x130] sm:$0xff]
    %v2507 = vld [vmem:[%s4 + $0x138] sm:$0xff]
    %v2508 = vld [vmem:[%s4 + $0x140] sm:$0xff]
    %v2509 = vld [vmem:[%s4 + $0x148] sm:$0xff]
    %v2510 = vld [vmem:[%s4 + $0x150] sm:$0xff]
    %v2511 = vld [vmem:[%s4 + $0x158] sm:$0xff]
    %v2512 = vld [vmem:[%s4 + $0x160] sm:$0xff]
    %vm2513 = vcmask 719872
    %v2515 = vsel %vm2513, %v2468, 0
    %v2518 = vsel %vm2513, %v2469, 0
    %v2521 = vsel %vm2513, %v2470, 0
    %v2524 = vsel %vm2513, %v2471, 0
    %v2527 = vsel %vm2513, %v2472, 0
    %v2530 = vsel %vm2513, %v2473, 0
    %v2533 = vsel %vm2513, %v2474, 0
    %v2536 = vsel %vm2513, %v2475, 0
    %v2539 = vsel %vm2513, %v2476, 0
    %v2542 = vsel %vm2513, %v2477, 0
    %v2545 = vsel %vm2513, %v2478, 0
    %v2548 = vsel %vm2513, %v2479, 0
    %v2551 = vsel %vm2513, %v2480, 0
    %v2554 = vsel %vm2513, %v2481, 0
    %v2557 = vsel %vm2513, %v2482, 0
    %v2560 = vsel %vm2513, %v2483, 0
    %v2563 = vsel %vm2513, %v2484, 0
    %v2566 = vsel %vm2513, %v2485, 0
    %v2569 = vsel %vm2513, %v2486, 0
    %v2572 = vsel %vm2513, %v2487, 0
    %v2575 = vsel %vm2513, %v2488, 0
    %v2578 = vsel %vm2513, %v2489, 0
    %v2581 = vsel %vm2513, %v2490, 0
    %v2584 = vsel %vm2513, %v2491, 0
    %v2587 = vsel %vm2513, %v2492, 0
    %v2590 = vsel %vm2513, %v2493, 0
    %v2593 = vsel %vm2513, %v2494, 0
    %v2596 = vsel %vm2513, %v2495, 0
    %v2599 = vsel %vm2513, %v2496, 0
    %v2602 = vsel %vm2513, %v2497, 0
    %v2605 = vsel %vm2513, %v2498, 0
    %v2608 = vsel %vm2513, %v2499, 0
    %v2611 = vsel %vm2513, %v2500, 0
    %v2614 = vsel %vm2513, %v2501, 0
    %v2617 = vsel %vm2513, %v2502, 0
    %v2620 = vsel %vm2513, %v2503, 0
    %v2623 = vsel %vm2513, %v2504, 0
    %v2626 = vsel %vm2513, %v2505, 0
    %v2629 = vsel %vm2513, %v2506, 0
    %v2632 = vsel %vm2513, %v2507, 0
    %v2635 = vsel %vm2513, %v2508, 0
    %v2638 = vsel %vm2513, %v2509, 0
    %v2641 = vsel %vm2513, %v2510, 0
    %v2644 = vsel %vm2513, %v2511, 0
    %v2647 = vsel %vm2513, %v2512, 0
    %2649 = vmatprep.subr.mxu0 0.0
    %2650 = vmatpush1.msra.mxu0 0.0
    %2651 = vmatprep.subr.mxu0 0.0
    %2652 = vmatpush1.msra.mxu0 0.0
    %2653 = vmatprep.subr.mxu0 0.0
    %2654 = vmatpush1.msra.mxu0 0.0
    %2655 = vmatprep.subr.mxu0 0.0
    %2656 = vmatpush1.msra.mxu0 0.0
    %2657 = vmatprep.subr.mxu0 0.0
    %2658 = vmatpush1.msra.mxu0 0.0
    %2659 = vmatprep.subr.mxu0 0.0
    %2660 = vmatpush1.msra.mxu0 %v2467
    %2661 = vmatprep.subr.mxu0 0.0
    %2662 = vmatpush1.msra.mxu0 %v2466
    %2663 = vmatprep.subr.mxu0 0.0
    %2664 = vmatpush1.msra.mxu0 %v2465
    %2665 = vmatprep.subr.mxu0 0.0
    %2666 = vmatpush1.msra.mxu0 %v2464
    %2667 = vmatprep.subr.mxu0 0.0
    %2668 = vmatpush1.msra.mxu0 %v2463
    %2669 = vmatprep.subr.mxu0 0.0
    %2670 = vmatpush1.msra.mxu0 %v2462
    %2671 = vmatprep.subr.mxu0 0.0
    %2672 = vmatpush1.msra.mxu0 %v2461
    %2673 = vmatprep.subr.mxu0 0.0
    %2674 = vmatpush1.msra.mxu0 %v2460
    %2675 = vmatprep.subr.mxu0 0.0
    %2676 = vmatpush1.msra.mxu0 %v2459
    %2677 = vmatprep.subr.mxu0 0.0
    %2678 = vmatpush1.msra.mxu0 %v2458
    %2679 = vmatprep.subr.mxu0 0.0
    %2680 = vmatpush1.msra.mxu0 %v2457
    %2681 = vmatprep.subr.mxu0 0.0
    %2682 = vmatpush2.msra.mxu0 0.0
    %2683 = vmatprep.subr.mxu0 0.0
    %2684 = vmatpush2.msra.mxu0 0.0
    %2685 = vmatprep.subr.mxu0 0.0
    %2686 = vmatpush2.msra.mxu0 0.0
    %2687 = vmatprep.subr.mxu0 0.0
    %2688 = vmatpush2.msra.mxu0 0.0
    %2689 = vmatprep.subr.mxu0 0.0
    %2690 = vmatpush2.msra.mxu0 0.0
    %2691 = vmatprep.subr.mxu0 0.0
    %2692 = vmatpush2.msra.mxu0 0.0
    %2693 = vmatprep.subr.mxu0 0.0
    %2694 = vmatpush2.msra.mxu0 0.0
    %2695 = vmatprep.subr.mxu0 0.0
    %2696 = vmatpush2.msra.mxu0 0.0
    %2697 = vmatprep.subr.mxu0 0.0
    %2698 = vmatpush2.msra.mxu0 0.0
    %2699 = vmatprep.subr.mxu0 0.0
    %2700 = vmatpush2.msra.mxu0 0.0
    %2701 = vmatprep.subr.mxu0 0.0
    %2702 = vmatpush2.msra.mxu0 0.0
    %2703 = vmatprep.subr.mxu0 0.0
    %2704 = vmatpush2.msra.mxu0 0.0
    %2705 = vmatprep.subr.mxu0 0.0
    %2706 = vmatpush2.msra.mxu0 0.0
    %2707 = vmatprep.subr.mxu0 0.0
    %2708 = vmatpush2.msra.mxu0 0.0
    %2709 = vmatprep.subr.mxu0 0.0
    %2710 = vmatpush2.msra.mxu0 0.0
    %2711 = vmatprep.subr.mxu0 0.0
    %2712 = vmatpush2.msra.mxu0 0.0
    %2713 = vmatprep.mubr.f32.mxu0 0.0
    %2714 = vmatmul.mubr.f32.gmra.mxu0 %v2515
    %v2715 = vpop.f32.mrf.mxu0
    %v2716 = vadd.f32 0.0, %v2715
    %v2717 = vpop.f32.mrf.mxu0
    %2718 = vmatprep.mubr.f32.mxu0 0.0
    %2719 = vmatmul.mubr.f32.gmra.mxu0 %v2518
    %v2720 = vpop.f32.mrf.mxu0
    %v2721 = vadd.f32 0.0, %v2720
    %v2722 = vpop.f32.mrf.mxu0
    %2723 = vmatprep.mubr.f32.mxu0 0.0
    %2724 = vmatmul.mubr.f32.gmra.mxu0 %v2521
    %v2725 = vpop.f32.mrf.mxu0
    %v2726 = vadd.f32 0.0, %v2725
    %v2727 = vpop.f32.mrf.mxu0
    %2728 = vmatprep.mubr.f32.mxu0 0.0
    %2729 = vmatmul.mubr.f32.gmra.mxu0 %v2524
    %v2730 = vpop.f32.mrf.mxu0
    %v2731 = vadd.f32 0.0, %v2730
    %v2732 = vpop.f32.mrf.mxu0
    %2733 = vmatprep.mubr.f32.mxu0 0.0
    %2734 = vmatmul.mubr.f32.gmra.mxu0 %v2527
    %v2735 = vpop.f32.mrf.mxu0
    %v2736 = vadd.f32 0.0, %v2735
    %v2737 = vpop.f32.mrf.mxu0
    %2738 = vmatprep.mubr.f32.mxu0 0.0
    %2739 = vmatmul.mubr.f32.gmra.mxu0 %v2530
    %v2740 = vpop.f32.mrf.mxu0
    %v2741 = vadd.f32 0.0, %v2740
    %v2742 = vpop.f32.mrf.mxu0
    %2743 = vmatprep.mubr.f32.mxu0 0.0
    %2744 = vmatmul.mubr.f32.gmra.mxu0 %v2533
    %v2745 = vpop.f32.mrf.mxu0
    %v2746 = vadd.f32 0.0, %v2745
    %v2747 = vpop.f32.mrf.mxu0
    %2748 = vmatprep.mubr.f32.mxu0 0.0
    %2749 = vmatmul.mubr.f32.gmra.mxu0 %v2536
    %v2750 = vpop.f32.mrf.mxu0
    %v2751 = vadd.f32 0.0, %v2750
    %v2752 = vpop.f32.mrf.mxu0
    %2753 = vmatprep.mubr.f32.mxu0 0.0
    %2754 = vmatmul.mubr.f32.gmra.mxu0 %v2539
    %v2755 = vpop.f32.mrf.mxu0
    %v2756 = vadd.f32 0.0, %v2755
    %v2757 = vpop.f32.mrf.mxu0
    %2758 = vmatprep.mubr.f32.mxu0 0.0
    %2759 = vmatmul.mubr.f32.gmra.mxu0 %v2542
    %v2760 = vpop.f32.mrf.mxu0
    %v2761 = vadd.f32 0.0, %v2760
    %v2762 = vpop.f32.mrf.mxu0
    %2763 = vmatprep.mubr.f32.mxu0 0.0
    %2764 = vmatmul.mubr.f32.gmra.mxu0 %v2545
    %v2765 = vpop.f32.mrf.mxu0
    %v2766 = vadd.f32 0.0, %v2765
    %v2767 = vpop.f32.mrf.mxu0
    %2768 = vmatprep.mubr.f32.mxu0 0.0
    %2769 = vmatmul.mubr.f32.gmra.mxu0 %v2548
    %v2770 = vpop.f32.mrf.mxu0
    %v2771 = vadd.f32 0.0, %v2770
    %v2772 = vpop.f32.mrf.mxu0
    %2773 = vmatprep.mubr.f32.mxu0 0.0
    %2774 = vmatmul.mubr.f32.gmra.mxu0 %v2551
    %v2775 = vpop.f32.mrf.mxu0
    %v2776 = vadd.f32 0.0, %v2775
    %v2777 = vpop.f32.mrf.mxu0
    %2778 = vmatprep.mubr.f32.mxu0 0.0
    %2779 = vmatmul.mubr.f32.gmra.mxu0 %v2554
    %v2780 = vpop.f32.mrf.mxu0
    %v2781 = vadd.f32 0.0, %v2780
    %v2782 = vpop.f32.mrf.mxu0
    %2783 = vmatprep.mubr.f32.mxu0 0.0
    %2784 = vmatmul.mubr.f32.gmra.mxu0 %v2557
    %v2785 = vpop.f32.mrf.mxu0
    %v2786 = vadd.f32 0.0, %v2785
    %v2787 = vpop.f32.mrf.mxu0
    %2788 = vmatprep.mubr.f32.mxu0 0.0
    %2789 = vmatmul.mubr.f32.gmra.mxu0 %v2560
    %v2790 = vpop.f32.mrf.mxu0
    %v2791 = vadd.f32 0.0, %v2790
    %v2792 = vpop.f32.mrf.mxu0
    %2793 = vmatprep.mubr.f32.mxu0 0.0
    %2794 = vmatmul.mubr.f32.gmra.mxu0 %v2563
    %v2795 = vpop.f32.mrf.mxu0
    %v2796 = vadd.f32 0.0, %v2795
    %v2797 = vpop.f32.mrf.mxu0
    %2798 = vmatprep.mubr.f32.mxu0 0.0
    %2799 = vmatmul.mubr.f32.gmra.mxu0 %v2566
    %v2800 = vpop.f32.mrf.mxu0
    %v2801 = vadd.f32 0.0, %v2800
    %v2802 = vpop.f32.mrf.mxu0
    %2803 = vmatprep.mubr.f32.mxu0 0.0
    %2804 = vmatmul.mubr.f32.gmra.mxu0 %v2569
    %v2805 = vpop.f32.mrf.mxu0
    %v2806 = vadd.f32 0.0, %v2805
    %v2807 = vpop.f32.mrf.mxu0
    %2808 = vmatprep.mubr.f32.mxu0 0.0
    %2809 = vmatmul.mubr.f32.gmra.mxu0 %v2572
    %v2810 = vpop.f32.mrf.mxu0
    %v2811 = vadd.f32 0.0, %v2810
    %v2812 = vpop.f32.mrf.mxu0
    %2813 = vmatprep.mubr.f32.mxu0 0.0
    %2814 = vmatmul.mubr.f32.gmra.mxu0 %v2575
    %v2815 = vpop.f32.mrf.mxu0
    %v2816 = vadd.f32 0.0, %v2815
    %v2817 = vpop.f32.mrf.mxu0
    %2818 = vmatprep.mubr.f32.mxu0 0.0
    %2819 = vmatmul.mubr.f32.gmra.mxu0 %v2578
    %v2820 = vpop.f32.mrf.mxu0
    %v2821 = vadd.f32 0.0, %v2820
    %v2822 = vpop.f32.mrf.mxu0
    %2823 = vmatprep.mubr.f32.mxu0 0.0
    %2824 = vmatmul.mubr.f32.gmra.mxu0 %v2581
    %v2825 = vpop.f32.mrf.mxu0
    %v2826 = vadd.f32 0.0, %v2825
    %v2827 = vpop.f32.mrf.mxu0
    %2828 = vmatprep.mubr.f32.mxu0 0.0
    %2829 = vmatmul.mubr.f32.gmra.mxu0 %v2584
    %v2830 = vpop.f32.mrf.mxu0
    %v2831 = vadd.f32 0.0, %v2830
    %v2832 = vpop.f32.mrf.mxu0
    %2833 = vmatprep.mubr.f32.mxu0 0.0
    %2834 = vmatmul.mubr.f32.gmra.mxu0 %v2587
    %v2835 = vpop.f32.mrf.mxu0
    %v2836 = vadd.f32 0.0, %v2835
    %v2837 = vpop.f32.mrf.mxu0
    %2838 = vmatprep.mubr.f32.mxu0 0.0
    %2839 = vmatmul.mubr.f32.gmra.mxu0 %v2590
    %v2840 = vpop.f32.mrf.mxu0
    %v2841 = vadd.f32 0.0, %v2840
    %v2842 = vpop.f32.mrf.mxu0
    %2843 = vmatprep.mubr.f32.mxu0 0.0
    %2844 = vmatmul.mubr.f32.gmra.mxu0 %v2593
    %v2845 = vpop.f32.mrf.mxu0
    %v2846 = vadd.f32 0.0, %v2845
    %v2847 = vpop.f32.mrf.mxu0
    %2848 = vmatprep.mubr.f32.mxu0 0.0
    %2849 = vmatmul.mubr.f32.gmra.mxu0 %v2596
    %v2850 = vpop.f32.mrf.mxu0
    %v2851 = vadd.f32 0.0, %v2850
    %v2852 = vpop.f32.mrf.mxu0
    %2853 = vmatprep.mubr.f32.mxu0 0.0
    %2854 = vmatmul.mubr.f32.gmra.mxu0 %v2599
    %v2855 = vpop.f32.mrf.mxu0
    %v2856 = vadd.f32 0.0, %v2855
    %v2857 = vpop.f32.mrf.mxu0
    %2858 = vmatprep.mubr.f32.mxu0 0.0
    %2859 = vmatmul.mubr.f32.gmra.mxu0 %v2602
    %v2860 = vpop.f32.mrf.mxu0
    %v2861 = vadd.f32 0.0, %v2860
    %v2862 = vpop.f32.mrf.mxu0
    %2863 = vmatprep.mubr.f32.mxu0 0.0
    %2864 = vmatmul.mubr.f32.gmra.mxu0 %v2605
    %v2865 = vpop.f32.mrf.mxu0
    %v2866 = vadd.f32 0.0, %v2865
    %v2867 = vpop.f32.mrf.mxu0
    %2868 = vmatprep.mubr.f32.mxu0 0.0
    %2869 = vmatmul.mubr.f32.gmra.mxu0 %v2608
    %v2870 = vpop.f32.mrf.mxu0
    %v2871 = vadd.f32 0.0, %v2870
    %v2872 = vpop.f32.mrf.mxu0
    %2873 = vmatprep.mubr.f32.mxu0 0.0
    %2874 = vmatmul.mubr.f32.gmra.mxu0 %v2611
    %v2875 = vpop.f32.mrf.mxu0
    %v2876 = vadd.f32 0.0, %v2875
    %v2877 = vpop.f32.mrf.mxu0
    %2878 = vmatprep.mubr.f32.mxu0 0.0
    %2879 = vmatmul.mubr.f32.gmra.mxu0 %v2614
    %v2880 = vpop.f32.mrf.mxu0
    %v2881 = vadd.f32 0.0, %v2880
    %v2882 = vpop.f32.mrf.mxu0
    %2883 = vmatprep.mubr.f32.mxu0 0.0
    %2884 = vmatmul.mubr.f32.gmra.mxu0 %v2617
    %v2885 = vpop.f32.mrf.mxu0
    %v2886 = vadd.f32 0.0, %v2885
    %v2887 = vpop.f32.mrf.mxu0
    %2888 = vmatprep.mubr.f32.mxu0 0.0
    %2889 = vmatmul.mubr.f32.gmra.mxu0 %v2620
    %v2890 = vpop.f32.mrf.mxu0
    %v2891 = vadd.f32 0.0, %v2890
    %v2892 = vpop.f32.mrf.mxu0
    %2893 = vmatprep.mubr.f32.mxu0 0.0
    %2894 = vmatmul.mubr.f32.gmra.mxu0 %v2623
    %v2895 = vpop.f32.mrf.mxu0
    %v2896 = vadd.f32 0.0, %v2895
    %v2897 = vpop.f32.mrf.mxu0
    %2898 = vmatprep.mubr.f32.mxu0 0.0
    %2899 = vmatmul.mubr.f32.gmra.mxu0 %v2626
    %v2900 = vpop.f32.mrf.mxu0
    %v2901 = vadd.f32 0.0, %v2900
    %v2902 = vpop.f32.mrf.mxu0
    %2903 = vmatprep.mubr.f32.mxu0 0.0
    %2904 = vmatmul.mubr.f32.gmra.mxu0 %v2629
    %v2905 = vpop.f32.mrf.mxu0
    %v2906 = vadd.f32 0.0, %v2905
    %v2907 = vpop.f32.mrf.mxu0
    %2908 = vmatprep.mubr.f32.mxu0 0.0
    %2909 = vmatmul.mubr.f32.gmra.mxu0 %v2632
    %v2910 = vpop.f32.mrf.mxu0
    %v2911 = vadd.f32 0.0, %v2910
    %v2912 = vpop.f32.mrf.mxu0
    %2913 = vmatprep.mubr.f32.mxu0 0.0
    %2914 = vmatmul.mubr.f32.gmra.mxu0 %v2635
    %v2915 = vpop.f32.mrf.mxu0
    %v2916 = vadd.f32 0.0, %v2915
    %v2917 = vpop.f32.mrf.mxu0
    %2918 = vmatprep.mubr.f32.mxu0 0.0
    %2919 = vmatmul.mubr.f32.gmra.mxu0 %v2638
    %v2920 = vpop.f32.mrf.mxu0
    %v2921 = vadd.f32 0.0, %v2920
    %v2922 = vpop.f32.mrf.mxu0
    %2923 = vmatprep.mubr.f32.mxu0 0.0
    %2924 = vmatmul.mubr.f32.gmra.mxu0 %v2641
    %v2925 = vpop.f32.mrf.mxu0
    %v2926 = vadd.f32 0.0, %v2925
    %v2927 = vpop.f32.mrf.mxu0
    %2928 = vmatprep.mubr.f32.mxu0 0.0
    %2929 = vmatmul.mubr.f32.gmra.mxu0 %v2644
    %v2930 = vpop.f32.mrf.mxu0
    %v2931 = vadd.f32 0.0, %v2930
    %v2932 = vpop.f32.mrf.mxu0
    %2933 = vmatprep.mubr.f32.mxu0 0.0
    %2934 = vmatmul.mubr.f32.gmra.mxu0 %v2647
    %v2935 = vpop.f32.mrf.mxu0
    %v2936 = vadd.f32 0.0, %v2935
    %v2937 = vpop.f32.mrf.mxu0
    %2938 = vdwg.mxu0
    %v2939 = vld [vmem:[#allocation6] sm:$0xff]
    %v2940 = vld [vmem:[#allocation6 + $0x8] sm:$0xff]
    %v2941 = vld [vmem:[#allocation6 + $0x10] sm:$0xff]
    %v2942 = vld [vmem:[#allocation6 + $0x18] sm:$0xff]
    %s2943 = scalar_lea.vmem [#allocation6], 32
    %v2944 = vld [vmem:[%s2943] sm:$0xff]
    %v2945 = vld [vmem:[%s2943 + $0x8] sm:$0xff]
    %v2946 = vld [vmem:[%s2943 + $0x10] sm:$0xff]
    %v2947 = vld [vmem:[%s2943 + $0x18] sm:$0xff]
    %vm2948 = vcmask 261120
    %v2950 = vsel %vm2948, %v2741, 0
    %v2953 = vsel %vm2948, %v2746, 0
    %v2956 = vsel %vm2948, %v2751, 0
    %v2959 = vsel %vm2948, %v2756, 0
    %v2962 = vsel %vm2948, %v2761, 0
    %2964 = vmatprep.subr.mxu0 0.0
    %2965 = vmatpush1.msra.mxu0 0.0
    %2966 = vmatprep.subr.mxu0 0.0
    %2967 = vmatpush1.msra.mxu0 0.0
    %2968 = vmatprep.subr.mxu0 0.0
    %2969 = vmatpush1.msra.mxu0 0.0
    %2970 = vmatprep.subr.mxu0 0.0
    %2971 = vmatpush1.msra.mxu0 0.0
    %2972 = vmatprep.subr.mxu0 0.0
    %2973 = vmatpush1.msra.mxu0 0.0
    %2974 = vmatprep.subr.mxu0 0.0
    %2975 = vmatpush1.msra.mxu0 0.0
    %2976 = vmatprep.subr.mxu0 0.0
    %2977 = vmatpush1.msra.mxu0 0.0
    %2978 = vmatprep.subr.mxu0 0.0
    %2979 = vmatpush1.msra.mxu0 0.0
    %2980 = vmatprep.subr.mxu0 0.0
    %2981 = vmatpush1.msra.mxu0 0.0
    %2982 = vmatprep.subr.mxu0 0.0
    %2983 = vmatpush1.msra.mxu0 0.0
    %2984 = vmatprep.subr.mxu0 0.0
    %2985 = vmatpush1.msra.mxu0 0.0
    %2986 = vmatprep.subr.mxu0 0.0
    %2987 = vmatpush1.msra.mxu0 0.0
    %2988 = vmatprep.subr.mxu0 0.0
    %2989 = vmatpush1.msra.mxu0 %v2947
    %2990 = vmatprep.subr.mxu0 0.0
    %2991 = vmatpush1.msra.mxu0 %v2946
    %2992 = vmatprep.subr.mxu0 0.0
    %2993 = vmatpush1.msra.mxu0 %v2945
    %2994 = vmatprep.subr.mxu0 0.0
    %2995 = vmatpush1.msra.mxu0 %v2944
    %2996 = vmatprep.subr.mxu0 0.0
    %2997 = vmatpush2.msra.mxu0 0.0
    %2998 = vmatprep.subr.mxu0 0.0
    %2999 = vmatpush2.msra.mxu0 0.0
    %3000 = vmatprep.subr.mxu0 0.0
    %3001 = vmatpush2.msra.mxu0 0.0
    %3002 = vmatprep.subr.mxu0 0.0
    %3003 = vmatpush2.msra.mxu0 0.0
    %3004 = vmatprep.subr.mxu0 0.0
    %3005 = vmatpush2.msra.mxu0 0.0
    %3006 = vmatprep.subr.mxu0 0.0
    %3007 = vmatpush2.msra.mxu0 0.0
    %3008 = vmatprep.subr.mxu0 0.0
    %3009 = vmatpush2.msra.mxu0 0.0
    %3010 = vmatprep.subr.mxu0 0.0
    %3011 = vmatpush2.msra.mxu0 0.0
    %3012 = vmatprep.subr.mxu0 0.0
    %3013 = vmatpush2.msra.mxu0 0.0
    %3014 = vmatprep.subr.mxu0 0.0
    %3015 = vmatpush2.msra.mxu0 0.0
    %3016 = vmatprep.subr.mxu0 0.0
    %3017 = vmatpush2.msra.mxu0 0.0
    %3018 = vmatprep.subr.mxu0 0.0
    %3019 = vmatpush2.msra.mxu0 0.0
    %3020 = vmatprep.subr.mxu0 0.0
    %3021 = vmatpush2.msra.mxu0 0.0
    %3022 = vmatprep.subr.mxu0 0.0
    %3023 = vmatpush2.msra.mxu0 0.0
    %3024 = vmatprep.subr.mxu0 0.0
    %3025 = vmatpush2.msra.mxu0 0.0
    %3026 = vmatprep.subr.mxu0 0.0
    %3027 = vmatpush2.msra.mxu0 0.0
    %3028 = vmatprep.mubr.f32.mxu0 0.0
    %3029 = vmatmul.mubr.f32.gmra.mxu0 %v2950
    %v3030 = vpop.f32.mrf.mxu0
    %v3031 = vadd.f32 0.0, %v3030
    %v3032 = vpop.f32.mrf.mxu0
    %3033 = vmatprep.mubr.f32.mxu0 0.0
    %3034 = vmatmul.mubr.f32.gmra.mxu0 %v2953
    %v3035 = vpop.f32.mrf.mxu0
    %v3036 = vadd.f32 0.0, %v3035
    %v3037 = vpop.f32.mrf.mxu0
    %3038 = vmatprep.mubr.f32.mxu0 0.0
    %3039 = vmatmul.mubr.f32.gmra.mxu0 %v2956
    %v3040 = vpop.f32.mrf.mxu0
    %v3041 = vadd.f32 0.0, %v3040
    %v3042 = vpop.f32.mrf.mxu0
    %3043 = vmatprep.mubr.f32.mxu0 0.0
    %3044 = vmatmul.mubr.f32.gmra.mxu0 %v2959
    %v3045 = vpop.f32.mrf.mxu0
    %v3046 = vadd.f32 0.0, %v3045
    %v3047 = vpop.f32.mrf.mxu0
    %3048 = vmatprep.mubr.f32.mxu0 0.0
    %3049 = vmatmul.mubr.f32.gmra.mxu0 %v2962
    %v3050 = vpop.f32.mrf.mxu0
    %v3051 = vadd.f32 0.0, %v3050
    %v3052 = vpop.f32.mrf.mxu0
    %3053 = vdwg.mxu0
    %v3055 = vsel %vm2948, %v2716, 0
    %v3058 = vsel %vm2948, %v2721, 0
    %v3061 = vsel %vm2948, %v2726, 0
    %v3064 = vsel %vm2948, %v2731, 0
    %v3067 = vsel %vm2948, %v2736, 0
    %3069 = vmatprep.subr.mxu0 0.0
    %3070 = vmatpush1.msra.mxu0 0.0
    %3071 = vmatprep.subr.mxu0 0.0
    %3072 = vmatpush1.msra.mxu0 0.0
    %3073 = vmatprep.subr.mxu0 0.0
    %3074 = vmatpush1.msra.mxu0 0.0
    %3075 = vmatprep.subr.mxu0 0.0
    %3076 = vmatpush1.msra.mxu0 0.0
    %3077 = vmatprep.subr.mxu0 0.0
    %3078 = vmatpush1.msra.mxu0 0.0
    %3079 = vmatprep.subr.mxu0 0.0
    %3080 = vmatpush1.msra.mxu0 0.0
    %3081 = vmatprep.subr.mxu0 0.0
    %3082 = vmatpush1.msra.mxu0 0.0
    %3083 = vmatprep.subr.mxu0 0.0
    %3084 = vmatpush1.msra.mxu0 0.0
    %3085 = vmatprep.subr.mxu0 0.0
    %3086 = vmatpush1.msra.mxu0 0.0
    %3087 = vmatprep.subr.mxu0 0.0
    %3088 = vmatpush1.msra.mxu0 0.0
    %3089 = vmatprep.subr.mxu0 0.0
    %3090 = vmatpush1.msra.mxu0 0.0
    %3091 = vmatprep.subr.mxu0 0.0
    %3092 = vmatpush1.msra.mxu0 0.0
    %3093 = vmatprep.subr.mxu0 0.0
    %3094 = vmatpush1.msra.mxu0 %v2942
    %3095 = vmatprep.subr.mxu0 0.0
    %3096 = vmatpush1.msra.mxu0 %v2941
    %3097 = vmatprep.subr.mxu0 0.0
    %3098 = vmatpush1.msra.mxu0 %v2940
    %3099 = vmatprep.subr.mxu0 0.0
    %3100 = vmatpush1.msra.mxu0 %v2939
    %3101 = vmatprep.subr.mxu0 0.0
    %3102 = vmatpush2.msra.mxu0 0.0
    %3103 = vmatprep.subr.mxu0 0.0
    %3104 = vmatpush2.msra.mxu0 0.0
    %3105 = vmatprep.subr.mxu0 0.0
    %3106 = vmatpush2.msra.mxu0 0.0
    %3107 = vmatprep.subr.mxu0 0.0
    %3108 = vmatpush2.msra.mxu0 0.0
    %3109 = vmatprep.subr.mxu0 0.0
    %3110 = vmatpush2.msra.mxu0 0.0
    %3111 = vmatprep.subr.mxu0 0.0
    %3112 = vmatpush2.msra.mxu0 0.0
    %3113 = vmatprep.subr.mxu0 0.0
    %3114 = vmatpush2.msra.mxu0 0.0
    %3115 = vmatprep.subr.mxu0 0.0
    %3116 = vmatpush2.msra.mxu0 0.0
    %3117 = vmatprep.subr.mxu0 0.0
    %3118 = vmatpush2.msra.mxu0 0.0
    %3119 = vmatprep.subr.mxu0 0.0
    %3120 = vmatpush2.msra.mxu0 0.0
    %3121 = vmatprep.subr.mxu0 0.0
    %3122 = vmatpush2.msra.mxu0 0.0
    %3123 = vmatprep.subr.mxu0 0.0
    %3124 = vmatpush2.msra.mxu0 0.0
    %3125 = vmatprep.subr.mxu0 0.0
    %3126 = vmatpush2.msra.mxu0 0.0
    %3127 = vmatprep.subr.mxu0 0.0
    %3128 = vmatpush2.msra.mxu0 0.0
    %3129 = vmatprep.subr.mxu0 0.0
    %3130 = vmatpush2.msra.mxu0 0.0
    %3131 = vmatprep.subr.mxu0 0.0
    %3132 = vmatpush2.msra.mxu0 0.0
    %3133 = vmatprep.mubr.f32.mxu0 0.0
    %3134 = vmatmul.mubr.f32.gmra.mxu0 %v3055
    %v3135 = vpop.f32.mrf.mxu0
    %v3136 = vadd.f32 %v3031, %v3135
    %v3137 = vpop.f32.mrf.mxu0
    %3138 = vmatprep.mubr.f32.mxu0 0.0
    %3139 = vmatmul.mubr.f32.gmra.mxu0 %v3058
    %v3140 = vpop.f32.mrf.mxu0
    %v3141 = vadd.f32 %v3036, %v3140
    %v3142 = vpop.f32.mrf.mxu0
    %3143 = vmatprep.mubr.f32.mxu0 0.0
    %3144 = vmatmul.mubr.f32.gmra.mxu0 %v3061
    %v3145 = vpop.f32.mrf.mxu0
    %v3146 = vadd.f32 %v3041, %v3145
    %v3147 = vpop.f32.mrf.mxu0
    %3148 = vmatprep.mubr.f32.mxu0 0.0
    %3149 = vmatmul.mubr.f32.gmra.mxu0 %v3064
    %v3150 = vpop.f32.mrf.mxu0
    %v3151 = vadd.f32 %v3046, %v3150
    %v3152 = vpop.f32.mrf.mxu0
    %3153 = vmatprep.mubr.f32.mxu0 0.0
    %3154 = vmatmul.mubr.f32.gmra.mxu0 %v3067
    %v3155 = vpop.f32.mrf.mxu0
    %v3156 = vadd.f32 %v3051, %v3155
    %v3157 = vpop.f32.mrf.mxu0
    %3158 = vdwg.mxu0
    %s3159 = scalar_lea.vmem [#allocation6], 64
    %v3160 = vld [vmem:[%s3159] sm:$0xff]
    %v3161 = vld [vmem:[%s3159 + $0x8] sm:$0xff]
    %v3162 = vld [vmem:[%s3159 + $0x10] sm:$0xff]
    %v3163 = vld [vmem:[%s3159 + $0x18] sm:$0xff]
    %v3165 = vsel %vm2948, %v2766, 0
    %v3168 = vsel %vm2948, %v2771, 0
    %v3171 = vsel %vm2948, %v2776, 0
    %v3174 = vsel %vm2948, %v2781, 0
    %v3177 = vsel %vm2948, %v2786, 0
    %3179 = vmatprep.subr.mxu0 0.0
    %3180 = vmatpush1.msra.mxu0 0.0
    %3181 = vmatprep.subr.mxu0 0.0
    %3182 = vmatpush1.msra.mxu0 0.0
    %3183 = vmatprep.subr.mxu0 0.0
    %3184 = vmatpush1.msra.mxu0 0.0
    %3185 = vmatprep.subr.mxu0 0.0
    %3186 = vmatpush1.msra.mxu0 0.0
    %3187 = vmatprep.subr.mxu0 0.0
    %3188 = vmatpush1.msra.mxu0 0.0
    %3189 = vmatprep.subr.mxu0 0.0
    %3190 = vmatpush1.msra.mxu0 0.0
    %3191 = vmatprep.subr.mxu0 0.0
    %3192 = vmatpush1.msra.mxu0 0.0
    %3193 = vmatprep.subr.mxu0 0.0
    %3194 = vmatpush1.msra.mxu0 0.0
    %3195 = vmatprep.subr.mxu0 0.0
    %3196 = vmatpush1.msra.mxu0 0.0
    %3197 = vmatprep.subr.mxu0 0.0
    %3198 = vmatpush1.msra.mxu0 0.0
    %3199 = vmatprep.subr.mxu0 0.0
    %3200 = vmatpush1.msra.mxu0 0.0
    %3201 = vmatprep.subr.mxu0 0.0
    %3202 = vmatpush1.msra.mxu0 0.0
    %3203 = vmatprep.subr.mxu0 0.0
    %3204 = vmatpush1.msra.mxu0 %v3163
    %3205 = vmatprep.subr.mxu0 0.0
    %3206 = vmatpush1.msra.mxu0 %v3162
    %3207 = vmatprep.subr.mxu0 0.0
    %3208 = vmatpush1.msra.mxu0 %v3161
    %3209 = vmatprep.subr.mxu0 0.0
    %3210 = vmatpush1.msra.mxu0 %v3160
    %3211 = vmatprep.subr.mxu0 0.0
    %3212 = vmatpush2.msra.mxu0 0.0
    %3213 = vmatprep.subr.mxu0 0.0
    %3214 = vmatpush2.msra.mxu0 0.0
    %3215 = vmatprep.subr.mxu0 0.0
    %3216 = vmatpush2.msra.mxu0 0.0
    %3217 = vmatprep.subr.mxu0 0.0
    %3218 = vmatpush2.msra.mxu0 0.0
    %3219 = vmatprep.subr.mxu0 0.0
    %3220 = vmatpush2.msra.mxu0 0.0
    %3221 = vmatprep.subr.mxu0 0.0
    %3222 = vmatpush2.msra.mxu0 0.0
    %3223 = vmatprep.subr.mxu0 0.0
    %3224 = vmatpush2.msra.mxu0 0.0
    %3225 = vmatprep.subr.mxu0 0.0
    %3226 = vmatpush2.msra.mxu0 0.0
    %3227 = vmatprep.subr.mxu0 0.0
    %3228 = vmatpush2.msra.mxu0 0.0
    %3229 = vmatprep.subr.mxu0 0.0
    %3230 = vmatpush2.msra.mxu0 0.0
    %3231 = vmatprep.subr.mxu0 0.0
    %3232 = vmatpush2.msra.mxu0 0.0
    %3233 = vmatprep.subr.mxu0 0.0
    %3234 = vmatpush2.msra.mxu0 0.0
    %3235 = vmatprep.subr.mxu0 0.0
    %3236 = vmatpush2.msra.mxu0 0.0
    %3237 = vmatprep.subr.mxu0 0.0
    %3238 = vmatpush2.msra.mxu0 0.0
    %3239 = vmatprep.subr.mxu0 0.0
    %3240 = vmatpush2.msra.mxu0 0.0
    %3241 = vmatprep.subr.mxu0 0.0
    %3242 = vmatpush2.msra.mxu0 0.0
    %3243 = vmatprep.mubr.f32.mxu0 0.0
    %3244 = vmatmul.mubr.f32.gmra.mxu0 %v3165
    %v3245 = vpop.f32.mrf.mxu0
    %v3246 = vadd.f32 0.0, %v3245
    %v3247 = vpop.f32.mrf.mxu0
    %3248 = vmatprep.mubr.f32.mxu0 0.0
    %3249 = vmatmul.mubr.f32.gmra.mxu0 %v3168
    %v3250 = vpop.f32.mrf.mxu0
    %v3251 = vadd.f32 0.0, %v3250
    %v3252 = vpop.f32.mrf.mxu0
    %3253 = vmatprep.mubr.f32.mxu0 0.0
    %3254 = vmatmul.mubr.f32.gmra.mxu0 %v3171
    %v3255 = vpop.f32.mrf.mxu0
    %v3256 = vadd.f32 0.0, %v3255
    %v3257 = vpop.f32.mrf.mxu0
    %3258 = vmatprep.mubr.f32.mxu0 0.0
    %3259 = vmatmul.mubr.f32.gmra.mxu0 %v3174
    %v3260 = vpop.f32.mrf.mxu0
    %v3261 = vadd.f32 0.0, %v3260
    %v3262 = vpop.f32.mrf.mxu0
    %3263 = vmatprep.mubr.f32.mxu0 0.0
    %3264 = vmatmul.mubr.f32.gmra.mxu0 %v3177
    %v3265 = vpop.f32.mrf.mxu0
    %v3266 = vadd.f32 0.0, %v3265
    %v3267 = vpop.f32.mrf.mxu0
    %3268 = vdwg.mxu0
    %v3269 = vadd.f32 %v3136, %v3246
    %v3270 = vadd.f32 %v3141, %v3251
    %v3271 = vadd.f32 %v3146, %v3256
    %v3272 = vadd.f32 %v3151, %v3261
    %v3273 = vadd.f32 %v3156, %v3266
    %s3274 = scalar_lea.vmem [#allocation6], 96
    %v3275 = vld [vmem:[%s3274] sm:$0xff]
    %v3276 = vld [vmem:[%s3274 + $0x8] sm:$0xff]
    %v3277 = vld [vmem:[%s3274 + $0x10] sm:$0xff]
    %v3278 = vld [vmem:[%s3274 + $0x18] sm:$0xff]
    %v3280 = vsel %vm2948, %v2791, 0
    %v3283 = vsel %vm2948, %v2796, 0
    %v3286 = vsel %vm2948, %v2801, 0
    %v3289 = vsel %vm2948, %v2806, 0
    %v3292 = vsel %vm2948, %v2811, 0
    %3294 = vmatprep.subr.mxu0 0.0
    %3295 = vmatpush1.msra.mxu0 0.0
    %3296 = vmatprep.subr.mxu0 0.0
    %3297 = vmatpush1.msra.mxu0 0.0
    %3298 = vmatprep.subr.mxu0 0.0
    %3299 = vmatpush1.msra.mxu0 0.0
    %3300 = vmatprep.subr.mxu0 0.0
    %3301 = vmatpush1.msra.mxu0 0.0
    %3302 = vmatprep.subr.mxu0 0.0
    %3303 = vmatpush1.msra.mxu0 0.0
    %3304 = vmatprep.subr.mxu0 0.0
    %3305 = vmatpush1.msra.mxu0 0.0
    %3306 = vmatprep.subr.mxu0 0.0
    %3307 = vmatpush1.msra.mxu0 0.0
    %3308 = vmatprep.subr.mxu0 0.0
    %3309 = vmatpush1.msra.mxu0 0.0
    %3310 = vmatprep.subr.mxu0 0.0
    %3311 = vmatpush1.msra.mxu0 0.0
    %3312 = vmatprep.subr.mxu0 0.0
    %3313 = vmatpush1.msra.mxu0 0.0
    %3314 = vmatprep.subr.mxu0 0.0
    %3315 = vmatpush1.msra.mxu0 0.0
    %3316 = vmatprep.subr.mxu0 0.0
    %3317 = vmatpush1.msra.mxu0 0.0
    %3318 = vmatprep.subr.mxu0 0.0
    %3319 = vmatpush1.msra.mxu0 %v3278
    %3320 = vmatprep.subr.mxu0 0.0
    %3321 = vmatpush1.msra.mxu0 %v3277
    %3322 = vmatprep.subr.mxu0 0.0
    %3323 = vmatpush1.msra.mxu0 %v3276
    %3324 = vmatprep.subr.mxu0 0.0
    %3325 = vmatpush1.msra.mxu0 %v3275
    %3326 = vmatprep.subr.mxu0 0.0
    %3327 = vmatpush2.msra.mxu0 0.0
    %3328 = vmatprep.subr.mxu0 0.0
    %3329 = vmatpush2.msra.mxu0 0.0
    %3330 = vmatprep.subr.mxu0 0.0
    %3331 = vmatpush2.msra.mxu0 0.0
    %3332 = vmatprep.subr.mxu0 0.0
    %3333 = vmatpush2.msra.mxu0 0.0
    %3334 = vmatprep.subr.mxu0 0.0
    %3335 = vmatpush2.msra.mxu0 0.0
    %3336 = vmatprep.subr.mxu0 0.0
    %3337 = vmatpush2.msra.mxu0 0.0
    %3338 = vmatprep.subr.mxu0 0.0
    %3339 = vmatpush2.msra.mxu0 0.0
    %3340 = vmatprep.subr.mxu0 0.0
    %3341 = vmatpush2.msra.mxu0 0.0
    %3342 = vmatprep.subr.mxu0 0.0
    %3343 = vmatpush2.msra.mxu0 0.0
    %3344 = vmatprep.subr.mxu0 0.0
    %3345 = vmatpush2.msra.mxu0 0.0
    %3346 = vmatprep.subr.mxu0 0.0
    %3347 = vmatpush2.msra.mxu0 0.0
    %3348 = vmatprep.subr.mxu0 0.0
    %3349 = vmatpush2.msra.mxu0 0.0
    %3350 = vmatprep.subr.mxu0 0.0
    %3351 = vmatpush2.msra.mxu0 0.0
    %3352 = vmatprep.subr.mxu0 0.0
    %3353 = vmatpush2.msra.mxu0 0.0
    %3354 = vmatprep.subr.mxu0 0.0
    %3355 = vmatpush2.msra.mxu0 0.0
    %3356 = vmatprep.subr.mxu0 0.0
    %3357 = vmatpush2.msra.mxu0 0.0
    %3358 = vmatprep.mubr.f32.mxu0 0.0
    %3359 = vmatmul.mubr.f32.gmra.mxu0 %v3280
    %v3360 = vpop.f32.mrf.mxu0
    %v3361 = vadd.f32 0.0, %v3360
    %v3362 = vpop.f32.mrf.mxu0
    %3363 = vmatprep.mubr.f32.mxu0 0.0
    %3364 = vmatmul.mubr.f32.gmra.mxu0 %v3283
    %v3365 = vpop.f32.mrf.mxu0
    %v3366 = vadd.f32 0.0, %v3365
    %v3367 = vpop.f32.mrf.mxu0
    %3368 = vmatprep.mubr.f32.mxu0 0.0
    %3369 = vmatmul.mubr.f32.gmra.mxu0 %v3286
    %v3370 = vpop.f32.mrf.mxu0
    %v3371 = vadd.f32 0.0, %v3370
    %v3372 = vpop.f32.mrf.mxu0
    %3373 = vmatprep.mubr.f32.mxu0 0.0
    %3374 = vmatmul.mubr.f32.gmra.mxu0 %v3289
    %v3375 = vpop.f32.mrf.mxu0
    %v3376 = vadd.f32 0.0, %v3375
    %v3377 = vpop.f32.mrf.mxu0
    %3378 = vmatprep.mubr.f32.mxu0 0.0
    %3379 = vmatmul.mubr.f32.gmra.mxu0 %v3292
    %v3380 = vpop.f32.mrf.mxu0
    %v3381 = vadd.f32 0.0, %v3380
    %v3382 = vpop.f32.mrf.mxu0
    %3383 = vdwg.mxu0
    %v3384 = vadd.f32 %v3269, %v3361
    %v3385 = vadd.f32 %v3270, %v3366
    %v3386 = vadd.f32 %v3271, %v3371
    %v3387 = vadd.f32 %v3272, %v3376
    %v3388 = vadd.f32 %v3273, %v3381
    %s3389 = scalar_lea.vmem [#allocation6], 128
    %v3390 = vld [vmem:[%s3389] sm:$0xff]
    %v3391 = vld [vmem:[%s3389 + $0x8] sm:$0xff]
    %v3392 = vld [vmem:[%s3389 + $0x10] sm:$0xff]
    %v3393 = vld [vmem:[%s3389 + $0x18] sm:$0xff]
    %v3395 = vsel %vm2948, %v2816, 0
    %v3398 = vsel %vm2948, %v2821, 0
    %v3401 = vsel %vm2948, %v2826, 0
    %v3404 = vsel %vm2948, %v2831, 0
    %v3407 = vsel %vm2948, %v2836, 0
    %3409 = vmatprep.subr.mxu0 0.0
    %3410 = vmatpush1.msra.mxu0 0.0
    %3411 = vmatprep.subr.mxu0 0.0
    %3412 = vmatpush1.msra.mxu0 0.0
    %3413 = vmatprep.subr.mxu0 0.0
    %3414 = vmatpush1.msra.mxu0 0.0
    %3415 = vmatprep.subr.mxu0 0.0
    %3416 = vmatpush1.msra.mxu0 0.0
    %3417 = vmatprep.subr.mxu0 0.0
    %3418 = vmatpush1.msra.mxu0 0.0
    %3419 = vmatprep.subr.mxu0 0.0
    %3420 = vmatpush1.msra.mxu0 0.0
    %3421 = vmatprep.subr.mxu0 0.0
    %3422 = vmatpush1.msra.mxu0 0.0
    %3423 = vmatprep.subr.mxu0 0.0
    %3424 = vmatpush1.msra.mxu0 0.0
    %3425 = vmatprep.subr.mxu0 0.0
    %3426 = vmatpush1.msra.mxu0 0.0
    %3427 = vmatprep.subr.mxu0 0.0
    %3428 = vmatpush1.msra.mxu0 0.0
    %3429 = vmatprep.subr.mxu0 0.0
    %3430 = vmatpush1.msra.mxu0 0.0
    %3431 = vmatprep.subr.mxu0 0.0
    %3432 = vmatpush1.msra.mxu0 0.0
    %3433 = vmatprep.subr.mxu0 0.0
    %3434 = vmatpush1.msra.mxu0 %v3393
    %3435 = vmatprep.subr.mxu0 0.0
    %3436 = vmatpush1.msra.mxu0 %v3392
    %3437 = vmatprep.subr.mxu0 0.0
    %3438 = vmatpush1.msra.mxu0 %v3391
    %3439 = vmatprep.subr.mxu0 0.0
    %3440 = vmatpush1.msra.mxu0 %v3390
    %3441 = vmatprep.subr.mxu0 0.0
    %3442 = vmatpush2.msra.mxu0 0.0
    %3443 = vmatprep.subr.mxu0 0.0
    %3444 = vmatpush2.msra.mxu0 0.0
    %3445 = vmatprep.subr.mxu0 0.0
    %3446 = vmatpush2.msra.mxu0 0.0
    %3447 = vmatprep.subr.mxu0 0.0
    %3448 = vmatpush2.msra.mxu0 0.0
    %3449 = vmatprep.subr.mxu0 0.0
    %3450 = vmatpush2.msra.mxu0 0.0
    %3451 = vmatprep.subr.mxu0 0.0
    %3452 = vmatpush2.msra.mxu0 0.0
    %3453 = vmatprep.subr.mxu0 0.0
    %3454 = vmatpush2.msra.mxu0 0.0
    %3455 = vmatprep.subr.mxu0 0.0
    %3456 = vmatpush2.msra.mxu0 0.0
    %3457 = vmatprep.subr.mxu0 0.0
    %3458 = vmatpush2.msra.mxu0 0.0
    %3459 = vmatprep.subr.mxu0 0.0
    %3460 = vmatpush2.msra.mxu0 0.0
    %3461 = vmatprep.subr.mxu0 0.0
    %3462 = vmatpush2.msra.mxu0 0.0
    %3463 = vmatprep.subr.mxu0 0.0
    %3464 = vmatpush2.msra.mxu0 0.0
    %3465 = vmatprep.subr.mxu0 0.0
    %3466 = vmatpush2.msra.mxu0 0.0
    %3467 = vmatprep.subr.mxu0 0.0
    %3468 = vmatpush2.msra.mxu0 0.0
    %3469 = vmatprep.subr.mxu0 0.0
    %3470 = vmatpush2.msra.mxu0 0.0
    %3471 = vmatprep.subr.mxu0 0.0
    %3472 = vmatpush2.msra.mxu0 0.0
    %3473 = vmatprep.mubr.f32.mxu0 0.0
    %3474 = vmatmul.mubr.f32.gmra.mxu0 %v3395
    %v3475 = vpop.f32.mrf.mxu0
    %v3476 = vadd.f32 0.0, %v3475
    %v3477 = vpop.f32.mrf.mxu0
    %3478 = vmatprep.mubr.f32.mxu0 0.0
    %3479 = vmatmul.mubr.f32.gmra.mxu0 %v3398
    %v3480 = vpop.f32.mrf.mxu0
    %v3481 = vadd.f32 0.0, %v3480
    %v3482 = vpop.f32.mrf.mxu0
    %3483 = vmatprep.mubr.f32.mxu0 0.0
    %3484 = vmatmul.mubr.f32.gmra.mxu0 %v3401
    %v3485 = vpop.f32.mrf.mxu0
    %v3486 = vadd.f32 0.0, %v3485
    %v3487 = vpop.f32.mrf.mxu0
    %3488 = vmatprep.mubr.f32.mxu0 0.0
    %3489 = vmatmul.mubr.f32.gmra.mxu0 %v3404
    %v3490 = vpop.f32.mrf.mxu0
    %v3491 = vadd.f32 0.0, %v3490
    %v3492 = vpop.f32.mrf.mxu0
    %3493 = vmatprep.mubr.f32.mxu0 0.0
    %3494 = vmatmul.mubr.f32.gmra.mxu0 %v3407
    %v3495 = vpop.f32.mrf.mxu0
    %v3496 = vadd.f32 0.0, %v3495
    %v3497 = vpop.f32.mrf.mxu0
    %3498 = vdwg.mxu0
    %v3499 = vadd.f32 %v3384, %v3476
    %v3500 = vadd.f32 %v3385, %v3481
    %v3501 = vadd.f32 %v3386, %v3486
    %v3502 = vadd.f32 %v3387, %v3491
    %v3503 = vadd.f32 %v3388, %v3496
    %s3504 = scalar_lea.vmem [#allocation6], 160
    %v3505 = vld [vmem:[%s3504] sm:$0xff]
    %v3506 = vld [vmem:[%s3504 + $0x8] sm:$0xff]
    %v3507 = vld [vmem:[%s3504 + $0x10] sm:$0xff]
    %v3508 = vld [vmem:[%s3504 + $0x18] sm:$0xff]
    %v3510 = vsel %vm2948, %v2841, 0
    %v3513 = vsel %vm2948, %v2846, 0
    %v3516 = vsel %vm2948, %v2851, 0
    %v3519 = vsel %vm2948, %v2856, 0
    %v3522 = vsel %vm2948, %v2861, 0
    %3524 = vmatprep.subr.mxu0 0.0
    %3525 = vmatpush1.msra.mxu0 0.0
    %3526 = vmatprep.subr.mxu0 0.0
    %3527 = vmatpush1.msra.mxu0 0.0
    %3528 = vmatprep.subr.mxu0 0.0
    %3529 = vmatpush1.msra.mxu0 0.0
    %3530 = vmatprep.subr.mxu0 0.0
    %3531 = vmatpush1.msra.mxu0 0.0
    %3532 = vmatprep.subr.mxu0 0.0
    %3533 = vmatpush1.msra.mxu0 0.0
    %3534 = vmatprep.subr.mxu0 0.0
    %3535 = vmatpush1.msra.mxu0 0.0
    %3536 = vmatprep.subr.mxu0 0.0
    %3537 = vmatpush1.msra.mxu0 0.0
    %3538 = vmatprep.subr.mxu0 0.0
    %3539 = vmatpush1.msra.mxu0 0.0
    %3540 = vmatprep.subr.mxu0 0.0
    %3541 = vmatpush1.msra.mxu0 0.0
    %3542 = vmatprep.subr.mxu0 0.0
    %3543 = vmatpush1.msra.mxu0 0.0
    %3544 = vmatprep.subr.mxu0 0.0
    %3545 = vmatpush1.msra.mxu0 0.0
    %3546 = vmatprep.subr.mxu0 0.0
    %3547 = vmatpush1.msra.mxu0 0.0
    %3548 = vmatprep.subr.mxu0 0.0
    %3549 = vmatpush1.msra.mxu0 %v3508
    %3550 = vmatprep.subr.mxu0 0.0
    %3551 = vmatpush1.msra.mxu0 %v3507
    %3552 = vmatprep.subr.mxu0 0.0
    %3553 = vmatpush1.msra.mxu0 %v3506
    %3554 = vmatprep.subr.mxu0 0.0
    %3555 = vmatpush1.msra.mxu0 %v3505
    %3556 = vmatprep.subr.mxu0 0.0
    %3557 = vmatpush2.msra.mxu0 0.0
    %3558 = vmatprep.subr.mxu0 0.0
    %3559 = vmatpush2.msra.mxu0 0.0
    %3560 = vmatprep.subr.mxu0 0.0
    %3561 = vmatpush2.msra.mxu0 0.0
    %3562 = vmatprep.subr.mxu0 0.0
    %3563 = vmatpush2.msra.mxu0 0.0
    %3564 = vmatprep.subr.mxu0 0.0
    %3565 = vmatpush2.msra.mxu0 0.0
    %3566 = vmatprep.subr.mxu0 0.0
    %3567 = vmatpush2.msra.mxu0 0.0
    %3568 = vmatprep.subr.mxu0 0.0
    %3569 = vmatpush2.msra.mxu0 0.0
    %3570 = vmatprep.subr.mxu0 0.0
    %3571 = vmatpush2.msra.mxu0 0.0
    %3572 = vmatprep.subr.mxu0 0.0
    %3573 = vmatpush2.msra.mxu0 0.0
    %3574 = vmatprep.subr.mxu0 0.0
    %3575 = vmatpush2.msra.mxu0 0.0
    %3576 = vmatprep.subr.mxu0 0.0
    %3577 = vmatpush2.msra.mxu0 0.0
    %3578 = vmatprep.subr.mxu0 0.0
    %3579 = vmatpush2.msra.mxu0 0.0
    %3580 = vmatprep.subr.mxu0 0.0
    %3581 = vmatpush2.msra.mxu0 0.0
    %3582 = vmatprep.subr.mxu0 0.0
    %3583 = vmatpush2.msra.mxu0 0.0
    %3584 = vmatprep.subr.mxu0 0.0
    %3585 = vmatpush2.msra.mxu0 0.0
    %3586 = vmatprep.subr.mxu0 0.0
    %3587 = vmatpush2.msra.mxu0 0.0
    %3588 = vmatprep.mubr.f32.mxu0 0.0
    %3589 = vmatmul.mubr.f32.gmra.mxu0 %v3510
    %v3590 = vpop.f32.mrf.mxu0
    %v3591 = vadd.f32 0.0, %v3590
    %v3592 = vpop.f32.mrf.mxu0
    %3593 = vmatprep.mubr.f32.mxu0 0.0
    %3594 = vmatmul.mubr.f32.gmra.mxu0 %v3513
    %v3595 = vpop.f32.mrf.mxu0
    %v3596 = vadd.f32 0.0, %v3595
    %v3597 = vpop.f32.mrf.mxu0
    %3598 = vmatprep.mubr.f32.mxu0 0.0
    %3599 = vmatmul.mubr.f32.gmra.mxu0 %v3516
    %v3600 = vpop.f32.mrf.mxu0
    %v3601 = vadd.f32 0.0, %v3600
    %v3602 = vpop.f32.mrf.mxu0
    %3603 = vmatprep.mubr.f32.mxu0 0.0
    %3604 = vmatmul.mubr.f32.gmra.mxu0 %v3519
    %v3605 = vpop.f32.mrf.mxu0
    %v3606 = vadd.f32 0.0, %v3605
    %v3607 = vpop.f32.mrf.mxu0
    %3608 = vmatprep.mubr.f32.mxu0 0.0
    %3609 = vmatmul.mubr.f32.gmra.mxu0 %v3522
    %v3610 = vpop.f32.mrf.mxu0
    %v3611 = vadd.f32 0.0, %v3610
    %v3612 = vpop.f32.mrf.mxu0
    %3613 = vdwg.mxu0
    %v3614 = vadd.f32 %v3499, %v3591
    %v3615 = vadd.f32 %v3500, %v3596
    %v3616 = vadd.f32 %v3501, %v3601
    %v3617 = vadd.f32 %v3502, %v3606
    %v3618 = vadd.f32 %v3503, %v3611
    %s3619 = scalar_lea.vmem [#allocation6], 192
    %v3620 = vld [vmem:[%s3619] sm:$0xff]
    %v3621 = vld [vmem:[%s3619 + $0x8] sm:$0xff]
    %v3622 = vld [vmem:[%s3619 + $0x10] sm:$0xff]
    %v3623 = vld [vmem:[%s3619 + $0x18] sm:$0xff]
    %v3625 = vsel %vm2948, %v2866, 0
    %v3628 = vsel %vm2948, %v2871, 0
    %v3631 = vsel %vm2948, %v2876, 0
    %v3634 = vsel %vm2948, %v2881, 0
    %v3637 = vsel %vm2948, %v2886, 0
    %3639 = vmatprep.subr.mxu0 0.0
    %3640 = vmatpush1.msra.mxu0 0.0
    %3641 = vmatprep.subr.mxu0 0.0
    %3642 = vmatpush1.msra.mxu0 0.0
    %3643 = vmatprep.subr.mxu0 0.0
    %3644 = vmatpush1.msra.mxu0 0.0
    %3645 = vmatprep.subr.mxu0 0.0
    %3646 = vmatpush1.msra.mxu0 0.0
    %3647 = vmatprep.subr.mxu0 0.0
    %3648 = vmatpush1.msra.mxu0 0.0
    %3649 = vmatprep.subr.mxu0 0.0
    %3650 = vmatpush1.msra.mxu0 0.0
    %3651 = vmatprep.subr.mxu0 0.0
    %3652 = vmatpush1.msra.mxu0 0.0
    %3653 = vmatprep.subr.mxu0 0.0
    %3654 = vmatpush1.msra.mxu0 0.0
    %3655 = vmatprep.subr.mxu0 0.0
    %3656 = vmatpush1.msra.mxu0 0.0
    %3657 = vmatprep.subr.mxu0 0.0
    %3658 = vmatpush1.msra.mxu0 0.0
    %3659 = vmatprep.subr.mxu0 0.0
    %3660 = vmatpush1.msra.mxu0 0.0
    %3661 = vmatprep.subr.mxu0 0.0
    %3662 = vmatpush1.msra.mxu0 0.0
    %3663 = vmatprep.subr.mxu0 0.0
    %3664 = vmatpush1.msra.mxu0 %v3623
    %3665 = vmatprep.subr.mxu0 0.0
    %3666 = vmatpush1.msra.mxu0 %v3622
    %3667 = vmatprep.subr.mxu0 0.0
    %3668 = vmatpush1.msra.mxu0 %v3621
    %3669 = vmatprep.subr.mxu0 0.0
    %3670 = vmatpush1.msra.mxu0 %v3620
    %3671 = vmatprep.subr.mxu0 0.0
    %3672 = vmatpush2.msra.mxu0 0.0
    %3673 = vmatprep.subr.mxu0 0.0
    %3674 = vmatpush2.msra.mxu0 0.0
    %3675 = vmatprep.subr.mxu0 0.0
    %3676 = vmatpush2.msra.mxu0 0.0
    %3677 = vmatprep.subr.mxu0 0.0
    %3678 = vmatpush2.msra.mxu0 0.0
    %3679 = vmatprep.subr.mxu0 0.0
    %3680 = vmatpush2.msra.mxu0 0.0
    %3681 = vmatprep.subr.mxu0 0.0
    %3682 = vmatpush2.msra.mxu0 0.0
    %3683 = vmatprep.subr.mxu0 0.0
    %3684 = vmatpush2.msra.mxu0 0.0
    %3685 = vmatprep.subr.mxu0 0.0
    %3686 = vmatpush2.msra.mxu0 0.0
    %3687 = vmatprep.subr.mxu0 0.0
    %3688 = vmatpush2.msra.mxu0 0.0
    %3689 = vmatprep.subr.mxu0 0.0
    %3690 = vmatpush2.msra.mxu0 0.0
    %3691 = vmatprep.subr.mxu0 0.0
    %3692 = vmatpush2.msra.mxu0 0.0
    %3693 = vmatprep.subr.mxu0 0.0
    %3694 = vmatpush2.msra.mxu0 0.0
    %3695 = vmatprep.subr.mxu0 0.0
    %3696 = vmatpush2.msra.mxu0 0.0
    %3697 = vmatprep.subr.mxu0 0.0
    %3698 = vmatpush2.msra.mxu0 0.0
    %3699 = vmatprep.subr.mxu0 0.0
    %3700 = vmatpush2.msra.mxu0 0.0
    %3701 = vmatprep.subr.mxu0 0.0
    %3702 = vmatpush2.msra.mxu0 0.0
    %3703 = vmatprep.mubr.f32.mxu0 0.0
    %3704 = vmatmul.mubr.f32.gmra.mxu0 %v3625
    %v3705 = vpop.f32.mrf.mxu0
    %v3706 = vadd.f32 0.0, %v3705
    %v3707 = vpop.f32.mrf.mxu0
    %3708 = vmatprep.mubr.f32.mxu0 0.0
    %3709 = vmatmul.mubr.f32.gmra.mxu0 %v3628
    %v3710 = vpop.f32.mrf.mxu0
    %v3711 = vadd.f32 0.0, %v3710
    %v3712 = vpop.f32.mrf.mxu0
    %3713 = vmatprep.mubr.f32.mxu0 0.0
    %3714 = vmatmul.mubr.f32.gmra.mxu0 %v3631
    %v3715 = vpop.f32.mrf.mxu0
    %v3716 = vadd.f32 0.0, %v3715
    %v3717 = vpop.f32.mrf.mxu0
    %3718 = vmatprep.mubr.f32.mxu0 0.0
    %3719 = vmatmul.mubr.f32.gmra.mxu0 %v3634
    %v3720 = vpop.f32.mrf.mxu0
    %v3721 = vadd.f32 0.0, %v3720
    %v3722 = vpop.f32.mrf.mxu0
    %3723 = vmatprep.mubr.f32.mxu0 0.0
    %3724 = vmatmul.mubr.f32.gmra.mxu0 %v3637
    %v3725 = vpop.f32.mrf.mxu0
    %v3726 = vadd.f32 0.0, %v3725
    %v3727 = vpop.f32.mrf.mxu0
    %3728 = vdwg.mxu0
    %v3729 = vadd.f32 %v3614, %v3706
    %v3730 = vadd.f32 %v3615, %v3711
    %v3731 = vadd.f32 %v3616, %v3716
    %v3732 = vadd.f32 %v3617, %v3721
    %v3733 = vadd.f32 %v3618, %v3726
    %s3734 = scalar_lea.vmem [#allocation6], 224
    %v3735 = vld [vmem:[%s3734] sm:$0xff]
    %v3736 = vld [vmem:[%s3734 + $0x8] sm:$0xff]
    %v3737 = vld [vmem:[%s3734 + $0x10] sm:$0xff]
    %v3738 = vld [vmem:[%s3734 + $0x18] sm:$0xff]
    %v3740 = vsel %vm2948, %v2891, 0
    %v3743 = vsel %vm2948, %v2896, 0
    %v3746 = vsel %vm2948, %v2901, 0
    %v3749 = vsel %vm2948, %v2906, 0
    %v3752 = vsel %vm2948, %v2911, 0
    %3754 = vmatprep.subr.mxu0 0.0
    %3755 = vmatpush1.msra.mxu0 0.0
    %3756 = vmatprep.subr.mxu0 0.0
    %3757 = vmatpush1.msra.mxu0 0.0
    %3758 = vmatprep.subr.mxu0 0.0
    %3759 = vmatpush1.msra.mxu0 0.0
    %3760 = vmatprep.subr.mxu0 0.0
    %3761 = vmatpush1.msra.mxu0 0.0
    %3762 = vmatprep.subr.mxu0 0.0
    %3763 = vmatpush1.msra.mxu0 0.0
    %3764 = vmatprep.subr.mxu0 0.0
    %3765 = vmatpush1.msra.mxu0 0.0
    %3766 = vmatprep.subr.mxu0 0.0
    %3767 = vmatpush1.msra.mxu0 0.0
    %3768 = vmatprep.subr.mxu0 0.0
    %3769 = vmatpush1.msra.mxu0 0.0
    %3770 = vmatprep.subr.mxu0 0.0
    %3771 = vmatpush1.msra.mxu0 0.0
    %3772 = vmatprep.subr.mxu0 0.0
    %3773 = vmatpush1.msra.mxu0 0.0
    %3774 = vmatprep.subr.mxu0 0.0
    %3775 = vmatpush1.msra.mxu0 0.0
    %3776 = vmatprep.subr.mxu0 0.0
    %3777 = vmatpush1.msra.mxu0 0.0
    %3778 = vmatprep.subr.mxu0 0.0
    %3779 = vmatpush1.msra.mxu0 %v3738
    %3780 = vmatprep.subr.mxu0 0.0
    %3781 = vmatpush1.msra.mxu0 %v3737
    %3782 = vmatprep.subr.mxu0 0.0
    %3783 = vmatpush1.msra.mxu0 %v3736
    %3784 = vmatprep.subr.mxu0 0.0
    %3785 = vmatpush1.msra.mxu0 %v3735
    %3786 = vmatprep.subr.mxu0 0.0
    %3787 = vmatpush2.msra.mxu0 0.0
    %3788 = vmatprep.subr.mxu0 0.0
    %3789 = vmatpush2.msra.mxu0 0.0
    %3790 = vmatprep.subr.mxu0 0.0
    %3791 = vmatpush2.msra.mxu0 0.0
    %3792 = vmatprep.subr.mxu0 0.0
    %3793 = vmatpush2.msra.mxu0 0.0
    %3794 = vmatprep.subr.mxu0 0.0
    %3795 = vmatpush2.msra.mxu0 0.0
    %3796 = vmatprep.subr.mxu0 0.0
    %3797 = vmatpush2.msra.mxu0 0.0
    %3798 = vmatprep.subr.mxu0 0.0
    %3799 = vmatpush2.msra.mxu0 0.0
    %3800 = vmatprep.subr.mxu0 0.0
    %3801 = vmatpush2.msra.mxu0 0.0
    %3802 = vmatprep.subr.mxu0 0.0
    %3803 = vmatpush2.msra.mxu0 0.0
    %3804 = vmatprep.subr.mxu0 0.0
    %3805 = vmatpush2.msra.mxu0 0.0
    %3806 = vmatprep.subr.mxu0 0.0
    %3807 = vmatpush2.msra.mxu0 0.0
    %3808 = vmatprep.subr.mxu0 0.0
    %3809 = vmatpush2.msra.mxu0 0.0
    %3810 = vmatprep.subr.mxu0 0.0
    %3811 = vmatpush2.msra.mxu0 0.0
    %3812 = vmatprep.subr.mxu0 0.0
    %3813 = vmatpush2.msra.mxu0 0.0
    %3814 = vmatprep.subr.mxu0 0.0
    %3815 = vmatpush2.msra.mxu0 0.0
    %3816 = vmatprep.subr.mxu0 0.0
    %3817 = vmatpush2.msra.mxu0 0.0
    %3818 = vmatprep.mubr.f32.mxu0 0.0
    %3819 = vmatmul.mubr.f32.gmra.mxu0 %v3740
    %v3820 = vpop.f32.mrf.mxu0
    %v3821 = vadd.f32 0.0, %v3820
    %v3822 = vpop.f32.mrf.mxu0
    %3823 = vmatprep.mubr.f32.mxu0 0.0
    %3824 = vmatmul.mubr.f32.gmra.mxu0 %v3743
    %v3825 = vpop.f32.mrf.mxu0
    %v3826 = vadd.f32 0.0, %v3825
    %v3827 = vpop.f32.mrf.mxu0
    %3828 = vmatprep.mubr.f32.mxu0 0.0
    %3829 = vmatmul.mubr.f32.gmra.mxu0 %v3746
    %v3830 = vpop.f32.mrf.mxu0
    %v3831 = vadd.f32 0.0, %v3830
    %v3832 = vpop.f32.mrf.mxu0
    %3833 = vmatprep.mubr.f32.mxu0 0.0
    %3834 = vmatmul.mubr.f32.gmra.mxu0 %v3749
    %v3835 = vpop.f32.mrf.mxu0
    %v3836 = vadd.f32 0.0, %v3835
    %v3837 = vpop.f32.mrf.mxu0
    %3838 = vmatprep.mubr.f32.mxu0 0.0
    %3839 = vmatmul.mubr.f32.gmra.mxu0 %v3752
    %v3840 = vpop.f32.mrf.mxu0
    %v3841 = vadd.f32 0.0, %v3840
    %v3842 = vpop.f32.mrf.mxu0
    %3843 = vdwg.mxu0
    %v3844 = vadd.f32 %v3729, %v3821
    %v3845 = vadd.f32 %v3730, %v3826
    %v3846 = vadd.f32 %v3731, %v3831
    %v3847 = vadd.f32 %v3732, %v3836
    %v3848 = vadd.f32 %v3733, %v3841
    %s3849 = scalar_lea.vmem [#allocation6], 256
    %v3850 = vld [vmem:[%s3849] sm:$0xff]
    %v3851 = vld [vmem:[%s3849 + $0x8] sm:$0xff]
    %v3852 = vld [vmem:[%s3849 + $0x10] sm:$0xff]
    %v3853 = vld [vmem:[%s3849 + $0x18] sm:$0xff]
    %v3855 = vsel %vm2948, %v2916, 0
    %v3858 = vsel %vm2948, %v2921, 0
    %v3861 = vsel %vm2948, %v2926, 0
    %v3864 = vsel %vm2948, %v2931, 0
    %v3867 = vsel %vm2948, %v2936, 0
    %3869 = vmatprep.subr.mxu0 0.0
    %3870 = vmatpush1.msra.mxu0 0.0
    %3871 = vmatprep.subr.mxu0 0.0
    %3872 = vmatpush1.msra.mxu0 0.0
    %3873 = vmatprep.subr.mxu0 0.0
    %3874 = vmatpush1.msra.mxu0 0.0
    %3875 = vmatprep.subr.mxu0 0.0
    %3876 = vmatpush1.msra.mxu0 0.0
    %3877 = vmatprep.subr.mxu0 0.0
    %3878 = vmatpush1.msra.mxu0 0.0
    %3879 = vmatprep.subr.mxu0 0.0
    %3880 = vmatpush1.msra.mxu0 0.0
    %3881 = vmatprep.subr.mxu0 0.0
    %3882 = vmatpush1.msra.mxu0 0.0
    %3883 = vmatprep.subr.mxu0 0.0
    %3884 = vmatpush1.msra.mxu0 0.0
    %3885 = vmatprep.subr.mxu0 0.0
    %3886 = vmatpush1.msra.mxu0 0.0
    %3887 = vmatprep.subr.mxu0 0.0
    %3888 = vmatpush1.msra.mxu0 0.0
    %3889 = vmatprep.subr.mxu0 0.0
    %3890 = vmatpush1.msra.mxu0 0.0
    %3891 = vmatprep.subr.mxu0 0.0
    %3892 = vmatpush1.msra.mxu0 0.0
    %3893 = vmatprep.subr.mxu0 0.0
    %3894 = vmatpush1.msra.mxu0 %v3853
    %3895 = vmatprep.subr.mxu0 0.0
    %3896 = vmatpush1.msra.mxu0 %v3852
    %3897 = vmatprep.subr.mxu0 0.0
    %3898 = vmatpush1.msra.mxu0 %v3851
    %3899 = vmatprep.subr.mxu0 0.0
    %3900 = vmatpush1.msra.mxu0 %v3850
    %3901 = vmatprep.subr.mxu0 0.0
    %3902 = vmatpush2.msra.mxu0 0.0
    %3903 = vmatprep.subr.mxu0 0.0
    %3904 = vmatpush2.msra.mxu0 0.0
    %3905 = vmatprep.subr.mxu0 0.0
    %3906 = vmatpush2.msra.mxu0 0.0
    %3907 = vmatprep.subr.mxu0 0.0
    %3908 = vmatpush2.msra.mxu0 0.0
    %3909 = vmatprep.subr.mxu0 0.0
    %3910 = vmatpush2.msra.mxu0 0.0
    %3911 = vmatprep.subr.mxu0 0.0
    %3912 = vmatpush2.msra.mxu0 0.0
    %3913 = vmatprep.subr.mxu0 0.0
    %3914 = vmatpush2.msra.mxu0 0.0
    %3915 = vmatprep.subr.mxu0 0.0
    %3916 = vmatpush2.msra.mxu0 0.0
    %3917 = vmatprep.subr.mxu0 0.0
    %3918 = vmatpush2.msra.mxu0 0.0
    %3919 = vmatprep.subr.mxu0 0.0
    %3920 = vmatpush2.msra.mxu0 0.0
    %3921 = vmatprep.subr.mxu0 0.0
    %3922 = vmatpush2.msra.mxu0 0.0
    %3923 = vmatprep.subr.mxu0 0.0
    %3924 = vmatpush2.msra.mxu0 0.0
    %3925 = vmatprep.subr.mxu0 0.0
    %3926 = vmatpush2.msra.mxu0 0.0
    %3927 = vmatprep.subr.mxu0 0.0
    %3928 = vmatpush2.msra.mxu0 0.0
    %3929 = vmatprep.subr.mxu0 0.0
    %3930 = vmatpush2.msra.mxu0 0.0
    %3931 = vmatprep.subr.mxu0 0.0
    %3932 = vmatpush2.msra.mxu0 0.0
    %3933 = vmatprep.mubr.f32.mxu0 0.0
    %3934 = vmatmul.mubr.f32.gmra.mxu0 %v3855
    %v3935 = vpop.f32.mrf.mxu0
    %v3936 = vadd.f32 0.0, %v3935
    %v3937 = vpop.f32.mrf.mxu0
    %3938 = vmatprep.mubr.f32.mxu0 0.0
    %3939 = vmatmul.mubr.f32.gmra.mxu0 %v3858
    %v3940 = vpop.f32.mrf.mxu0
    %v3941 = vadd.f32 0.0, %v3940
    %v3942 = vpop.f32.mrf.mxu0
    %3943 = vmatprep.mubr.f32.mxu0 0.0
    %3944 = vmatmul.mubr.f32.gmra.mxu0 %v3861
    %v3945 = vpop.f32.mrf.mxu0
    %v3946 = vadd.f32 0.0, %v3945
    %v3947 = vpop.f32.mrf.mxu0
    %3948 = vmatprep.mubr.f32.mxu0 0.0
    %3949 = vmatmul.mubr.f32.gmra.mxu0 %v3864
    %v3950 = vpop.f32.mrf.mxu0
    %v3951 = vadd.f32 0.0, %v3950
    %v3952 = vpop.f32.mrf.mxu0
    %3953 = vmatprep.mubr.f32.mxu0 0.0
    %3954 = vmatmul.mubr.f32.gmra.mxu0 %v3867
    %v3955 = vpop.f32.mrf.mxu0
    %v3956 = vadd.f32 0.0, %v3955
    %v3957 = vpop.f32.mrf.mxu0
    %3958 = vdwg.mxu0
    %v3959 = vadd.f32 %v3844, %v3936
    %v3960 = vadd.f32 %v3845, %v3941
    %v3961 = vadd.f32 %v3846, %v3946
    %v3962 = vadd.f32 %v3847, %v3951
    %v3963 = vadd.f32 %v3848, %v3956
    %v3964 = vld [vmem:[#allocation7] sm:$0x1]
    %v3966 = vlaneseq
    %v3967 = vshrl.u32 %v3966, 7
    %v3968 = vsub.s32 0, %v3967
    %v3969 = vrot.slane %v3964, %v3968
    %v3971 = vadd.f32 %v3959, %v3969
    %v3972 = vadd.f32 %v3960, %v3969
    %v3973 = vadd.f32 %v3961, %v3969
    %v3974 = vadd.f32 %v3962, %v3969
    %v3975 = vadd.f32 %v3963, %v3969
    %v3976 = vmax.f32 %v3971, 0.0
    %v3977 = vmax.f32 %v3972, 0.0
    %v3978 = vmax.f32 %v3973, 0.0
    %v3979 = vmax.f32 %v3974, 0.0
    %v3980 = vmax.f32 %v3975, 0.0
    %v3981 = vld [vmem:[%s7] sm:$0xff]
    %v3982 = vld [vmem:[%s7 + $0x8] sm:$0xff]
    %v3983 = vld [vmem:[%s7 + $0x10] sm:$0xff]
    %v3984 = vld [vmem:[%s7 + $0x18] sm:$0xff]
    %v3985 = vld [vmem:[%s7 + $0x20] sm:$0xff]
    %v3986 = vld [vmem:[%s7 + $0x28] sm:$0xff]
    %v3987 = vld [vmem:[%s7 + $0x30] sm:$0xff]
    %v3988 = vld [vmem:[%s7 + $0x38] sm:$0xff]
    %v3989 = vld [vmem:[%s7 + $0x40] sm:$0xff]
    %v3990 = vld [vmem:[%s7 + $0x48] sm:$0xff]
    %v3991 = vld [vmem:[%s7 + $0x50] sm:$0xff]
    %v3992 = vld [vmem:[%s7 + $0x58] sm:$0xff]
    %v3993 = vld [vmem:[%s7 + $0x60] sm:$0xff]
    %v3994 = vld [vmem:[%s7 + $0x68] sm:$0xff]
    %v3995 = vld [vmem:[%s7 + $0x70] sm:$0xff]
    %v3996 = vld [vmem:[%s7 + $0x78] sm:$0xff]
    %v3997 = vld [vmem:[%s7 + $0x80] sm:$0xff]
    %v3998 = vld [vmem:[%s7 + $0x88] sm:$0xff]
    %vm3999 = vcmask 326656
    %v4001 = vsel %vm3999, %v3981, 0
    %v4004 = vsel %vm3999, %v3982, 0
    %v4007 = vsel %vm3999, %v3983, 0
    %v4010 = vsel %vm3999, %v3984, 0
    %v4013 = vsel %vm3999, %v3985, 0
    %v4016 = vsel %vm3999, %v3986, 0
    %v4019 = vsel %vm3999, %v3987, 0
    %v4022 = vsel %vm3999, %v3988, 0
    %v4025 = vsel %vm3999, %v3989, 0
    %v4028 = vsel %vm3999, %v3990, 0
    %v4031 = vsel %vm3999, %v3991, 0
    %v4034 = vsel %vm3999, %v3992, 0
    %v4037 = vsel %vm3999, %v3993, 0
    %v4040 = vsel %vm3999, %v3994, 0
    %v4043 = vsel %vm3999, %v3995, 0
    %v4046 = vsel %vm3999, %v3996, 0
    %v4049 = vsel %vm3999, %v3997, 0
    %v4052 = vsel %vm3999, %v3998, 0
    %4054 = vmatprep.subr.mxu0 0.0
    %4055 = vmatpush1.msra.mxu0 0.0
    %4056 = vmatprep.subr.mxu0 0.0
    %4057 = vmatpush1.msra.mxu0 0.0
    %4058 = vmatprep.subr.mxu0 0.0
    %4059 = vmatpush1.msra.mxu0 0.0
    %4060 = vmatprep.subr.mxu0 0.0
    %4061 = vmatpush1.msra.mxu0 0.0
    %4062 = vmatprep.subr.mxu0 0.0
    %4063 = vmatpush1.msra.mxu0 0.0
    %4064 = vmatprep.subr.mxu0 0.0
    %4065 = vmatpush1.msra.mxu0 0.0
    %4066 = vmatprep.subr.mxu0 0.0
    %4067 = vmatpush1.msra.mxu0 0.0
    %4068 = vmatprep.subr.mxu0 0.0
    %4069 = vmatpush1.msra.mxu0 0.0
    %4070 = vmatprep.subr.mxu0 0.0
    %4071 = vmatpush1.msra.mxu0 0.0
    %4072 = vmatprep.subr.mxu0 0.0
    %4073 = vmatpush1.msra.mxu0 0.0
    %4074 = vmatprep.subr.mxu0 0.0
    %4075 = vmatpush1.msra.mxu0 0.0
    %4076 = vmatprep.subr.mxu0 0.0
    %4077 = vmatpush1.msra.mxu0 %v3980
    %4078 = vmatprep.subr.mxu0 0.0
    %4079 = vmatpush1.msra.mxu0 %v3979
    %4080 = vmatprep.subr.mxu0 0.0
    %4081 = vmatpush1.msra.mxu0 %v3978
    %4082 = vmatprep.subr.mxu0 0.0
    %4083 = vmatpush1.msra.mxu0 %v3977
    %4084 = vmatprep.subr.mxu0 0.0
    %4085 = vmatpush1.msra.mxu0 %v3976
    %4086 = vmatprep.subr.mxu0 0.0
    %4087 = vmatpush2.msra.mxu0 0.0
    %4088 = vmatprep.subr.mxu0 0.0
    %4089 = vmatpush2.msra.mxu0 0.0
    %4090 = vmatprep.subr.mxu0 0.0
    %4091 = vmatpush2.msra.mxu0 0.0
    %4092 = vmatprep.subr.mxu0 0.0
    %4093 = vmatpush2.msra.mxu0 0.0
    %4094 = vmatprep.subr.mxu0 0.0
    %4095 = vmatpush2.msra.mxu0 0.0
    %4096 = vmatprep.subr.mxu0 0.0
    %4097 = vmatpush2.msra.mxu0 0.0
    %4098 = vmatprep.subr.mxu0 0.0
    %4099 = vmatpush2.msra.mxu0 0.0
    %4100 = vmatprep.subr.mxu0 0.0
    %4101 = vmatpush2.msra.mxu0 0.0
    %4102 = vmatprep.subr.mxu0 0.0
    %4103 = vmatpush2.msra.mxu0 0.0
    %4104 = vmatprep.subr.mxu0 0.0
    %4105 = vmatpush2.msra.mxu0 0.0
    %4106 = vmatprep.subr.mxu0 0.0
    %4107 = vmatpush2.msra.mxu0 0.0
    %4108 = vmatprep.subr.mxu0 0.0
    %4109 = vmatpush2.msra.mxu0 0.0
    %4110 = vmatprep.subr.mxu0 0.0
    %4111 = vmatpush2.msra.mxu0 0.0
    %4112 = vmatprep.subr.mxu0 0.0
    %4113 = vmatpush2.msra.mxu0 0.0
    %4114 = vmatprep.subr.mxu0 0.0
    %4115 = vmatpush2.msra.mxu0 0.0
    %4116 = vmatprep.subr.mxu0 0.0
    %4117 = vmatpush2.msra.mxu0 0.0
    %4118 = vmatprep.mubr.f32.mxu0 0.0
    %4119 = vmatmul.mubr.f32.gmra.mxu0 %v4001
    %v4120 = vpop.f32.mrf.mxu0
    %v4121 = vadd.f32 0.0, %v4120
    %v4122 = vpop.f32.mrf.mxu0
    %4123 = vmatprep.mubr.f32.mxu0 0.0
    %4124 = vmatmul.mubr.f32.gmra.mxu0 %v4004
    %v4125 = vpop.f32.mrf.mxu0
    %v4126 = vadd.f32 0.0, %v4125
    %v4127 = vpop.f32.mrf.mxu0
    %4128 = vmatprep.mubr.f32.mxu0 0.0
    %4129 = vmatmul.mubr.f32.gmra.mxu0 %v4007
    %v4130 = vpop.f32.mrf.mxu0
    %v4131 = vadd.f32 0.0, %v4130
    %v4132 = vpop.f32.mrf.mxu0
    %4133 = vmatprep.mubr.f32.mxu0 0.0
    %4134 = vmatmul.mubr.f32.gmra.mxu0 %v4010
    %v4135 = vpop.f32.mrf.mxu0
    %v4136 = vadd.f32 0.0, %v4135
    %v4137 = vpop.f32.mrf.mxu0
    %4138 = vmatprep.mubr.f32.mxu0 0.0
    %4139 = vmatmul.mubr.f32.gmra.mxu0 %v4013
    %v4140 = vpop.f32.mrf.mxu0
    %v4141 = vadd.f32 0.0, %v4140
    %v4142 = vpop.f32.mrf.mxu0
    %4143 = vmatprep.mubr.f32.mxu0 0.0
    %4144 = vmatmul.mubr.f32.gmra.mxu0 %v4016
    %v4145 = vpop.f32.mrf.mxu0
    %v4146 = vadd.f32 0.0, %v4145
    %v4147 = vpop.f32.mrf.mxu0
    %4148 = vmatprep.mubr.f32.mxu0 0.0
    %4149 = vmatmul.mubr.f32.gmra.mxu0 %v4019
    %v4150 = vpop.f32.mrf.mxu0
    %v4151 = vadd.f32 0.0, %v4150
    %v4152 = vpop.f32.mrf.mxu0
    %4153 = vmatprep.mubr.f32.mxu0 0.0
    %4154 = vmatmul.mubr.f32.gmra.mxu0 %v4022
    %v4155 = vpop.f32.mrf.mxu0
    %v4156 = vadd.f32 0.0, %v4155
    %v4157 = vpop.f32.mrf.mxu0
    %4158 = vmatprep.mubr.f32.mxu0 0.0
    %4159 = vmatmul.mubr.f32.gmra.mxu0 %v4025
    %v4160 = vpop.f32.mrf.mxu0
    %v4161 = vadd.f32 0.0, %v4160
    %v4162 = vpop.f32.mrf.mxu0
    %4163 = vmatprep.mubr.f32.mxu0 0.0
    %4164 = vmatmul.mubr.f32.gmra.mxu0 %v4028
    %v4165 = vpop.f32.mrf.mxu0
    %v4166 = vadd.f32 0.0, %v4165
    %v4167 = vpop.f32.mrf.mxu0
    %4168 = vmatprep.mubr.f32.mxu0 0.0
    %4169 = vmatmul.mubr.f32.gmra.mxu0 %v4031
    %v4170 = vpop.f32.mrf.mxu0
    %v4171 = vadd.f32 0.0, %v4170
    %v4172 = vpop.f32.mrf.mxu0
    %4173 = vmatprep.mubr.f32.mxu0 0.0
    %4174 = vmatmul.mubr.f32.gmra.mxu0 %v4034
    %v4175 = vpop.f32.mrf.mxu0
    %v4176 = vadd.f32 0.0, %v4175
    %v4177 = vpop.f32.mrf.mxu0
    %4178 = vmatprep.mubr.f32.mxu0 0.0
    %4179 = vmatmul.mubr.f32.gmra.mxu0 %v4037
    %v4180 = vpop.f32.mrf.mxu0
    %v4181 = vadd.f32 0.0, %v4180
    %v4182 = vpop.f32.mrf.mxu0
    %4183 = vmatprep.mubr.f32.mxu0 0.0
    %4184 = vmatmul.mubr.f32.gmra.mxu0 %v4040
    %v4185 = vpop.f32.mrf.mxu0
    %v4186 = vadd.f32 0.0, %v4185
    %v4187 = vpop.f32.mrf.mxu0
    %4188 = vmatprep.mubr.f32.mxu0 0.0
    %4189 = vmatmul.mubr.f32.gmra.mxu0 %v4043
    %v4190 = vpop.f32.mrf.mxu0
    %v4191 = vadd.f32 0.0, %v4190
    %v4192 = vpop.f32.mrf.mxu0
    %4193 = vmatprep.mubr.f32.mxu0 0.0
    %4194 = vmatmul.mubr.f32.gmra.mxu0 %v4046
    %v4195 = vpop.f32.mrf.mxu0
    %v4196 = vadd.f32 0.0, %v4195
    %v4197 = vpop.f32.mrf.mxu0
    %4198 = vmatprep.mubr.f32.mxu0 0.0
    %4199 = vmatmul.mubr.f32.gmra.mxu0 %v4049
    %v4200 = vpop.f32.mrf.mxu0
    %v4201 = vadd.f32 0.0, %v4200
    %v4202 = vpop.f32.mrf.mxu0
    %4203 = vmatprep.mubr.f32.mxu0 0.0
    %4204 = vmatmul.mubr.f32.gmra.mxu0 %v4052
    %v4205 = vpop.f32.mrf.mxu0
    %v4206 = vadd.f32 0.0, %v4205
    %v4207 = vpop.f32.mrf.mxu0
    %4208 = vdwg.mxu0
    %v4209 = vld [vmem:[#allocation9] sm:$0xff]
    %v4210 = vld [vmem:[#allocation9 + $0x8] sm:$0xff]
    %v4211 = vld [vmem:[#allocation9 + $0x10] sm:$0xff]
    %v4212 = vld [vmem:[#allocation9 + $0x18] sm:$0xff]
    %v4213 = vld [vmem:[#allocation9 + $0x20] sm:$0xff]
    %v4214 = vld [vmem:[#allocation9 + $0x28] sm:$0xff]
    %v4215 = vld [vmem:[#allocation9 + $0x30] sm:$0xff]
    %v4216 = vld [vmem:[#allocation9 + $0x38] sm:$0xff]
    %s4217 = scalar_lea.vmem [#allocation9], 64
    %v4218 = vld [vmem:[%s4217] sm:$0xff]
    %v4219 = vld [vmem:[%s4217 + $0x8] sm:$0xff]
    %v4220 = vld [vmem:[%s4217 + $0x10] sm:$0xff]
    %v4221 = vld [vmem:[%s4217 + $0x18] sm:$0xff]
    %v4222 = vld [vmem:[%s4217 + $0x20] sm:$0xff]
    %v4223 = vld [vmem:[%s4217 + $0x28] sm:$0xff]
    %v4224 = vld [vmem:[%s4217 + $0x30] sm:$0xff]
    %v4225 = vld [vmem:[%s4217 + $0x38] sm:$0xff]
    %vm4226 = vcmask 523264
    %v4228 = vsel %vm4226, %v4131, 0
    %v4231 = vsel %vm4226, %v4136, 0
    %4233 = vmatprep.subr.mxu0 0.0
    %4234 = vmatpush1.msra.mxu0 0.0
    %4235 = vmatprep.subr.mxu0 0.0
    %4236 = vmatpush1.msra.mxu0 0.0
    %4237 = vmatprep.subr.mxu0 0.0
    %4238 = vmatpush1.msra.mxu0 0.0
    %4239 = vmatprep.subr.mxu0 0.0
    %4240 = vmatpush1.msra.mxu0 0.0
    %4241 = vmatprep.subr.mxu0 0.0
    %4242 = vmatpush1.msra.mxu0 0.0
    %4243 = vmatprep.subr.mxu0 0.0
    %4244 = vmatpush1.msra.mxu0 0.0
    %4245 = vmatprep.subr.mxu0 0.0
    %4246 = vmatpush1.msra.mxu0 0.0
    %4247 = vmatprep.subr.mxu0 0.0
    %4248 = vmatpush1.msra.mxu0 0.0
    %4249 = vmatprep.subr.mxu0 0.0
    %4250 = vmatpush1.msra.mxu0 %v4225
    %4251 = vmatprep.subr.mxu0 0.0
    %4252 = vmatpush1.msra.mxu0 %v4224
    %4253 = vmatprep.subr.mxu0 0.0
    %4254 = vmatpush1.msra.mxu0 %v4223
    %4255 = vmatprep.subr.mxu0 0.0
    %4256 = vmatpush1.msra.mxu0 %v4222
    %4257 = vmatprep.subr.mxu0 0.0
    %4258 = vmatpush1.msra.mxu0 %v4221
    %4259 = vmatprep.subr.mxu0 0.0
    %4260 = vmatpush1.msra.mxu0 %v4220
    %4261 = vmatprep.subr.mxu0 0.0
    %4262 = vmatpush1.msra.mxu0 %v4219
    %4263 = vmatprep.subr.mxu0 0.0
    %4264 = vmatpush1.msra.mxu0 %v4218
    %4265 = vmatprep.subr.mxu0 0.0
    %4266 = vmatpush2.msra.mxu0 0.0
    %4267 = vmatprep.subr.mxu0 0.0
    %4268 = vmatpush2.msra.mxu0 0.0
    %4269 = vmatprep.subr.mxu0 0.0
    %4270 = vmatpush2.msra.mxu0 0.0
    %4271 = vmatprep.subr.mxu0 0.0
    %4272 = vmatpush2.msra.mxu0 0.0
    %4273 = vmatprep.subr.mxu0 0.0
    %4274 = vmatpush2.msra.mxu0 0.0
    %4275 = vmatprep.subr.mxu0 0.0
    %4276 = vmatpush2.msra.mxu0 0.0
    %4277 = vmatprep.subr.mxu0 0.0
    %4278 = vmatpush2.msra.mxu0 0.0
    %4279 = vmatprep.subr.mxu0 0.0
    %4280 = vmatpush2.msra.mxu0 0.0
    %4281 = vmatprep.subr.mxu0 0.0
    %4282 = vmatpush2.msra.mxu0 0.0
    %4283 = vmatprep.subr.mxu0 0.0
    %4284 = vmatpush2.msra.mxu0 0.0
    %4285 = vmatprep.subr.mxu0 0.0
    %4286 = vmatpush2.msra.mxu0 0.0
    %4287 = vmatprep.subr.mxu0 0.0
    %4288 = vmatpush2.msra.mxu0 0.0
    %4289 = vmatprep.subr.mxu0 0.0
    %4290 = vmatpush2.msra.mxu0 0.0
    %4291 = vmatprep.subr.mxu0 0.0
    %4292 = vmatpush2.msra.mxu0 0.0
    %4293 = vmatprep.subr.mxu0 0.0
    %4294 = vmatpush2.msra.mxu0 0.0
    %4295 = vmatprep.subr.mxu0 0.0
    %4296 = vmatpush2.msra.mxu0 0.0
    %4297 = vmatprep.mubr.f32.mxu0 0.0
    %4298 = vmatmul.mubr.f32.gmra.mxu0 %v4228
    %v4299 = vpop.f32.mrf.mxu0
    %v4300 = vadd.f32 0.0, %v4299
    %v4301 = vpop.f32.mrf.mxu0
    %4302 = vmatprep.mubr.f32.mxu0 0.0
    %4303 = vmatmul.mubr.f32.gmra.mxu0 %v4231
    %v4304 = vpop.f32.mrf.mxu0
    %v4305 = vadd.f32 0.0, %v4304
    %v4306 = vpop.f32.mrf.mxu0
    %4307 = vdwg.mxu0
    %v4309 = vsel %vm4226, %v4121, 0
    %v4312 = vsel %vm4226, %v4126, 0
    %4314 = vmatprep.subr.mxu0 0.0
    %4315 = vmatpush1.msra.mxu0 0.0
    %4316 = vmatprep.subr.mxu0 0.0
    %4317 = vmatpush1.msra.mxu0 0.0
    %4318 = vmatprep.subr.mxu0 0.0
    %4319 = vmatpush1.msra.mxu0 0.0
    %4320 = vmatprep.subr.mxu0 0.0
    %4321 = vmatpush1.msra.mxu0 0.0
    %4322 = vmatprep.subr.mxu0 0.0
    %4323 = vmatpush1.msra.mxu0 0.0
    %4324 = vmatprep.subr.mxu0 0.0
    %4325 = vmatpush1.msra.mxu0 0.0
    %4326 = vmatprep.subr.mxu0 0.0
    %4327 = vmatpush1.msra.mxu0 0.0
    %4328 = vmatprep.subr.mxu0 0.0
    %4329 = vmatpush1.msra.mxu0 0.0
    %4330 = vmatprep.subr.mxu0 0.0
    %4331 = vmatpush1.msra.mxu0 %v4216
    %4332 = vmatprep.subr.mxu0 0.0
    %4333 = vmatpush1.msra.mxu0 %v4215
    %4334 = vmatprep.subr.mxu0 0.0
    %4335 = vmatpush1.msra.mxu0 %v4214
    %4336 = vmatprep.subr.mxu0 0.0
    %4337 = vmatpush1.msra.mxu0 %v4213
    %4338 = vmatprep.subr.mxu0 0.0
    %4339 = vmatpush1.msra.mxu0 %v4212
    %4340 = vmatprep.subr.mxu0 0.0
    %4341 = vmatpush1.msra.mxu0 %v4211
    %4342 = vmatprep.subr.mxu0 0.0
    %4343 = vmatpush1.msra.mxu0 %v4210
    %4344 = vmatprep.subr.mxu0 0.0
    %4345 = vmatpush1.msra.mxu0 %v4209
    %4346 = vmatprep.subr.mxu0 0.0
    %4347 = vmatpush2.msra.mxu0 0.0
    %4348 = vmatprep.subr.mxu0 0.0
    %4349 = vmatpush2.msra.mxu0 0.0
    %4350 = vmatprep.subr.mxu0 0.0
    %4351 = vmatpush2.msra.mxu0 0.0
    %4352 = vmatprep.subr.mxu0 0.0
    %4353 = vmatpush2.msra.mxu0 0.0
    %4354 = vmatprep.subr.mxu0 0.0
    %4355 = vmatpush2.msra.mxu0 0.0
    %4356 = vmatprep.subr.mxu0 0.0
    %4357 = vmatpush2.msra.mxu0 0.0
    %4358 = vmatprep.subr.mxu0 0.0
    %4359 = vmatpush2.msra.mxu0 0.0
    %4360 = vmatprep.subr.mxu0 0.0
    %4361 = vmatpush2.msra.mxu0 0.0
    %4362 = vmatprep.subr.mxu0 0.0
    %4363 = vmatpush2.msra.mxu0 0.0
    %4364 = vmatprep.subr.mxu0 0.0
    %4365 = vmatpush2.msra.mxu0 0.0
    %4366 = vmatprep.subr.mxu0 0.0
    %4367 = vmatpush2.msra.mxu0 0.0
    %4368 = vmatprep.subr.mxu0 0.0
    %4369 = vmatpush2.msra.mxu0 0.0
    %4370 = vmatprep.subr.mxu0 0.0
    %4371 = vmatpush2.msra.mxu0 0.0
    %4372 = vmatprep.subr.mxu0 0.0
    %4373 = vmatpush2.msra.mxu0 0.0
    %4374 = vmatprep.subr.mxu0 0.0
    %4375 = vmatpush2.msra.mxu0 0.0
    %4376 = vmatprep.subr.mxu0 0.0
    %4377 = vmatpush2.msra.mxu0 0.0
    %4378 = vmatprep.mubr.f32.mxu0 0.0
    %4379 = vmatmul.mubr.f32.gmra.mxu0 %v4309
    %v4380 = vpop.f32.mrf.mxu0
    %v4381 = vadd.f32 %v4300, %v4380
    %v4382 = vpop.f32.mrf.mxu0
    %4383 = vmatprep.mubr.f32.mxu0 0.0
    %4384 = vmatmul.mubr.f32.gmra.mxu0 %v4312
    %v4385 = vpop.f32.mrf.mxu0
    %v4386 = vadd.f32 %v4305, %v4385
    %v4387 = vpop.f32.mrf.mxu0
    %4388 = vdwg.mxu0
    %s4389 = scalar_lea.vmem [#allocation9], 128
    %v4390 = vld [vmem:[%s4389] sm:$0xff]
    %v4391 = vld [vmem:[%s4389 + $0x8] sm:$0xff]
    %v4392 = vld [vmem:[%s4389 + $0x10] sm:$0xff]
    %v4393 = vld [vmem:[%s4389 + $0x18] sm:$0xff]
    %v4394 = vld [vmem:[%s4389 + $0x20] sm:$0xff]
    %v4395 = vld [vmem:[%s4389 + $0x28] sm:$0xff]
    %v4396 = vld [vmem:[%s4389 + $0x30] sm:$0xff]
    %v4397 = vld [vmem:[%s4389 + $0x38] sm:$0xff]
    %v4399 = vsel %vm4226, %v4141, 0
    %v4402 = vsel %vm4226, %v4146, 0
    %4404 = vmatprep.subr.mxu0 0.0
    %4405 = vmatpush1.msra.mxu0 0.0
    %4406 = vmatprep.subr.mxu0 0.0
    %4407 = vmatpush1.msra.mxu0 0.0
    %4408 = vmatprep.subr.mxu0 0.0
    %4409 = vmatpush1.msra.mxu0 0.0
    %4410 = vmatprep.subr.mxu0 0.0
    %4411 = vmatpush1.msra.mxu0 0.0
    %4412 = vmatprep.subr.mxu0 0.0
    %4413 = vmatpush1.msra.mxu0 0.0
    %4414 = vmatprep.subr.mxu0 0.0
    %4415 = vmatpush1.msra.mxu0 0.0
    %4416 = vmatprep.subr.mxu0 0.0
    %4417 = vmatpush1.msra.mxu0 0.0
    %4418 = vmatprep.subr.mxu0 0.0
    %4419 = vmatpush1.msra.mxu0 0.0
    %4420 = vmatprep.subr.mxu0 0.0
    %4421 = vmatpush1.msra.mxu0 %v4397
    %4422 = vmatprep.subr.mxu0 0.0
    %4423 = vmatpush1.msra.mxu0 %v4396
    %4424 = vmatprep.subr.mxu0 0.0
    %4425 = vmatpush1.msra.mxu0 %v4395
    %4426 = vmatprep.subr.mxu0 0.0
    %4427 = vmatpush1.msra.mxu0 %v4394
    %4428 = vmatprep.subr.mxu0 0.0
    %4429 = vmatpush1.msra.mxu0 %v4393
    %4430 = vmatprep.subr.mxu0 0.0
    %4431 = vmatpush1.msra.mxu0 %v4392
    %4432 = vmatprep.subr.mxu0 0.0
    %4433 = vmatpush1.msra.mxu0 %v4391
    %4434 = vmatprep.subr.mxu0 0.0
    %4435 = vmatpush1.msra.mxu0 %v4390
    %4436 = vmatprep.subr.mxu0 0.0
    %4437 = vmatpush2.msra.mxu0 0.0
    %4438 = vmatprep.subr.mxu0 0.0
    %4439 = vmatpush2.msra.mxu0 0.0
    %4440 = vmatprep.subr.mxu0 0.0
    %4441 = vmatpush2.msra.mxu0 0.0
    %4442 = vmatprep.subr.mxu0 0.0
    %4443 = vmatpush2.msra.mxu0 0.0
    %4444 = vmatprep.subr.mxu0 0.0
    %4445 = vmatpush2.msra.mxu0 0.0
    %4446 = vmatprep.subr.mxu0 0.0
    %4447 = vmatpush2.msra.mxu0 0.0
    %4448 = vmatprep.subr.mxu0 0.0
    %4449 = vmatpush2.msra.mxu0 0.0
    %4450 = vmatprep.subr.mxu0 0.0
    %4451 = vmatpush2.msra.mxu0 0.0
    %4452 = vmatprep.subr.mxu0 0.0
    %4453 = vmatpush2.msra.mxu0 0.0
    %4454 = vmatprep.subr.mxu0 0.0
    %4455 = vmatpush2.msra.mxu0 0.0
    %4456 = vmatprep.subr.mxu0 0.0
    %4457 = vmatpush2.msra.mxu0 0.0
    %4458 = vmatprep.subr.mxu0 0.0
    %4459 = vmatpush2.msra.mxu0 0.0
    %4460 = vmatprep.subr.mxu0 0.0
    %4461 = vmatpush2.msra.mxu0 0.0
    %4462 = vmatprep.subr.mxu0 0.0
    %4463 = vmatpush2.msra.mxu0 0.0
    %4464 = vmatprep.subr.mxu0 0.0
    %4465 = vmatpush2.msra.mxu0 0.0
    %4466 = vmatprep.subr.mxu0 0.0
    %4467 = vmatpush2.msra.mxu0 0.0
    %4468 = vmatprep.mubr.f32.mxu0 0.0
    %4469 = vmatmul.mubr.f32.gmra.mxu0 %v4399
    %v4470 = vpop.f32.mrf.mxu0
    %v4471 = vadd.f32 0.0, %v4470
    %v4472 = vpop.f32.mrf.mxu0
    %4473 = vmatprep.mubr.f32.mxu0 0.0
    %4474 = vmatmul.mubr.f32.gmra.mxu0 %v4402
    %v4475 = vpop.f32.mrf.mxu0
    %v4476 = vadd.f32 0.0, %v4475
    %v4477 = vpop.f32.mrf.mxu0
    %4478 = vdwg.mxu0
    %v4479 = vadd.f32 %v4381, %v4471
    %v4480 = vadd.f32 %v4386, %v4476
    %s4481 = scalar_lea.vmem [#allocation9], 192
    %v4482 = vld [vmem:[%s4481] sm:$0xff]
    %v4483 = vld [vmem:[%s4481 + $0x8] sm:$0xff]
    %v4484 = vld [vmem:[%s4481 + $0x10] sm:$0xff]
    %v4485 = vld [vmem:[%s4481 + $0x18] sm:$0xff]
    %v4486 = vld [vmem:[%s4481 + $0x20] sm:$0xff]
    %v4487 = vld [vmem:[%s4481 + $0x28] sm:$0xff]
    %v4488 = vld [vmem:[%s4481 + $0x30] sm:$0xff]
    %v4489 = vld [vmem:[%s4481 + $0x38] sm:$0xff]
    %v4491 = vsel %vm4226, %v4151, 0
    %v4494 = vsel %vm4226, %v4156, 0
    %4496 = vmatprep.subr.mxu0 0.0
    %4497 = vmatpush1.msra.mxu0 0.0
    %4498 = vmatprep.subr.mxu0 0.0
    %4499 = vmatpush1.msra.mxu0 0.0
    %4500 = vmatprep.subr.mxu0 0.0
    %4501 = vmatpush1.msra.mxu0 0.0
    %4502 = vmatprep.subr.mxu0 0.0
    %4503 = vmatpush1.msra.mxu0 0.0
    %4504 = vmatprep.subr.mxu0 0.0
    %4505 = vmatpush1.msra.mxu0 0.0
    %4506 = vmatprep.subr.mxu0 0.0
    %4507 = vmatpush1.msra.mxu0 0.0
    %4508 = vmatprep.subr.mxu0 0.0
    %4509 = vmatpush1.msra.mxu0 0.0
    %4510 = vmatprep.subr.mxu0 0.0
    %4511 = vmatpush1.msra.mxu0 0.0
    %4512 = vmatprep.subr.mxu0 0.0
    %4513 = vmatpush1.msra.mxu0 %v4489
    %4514 = vmatprep.subr.mxu0 0.0
    %4515 = vmatpush1.msra.mxu0 %v4488
    %4516 = vmatprep.subr.mxu0 0.0
    %4517 = vmatpush1.msra.mxu0 %v4487
    %4518 = vmatprep.subr.mxu0 0.0
    %4519 = vmatpush1.msra.mxu0 %v4486
    %4520 = vmatprep.subr.mxu0 0.0
    %4521 = vmatpush1.msra.mxu0 %v4485
    %4522 = vmatprep.subr.mxu0 0.0
    %4523 = vmatpush1.msra.mxu0 %v4484
    %4524 = vmatprep.subr.mxu0 0.0
    %4525 = vmatpush1.msra.mxu0 %v4483
    %4526 = vmatprep.subr.mxu0 0.0
    %4527 = vmatpush1.msra.mxu0 %v4482
    %4528 = vmatprep.subr.mxu0 0.0
    %4529 = vmatpush2.msra.mxu0 0.0
    %4530 = vmatprep.subr.mxu0 0.0
    %4531 = vmatpush2.msra.mxu0 0.0
    %4532 = vmatprep.subr.mxu0 0.0
    %4533 = vmatpush2.msra.mxu0 0.0
    %4534 = vmatprep.subr.mxu0 0.0
    %4535 = vmatpush2.msra.mxu0 0.0
    %4536 = vmatprep.subr.mxu0 0.0
    %4537 = vmatpush2.msra.mxu0 0.0
    %4538 = vmatprep.subr.mxu0 0.0
    %4539 = vmatpush2.msra.mxu0 0.0
    %4540 = vmatprep.subr.mxu0 0.0
    %4541 = vmatpush2.msra.mxu0 0.0
    %4542 = vmatprep.subr.mxu0 0.0
    %4543 = vmatpush2.msra.mxu0 0.0
    %4544 = vmatprep.subr.mxu0 0.0
    %4545 = vmatpush2.msra.mxu0 0.0
    %4546 = vmatprep.subr.mxu0 0.0
    %4547 = vmatpush2.msra.mxu0 0.0
    %4548 = vmatprep.subr.mxu0 0.0
    %4549 = vmatpush2.msra.mxu0 0.0
    %4550 = vmatprep.subr.mxu0 0.0
    %4551 = vmatpush2.msra.mxu0 0.0
    %4552 = vmatprep.subr.mxu0 0.0
    %4553 = vmatpush2.msra.mxu0 0.0
    %4554 = vmatprep.subr.mxu0 0.0
    %4555 = vmatpush2.msra.mxu0 0.0
    %4556 = vmatprep.subr.mxu0 0.0
    %4557 = vmatpush2.msra.mxu0 0.0
    %4558 = vmatprep.subr.mxu0 0.0
    %4559 = vmatpush2.msra.mxu0 0.0
    %4560 = vmatprep.mubr.f32.mxu0 0.0
    %4561 = vmatmul.mubr.f32.gmra.mxu0 %v4491
    %v4562 = vpop.f32.mrf.mxu0
    %v4563 = vadd.f32 0.0, %v4562
    %v4564 = vpop.f32.mrf.mxu0
    %4565 = vmatprep.mubr.f32.mxu0 0.0
    %4566 = vmatmul.mubr.f32.gmra.mxu0 %v4494
    %v4567 = vpop.f32.mrf.mxu0
    %v4568 = vadd.f32 0.0, %v4567
    %v4569 = vpop.f32.mrf.mxu0
    %4570 = vdwg.mxu0
    %v4571 = vadd.f32 %v4479, %v4563
    %v4572 = vadd.f32 %v4480, %v4568
    %s4573 = scalar_lea.vmem [#allocation9], 256
    %v4574 = vld [vmem:[%s4573] sm:$0xff]
    %v4575 = vld [vmem:[%s4573 + $0x8] sm:$0xff]
    %v4576 = vld [vmem:[%s4573 + $0x10] sm:$0xff]
    %v4577 = vld [vmem:[%s4573 + $0x18] sm:$0xff]
    %v4578 = vld [vmem:[%s4573 + $0x20] sm:$0xff]
    %v4579 = vld [vmem:[%s4573 + $0x28] sm:$0xff]
    %v4580 = vld [vmem:[%s4573 + $0x30] sm:$0xff]
    %v4581 = vld [vmem:[%s4573 + $0x38] sm:$0xff]
    %v4583 = vsel %vm4226, %v4161, 0
    %v4586 = vsel %vm4226, %v4166, 0
    %4588 = vmatprep.subr.mxu0 0.0
    %4589 = vmatpush1.msra.mxu0 0.0
    %4590 = vmatprep.subr.mxu0 0.0
    %4591 = vmatpush1.msra.mxu0 0.0
    %4592 = vmatprep.subr.mxu0 0.0
    %4593 = vmatpush1.msra.mxu0 0.0
    %4594 = vmatprep.subr.mxu0 0.0
    %4595 = vmatpush1.msra.mxu0 0.0
    %4596 = vmatprep.subr.mxu0 0.0
    %4597 = vmatpush1.msra.mxu0 0.0
    %4598 = vmatprep.subr.mxu0 0.0
    %4599 = vmatpush1.msra.mxu0 0.0
    %4600 = vmatprep.subr.mxu0 0.0
    %4601 = vmatpush1.msra.mxu0 0.0
    %4602 = vmatprep.subr.mxu0 0.0
    %4603 = vmatpush1.msra.mxu0 0.0
    %4604 = vmatprep.subr.mxu0 0.0
    %4605 = vmatpush1.msra.mxu0 %v4581
    %4606 = vmatprep.subr.mxu0 0.0
    %4607 = vmatpush1.msra.mxu0 %v4580
    %4608 = vmatprep.subr.mxu0 0.0
    %4609 = vmatpush1.msra.mxu0 %v4579
    %4610 = vmatprep.subr.mxu0 0.0
    %4611 = vmatpush1.msra.mxu0 %v4578
    %4612 = vmatprep.subr.mxu0 0.0
    %4613 = vmatpush1.msra.mxu0 %v4577
    %4614 = vmatprep.subr.mxu0 0.0
    %4615 = vmatpush1.msra.mxu0 %v4576
    %4616 = vmatprep.subr.mxu0 0.0
    %4617 = vmatpush1.msra.mxu0 %v4575
    %4618 = vmatprep.subr.mxu0 0.0
    %4619 = vmatpush1.msra.mxu0 %v4574
    %4620 = vmatprep.subr.mxu0 0.0
    %4621 = vmatpush2.msra.mxu0 0.0
    %4622 = vmatprep.subr.mxu0 0.0
    %4623 = vmatpush2.msra.mxu0 0.0
    %4624 = vmatprep.subr.mxu0 0.0
    %4625 = vmatpush2.msra.mxu0 0.0
    %4626 = vmatprep.subr.mxu0 0.0
    %4627 = vmatpush2.msra.mxu0 0.0
    %4628 = vmatprep.subr.mxu0 0.0
    %4629 = vmatpush2.msra.mxu0 0.0
    %4630 = vmatprep.subr.mxu0 0.0
    %4631 = vmatpush2.msra.mxu0 0.0
    %4632 = vmatprep.subr.mxu0 0.0
    %4633 = vmatpush2.msra.mxu0 0.0
    %4634 = vmatprep.subr.mxu0 0.0
    %4635 = vmatpush2.msra.mxu0 0.0
    %4636 = vmatprep.subr.mxu0 0.0
    %4637 = vmatpush2.msra.mxu0 0.0
    %4638 = vmatprep.subr.mxu0 0.0
    %4639 = vmatpush2.msra.mxu0 0.0
    %4640 = vmatprep.subr.mxu0 0.0
    %4641 = vmatpush2.msra.mxu0 0.0
    %4642 = vmatprep.subr.mxu0 0.0
    %4643 = vmatpush2.msra.mxu0 0.0
    %4644 = vmatprep.subr.mxu0 0.0
    %4645 = vmatpush2.msra.mxu0 0.0
    %4646 = vmatprep.subr.mxu0 0.0
    %4647 = vmatpush2.msra.mxu0 0.0
    %4648 = vmatprep.subr.mxu0 0.0
    %4649 = vmatpush2.msra.mxu0 0.0
    %4650 = vmatprep.subr.mxu0 0.0
    %4651 = vmatpush2.msra.mxu0 0.0
    %4652 = vmatprep.mubr.f32.mxu0 0.0
    %4653 = vmatmul.mubr.f32.gmra.mxu0 %v4583
    %v4654 = vpop.f32.mrf.mxu0
    %v4655 = vadd.f32 0.0, %v4654
    %v4656 = vpop.f32.mrf.mxu0
    %4657 = vmatprep.mubr.f32.mxu0 0.0
    %4658 = vmatmul.mubr.f32.gmra.mxu0 %v4586
    %v4659 = vpop.f32.mrf.mxu0
    %v4660 = vadd.f32 0.0, %v4659
    %v4661 = vpop.f32.mrf.mxu0
    %4662 = vdwg.mxu0
    %v4663 = vadd.f32 %v4571, %v4655
    %v4664 = vadd.f32 %v4572, %v4660
    %s4665 = scalar_lea.vmem [#allocation9], 320
    %v4666 = vld [vmem:[%s4665] sm:$0xff]
    %v4667 = vld [vmem:[%s4665 + $0x8] sm:$0xff]
    %v4668 = vld [vmem:[%s4665 + $0x10] sm:$0xff]
    %v4669 = vld [vmem:[%s4665 + $0x18] sm:$0xff]
    %v4670 = vld [vmem:[%s4665 + $0x20] sm:$0xff]
    %v4671 = vld [vmem:[%s4665 + $0x28] sm:$0xff]
    %v4672 = vld [vmem:[%s4665 + $0x30] sm:$0xff]
    %v4673 = vld [vmem:[%s4665 + $0x38] sm:$0xff]
    %v4675 = vsel %vm4226, %v4171, 0
    %v4678 = vsel %vm4226, %v4176, 0
    %4680 = vmatprep.subr.mxu0 0.0
    %4681 = vmatpush1.msra.mxu0 0.0
    %4682 = vmatprep.subr.mxu0 0.0
    %4683 = vmatpush1.msra.mxu0 0.0
    %4684 = vmatprep.subr.mxu0 0.0
    %4685 = vmatpush1.msra.mxu0 0.0
    %4686 = vmatprep.subr.mxu0 0.0
    %4687 = vmatpush1.msra.mxu0 0.0
    %4688 = vmatprep.subr.mxu0 0.0
    %4689 = vmatpush1.msra.mxu0 0.0
    %4690 = vmatprep.subr.mxu0 0.0
    %4691 = vmatpush1.msra.mxu0 0.0
    %4692 = vmatprep.subr.mxu0 0.0
    %4693 = vmatpush1.msra.mxu0 0.0
    %4694 = vmatprep.subr.mxu0 0.0
    %4695 = vmatpush1.msra.mxu0 0.0
    %4696 = vmatprep.subr.mxu0 0.0
    %4697 = vmatpush1.msra.mxu0 %v4673
    %4698 = vmatprep.subr.mxu0 0.0
    %4699 = vmatpush1.msra.mxu0 %v4672
    %4700 = vmatprep.subr.mxu0 0.0
    %4701 = vmatpush1.msra.mxu0 %v4671
    %4702 = vmatprep.subr.mxu0 0.0
    %4703 = vmatpush1.msra.mxu0 %v4670
    %4704 = vmatprep.subr.mxu0 0.0
    %4705 = vmatpush1.msra.mxu0 %v4669
    %4706 = vmatprep.subr.mxu0 0.0
    %4707 = vmatpush1.msra.mxu0 %v4668
    %4708 = vmatprep.subr.mxu0 0.0
    %4709 = vmatpush1.msra.mxu0 %v4667
    %4710 = vmatprep.subr.mxu0 0.0
    %4711 = vmatpush1.msra.mxu0 %v4666
    %4712 = vmatprep.subr.mxu0 0.0
    %4713 = vmatpush2.msra.mxu0 0.0
    %4714 = vmatprep.subr.mxu0 0.0
    %4715 = vmatpush2.msra.mxu0 0.0
    %4716 = vmatprep.subr.mxu0 0.0
    %4717 = vmatpush2.msra.mxu0 0.0
    %4718 = vmatprep.subr.mxu0 0.0
    %4719 = vmatpush2.msra.mxu0 0.0
    %4720 = vmatprep.subr.mxu0 0.0
    %4721 = vmatpush2.msra.mxu0 0.0
    %4722 = vmatprep.subr.mxu0 0.0
    %4723 = vmatpush2.msra.mxu0 0.0
    %4724 = vmatprep.subr.mxu0 0.0
    %4725 = vmatpush2.msra.mxu0 0.0
    %4726 = vmatprep.subr.mxu0 0.0
    %4727 = vmatpush2.msra.mxu0 0.0
    %4728 = vmatprep.subr.mxu0 0.0
    %4729 = vmatpush2.msra.mxu0 0.0
    %4730 = vmatprep.subr.mxu0 0.0
    %4731 = vmatpush2.msra.mxu0 0.0
    %4732 = vmatprep.subr.mxu0 0.0
    %4733 = vmatpush2.msra.mxu0 0.0
    %4734 = vmatprep.subr.mxu0 0.0
    %4735 = vmatpush2.msra.mxu0 0.0
    %4736 = vmatprep.subr.mxu0 0.0
    %4737 = vmatpush2.msra.mxu0 0.0
    %4738 = vmatprep.subr.mxu0 0.0
    %4739 = vmatpush2.msra.mxu0 0.0
    %4740 = vmatprep.subr.mxu0 0.0
    %4741 = vmatpush2.msra.mxu0 0.0
    %4742 = vmatprep.subr.mxu0 0.0
    %4743 = vmatpush2.msra.mxu0 0.0
    %4744 = vmatprep.mubr.f32.mxu0 0.0
    %4745 = vmatmul.mubr.f32.gmra.mxu0 %v4675
    %v4746 = vpop.f32.mrf.mxu0
    %v4747 = vadd.f32 0.0, %v4746
    %v4748 = vpop.f32.mrf.mxu0
    %4749 = vmatprep.mubr.f32.mxu0 0.0
    %4750 = vmatmul.mubr.f32.gmra.mxu0 %v4678
    %v4751 = vpop.f32.mrf.mxu0
    %v4752 = vadd.f32 0.0, %v4751
    %v4753 = vpop.f32.mrf.mxu0
    %4754 = vdwg.mxu0
    %v4755 = vadd.f32 %v4663, %v4747
    %v4756 = vadd.f32 %v4664, %v4752
    %s4757 = scalar_lea.vmem [#allocation9], 384
    %v4758 = vld [vmem:[%s4757] sm:$0xff]
    %v4759 = vld [vmem:[%s4757 + $0x8] sm:$0xff]
    %v4760 = vld [vmem:[%s4757 + $0x10] sm:$0xff]
    %v4761 = vld [vmem:[%s4757 + $0x18] sm:$0xff]
    %v4762 = vld [vmem:[%s4757 + $0x20] sm:$0xff]
    %v4763 = vld [vmem:[%s4757 + $0x28] sm:$0xff]
    %v4764 = vld [vmem:[%s4757 + $0x30] sm:$0xff]
    %v4765 = vld [vmem:[%s4757 + $0x38] sm:$0xff]
    %v4767 = vsel %vm4226, %v4181, 0
    %v4770 = vsel %vm4226, %v4186, 0
    %4772 = vmatprep.subr.mxu0 0.0
    %4773 = vmatpush1.msra.mxu0 0.0
    %4774 = vmatprep.subr.mxu0 0.0
    %4775 = vmatpush1.msra.mxu0 0.0
    %4776 = vmatprep.subr.mxu0 0.0
    %4777 = vmatpush1.msra.mxu0 0.0
    %4778 = vmatprep.subr.mxu0 0.0
    %4779 = vmatpush1.msra.mxu0 0.0
    %4780 = vmatprep.subr.mxu0 0.0
    %4781 = vmatpush1.msra.mxu0 0.0
    %4782 = vmatprep.subr.mxu0 0.0
    %4783 = vmatpush1.msra.mxu0 0.0
    %4784 = vmatprep.subr.mxu0 0.0
    %4785 = vmatpush1.msra.mxu0 0.0
    %4786 = vmatprep.subr.mxu0 0.0
    %4787 = vmatpush1.msra.mxu0 0.0
    %4788 = vmatprep.subr.mxu0 0.0
    %4789 = vmatpush1.msra.mxu0 %v4765
    %4790 = vmatprep.subr.mxu0 0.0
    %4791 = vmatpush1.msra.mxu0 %v4764
    %4792 = vmatprep.subr.mxu0 0.0
    %4793 = vmatpush1.msra.mxu0 %v4763
    %4794 = vmatprep.subr.mxu0 0.0
    %4795 = vmatpush1.msra.mxu0 %v4762
    %4796 = vmatprep.subr.mxu0 0.0
    %4797 = vmatpush1.msra.mxu0 %v4761
    %4798 = vmatprep.subr.mxu0 0.0
    %4799 = vmatpush1.msra.mxu0 %v4760
    %4800 = vmatprep.subr.mxu0 0.0
    %4801 = vmatpush1.msra.mxu0 %v4759
    %4802 = vmatprep.subr.mxu0 0.0
    %4803 = vmatpush1.msra.mxu0 %v4758
    %4804 = vmatprep.subr.mxu0 0.0
    %4805 = vmatpush2.msra.mxu0 0.0
    %4806 = vmatprep.subr.mxu0 0.0
    %4807 = vmatpush2.msra.mxu0 0.0
    %4808 = vmatprep.subr.mxu0 0.0
    %4809 = vmatpush2.msra.mxu0 0.0
    %4810 = vmatprep.subr.mxu0 0.0
    %4811 = vmatpush2.msra.mxu0 0.0
    %4812 = vmatprep.subr.mxu0 0.0
    %4813 = vmatpush2.msra.mxu0 0.0
    %4814 = vmatprep.subr.mxu0 0.0
    %4815 = vmatpush2.msra.mxu0 0.0
    %4816 = vmatprep.subr.mxu0 0.0
    %4817 = vmatpush2.msra.mxu0 0.0
    %4818 = vmatprep.subr.mxu0 0.0
    %4819 = vmatpush2.msra.mxu0 0.0
    %4820 = vmatprep.subr.mxu0 0.0
    %4821 = vmatpush2.msra.mxu0 0.0
    %4822 = vmatprep.subr.mxu0 0.0
    %4823 = vmatpush2.msra.mxu0 0.0
    %4824 = vmatprep.subr.mxu0 0.0
    %4825 = vmatpush2.msra.mxu0 0.0
    %4826 = vmatprep.subr.mxu0 0.0
    %4827 = vmatpush2.msra.mxu0 0.0
    %4828 = vmatprep.subr.mxu0 0.0
    %4829 = vmatpush2.msra.mxu0 0.0
    %4830 = vmatprep.subr.mxu0 0.0
    %4831 = vmatpush2.msra.mxu0 0.0
    %4832 = vmatprep.subr.mxu0 0.0
    %4833 = vmatpush2.msra.mxu0 0.0
    %4834 = vmatprep.subr.mxu0 0.0
    %4835 = vmatpush2.msra.mxu0 0.0
    %4836 = vmatprep.mubr.f32.mxu0 0.0
    %4837 = vmatmul.mubr.f32.gmra.mxu0 %v4767
    %v4838 = vpop.f32.mrf.mxu0
    %v4839 = vadd.f32 0.0, %v4838
    %v4840 = vpop.f32.mrf.mxu0
    %4841 = vmatprep.mubr.f32.mxu0 0.0
    %4842 = vmatmul.mubr.f32.gmra.mxu0 %v4770
    %v4843 = vpop.f32.mrf.mxu0
    %v4844 = vadd.f32 0.0, %v4843
    %v4845 = vpop.f32.mrf.mxu0
    %4846 = vdwg.mxu0
    %v4847 = vadd.f32 %v4755, %v4839
    %v4848 = vadd.f32 %v4756, %v4844
    %s4849 = scalar_lea.vmem [#allocation9], 448
    %v4850 = vld [vmem:[%s4849] sm:$0xff]
    %v4851 = vld [vmem:[%s4849 + $0x8] sm:$0xff]
    %v4852 = vld [vmem:[%s4849 + $0x10] sm:$0xff]
    %v4853 = vld [vmem:[%s4849 + $0x18] sm:$0xff]
    %v4854 = vld [vmem:[%s4849 + $0x20] sm:$0xff]
    %v4855 = vld [vmem:[%s4849 + $0x28] sm:$0xff]
    %v4856 = vld [vmem:[%s4849 + $0x30] sm:$0xff]
    %v4857 = vld [vmem:[%s4849 + $0x38] sm:$0xff]
    %v4859 = vsel %vm4226, %v4191, 0
    %v4862 = vsel %vm4226, %v4196, 0
    %4864 = vmatprep.subr.mxu0 0.0
    %4865 = vmatpush1.msra.mxu0 0.0
    %4866 = vmatprep.subr.mxu0 0.0
    %4867 = vmatpush1.msra.mxu0 0.0
    %4868 = vmatprep.subr.mxu0 0.0
    %4869 = vmatpush1.msra.mxu0 0.0
    %4870 = vmatprep.subr.mxu0 0.0
    %4871 = vmatpush1.msra.mxu0 0.0
    %4872 = vmatprep.subr.mxu0 0.0
    %4873 = vmatpush1.msra.mxu0 0.0
    %4874 = vmatprep.subr.mxu0 0.0
    %4875 = vmatpush1.msra.mxu0 0.0
    %4876 = vmatprep.subr.mxu0 0.0
    %4877 = vmatpush1.msra.mxu0 0.0
    %4878 = vmatprep.subr.mxu0 0.0
    %4879 = vmatpush1.msra.mxu0 0.0
    %4880 = vmatprep.subr.mxu0 0.0
    %4881 = vmatpush1.msra.mxu0 %v4857
    %4882 = vmatprep.subr.mxu0 0.0
    %4883 = vmatpush1.msra.mxu0 %v4856
    %4884 = vmatprep.subr.mxu0 0.0
    %4885 = vmatpush1.msra.mxu0 %v4855
    %4886 = vmatprep.subr.mxu0 0.0
    %4887 = vmatpush1.msra.mxu0 %v4854
    %4888 = vmatprep.subr.mxu0 0.0
    %4889 = vmatpush1.msra.mxu0 %v4853
    %4890 = vmatprep.subr.mxu0 0.0
    %4891 = vmatpush1.msra.mxu0 %v4852
    %4892 = vmatprep.subr.mxu0 0.0
    %4893 = vmatpush1.msra.mxu0 %v4851
    %4894 = vmatprep.subr.mxu0 0.0
    %4895 = vmatpush1.msra.mxu0 %v4850
    %4896 = vmatprep.subr.mxu0 0.0
    %4897 = vmatpush2.msra.mxu0 0.0
    %4898 = vmatprep.subr.mxu0 0.0
    %4899 = vmatpush2.msra.mxu0 0.0
    %4900 = vmatprep.subr.mxu0 0.0
    %4901 = vmatpush2.msra.mxu0 0.0
    %4902 = vmatprep.subr.mxu0 0.0
    %4903 = vmatpush2.msra.mxu0 0.0
    %4904 = vmatprep.subr.mxu0 0.0
    %4905 = vmatpush2.msra.mxu0 0.0
    %4906 = vmatprep.subr.mxu0 0.0
    %4907 = vmatpush2.msra.mxu0 0.0
    %4908 = vmatprep.subr.mxu0 0.0
    %4909 = vmatpush2.msra.mxu0 0.0
    %4910 = vmatprep.subr.mxu0 0.0
    %4911 = vmatpush2.msra.mxu0 0.0
    %4912 = vmatprep.subr.mxu0 0.0
    %4913 = vmatpush2.msra.mxu0 0.0
    %4914 = vmatprep.subr.mxu0 0.0
    %4915 = vmatpush2.msra.mxu0 0.0
    %4916 = vmatprep.subr.mxu0 0.0
    %4917 = vmatpush2.msra.mxu0 0.0
    %4918 = vmatprep.subr.mxu0 0.0
    %4919 = vmatpush2.msra.mxu0 0.0
    %4920 = vmatprep.subr.mxu0 0.0
    %4921 = vmatpush2.msra.mxu0 0.0
    %4922 = vmatprep.subr.mxu0 0.0
    %4923 = vmatpush2.msra.mxu0 0.0
    %4924 = vmatprep.subr.mxu0 0.0
    %4925 = vmatpush2.msra.mxu0 0.0
    %4926 = vmatprep.subr.mxu0 0.0
    %4927 = vmatpush2.msra.mxu0 0.0
    %4928 = vmatprep.mubr.f32.mxu0 0.0
    %4929 = vmatmul.mubr.f32.gmra.mxu0 %v4859
    %v4930 = vpop.f32.mrf.mxu0
    %v4931 = vadd.f32 0.0, %v4930
    %v4932 = vpop.f32.mrf.mxu0
    %4933 = vmatprep.mubr.f32.mxu0 0.0
    %4934 = vmatmul.mubr.f32.gmra.mxu0 %v4862
    %v4935 = vpop.f32.mrf.mxu0
    %v4936 = vadd.f32 0.0, %v4935
    %v4937 = vpop.f32.mrf.mxu0
    %4938 = vdwg.mxu0
    %v4939 = vadd.f32 %v4847, %v4931
    %v4940 = vadd.f32 %v4848, %v4936
    %s4941 = scalar_lea.vmem [#allocation9], 512
    %v4942 = vld [vmem:[%s4941] sm:$0xff]
    %v4943 = vld [vmem:[%s4941 + $0x8] sm:$0xff]
    %v4944 = vld [vmem:[%s4941 + $0x10] sm:$0xff]
    %v4945 = vld [vmem:[%s4941 + $0x18] sm:$0xff]
    %v4946 = vld [vmem:[%s4941 + $0x20] sm:$0xff]
    %v4947 = vld [vmem:[%s4941 + $0x28] sm:$0xff]
    %v4948 = vld [vmem:[%s4941 + $0x30] sm:$0xff]
    %v4949 = vld [vmem:[%s4941 + $0x38] sm:$0xff]
    %v4951 = vsel %vm4226, %v4201, 0
    %v4954 = vsel %vm4226, %v4206, 0
    %4956 = vmatprep.subr.mxu0 0.0
    %4957 = vmatpush1.msra.mxu0 0.0
    %4958 = vmatprep.subr.mxu0 0.0
    %4959 = vmatpush1.msra.mxu0 0.0
    %4960 = vmatprep.subr.mxu0 0.0
    %4961 = vmatpush1.msra.mxu0 0.0
    %4962 = vmatprep.subr.mxu0 0.0
    %4963 = vmatpush1.msra.mxu0 0.0
    %4964 = vmatprep.subr.mxu0 0.0
    %4965 = vmatpush1.msra.mxu0 0.0
    %4966 = vmatprep.subr.mxu0 0.0
    %4967 = vmatpush1.msra.mxu0 0.0
    %4968 = vmatprep.subr.mxu0 0.0
    %4969 = vmatpush1.msra.mxu0 0.0
    %4970 = vmatprep.subr.mxu0 0.0
    %4971 = vmatpush1.msra.mxu0 0.0
    %4972 = vmatprep.subr.mxu0 0.0
    %4973 = vmatpush1.msra.mxu0 %v4949
    %4974 = vmatprep.subr.mxu0 0.0
    %4975 = vmatpush1.msra.mxu0 %v4948
    %4976 = vmatprep.subr.mxu0 0.0
    %4977 = vmatpush1.msra.mxu0 %v4947
    %4978 = vmatprep.subr.mxu0 0.0
    %4979 = vmatpush1.msra.mxu0 %v4946
    %4980 = vmatprep.subr.mxu0 0.0
    %4981 = vmatpush1.msra.mxu0 %v4945
    %4982 = vmatprep.subr.mxu0 0.0
    %4983 = vmatpush1.msra.mxu0 %v4944
    %4984 = vmatprep.subr.mxu0 0.0
    %4985 = vmatpush1.msra.mxu0 %v4943
    %4986 = vmatprep.subr.mxu0 0.0
    %4987 = vmatpush1.msra.mxu0 %v4942
    %4988 = vmatprep.subr.mxu0 0.0
    %4989 = vmatpush2.msra.mxu0 0.0
    %4990 = vmatprep.subr.mxu0 0.0
    %4991 = vmatpush2.msra.mxu0 0.0
    %4992 = vmatprep.subr.mxu0 0.0
    %4993 = vmatpush2.msra.mxu0 0.0
    %4994 = vmatprep.subr.mxu0 0.0
    %4995 = vmatpush2.msra.mxu0 0.0
    %4996 = vmatprep.subr.mxu0 0.0
    %4997 = vmatpush2.msra.mxu0 0.0
    %4998 = vmatprep.subr.mxu0 0.0
    %4999 = vmatpush2.msra.mxu0 0.0
    %5000 = vmatprep.subr.mxu0 0.0
    %5001 = vmatpush2.msra.mxu0 0.0
    %5002 = vmatprep.subr.mxu0 0.0
    %5003 = vmatpush2.msra.mxu0 0.0
    %5004 = vmatprep.subr.mxu0 0.0
    %5005 = vmatpush2.msra.mxu0 0.0
    %5006 = vmatprep.subr.mxu0 0.0
    %5007 = vmatpush2.msra.mxu0 0.0
    %5008 = vmatprep.subr.mxu0 0.0
    %5009 = vmatpush2.msra.mxu0 0.0
    %5010 = vmatprep.subr.mxu0 0.0
    %5011 = vmatpush2.msra.mxu0 0.0
    %5012 = vmatprep.subr.mxu0 0.0
    %5013 = vmatpush2.msra.mxu0 0.0
    %5014 = vmatprep.subr.mxu0 0.0
    %5015 = vmatpush2.msra.mxu0 0.0
    %5016 = vmatprep.subr.mxu0 0.0
    %5017 = vmatpush2.msra.mxu0 0.0
    %5018 = vmatprep.subr.mxu0 0.0
    %5019 = vmatpush2.msra.mxu0 0.0
    %5020 = vmatprep.mubr.f32.mxu0 0.0
    %5021 = vmatmul.mubr.f32.gmra.mxu0 %v4951
    %v5022 = vpop.f32.mrf.mxu0
    %v5023 = vadd.f32 0.0, %v5022
    %v5024 = vpop.f32.mrf.mxu0
    %5025 = vmatprep.mubr.f32.mxu0 0.0
    %5026 = vmatmul.mubr.f32.gmra.mxu0 %v4954
    %v5027 = vpop.f32.mrf.mxu0
    %v5028 = vadd.f32 0.0, %v5027
    %v5029 = vpop.f32.mrf.mxu0
    %5030 = vdwg.mxu0
    %v5031 = vadd.f32 %v4939, %v5023
    %v5032 = vadd.f32 %v4940, %v5028
    %v5033 = vld [vmem:[#allocation10] sm:$0x1]
    %v5035 = vlaneseq
    %v5036 = vshrl.u32 %v5035, 7
    %v5037 = vsub.s32 0, %v5036
    %v5038 = vrot.slane %v5033, %v5037
    %v5040 = vadd.f32 %v5031, %v5038
    %v5041 = vadd.f32 %v5032, %v5038
    %v5042 = vmax.f32 %v5040, 0.0
    %v5043 = vmax.f32 %v5041, 0.0
    %v5044 = vld [vmem:[%s10] sm:$0xff]
    %v5045 = vld [vmem:[%s10 + $0x8] sm:$0xff]
    %v5046 = vld [vmem:[%s10 + $0x10] sm:$0xff]
    %v5047 = vld [vmem:[%s10 + $0x18] sm:$0xff]
    %v5048 = vld [vmem:[%s10 + $0x20] sm:$0xff]
    %v5049 = vld [vmem:[%s10 + $0x28] sm:$0xff]
    %v5050 = vld [vmem:[%s10 + $0x30] sm:$0xff]
    %v5051 = vld [vmem:[%s10 + $0x38] sm:$0xff]
    %v5052 = vld [vmem:[%s10 + $0x40] sm:$0xff]
    %v5053 = vld [vmem:[%s10 + $0x48] sm:$0xff]
    %v5054 = vld [vmem:[%s10 + $0x50] sm:$0xff]
    %v5055 = vld [vmem:[%s10 + $0x58] sm:$0xff]
    %v5056 = vld [vmem:[%s10 + $0x60] sm:$0xff]
    %v5057 = vld [vmem:[%s10 + $0x68] sm:$0xff]
    %v5058 = vld [vmem:[%s10 + $0x70] sm:$0xff]
    %v5059 = vld [vmem:[%s10 + $0x78] sm:$0xff]
    %v5060 = vld [vmem:[%s10 + $0x80] sm:$0xff]
    %v5061 = vld [vmem:[%s10 + $0x88] sm:$0xff]
    %vm5062 = vcmask 130048
    %v5064 = vsel %vm5062, %v5044, 0
    %v5067 = vsel %vm5062, %v5045, 0
    %v5070 = vsel %vm5062, %v5046, 0
    %v5073 = vsel %vm5062, %v5047, 0
    %v5076 = vsel %vm5062, %v5048, 0
    %v5079 = vsel %vm5062, %v5049, 0
    %v5082 = vsel %vm5062, %v5050, 0
    %v5085 = vsel %vm5062, %v5051, 0
    %v5088 = vsel %vm5062, %v5052, 0
    %v5091 = vsel %vm5062, %v5053, 0
    %v5094 = vsel %vm5062, %v5054, 0
    %v5097 = vsel %vm5062, %v5055, 0
    %v5100 = vsel %vm5062, %v5056, 0
    %v5103 = vsel %vm5062, %v5057, 0
    %v5106 = vsel %vm5062, %v5058, 0
    %v5109 = vsel %vm5062, %v5059, 0
    %v5112 = vsel %vm5062, %v5060, 0
    %v5115 = vsel %vm5062, %v5061, 0
    %5117 = vmatprep.subr.mxu0 0.0
    %5118 = vmatpush1.msra.mxu0 0.0
    %5119 = vmatprep.subr.mxu0 0.0
    %5120 = vmatpush1.msra.mxu0 0.0
    %5121 = vmatprep.subr.mxu0 0.0
    %5122 = vmatpush1.msra.mxu0 0.0
    %5123 = vmatprep.subr.mxu0 0.0
    %5124 = vmatpush1.msra.mxu0 0.0
    %5125 = vmatprep.subr.mxu0 0.0
    %5126 = vmatpush1.msra.mxu0 0.0
    %5127 = vmatprep.subr.mxu0 0.0
    %5128 = vmatpush1.msra.mxu0 0.0
    %5129 = vmatprep.subr.mxu0 0.0
    %5130 = vmatpush1.msra.mxu0 0.0
    %5131 = vmatprep.subr.mxu0 0.0
    %5132 = vmatpush1.msra.mxu0 0.0
    %5133 = vmatprep.subr.mxu0 0.0
    %5134 = vmatpush1.msra.mxu0 0.0
    %5135 = vmatprep.subr.mxu0 0.0
    %5136 = vmatpush1.msra.mxu0 0.0
    %5137 = vmatprep.subr.mxu0 0.0
    %5138 = vmatpush1.msra.mxu0 0.0
    %5139 = vmatprep.subr.mxu0 0.0
    %5140 = vmatpush1.msra.mxu0 0.0
    %5141 = vmatprep.subr.mxu0 0.0
    %5142 = vmatpush1.msra.mxu0 0.0
    %5143 = vmatprep.subr.mxu0 0.0
    %5144 = vmatpush1.msra.mxu0 0.0
    %5145 = vmatprep.subr.mxu0 0.0
    %5146 = vmatpush1.msra.mxu0 %v5043
    %5147 = vmatprep.subr.mxu0 0.0
    %5148 = vmatpush1.msra.mxu0 %v5042
    %5149 = vmatprep.subr.mxu0 0.0
    %5150 = vmatpush2.msra.mxu0 0.0
    %5151 = vmatprep.subr.mxu0 0.0
    %5152 = vmatpush2.msra.mxu0 0.0
    %5153 = vmatprep.subr.mxu0 0.0
    %5154 = vmatpush2.msra.mxu0 0.0
    %5155 = vmatprep.subr.mxu0 0.0
    %5156 = vmatpush2.msra.mxu0 0.0
    %5157 = vmatprep.subr.mxu0 0.0
    %5158 = vmatpush2.msra.mxu0 0.0
    %5159 = vmatprep.subr.mxu0 0.0
    %5160 = vmatpush2.msra.mxu0 0.0
    %5161 = vmatprep.subr.mxu0 0.0
    %5162 = vmatpush2.msra.mxu0 0.0
    %5163 = vmatprep.subr.mxu0 0.0
    %5164 = vmatpush2.msra.mxu0 0.0
    %5165 = vmatprep.subr.mxu0 0.0
    %5166 = vmatpush2.msra.mxu0 0.0
    %5167 = vmatprep.subr.mxu0 0.0
    %5168 = vmatpush2.msra.mxu0 0.0
    %5169 = vmatprep.subr.mxu0 0.0
    %5170 = vmatpush2.msra.mxu0 0.0
    %5171 = vmatprep.subr.mxu0 0.0
    %5172 = vmatpush2.msra.mxu0 0.0
    %5173 = vmatprep.subr.mxu0 0.0
    %5174 = vmatpush2.msra.mxu0 0.0
    %5175 = vmatprep.subr.mxu0 0.0
    %5176 = vmatpush2.msra.mxu0 0.0
    %5177 = vmatprep.subr.mxu0 0.0
    %5178 = vmatpush2.msra.mxu0 0.0
    %5179 = vmatprep.subr.mxu0 0.0
    %5180 = vmatpush2.msra.mxu0 0.0
    %5181 = vmatprep.mubr.f32.mxu0 0.0
    %5182 = vmatmul.mubr.f32.gmra.mxu0 %v5064
    %v5183 = vpop.f32.mrf.mxu0
    %v5184 = vadd.f32 0.0, %v5183
    %v5185 = vpop.f32.mrf.mxu0
    %5186 = vmatprep.mubr.f32.mxu0 0.0
    %5187 = vmatmul.mubr.f32.gmra.mxu0 %v5067
    %v5188 = vpop.f32.mrf.mxu0
    %v5189 = vadd.f32 0.0, %v5188
    %v5190 = vpop.f32.mrf.mxu0
    %5191 = vmatprep.mubr.f32.mxu0 0.0
    %5192 = vmatmul.mubr.f32.gmra.mxu0 %v5070
    %v5193 = vpop.f32.mrf.mxu0
    %v5194 = vadd.f32 0.0, %v5193
    %v5195 = vpop.f32.mrf.mxu0
    %5196 = vmatprep.mubr.f32.mxu0 0.0
    %5197 = vmatmul.mubr.f32.gmra.mxu0 %v5073
    %v5198 = vpop.f32.mrf.mxu0
    %v5199 = vadd.f32 0.0, %v5198
    %v5200 = vpop.f32.mrf.mxu0
    %5201 = vmatprep.mubr.f32.mxu0 0.0
    %5202 = vmatmul.mubr.f32.gmra.mxu0 %v5076
    %v5203 = vpop.f32.mrf.mxu0
    %v5204 = vadd.f32 0.0, %v5203
    %v5205 = vpop.f32.mrf.mxu0
    %5206 = vmatprep.mubr.f32.mxu0 0.0
    %5207 = vmatmul.mubr.f32.gmra.mxu0 %v5079
    %v5208 = vpop.f32.mrf.mxu0
    %v5209 = vadd.f32 0.0, %v5208
    %v5210 = vpop.f32.mrf.mxu0
    %5211 = vmatprep.mubr.f32.mxu0 0.0
    %5212 = vmatmul.mubr.f32.gmra.mxu0 %v5082
    %v5213 = vpop.f32.mrf.mxu0
    %v5214 = vadd.f32 0.0, %v5213
    %v5215 = vpop.f32.mrf.mxu0
    %5216 = vmatprep.mubr.f32.mxu0 0.0
    %5217 = vmatmul.mubr.f32.gmra.mxu0 %v5085
    %v5218 = vpop.f32.mrf.mxu0
    %v5219 = vadd.f32 0.0, %v5218
    %v5220 = vpop.f32.mrf.mxu0
    %5221 = vmatprep.mubr.f32.mxu0 0.0
    %5222 = vmatmul.mubr.f32.gmra.mxu0 %v5088
    %v5223 = vpop.f32.mrf.mxu0
    %v5224 = vadd.f32 0.0, %v5223
    %v5225 = vpop.f32.mrf.mxu0
    %5226 = vmatprep.mubr.f32.mxu0 0.0
    %5227 = vmatmul.mubr.f32.gmra.mxu0 %v5091
    %v5228 = vpop.f32.mrf.mxu0
    %v5229 = vadd.f32 0.0, %v5228
    %v5230 = vpop.f32.mrf.mxu0
    %5231 = vmatprep.mubr.f32.mxu0 0.0
    %5232 = vmatmul.mubr.f32.gmra.mxu0 %v5094
    %v5233 = vpop.f32.mrf.mxu0
    %v5234 = vadd.f32 0.0, %v5233
    %v5235 = vpop.f32.mrf.mxu0
    %5236 = vmatprep.mubr.f32.mxu0 0.0
    %5237 = vmatmul.mubr.f32.gmra.mxu0 %v5097
    %v5238 = vpop.f32.mrf.mxu0
    %v5239 = vadd.f32 0.0, %v5238
    %v5240 = vpop.f32.mrf.mxu0
    %5241 = vmatprep.mubr.f32.mxu0 0.0
    %5242 = vmatmul.mubr.f32.gmra.mxu0 %v5100
    %v5243 = vpop.f32.mrf.mxu0
    %v5244 = vadd.f32 0.0, %v5243
    %v5245 = vpop.f32.mrf.mxu0
    %5246 = vmatprep.mubr.f32.mxu0 0.0
    %5247 = vmatmul.mubr.f32.gmra.mxu0 %v5103
    %v5248 = vpop.f32.mrf.mxu0
    %v5249 = vadd.f32 0.0, %v5248
    %v5250 = vpop.f32.mrf.mxu0
    %5251 = vmatprep.mubr.f32.mxu0 0.0
    %5252 = vmatmul.mubr.f32.gmra.mxu0 %v5106
    %v5253 = vpop.f32.mrf.mxu0
    %v5254 = vadd.f32 0.0, %v5253
    %v5255 = vpop.f32.mrf.mxu0
    %5256 = vmatprep.mubr.f32.mxu0 0.0
    %5257 = vmatmul.mubr.f32.gmra.mxu0 %v5109
    %v5258 = vpop.f32.mrf.mxu0
    %v5259 = vadd.f32 0.0, %v5258
    %v5260 = vpop.f32.mrf.mxu0
    %5261 = vmatprep.mubr.f32.mxu0 0.0
    %5262 = vmatmul.mubr.f32.gmra.mxu0 %v5112
    %v5263 = vpop.f32.mrf.mxu0
    %v5264 = vadd.f32 0.0, %v5263
    %v5265 = vpop.f32.mrf.mxu0
    %5266 = vmatprep.mubr.f32.mxu0 0.0
    %5267 = vmatmul.mubr.f32.gmra.mxu0 %v5115
    %v5268 = vpop.f32.mrf.mxu0
    %v5269 = vadd.f32 0.0, %v5268
    %v5270 = vpop.f32.mrf.mxu0
    %5271 = vdwg.mxu0
    %v5272 = vld [vmem:[#allocation12] sm:$0xff]
    %v5273 = vld [vmem:[#allocation12 + $0x8] sm:$0xff]
    %v5274 = vld [vmem:[#allocation12 + $0x10] sm:$0xff]
    %v5275 = vld [vmem:[#allocation12 + $0x18] sm:$0xff]
    %v5276 = vld [vmem:[#allocation12 + $0x20] sm:$0xff]
    %v5277 = vld [vmem:[#allocation12 + $0x28] sm:$0xff]
    %v5278 = vld [vmem:[#allocation12 + $0x30] sm:$0xff]
    %v5279 = vld [vmem:[#allocation12 + $0x38] sm:$0xff]
    %v5280 = vld [vmem:[#allocation12 + $0x40] sm:$0xff]
    %v5281 = vld [vmem:[#allocation12 + $0x48] sm:$0xff]
    %v5282 = vld [vmem:[#allocation12 + $0x50] sm:$0xff]
    %v5283 = vld [vmem:[#allocation12 + $0x58] sm:$0xff]
    %v5284 = vld [vmem:[#allocation12 + $0x60] sm:$0xff]
    %v5285 = vld [vmem:[#allocation12 + $0x68] sm:$0xff]
    %v5286 = vld [vmem:[#allocation12 + $0x70] sm:$0xff]
    %v5287 = vld [vmem:[#allocation12 + $0x78] sm:$0xff]
    %v5288 = vld [vmem:[#allocation12 + $0x80] sm:$0xff]
    %v5289 = vld [vmem:[#allocation12 + $0x88] sm:$0xff]
    %v5290 = vld [vmem:[#allocation12 + $0x90] sm:$0xff]
    %v5291 = vld [vmem:[#allocation12 + $0x98] sm:$0xff]
    %v5292 = vld [vmem:[#allocation12 + $0xa0] sm:$0xff]
    %v5293 = vld [vmem:[#allocation12 + $0xa8] sm:$0xff]
    %v5294 = vld [vmem:[#allocation12 + $0xb0] sm:$0xff]
    %v5295 = vld [vmem:[#allocation12 + $0xb8] sm:$0xff]
    %v5296 = vld [vmem:[#allocation12 + $0xc0] sm:$0xff]
    %v5297 = vld [vmem:[#allocation12 + $0xc8] sm:$0xff]
    %v5298 = vld [vmem:[#allocation12 + $0xd0] sm:$0xff]
    %v5299 = vld [vmem:[#allocation12 + $0xd8] sm:$0xff]
    %v5300 = vld [vmem:[#allocation12 + $0xe0] sm:$0xff]
    %v5301 = vld [vmem:[#allocation12 + $0xe8] sm:$0xff]
    %v5302 = vld [vmem:[#allocation12 + $0xf0] sm:$0xff]
    %v5303 = vld [vmem:[#allocation12 + $0xf8] sm:$0xff]
    %s5304 = scalar_lea.vmem [#allocation12], 256
    %v5305 = vld [vmem:[%s5304] sm:$0xff]
    %v5306 = vld [vmem:[%s5304 + $0x8] sm:$0xff]
    %v5307 = vld [vmem:[%s5304 + $0x10] sm:$0xff]
    %v5308 = vld [vmem:[%s5304 + $0x18] sm:$0xff]
    %v5309 = vld [vmem:[%s5304 + $0x20] sm:$0xff]
    %v5310 = vld [vmem:[%s5304 + $0x28] sm:$0xff]
    %v5311 = vld [vmem:[%s5304 + $0x30] sm:$0xff]
    %v5312 = vld [vmem:[%s5304 + $0x38] sm:$0xff]
    %v5313 = vld [vmem:[%s5304 + $0x40] sm:$0xff]
    %v5314 = vld [vmem:[%s5304 + $0x48] sm:$0xff]
    %v5315 = vld [vmem:[%s5304 + $0x50] sm:$0xff]
    %v5316 = vld [vmem:[%s5304 + $0x58] sm:$0xff]
    %v5317 = vld [vmem:[%s5304 + $0x60] sm:$0xff]
    %v5318 = vld [vmem:[%s5304 + $0x68] sm:$0xff]
    %v5319 = vld [vmem:[%s5304 + $0x70] sm:$0xff]
    %v5320 = vld [vmem:[%s5304 + $0x78] sm:$0xff]
    %v5321 = vld [vmem:[%s5304 + $0x80] sm:$0xff]
    %v5322 = vld [vmem:[%s5304 + $0x88] sm:$0xff]
    %v5323 = vld [vmem:[%s5304 + $0x90] sm:$0xff]
    %v5324 = vld [vmem:[%s5304 + $0x98] sm:$0xff]
    %v5325 = vld [vmem:[%s5304 + $0xa0] sm:$0xff]
    %v5326 = vld [vmem:[%s5304 + $0xa8] sm:$0xff]
    %v5327 = vld [vmem:[%s5304 + $0xb0] sm:$0xff]
    %v5328 = vld [vmem:[%s5304 + $0xb8] sm:$0xff]
    %v5329 = vld [vmem:[%s5304 + $0xc0] sm:$0xff]
    %v5330 = vld [vmem:[%s5304 + $0xc8] sm:$0xff]
    %v5331 = vld [vmem:[%s5304 + $0xd0] sm:$0xff]
    %v5332 = vld [vmem:[%s5304 + $0xd8] sm:$0xff]
    %v5333 = vld [vmem:[%s5304 + $0xe0] sm:$0xff]
    %v5334 = vld [vmem:[%s5304 + $0xe8] sm:$0xff]
    %v5335 = vld [vmem:[%s5304 + $0xf0] sm:$0xff]
    %v5336 = vld [vmem:[%s5304 + $0xf8] sm:$0xff]
    %5337 = vmatprep.subr.mxu0 %v5336
    %5338 = vmatpush1.msra.mxu0 %v5335
    %5339 = vmatprep.subr.mxu0 %v5334
    %5340 = vmatpush1.msra.mxu0 %v5333
    %5341 = vmatprep.subr.mxu0 %v5332
    %5342 = vmatpush1.msra.mxu0 %v5331
    %5343 = vmatprep.subr.mxu0 %v5330
    %5344 = vmatpush1.msra.mxu0 %v5329
    %5345 = vmatprep.subr.mxu0 %v5328
    %5346 = vmatpush1.msra.mxu0 %v5327
    %5347 = vmatprep.subr.mxu0 %v5326
    %5348 = vmatpush1.msra.mxu0 %v5325
    %5349 = vmatprep.subr.mxu0 %v5324
    %5350 = vmatpush1.msra.mxu0 %v5323
    %5351 = vmatprep.subr.mxu0 %v5322
    %5352 = vmatpush1.msra.mxu0 %v5321
    %5353 = vmatprep.subr.mxu0 %v5320
    %5354 = vmatpush1.msra.mxu0 %v5319
    %5355 = vmatprep.subr.mxu0 %v5318
    %5356 = vmatpush1.msra.mxu0 %v5317
    %5357 = vmatprep.subr.mxu0 %v5316
    %5358 = vmatpush1.msra.mxu0 %v5315
    %5359 = vmatprep.subr.mxu0 %v5314
    %5360 = vmatpush1.msra.mxu0 %v5313
    %5361 = vmatprep.subr.mxu0 %v5312
    %5362 = vmatpush1.msra.mxu0 %v5311
    %5363 = vmatprep.subr.mxu0 %v5310
    %5364 = vmatpush1.msra.mxu0 %v5309
    %5365 = vmatprep.subr.mxu0 %v5308
    %5366 = vmatpush1.msra.mxu0 %v5307
    %5367 = vmatprep.subr.mxu0 %v5306
    %5368 = vmatpush1.msra.mxu0 %v5305
    %5369 = vmatprep.subr.mxu0 0.0
    %5370 = vmatpush2.msra.mxu0 0.0
    %5371 = vmatprep.subr.mxu0 0.0
    %5372 = vmatpush2.msra.mxu0 0.0
    %5373 = vmatprep.subr.mxu0 0.0
    %5374 = vmatpush2.msra.mxu0 0.0
    %5375 = vmatprep.subr.mxu0 0.0
    %5376 = vmatpush2.msra.mxu0 0.0
    %5377 = vmatprep.subr.mxu0 0.0
    %5378 = vmatpush2.msra.mxu0 0.0
    %5379 = vmatprep.subr.mxu0 0.0
    %5380 = vmatpush2.msra.mxu0 0.0
    %5381 = vmatprep.subr.mxu0 0.0
    %5382 = vmatpush2.msra.mxu0 0.0
    %5383 = vmatprep.subr.mxu0 0.0
    %5384 = vmatpush2.msra.mxu0 0.0
    %5385 = vmatprep.subr.mxu0 0.0
    %5386 = vmatpush2.msra.mxu0 0.0
    %5387 = vmatprep.subr.mxu0 0.0
    %5388 = vmatpush2.msra.mxu0 0.0
    %5389 = vmatprep.subr.mxu0 0.0
    %5390 = vmatpush2.msra.mxu0 0.0
    %5391 = vmatprep.subr.mxu0 0.0
    %5392 = vmatpush2.msra.mxu0 0.0
    %5393 = vmatprep.subr.mxu0 0.0
    %5394 = vmatpush2.msra.mxu0 0.0
    %5395 = vmatprep.subr.mxu0 0.0
    %5396 = vmatpush2.msra.mxu0 0.0
    %5397 = vmatprep.subr.mxu0 0.0
    %5398 = vmatpush2.msra.mxu0 0.0
    %5399 = vmatprep.subr.mxu0 0.0
    %5400 = vmatpush2.msra.mxu0 0.0
    %5401 = vmatprep.mubr.f32.mxu0 0.0
    %5402 = vmatmul.mubr.f32.gmra.mxu0 %v5194
    %v5403 = vpop.f32.mrf.mxu0
    %v5404 = vadd.f32 0.0, %v5403
    %v5405 = vpop.f32.mrf.mxu0
    %v5406 = vadd.f32 0.0, %v5405
    %5407 = vmatprep.mubr.f32.mxu0 0.0
    %5408 = vmatmul.mubr.f32.gmra.mxu0 %v5199
    %v5409 = vpop.f32.mrf.mxu0
    %v5410 = vadd.f32 0.0, %v5409
    %v5411 = vpop.f32.mrf.mxu0
    %v5412 = vadd.f32 0.0, %v5411
    %5413 = vdwg.mxu0
    %5414 = vmatprep.subr.mxu0 %v5303
    %5415 = vmatpush1.msra.mxu0 %v5302
    %5416 = vmatprep.subr.mxu0 %v5301
    %5417 = vmatpush1.msra.mxu0 %v5300
    %5418 = vmatprep.subr.mxu0 %v5299
    %5419 = vmatpush1.msra.mxu0 %v5298
    %5420 = vmatprep.subr.mxu0 %v5297
    %5421 = vmatpush1.msra.mxu0 %v5296
    %5422 = vmatprep.subr.mxu0 %v5295
    %5423 = vmatpush1.msra.mxu0 %v5294
    %5424 = vmatprep.subr.mxu0 %v5293
    %5425 = vmatpush1.msra.mxu0 %v5292
    %5426 = vmatprep.subr.mxu0 %v5291
    %5427 = vmatpush1.msra.mxu0 %v5290
    %5428 = vmatprep.subr.mxu0 %v5289
    %5429 = vmatpush1.msra.mxu0 %v5288
    %5430 = vmatprep.subr.mxu0 %v5287
    %5431 = vmatpush1.msra.mxu0 %v5286
    %5432 = vmatprep.subr.mxu0 %v5285
    %5433 = vmatpush1.msra.mxu0 %v5284
    %5434 = vmatprep.subr.mxu0 %v5283
    %5435 = vmatpush1.msra.mxu0 %v5282
    %5436 = vmatprep.subr.mxu0 %v5281
    %5437 = vmatpush1.msra.mxu0 %v5280
    %5438 = vmatprep.subr.mxu0 %v5279
    %5439 = vmatpush1.msra.mxu0 %v5278
    %5440 = vmatprep.subr.mxu0 %v5277
    %5441 = vmatpush1.msra.mxu0 %v5276
    %5442 = vmatprep.subr.mxu0 %v5275
    %5443 = vmatpush1.msra.mxu0 %v5274
    %5444 = vmatprep.subr.mxu0 %v5273
    %5445 = vmatpush1.msra.mxu0 %v5272
    %5446 = vmatprep.subr.mxu0 0.0
    %5447 = vmatpush2.msra.mxu0 0.0
    %5448 = vmatprep.subr.mxu0 0.0
    %5449 = vmatpush2.msra.mxu0 0.0
    %5450 = vmatprep.subr.mxu0 0.0
    %5451 = vmatpush2.msra.mxu0 0.0
    %5452 = vmatprep.subr.mxu0 0.0
    %5453 = vmatpush2.msra.mxu0 0.0
    %5454 = vmatprep.subr.mxu0 0.0
    %5455 = vmatpush2.msra.mxu0 0.0
    %5456 = vmatprep.subr.mxu0 0.0
    %5457 = vmatpush2.msra.mxu0 0.0
    %5458 = vmatprep.subr.mxu0 0.0
    %5459 = vmatpush2.msra.mxu0 0.0
    %5460 = vmatprep.subr.mxu0 0.0
    %5461 = vmatpush2.msra.mxu0 0.0
    %5462 = vmatprep.subr.mxu0 0.0
    %5463 = vmatpush2.msra.mxu0 0.0
    %5464 = vmatprep.subr.mxu0 0.0
    %5465 = vmatpush2.msra.mxu0 0.0
    %5466 = vmatprep.subr.mxu0 0.0
    %5467 = vmatpush2.msra.mxu0 0.0
    %5468 = vmatprep.subr.mxu0 0.0
    %5469 = vmatpush2.msra.mxu0 0.0
    %5470 = vmatprep.subr.mxu0 0.0
    %5471 = vmatpush2.msra.mxu0 0.0
    %5472 = vmatprep.subr.mxu0 0.0
    %5473 = vmatpush2.msra.mxu0 0.0
    %5474 = vmatprep.subr.mxu0 0.0
    %5475 = vmatpush2.msra.mxu0 0.0
    %5476 = vmatprep.subr.mxu0 0.0
    %5477 = vmatpush2.msra.mxu0 0.0
    %5478 = vmatprep.mubr.f32.mxu0 0.0
    %5479 = vmatmul.mubr.f32.gmra.mxu0 %v5184
    %v5480 = vpop.f32.mrf.mxu0
    %v5481 = vadd.f32 %v5404, %v5480
    %v5482 = vpop.f32.mrf.mxu0
    %v5483 = vadd.f32 %v5406, %v5482
    %5484 = vmatprep.mubr.f32.mxu0 0.0
    %5485 = vmatmul.mubr.f32.gmra.mxu0 %v5189
    %v5486 = vpop.f32.mrf.mxu0
    %v5487 = vadd.f32 %v5410, %v5486
    %v5488 = vpop.f32.mrf.mxu0
    %v5489 = vadd.f32 %v5412, %v5488
    %5490 = vdwg.mxu0
    %s5491 = scalar_lea.vmem [#allocation12], 512
    %v5492 = vld [vmem:[%s5491] sm:$0xff]
    %v5493 = vld [vmem:[%s5491 + $0x8] sm:$0xff]
    %v5494 = vld [vmem:[%s5491 + $0x10] sm:$0xff]
    %v5495 = vld [vmem:[%s5491 + $0x18] sm:$0xff]
    %v5496 = vld [vmem:[%s5491 + $0x20] sm:$0xff]
    %v5497 = vld [vmem:[%s5491 + $0x28] sm:$0xff]
    %v5498 = vld [vmem:[%s5491 + $0x30] sm:$0xff]
    %v5499 = vld [vmem:[%s5491 + $0x38] sm:$0xff]
    %v5500 = vld [vmem:[%s5491 + $0x40] sm:$0xff]
    %v5501 = vld [vmem:[%s5491 + $0x48] sm:$0xff]
    %v5502 = vld [vmem:[%s5491 + $0x50] sm:$0xff]
    %v5503 = vld [vmem:[%s5491 + $0x58] sm:$0xff]
    %v5504 = vld [vmem:[%s5491 + $0x60] sm:$0xff]
    %v5505 = vld [vmem:[%s5491 + $0x68] sm:$0xff]
    %v5506 = vld [vmem:[%s5491 + $0x70] sm:$0xff]
    %v5507 = vld [vmem:[%s5491 + $0x78] sm:$0xff]
    %v5508 = vld [vmem:[%s5491 + $0x80] sm:$0xff]
    %v5509 = vld [vmem:[%s5491 + $0x88] sm:$0xff]
    %v5510 = vld [vmem:[%s5491 + $0x90] sm:$0xff]
    %v5511 = vld [vmem:[%s5491 + $0x98] sm:$0xff]
    %v5512 = vld [vmem:[%s5491 + $0xa0] sm:$0xff]
    %v5513 = vld [vmem:[%s5491 + $0xa8] sm:$0xff]
    %v5514 = vld [vmem:[%s5491 + $0xb0] sm:$0xff]
    %v5515 = vld [vmem:[%s5491 + $0xb8] sm:$0xff]
    %v5516 = vld [vmem:[%s5491 + $0xc0] sm:$0xff]
    %v5517 = vld [vmem:[%s5491 + $0xc8] sm:$0xff]
    %v5518 = vld [vmem:[%s5491 + $0xd0] sm:$0xff]
    %v5519 = vld [vmem:[%s5491 + $0xd8] sm:$0xff]
    %v5520 = vld [vmem:[%s5491 + $0xe0] sm:$0xff]
    %v5521 = vld [vmem:[%s5491 + $0xe8] sm:$0xff]
    %v5522 = vld [vmem:[%s5491 + $0xf0] sm:$0xff]
    %v5523 = vld [vmem:[%s5491 + $0xf8] sm:$0xff]
    %5524 = vmatprep.subr.mxu0 %v5523
    %5525 = vmatpush1.msra.mxu0 %v5522
    %5526 = vmatprep.subr.mxu0 %v5521
    %5527 = vmatpush1.msra.mxu0 %v5520
    %5528 = vmatprep.subr.mxu0 %v5519
    %5529 = vmatpush1.msra.mxu0 %v5518
    %5530 = vmatprep.subr.mxu0 %v5517
    %5531 = vmatpush1.msra.mxu0 %v5516
    %5532 = vmatprep.subr.mxu0 %v5515
    %5533 = vmatpush1.msra.mxu0 %v5514
    %5534 = vmatprep.subr.mxu0 %v5513
    %5535 = vmatpush1.msra.mxu0 %v5512
    %5536 = vmatprep.subr.mxu0 %v5511
    %5537 = vmatpush1.msra.mxu0 %v5510
    %5538 = vmatprep.subr.mxu0 %v5509
    %5539 = vmatpush1.msra.mxu0 %v5508
    %5540 = vmatprep.subr.mxu0 %v5507
    %5541 = vmatpush1.msra.mxu0 %v5506
    %5542 = vmatprep.subr.mxu0 %v5505
    %5543 = vmatpush1.msra.mxu0 %v5504
    %5544 = vmatprep.subr.mxu0 %v5503
    %5545 = vmatpush1.msra.mxu0 %v5502
    %5546 = vmatprep.subr.mxu0 %v5501
    %5547 = vmatpush1.msra.mxu0 %v5500
    %5548 = vmatprep.subr.mxu0 %v5499
    %5549 = vmatpush1.msra.mxu0 %v5498
    %5550 = vmatprep.subr.mxu0 %v5497
    %5551 = vmatpush1.msra.mxu0 %v5496
    %5552 = vmatprep.subr.mxu0 %v5495
    %5553 = vmatpush1.msra.mxu0 %v5494
    %5554 = vmatprep.subr.mxu0 %v5493
    %5555 = vmatpush1.msra.mxu0 %v5492
    %5556 = vmatprep.subr.mxu0 0.0
    %5557 = vmatpush2.msra.mxu0 0.0
    %5558 = vmatprep.subr.mxu0 0.0
    %5559 = vmatpush2.msra.mxu0 0.0
    %5560 = vmatprep.subr.mxu0 0.0
    %5561 = vmatpush2.msra.mxu0 0.0
    %5562 = vmatprep.subr.mxu0 0.0
    %5563 = vmatpush2.msra.mxu0 0.0
    %5564 = vmatprep.subr.mxu0 0.0
    %5565 = vmatpush2.msra.mxu0 0.0
    %5566 = vmatprep.subr.mxu0 0.0
    %5567 = vmatpush2.msra.mxu0 0.0
    %5568 = vmatprep.subr.mxu0 0.0
    %5569 = vmatpush2.msra.mxu0 0.0
    %5570 = vmatprep.subr.mxu0 0.0
    %5571 = vmatpush2.msra.mxu0 0.0
    %5572 = vmatprep.subr.mxu0 0.0
    %5573 = vmatpush2.msra.mxu0 0.0
    %5574 = vmatprep.subr.mxu0 0.0
    %5575 = vmatpush2.msra.mxu0 0.0
    %5576 = vmatprep.subr.mxu0 0.0
    %5577 = vmatpush2.msra.mxu0 0.0
    %5578 = vmatprep.subr.mxu0 0.0
    %5579 = vmatpush2.msra.mxu0 0.0
    %5580 = vmatprep.subr.mxu0 0.0
    %5581 = vmatpush2.msra.mxu0 0.0
    %5582 = vmatprep.subr.mxu0 0.0
    %5583 = vmatpush2.msra.mxu0 0.0
    %5584 = vmatprep.subr.mxu0 0.0
    %5585 = vmatpush2.msra.mxu0 0.0
    %5586 = vmatprep.subr.mxu0 0.0
    %5587 = vmatpush2.msra.mxu0 0.0
    %5588 = vmatprep.mubr.f32.mxu0 0.0
    %5589 = vmatmul.mubr.f32.gmra.mxu0 %v5204
    %v5590 = vpop.f32.mrf.mxu0
    %v5591 = vadd.f32 0.0, %v5590
    %v5592 = vpop.f32.mrf.mxu0
    %v5593 = vadd.f32 0.0, %v5592
    %5594 = vmatprep.mubr.f32.mxu0 0.0
    %5595 = vmatmul.mubr.f32.gmra.mxu0 %v5209
    %v5596 = vpop.f32.mrf.mxu0
    %v5597 = vadd.f32 0.0, %v5596
    %v5598 = vpop.f32.mrf.mxu0
    %v5599 = vadd.f32 0.0, %v5598
    %5600 = vdwg.mxu0
    %v5601 = vadd.f32 %v5481, %v5591
    %v5602 = vadd.f32 %v5483, %v5593
    %v5603 = vadd.f32 %v5487, %v5597
    %v5604 = vadd.f32 %v5489, %v5599
    %s5605 = scalar_lea.vmem [#allocation12], 768
    %v5606 = vld [vmem:[%s5605] sm:$0xff]
    %v5607 = vld [vmem:[%s5605 + $0x8] sm:$0xff]
    %v5608 = vld [vmem:[%s5605 + $0x10] sm:$0xff]
    %v5609 = vld [vmem:[%s5605 + $0x18] sm:$0xff]
    %v5610 = vld [vmem:[%s5605 + $0x20] sm:$0xff]
    %v5611 = vld [vmem:[%s5605 + $0x28] sm:$0xff]
    %v5612 = vld [vmem:[%s5605 + $0x30] sm:$0xff]
    %v5613 = vld [vmem:[%s5605 + $0x38] sm:$0xff]
    %v5614 = vld [vmem:[%s5605 + $0x40] sm:$0xff]
    %v5615 = vld [vmem:[%s5605 + $0x48] sm:$0xff]
    %v5616 = vld [vmem:[%s5605 + $0x50] sm:$0xff]
    %v5617 = vld [vmem:[%s5605 + $0x58] sm:$0xff]
    %v5618 = vld [vmem:[%s5605 + $0x60] sm:$0xff]
    %v5619 = vld [vmem:[%s5605 + $0x68] sm:$0xff]
    %v5620 = vld [vmem:[%s5605 + $0x70] sm:$0xff]
    %v5621 = vld [vmem:[%s5605 + $0x78] sm:$0xff]
    %v5622 = vld [vmem:[%s5605 + $0x80] sm:$0xff]
    %v5623 = vld [vmem:[%s5605 + $0x88] sm:$0xff]
    %v5624 = vld [vmem:[%s5605 + $0x90] sm:$0xff]
    %v5625 = vld [vmem:[%s5605 + $0x98] sm:$0xff]
    %v5626 = vld [vmem:[%s5605 + $0xa0] sm:$0xff]
    %v5627 = vld [vmem:[%s5605 + $0xa8] sm:$0xff]
    %v5628 = vld [vmem:[%s5605 + $0xb0] sm:$0xff]
    %v5629 = vld [vmem:[%s5605 + $0xb8] sm:$0xff]
    %v5630 = vld [vmem:[%s5605 + $0xc0] sm:$0xff]
    %v5631 = vld [vmem:[%s5605 + $0xc8] sm:$0xff]
    %v5632 = vld [vmem:[%s5605 + $0xd0] sm:$0xff]
    %v5633 = vld [vmem:[%s5605 + $0xd8] sm:$0xff]
    %v5634 = vld [vmem:[%s5605 + $0xe0] sm:$0xff]
    %v5635 = vld [vmem:[%s5605 + $0xe8] sm:$0xff]
    %v5636 = vld [vmem:[%s5605 + $0xf0] sm:$0xff]
    %v5637 = vld [vmem:[%s5605 + $0xf8] sm:$0xff]
    %5638 = vmatprep.subr.mxu0 %v5637
    %5639 = vmatpush1.msra.mxu0 %v5636
    %5640 = vmatprep.subr.mxu0 %v5635
    %5641 = vmatpush1.msra.mxu0 %v5634
    %5642 = vmatprep.subr.mxu0 %v5633
    %5643 = vmatpush1.msra.mxu0 %v5632
    %5644 = vmatprep.subr.mxu0 %v5631
    %5645 = vmatpush1.msra.mxu0 %v5630
    %5646 = vmatprep.subr.mxu0 %v5629
    %5647 = vmatpush1.msra.mxu0 %v5628
    %5648 = vmatprep.subr.mxu0 %v5627
    %5649 = vmatpush1.msra.mxu0 %v5626
    %5650 = vmatprep.subr.mxu0 %v5625
    %5651 = vmatpush1.msra.mxu0 %v5624
    %5652 = vmatprep.subr.mxu0 %v5623
    %5653 = vmatpush1.msra.mxu0 %v5622
    %5654 = vmatprep.subr.mxu0 %v5621
    %5655 = vmatpush1.msra.mxu0 %v5620
    %5656 = vmatprep.subr.mxu0 %v5619
    %5657 = vmatpush1.msra.mxu0 %v5618
    %5658 = vmatprep.subr.mxu0 %v5617
    %5659 = vmatpush1.msra.mxu0 %v5616
    %5660 = vmatprep.subr.mxu0 %v5615
    %5661 = vmatpush1.msra.mxu0 %v5614
    %5662 = vmatprep.subr.mxu0 %v5613
    %5663 = vmatpush1.msra.mxu0 %v5612
    %5664 = vmatprep.subr.mxu0 %v5611
    %5665 = vmatpush1.msra.mxu0 %v5610
    %5666 = vmatprep.subr.mxu0 %v5609
    %5667 = vmatpush1.msra.mxu0 %v5608
    %5668 = vmatprep.subr.mxu0 %v5607
    %5669 = vmatpush1.msra.mxu0 %v5606
    %5670 = vmatprep.subr.mxu0 0.0
    %5671 = vmatpush2.msra.mxu0 0.0
    %5672 = vmatprep.subr.mxu0 0.0
    %5673 = vmatpush2.msra.mxu0 0.0
    %5674 = vmatprep.subr.mxu0 0.0
    %5675 = vmatpush2.msra.mxu0 0.0
    %5676 = vmatprep.subr.mxu0 0.0
    %5677 = vmatpush2.msra.mxu0 0.0
    %5678 = vmatprep.subr.mxu0 0.0
    %5679 = vmatpush2.msra.mxu0 0.0
    %5680 = vmatprep.subr.mxu0 0.0
    %5681 = vmatpush2.msra.mxu0 0.0
    %5682 = vmatprep.subr.mxu0 0.0
    %5683 = vmatpush2.msra.mxu0 0.0
    %5684 = vmatprep.subr.mxu0 0.0
    %5685 = vmatpush2.msra.mxu0 0.0
    %5686 = vmatprep.subr.mxu0 0.0
    %5687 = vmatpush2.msra.mxu0 0.0
    %5688 = vmatprep.subr.mxu0 0.0
    %5689 = vmatpush2.msra.mxu0 0.0
    %5690 = vmatprep.subr.mxu0 0.0
    %5691 = vmatpush2.msra.mxu0 0.0
    %5692 = vmatprep.subr.mxu0 0.0
    %5693 = vmatpush2.msra.mxu0 0.0
    %5694 = vmatprep.subr.mxu0 0.0
    %5695 = vmatpush2.msra.mxu0 0.0
    %5696 = vmatprep.subr.mxu0 0.0
    %5697 = vmatpush2.msra.mxu0 0.0
    %5698 = vmatprep.subr.mxu0 0.0
    %5699 = vmatpush2.msra.mxu0 0.0
    %5700 = vmatprep.subr.mxu0 0.0
    %5701 = vmatpush2.msra.mxu0 0.0
    %5702 = vmatprep.mubr.f32.mxu0 0.0
    %5703 = vmatmul.mubr.f32.gmra.mxu0 %v5214
    %v5704 = vpop.f32.mrf.mxu0
    %v5705 = vadd.f32 0.0, %v5704
    %v5706 = vpop.f32.mrf.mxu0
    %v5707 = vadd.f32 0.0, %v5706
    %5708 = vmatprep.mubr.f32.mxu0 0.0
    %5709 = vmatmul.mubr.f32.gmra.mxu0 %v5219
    %v5710 = vpop.f32.mrf.mxu0
    %v5711 = vadd.f32 0.0, %v5710
    %v5712 = vpop.f32.mrf.mxu0
    %v5713 = vadd.f32 0.0, %v5712
    %5714 = vdwg.mxu0
    %v5715 = vadd.f32 %v5601, %v5705
    %v5716 = vadd.f32 %v5602, %v5707
    %v5717 = vadd.f32 %v5603, %v5711
    %v5718 = vadd.f32 %v5604, %v5713
    %s5719 = scalar_lea.vmem [#allocation12], 1024
    %v5720 = vld [vmem:[%s5719] sm:$0xff]
    %v5721 = vld [vmem:[%s5719 + $0x8] sm:$0xff]
    %v5722 = vld [vmem:[%s5719 + $0x10] sm:$0xff]
    %v5723 = vld [vmem:[%s5719 + $0x18] sm:$0xff]
    %v5724 = vld [vmem:[%s5719 + $0x20] sm:$0xff]
    %v5725 = vld [vmem:[%s5719 + $0x28] sm:$0xff]
    %v5726 = vld [vmem:[%s5719 + $0x30] sm:$0xff]
    %v5727 = vld [vmem:[%s5719 + $0x38] sm:$0xff]
    %v5728 = vld [vmem:[%s5719 + $0x40] sm:$0xff]
    %v5729 = vld [vmem:[%s5719 + $0x48] sm:$0xff]
    %v5730 = vld [vmem:[%s5719 + $0x50] sm:$0xff]
    %v5731 = vld [vmem:[%s5719 + $0x58] sm:$0xff]
    %v5732 = vld [vmem:[%s5719 + $0x60] sm:$0xff]
    %v5733 = vld [vmem:[%s5719 + $0x68] sm:$0xff]
    %v5734 = vld [vmem:[%s5719 + $0x70] sm:$0xff]
    %v5735 = vld [vmem:[%s5719 + $0x78] sm:$0xff]
    %v5736 = vld [vmem:[%s5719 + $0x80] sm:$0xff]
    %v5737 = vld [vmem:[%s5719 + $0x88] sm:$0xff]
    %v5738 = vld [vmem:[%s5719 + $0x90] sm:$0xff]
    %v5739 = vld [vmem:[%s5719 + $0x98] sm:$0xff]
    %v5740 = vld [vmem:[%s5719 + $0xa0] sm:$0xff]
    %v5741 = vld [vmem:[%s5719 + $0xa8] sm:$0xff]
    %v5742 = vld [vmem:[%s5719 + $0xb0] sm:$0xff]
    %v5743 = vld [vmem:[%s5719 + $0xb8] sm:$0xff]
    %v5744 = vld [vmem:[%s5719 + $0xc0] sm:$0xff]
    %v5745 = vld [vmem:[%s5719 + $0xc8] sm:$0xff]
    %v5746 = vld [vmem:[%s5719 + $0xd0] sm:$0xff]
    %v5747 = vld [vmem:[%s5719 + $0xd8] sm:$0xff]
    %v5748 = vld [vmem:[%s5719 + $0xe0] sm:$0xff]
    %v5749 = vld [vmem:[%s5719 + $0xe8] sm:$0xff]
    %v5750 = vld [vmem:[%s5719 + $0xf0] sm:$0xff]
    %v5751 = vld [vmem:[%s5719 + $0xf8] sm:$0xff]
    %5752 = vmatprep.subr.mxu0 %v5751
    %5753 = vmatpush1.msra.mxu0 %v5750
    %5754 = vmatprep.subr.mxu0 %v5749
    %5755 = vmatpush1.msra.mxu0 %v5748
    %5756 = vmatprep.subr.mxu0 %v5747
    %5757 = vmatpush1.msra.mxu0 %v5746
    %5758 = vmatprep.subr.mxu0 %v5745
    %5759 = vmatpush1.msra.mxu0 %v5744
    %5760 = vmatprep.subr.mxu0 %v5743
    %5761 = vmatpush1.msra.mxu0 %v5742
    %5762 = vmatprep.subr.mxu0 %v5741
    %5763 = vmatpush1.msra.mxu0 %v5740
    %5764 = vmatprep.subr.mxu0 %v5739
    %5765 = vmatpush1.msra.mxu0 %v5738
    %5766 = vmatprep.subr.mxu0 %v5737
    %5767 = vmatpush1.msra.mxu0 %v5736
    %5768 = vmatprep.subr.mxu0 %v5735
    %5769 = vmatpush1.msra.mxu0 %v5734
    %5770 = vmatprep.subr.mxu0 %v5733
    %5771 = vmatpush1.msra.mxu0 %v5732
    %5772 = vmatprep.subr.mxu0 %v5731
    %5773 = vmatpush1.msra.mxu0 %v5730
    %5774 = vmatprep.subr.mxu0 %v5729
    %5775 = vmatpush1.msra.mxu0 %v5728
    %5776 = vmatprep.subr.mxu0 %v5727
    %5777 = vmatpush1.msra.mxu0 %v5726
    %5778 = vmatprep.subr.mxu0 %v5725
    %5779 = vmatpush1.msra.mxu0 %v5724
    %5780 = vmatprep.subr.mxu0 %v5723
    %5781 = vmatpush1.msra.mxu0 %v5722
    %5782 = vmatprep.subr.mxu0 %v5721
    %5783 = vmatpush1.msra.mxu0 %v5720
    %5784 = vmatprep.subr.mxu0 0.0
    %5785 = vmatpush2.msra.mxu0 0.0
    %5786 = vmatprep.subr.mxu0 0.0
    %5787 = vmatpush2.msra.mxu0 0.0
    %5788 = vmatprep.subr.mxu0 0.0
    %5789 = vmatpush2.msra.mxu0 0.0
    %5790 = vmatprep.subr.mxu0 0.0
    %5791 = vmatpush2.msra.mxu0 0.0
    %5792 = vmatprep.subr.mxu0 0.0
    %5793 = vmatpush2.msra.mxu0 0.0
    %5794 = vmatprep.subr.mxu0 0.0
    %5795 = vmatpush2.msra.mxu0 0.0
    %5796 = vmatprep.subr.mxu0 0.0
    %5797 = vmatpush2.msra.mxu0 0.0
    %5798 = vmatprep.subr.mxu0 0.0
    %5799 = vmatpush2.msra.mxu0 0.0
    %5800 = vmatprep.subr.mxu0 0.0
    %5801 = vmatpush2.msra.mxu0 0.0
    %5802 = vmatprep.subr.mxu0 0.0
    %5803 = vmatpush2.msra.mxu0 0.0
    %5804 = vmatprep.subr.mxu0 0.0
    %5805 = vmatpush2.msra.mxu0 0.0
    %5806 = vmatprep.subr.mxu0 0.0
    %5807 = vmatpush2.msra.mxu0 0.0
    %5808 = vmatprep.subr.mxu0 0.0
    %5809 = vmatpush2.msra.mxu0 0.0
    %5810 = vmatprep.subr.mxu0 0.0
    %5811 = vmatpush2.msra.mxu0 0.0
    %5812 = vmatprep.subr.mxu0 0.0
    %5813 = vmatpush2.msra.mxu0 0.0
    %5814 = vmatprep.subr.mxu0 0.0
    %5815 = vmatpush2.msra.mxu0 0.0
    %5816 = vmatprep.mubr.f32.mxu0 0.0
    %5817 = vmatmul.mubr.f32.gmra.mxu0 %v5224
    %v5818 = vpop.f32.mrf.mxu0
    %v5819 = vadd.f32 0.0, %v5818
    %v5820 = vpop.f32.mrf.mxu0
    %v5821 = vadd.f32 0.0, %v5820
    %5822 = vmatprep.mubr.f32.mxu0 0.0
    %5823 = vmatmul.mubr.f32.gmra.mxu0 %v5229
    %v5824 = vpop.f32.mrf.mxu0
    %v5825 = vadd.f32 0.0, %v5824
    %v5826 = vpop.f32.mrf.mxu0
    %v5827 = vadd.f32 0.0, %v5826
    %5828 = vdwg.mxu0
    %v5829 = vadd.f32 %v5715, %v5819
    %v5830 = vadd.f32 %v5716, %v5821
    %v5831 = vadd.f32 %v5717, %v5825
    %v5832 = vadd.f32 %v5718, %v5827
    %s5833 = scalar_lea.vmem [#allocation12], 1280
    %v5834 = vld [vmem:[%s5833] sm:$0xff]
    %v5835 = vld [vmem:[%s5833 + $0x8] sm:$0xff]
    %v5836 = vld [vmem:[%s5833 + $0x10] sm:$0xff]
    %v5837 = vld [vmem:[%s5833 + $0x18] sm:$0xff]
    %v5838 = vld [vmem:[%s5833 + $0x20] sm:$0xff]
    %v5839 = vld [vmem:[%s5833 + $0x28] sm:$0xff]
    %v5840 = vld [vmem:[%s5833 + $0x30] sm:$0xff]
    %v5841 = vld [vmem:[%s5833 + $0x38] sm:$0xff]
    %v5842 = vld [vmem:[%s5833 + $0x40] sm:$0xff]
    %v5843 = vld [vmem:[%s5833 + $0x48] sm:$0xff]
    %v5844 = vld [vmem:[%s5833 + $0x50] sm:$0xff]
    %v5845 = vld [vmem:[%s5833 + $0x58] sm:$0xff]
    %v5846 = vld [vmem:[%s5833 + $0x60] sm:$0xff]
    %v5847 = vld [vmem:[%s5833 + $0x68] sm:$0xff]
    %v5848 = vld [vmem:[%s5833 + $0x70] sm:$0xff]
    %v5849 = vld [vmem:[%s5833 + $0x78] sm:$0xff]
    %v5850 = vld [vmem:[%s5833 + $0x80] sm:$0xff]
    %v5851 = vld [vmem:[%s5833 + $0x88] sm:$0xff]
    %v5852 = vld [vmem:[%s5833 + $0x90] sm:$0xff]
    %v5853 = vld [vmem:[%s5833 + $0x98] sm:$0xff]
    %v5854 = vld [vmem:[%s5833 + $0xa0] sm:$0xff]
    %v5855 = vld [vmem:[%s5833 + $0xa8] sm:$0xff]
    %v5856 = vld [vmem:[%s5833 + $0xb0] sm:$0xff]
    %v5857 = vld [vmem:[%s5833 + $0xb8] sm:$0xff]
    %v5858 = vld [vmem:[%s5833 + $0xc0] sm:$0xff]
    %v5859 = vld [vmem:[%s5833 + $0xc8] sm:$0xff]
    %v5860 = vld [vmem:[%s5833 + $0xd0] sm:$0xff]
    %v5861 = vld [vmem:[%s5833 + $0xd8] sm:$0xff]
    %v5862 = vld [vmem:[%s5833 + $0xe0] sm:$0xff]
    %v5863 = vld [vmem:[%s5833 + $0xe8] sm:$0xff]
    %v5864 = vld [vmem:[%s5833 + $0xf0] sm:$0xff]
    %v5865 = vld [vmem:[%s5833 + $0xf8] sm:$0xff]
    %5866 = vmatprep.subr.mxu0 %v5865
    %5867 = vmatpush1.msra.mxu0 %v5864
    %5868 = vmatprep.subr.mxu0 %v5863
    %5869 = vmatpush1.msra.mxu0 %v5862
    %5870 = vmatprep.subr.mxu0 %v5861
    %5871 = vmatpush1.msra.mxu0 %v5860
    %5872 = vmatprep.subr.mxu0 %v5859
    %5873 = vmatpush1.msra.mxu0 %v5858
    %5874 = vmatprep.subr.mxu0 %v5857
    %5875 = vmatpush1.msra.mxu0 %v5856
    %5876 = vmatprep.subr.mxu0 %v5855
    %5877 = vmatpush1.msra.mxu0 %v5854
    %5878 = vmatprep.subr.mxu0 %v5853
    %5879 = vmatpush1.msra.mxu0 %v5852
    %5880 = vmatprep.subr.mxu0 %v5851
    %5881 = vmatpush1.msra.mxu0 %v5850
    %5882 = vmatprep.subr.mxu0 %v5849
    %5883 = vmatpush1.msra.mxu0 %v5848
    %5884 = vmatprep.subr.mxu0 %v5847
    %5885 = vmatpush1.msra.mxu0 %v5846
    %5886 = vmatprep.subr.mxu0 %v5845
    %5887 = vmatpush1.msra.mxu0 %v5844
    %5888 = vmatprep.subr.mxu0 %v5843
    %5889 = vmatpush1.msra.mxu0 %v5842
    %5890 = vmatprep.subr.mxu0 %v5841
    %5891 = vmatpush1.msra.mxu0 %v5840
    %5892 = vmatprep.subr.mxu0 %v5839
    %5893 = vmatpush1.msra.mxu0 %v5838
    %5894 = vmatprep.subr.mxu0 %v5837
    %5895 = vmatpush1.msra.mxu0 %v5836
    %5896 = vmatprep.subr.mxu0 %v5835
    %5897 = vmatpush1.msra.mxu0 %v5834
    %5898 = vmatprep.subr.mxu0 0.0
    %5899 = vmatpush2.msra.mxu0 0.0
    %5900 = vmatprep.subr.mxu0 0.0
    %5901 = vmatpush2.msra.mxu0 0.0
    %5902 = vmatprep.subr.mxu0 0.0
    %5903 = vmatpush2.msra.mxu0 0.0
    %5904 = vmatprep.subr.mxu0 0.0
    %5905 = vmatpush2.msra.mxu0 0.0
    %5906 = vmatprep.subr.mxu0 0.0
    %5907 = vmatpush2.msra.mxu0 0.0
    %5908 = vmatprep.subr.mxu0 0.0
    %5909 = vmatpush2.msra.mxu0 0.0
    %5910 = vmatprep.subr.mxu0 0.0
    %5911 = vmatpush2.msra.mxu0 0.0
    %5912 = vmatprep.subr.mxu0 0.0
    %5913 = vmatpush2.msra.mxu0 0.0
    %5914 = vmatprep.subr.mxu0 0.0
    %5915 = vmatpush2.msra.mxu0 0.0
    %5916 = vmatprep.subr.mxu0 0.0
    %5917 = vmatpush2.msra.mxu0 0.0
    %5918 = vmatprep.subr.mxu0 0.0
    %5919 = vmatpush2.msra.mxu0 0.0
    %5920 = vmatprep.subr.mxu0 0.0
    %5921 = vmatpush2.msra.mxu0 0.0
    %5922 = vmatprep.subr.mxu0 0.0
    %5923 = vmatpush2.msra.mxu0 0.0
    %5924 = vmatprep.subr.mxu0 0.0
    %5925 = vmatpush2.msra.mxu0 0.0
    %5926 = vmatprep.subr.mxu0 0.0
    %5927 = vmatpush2.msra.mxu0 0.0
    %5928 = vmatprep.subr.mxu0 0.0
    %5929 = vmatpush2.msra.mxu0 0.0
    %5930 = vmatprep.mubr.f32.mxu0 0.0
    %5931 = vmatmul.mubr.f32.gmra.mxu0 %v5234
    %v5932 = vpop.f32.mrf.mxu0
    %v5933 = vadd.f32 0.0, %v5932
    %v5934 = vpop.f32.mrf.mxu0
    %v5935 = vadd.f32 0.0, %v5934
    %5936 = vmatprep.mubr.f32.mxu0 0.0
    %5937 = vmatmul.mubr.f32.gmra.mxu0 %v5239
    %v5938 = vpop.f32.mrf.mxu0
    %v5939 = vadd.f32 0.0, %v5938
    %v5940 = vpop.f32.mrf.mxu0
    %v5941 = vadd.f32 0.0, %v5940
    %5942 = vdwg.mxu0
    %v5943 = vadd.f32 %v5829, %v5933
    %v5944 = vadd.f32 %v5830, %v5935
    %v5945 = vadd.f32 %v5831, %v5939
    %v5946 = vadd.f32 %v5832, %v5941
    %s5947 = scalar_lea.vmem [#allocation12], 1536
    %v5948 = vld [vmem:[%s5947] sm:$0xff]
    %v5949 = vld [vmem:[%s5947 + $0x8] sm:$0xff]
    %v5950 = vld [vmem:[%s5947 + $0x10] sm:$0xff]
    %v5951 = vld [vmem:[%s5947 + $0x18] sm:$0xff]
    %v5952 = vld [vmem:[%s5947 + $0x20] sm:$0xff]
    %v5953 = vld [vmem:[%s5947 + $0x28] sm:$0xff]
    %v5954 = vld [vmem:[%s5947 + $0x30] sm:$0xff]
    %v5955 = vld [vmem:[%s5947 + $0x38] sm:$0xff]
    %v5956 = vld [vmem:[%s5947 + $0x40] sm:$0xff]
    %v5957 = vld [vmem:[%s5947 + $0x48] sm:$0xff]
    %v5958 = vld [vmem:[%s5947 + $0x50] sm:$0xff]
    %v5959 = vld [vmem:[%s5947 + $0x58] sm:$0xff]
    %v5960 = vld [vmem:[%s5947 + $0x60] sm:$0xff]
    %v5961 = vld [vmem:[%s5947 + $0x68] sm:$0xff]
    %v5962 = vld [vmem:[%s5947 + $0x70] sm:$0xff]
    %v5963 = vld [vmem:[%s5947 + $0x78] sm:$0xff]
    %v5964 = vld [vmem:[%s5947 + $0x80] sm:$0xff]
    %v5965 = vld [vmem:[%s5947 + $0x88] sm:$0xff]
    %v5966 = vld [vmem:[%s5947 + $0x90] sm:$0xff]
    %v5967 = vld [vmem:[%s5947 + $0x98] sm:$0xff]
    %v5968 = vld [vmem:[%s5947 + $0xa0] sm:$0xff]
    %v5969 = vld [vmem:[%s5947 + $0xa8] sm:$0xff]
    %v5970 = vld [vmem:[%s5947 + $0xb0] sm:$0xff]
    %v5971 = vld [vmem:[%s5947 + $0xb8] sm:$0xff]
    %v5972 = vld [vmem:[%s5947 + $0xc0] sm:$0xff]
    %v5973 = vld [vmem:[%s5947 + $0xc8] sm:$0xff]
    %v5974 = vld [vmem:[%s5947 + $0xd0] sm:$0xff]
    %v5975 = vld [vmem:[%s5947 + $0xd8] sm:$0xff]
    %v5976 = vld [vmem:[%s5947 + $0xe0] sm:$0xff]
    %v5977 = vld [vmem:[%s5947 + $0xe8] sm:$0xff]
    %v5978 = vld [vmem:[%s5947 + $0xf0] sm:$0xff]
    %v5979 = vld [vmem:[%s5947 + $0xf8] sm:$0xff]
    %5980 = vmatprep.subr.mxu0 %v5979
    %5981 = vmatpush1.msra.mxu0 %v5978
    %5982 = vmatprep.subr.mxu0 %v5977
    %5983 = vmatpush1.msra.mxu0 %v5976
    %5984 = vmatprep.subr.mxu0 %v5975
    %5985 = vmatpush1.msra.mxu0 %v5974
    %5986 = vmatprep.subr.mxu0 %v5973
    %5987 = vmatpush1.msra.mxu0 %v5972
    %5988 = vmatprep.subr.mxu0 %v5971
    %5989 = vmatpush1.msra.mxu0 %v5970
    %5990 = vmatprep.subr.mxu0 %v5969
    %5991 = vmatpush1.msra.mxu0 %v5968
    %5992 = vmatprep.subr.mxu0 %v5967
    %5993 = vmatpush1.msra.mxu0 %v5966
    %5994 = vmatprep.subr.mxu0 %v5965
    %5995 = vmatpush1.msra.mxu0 %v5964
    %5996 = vmatprep.subr.mxu0 %v5963
    %5997 = vmatpush1.msra.mxu0 %v5962
    %5998 = vmatprep.subr.mxu0 %v5961
    %5999 = vmatpush1.msra.mxu0 %v5960
    %6000 = vmatprep.subr.mxu0 %v5959
    %6001 = vmatpush1.msra.mxu0 %v5958
    %6002 = vmatprep.subr.mxu0 %v5957
    %6003 = vmatpush1.msra.mxu0 %v5956
    %6004 = vmatprep.subr.mxu0 %v5955
    %6005 = vmatpush1.msra.mxu0 %v5954
    %6006 = vmatprep.subr.mxu0 %v5953
    %6007 = vmatpush1.msra.mxu0 %v5952
    %6008 = vmatprep.subr.mxu0 %v5951
    %6009 = vmatpush1.msra.mxu0 %v5950
    %6010 = vmatprep.subr.mxu0 %v5949
    %6011 = vmatpush1.msra.mxu0 %v5948
    %6012 = vmatprep.subr.mxu0 0.0
    %6013 = vmatpush2.msra.mxu0 0.0
    %6014 = vmatprep.subr.mxu0 0.0
    %6015 = vmatpush2.msra.mxu0 0.0
    %6016 = vmatprep.subr.mxu0 0.0
    %6017 = vmatpush2.msra.mxu0 0.0
    %6018 = vmatprep.subr.mxu0 0.0
    %6019 = vmatpush2.msra.mxu0 0.0
    %6020 = vmatprep.subr.mxu0 0.0
    %6021 = vmatpush2.msra.mxu0 0.0
    %6022 = vmatprep.subr.mxu0 0.0
    %6023 = vmatpush2.msra.mxu0 0.0
    %6024 = vmatprep.subr.mxu0 0.0
    %6025 = vmatpush2.msra.mxu0 0.0
    %6026 = vmatprep.subr.mxu0 0.0
    %6027 = vmatpush2.msra.mxu0 0.0
    %6028 = vmatprep.subr.mxu0 0.0
    %6029 = vmatpush2.msra.mxu0 0.0
    %6030 = vmatprep.subr.mxu0 0.0
    %6031 = vmatpush2.msra.mxu0 0.0
    %6032 = vmatprep.subr.mxu0 0.0
    %6033 = vmatpush2.msra.mxu0 0.0
    %6034 = vmatprep.subr.mxu0 0.0
    %6035 = vmatpush2.msra.mxu0 0.0
    %6036 = vmatprep.subr.mxu0 0.0
    %6037 = vmatpush2.msra.mxu0 0.0
    %6038 = vmatprep.subr.mxu0 0.0
    %6039 = vmatpush2.msra.mxu0 0.0
    %6040 = vmatprep.subr.mxu0 0.0
    %6041 = vmatpush2.msra.mxu0 0.0
    %6042 = vmatprep.subr.mxu0 0.0
    %6043 = vmatpush2.msra.mxu0 0.0
    %6044 = vmatprep.mubr.f32.mxu0 0.0
    %6045 = vmatmul.mubr.f32.gmra.mxu0 %v5244
    %v6046 = vpop.f32.mrf.mxu0
    %v6047 = vadd.f32 0.0, %v6046
    %v6048 = vpop.f32.mrf.mxu0
    %v6049 = vadd.f32 0.0, %v6048
    %6050 = vmatprep.mubr.f32.mxu0 0.0
    %6051 = vmatmul.mubr.f32.gmra.mxu0 %v5249
    %v6052 = vpop.f32.mrf.mxu0
    %v6053 = vadd.f32 0.0, %v6052
    %v6054 = vpop.f32.mrf.mxu0
    %v6055 = vadd.f32 0.0, %v6054
    %6056 = vdwg.mxu0
    %v6057 = vadd.f32 %v5943, %v6047
    %v6058 = vadd.f32 %v5944, %v6049
    %v6059 = vadd.f32 %v5945, %v6053
    %v6060 = vadd.f32 %v5946, %v6055
    %s6061 = scalar_lea.vmem [#allocation12], 1792
    %v6062 = vld [vmem:[%s6061] sm:$0xff]
    %v6063 = vld [vmem:[%s6061 + $0x8] sm:$0xff]
    %v6064 = vld [vmem:[%s6061 + $0x10] sm:$0xff]
    %v6065 = vld [vmem:[%s6061 + $0x18] sm:$0xff]
    %v6066 = vld [vmem:[%s6061 + $0x20] sm:$0xff]
    %v6067 = vld [vmem:[%s6061 + $0x28] sm:$0xff]
    %v6068 = vld [vmem:[%s6061 + $0x30] sm:$0xff]
    %v6069 = vld [vmem:[%s6061 + $0x38] sm:$0xff]
    %v6070 = vld [vmem:[%s6061 + $0x40] sm:$0xff]
    %v6071 = vld [vmem:[%s6061 + $0x48] sm:$0xff]
    %v6072 = vld [vmem:[%s6061 + $0x50] sm:$0xff]
    %v6073 = vld [vmem:[%s6061 + $0x58] sm:$0xff]
    %v6074 = vld [vmem:[%s6061 + $0x60] sm:$0xff]
    %v6075 = vld [vmem:[%s6061 + $0x68] sm:$0xff]
    %v6076 = vld [vmem:[%s6061 + $0x70] sm:$0xff]
    %v6077 = vld [vmem:[%s6061 + $0x78] sm:$0xff]
    %v6078 = vld [vmem:[%s6061 + $0x80] sm:$0xff]
    %v6079 = vld [vmem:[%s6061 + $0x88] sm:$0xff]
    %v6080 = vld [vmem:[%s6061 + $0x90] sm:$0xff]
    %v6081 = vld [vmem:[%s6061 + $0x98] sm:$0xff]
    %v6082 = vld [vmem:[%s6061 + $0xa0] sm:$0xff]
    %v6083 = vld [vmem:[%s6061 + $0xa8] sm:$0xff]
    %v6084 = vld [vmem:[%s6061 + $0xb0] sm:$0xff]
    %v6085 = vld [vmem:[%s6061 + $0xb8] sm:$0xff]
    %v6086 = vld [vmem:[%s6061 + $0xc0] sm:$0xff]
    %v6087 = vld [vmem:[%s6061 + $0xc8] sm:$0xff]
    %v6088 = vld [vmem:[%s6061 + $0xd0] sm:$0xff]
    %v6089 = vld [vmem:[%s6061 + $0xd8] sm:$0xff]
    %v6090 = vld [vmem:[%s6061 + $0xe0] sm:$0xff]
    %v6091 = vld [vmem:[%s6061 + $0xe8] sm:$0xff]
    %v6092 = vld [vmem:[%s6061 + $0xf0] sm:$0xff]
    %v6093 = vld [vmem:[%s6061 + $0xf8] sm:$0xff]
    %6094 = vmatprep.subr.mxu0 %v6093
    %6095 = vmatpush1.msra.mxu0 %v6092
    %6096 = vmatprep.subr.mxu0 %v6091
    %6097 = vmatpush1.msra.mxu0 %v6090
    %6098 = vmatprep.subr.mxu0 %v6089
    %6099 = vmatpush1.msra.mxu0 %v6088
    %6100 = vmatprep.subr.mxu0 %v6087
    %6101 = vmatpush1.msra.mxu0 %v6086
    %6102 = vmatprep.subr.mxu0 %v6085
    %6103 = vmatpush1.msra.mxu0 %v6084
    %6104 = vmatprep.subr.mxu0 %v6083
    %6105 = vmatpush1.msra.mxu0 %v6082
    %6106 = vmatprep.subr.mxu0 %v6081
    %6107 = vmatpush1.msra.mxu0 %v6080
    %6108 = vmatprep.subr.mxu0 %v6079
    %6109 = vmatpush1.msra.mxu0 %v6078
    %6110 = vmatprep.subr.mxu0 %v6077
    %6111 = vmatpush1.msra.mxu0 %v6076
    %6112 = vmatprep.subr.mxu0 %v6075
    %6113 = vmatpush1.msra.mxu0 %v6074
    %6114 = vmatprep.subr.mxu0 %v6073
    %6115 = vmatpush1.msra.mxu0 %v6072
    %6116 = vmatprep.subr.mxu0 %v6071
    %6117 = vmatpush1.msra.mxu0 %v6070
    %6118 = vmatprep.subr.mxu0 %v6069
    %6119 = vmatpush1.msra.mxu0 %v6068
    %6120 = vmatprep.subr.mxu0 %v6067
    %6121 = vmatpush1.msra.mxu0 %v6066
    %6122 = vmatprep.subr.mxu0 %v6065
    %6123 = vmatpush1.msra.mxu0 %v6064
    %6124 = vmatprep.subr.mxu0 %v6063
    %6125 = vmatpush1.msra.mxu0 %v6062
    %6126 = vmatprep.subr.mxu0 0.0
    %6127 = vmatpush2.msra.mxu0 0.0
    %6128 = vmatprep.subr.mxu0 0.0
    %6129 = vmatpush2.msra.mxu0 0.0
    %6130 = vmatprep.subr.mxu0 0.0
    %6131 = vmatpush2.msra.mxu0 0.0
    %6132 = vmatprep.subr.mxu0 0.0
    %6133 = vmatpush2.msra.mxu0 0.0
    %6134 = vmatprep.subr.mxu0 0.0
    %6135 = vmatpush2.msra.mxu0 0.0
    %6136 = vmatprep.subr.mxu0 0.0
    %6137 = vmatpush2.msra.mxu0 0.0
    %6138 = vmatprep.subr.mxu0 0.0
    %6139 = vmatpush2.msra.mxu0 0.0
    %6140 = vmatprep.subr.mxu0 0.0
    %6141 = vmatpush2.msra.mxu0 0.0
    %6142 = vmatprep.subr.mxu0 0.0
    %6143 = vmatpush2.msra.mxu0 0.0
    %6144 = vmatprep.subr.mxu0 0.0
    %6145 = vmatpush2.msra.mxu0 0.0
    %6146 = vmatprep.subr.mxu0 0.0
    %6147 = vmatpush2.msra.mxu0 0.0
    %6148 = vmatprep.subr.mxu0 0.0
    %6149 = vmatpush2.msra.mxu0 0.0
    %6150 = vmatprep.subr.mxu0 0.0
    %6151 = vmatpush2.msra.mxu0 0.0
    %6152 = vmatprep.subr.mxu0 0.0
    %6153 = vmatpush2.msra.mxu0 0.0
    %6154 = vmatprep.subr.mxu0 0.0
    %6155 = vmatpush2.msra.mxu0 0.0
    %6156 = vmatprep.subr.mxu0 0.0
    %6157 = vmatpush2.msra.mxu0 0.0
    %6158 = vmatprep.mubr.f32.mxu0 0.0
    %6159 = vmatmul.mubr.f32.gmra.mxu0 %v5254
    %v6160 = vpop.f32.mrf.mxu0
    %v6161 = vadd.f32 0.0, %v6160
    %v6162 = vpop.f32.mrf.mxu0
    %v6163 = vadd.f32 0.0, %v6162
    %6164 = vmatprep.mubr.f32.mxu0 0.0
    %6165 = vmatmul.mubr.f32.gmra.mxu0 %v5259
    %v6166 = vpop.f32.mrf.mxu0
    %v6167 = vadd.f32 0.0, %v6166
    %v6168 = vpop.f32.mrf.mxu0
    %v6169 = vadd.f32 0.0, %v6168
    %6170 = vdwg.mxu0
    %v6171 = vadd.f32 %v6057, %v6161
    %v6172 = vadd.f32 %v6058, %v6163
    %v6173 = vadd.f32 %v6059, %v6167
    %v6174 = vadd.f32 %v6060, %v6169
    %s6175 = scalar_lea.vmem [#allocation12], 2048
    %v6176 = vld [vmem:[%s6175] sm:$0xff]
    %v6177 = vld [vmem:[%s6175 + $0x8] sm:$0xff]
    %v6178 = vld [vmem:[%s6175 + $0x10] sm:$0xff]
    %v6179 = vld [vmem:[%s6175 + $0x18] sm:$0xff]
    %v6180 = vld [vmem:[%s6175 + $0x20] sm:$0xff]
    %v6181 = vld [vmem:[%s6175 + $0x28] sm:$0xff]
    %v6182 = vld [vmem:[%s6175 + $0x30] sm:$0xff]
    %v6183 = vld [vmem:[%s6175 + $0x38] sm:$0xff]
    %v6184 = vld [vmem:[%s6175 + $0x40] sm:$0xff]
    %v6185 = vld [vmem:[%s6175 + $0x48] sm:$0xff]
    %v6186 = vld [vmem:[%s6175 + $0x50] sm:$0xff]
    %v6187 = vld [vmem:[%s6175 + $0x58] sm:$0xff]
    %v6188 = vld [vmem:[%s6175 + $0x60] sm:$0xff]
    %v6189 = vld [vmem:[%s6175 + $0x68] sm:$0xff]
    %v6190 = vld [vmem:[%s6175 + $0x70] sm:$0xff]
    %v6191 = vld [vmem:[%s6175 + $0x78] sm:$0xff]
    %v6192 = vld [vmem:[%s6175 + $0x80] sm:$0xff]
    %v6193 = vld [vmem:[%s6175 + $0x88] sm:$0xff]
    %v6194 = vld [vmem:[%s6175 + $0x90] sm:$0xff]
    %v6195 = vld [vmem:[%s6175 + $0x98] sm:$0xff]
    %v6196 = vld [vmem:[%s6175 + $0xa0] sm:$0xff]
    %v6197 = vld [vmem:[%s6175 + $0xa8] sm:$0xff]
    %v6198 = vld [vmem:[%s6175 + $0xb0] sm:$0xff]
    %v6199 = vld [vmem:[%s6175 + $0xb8] sm:$0xff]
    %v6200 = vld [vmem:[%s6175 + $0xc0] sm:$0xff]
    %v6201 = vld [vmem:[%s6175 + $0xc8] sm:$0xff]
    %v6202 = vld [vmem:[%s6175 + $0xd0] sm:$0xff]
    %v6203 = vld [vmem:[%s6175 + $0xd8] sm:$0xff]
    %v6204 = vld [vmem:[%s6175 + $0xe0] sm:$0xff]
    %v6205 = vld [vmem:[%s6175 + $0xe8] sm:$0xff]
    %v6206 = vld [vmem:[%s6175 + $0xf0] sm:$0xff]
    %v6207 = vld [vmem:[%s6175 + $0xf8] sm:$0xff]
    %6208 = vmatprep.subr.mxu0 %v6207
    %6209 = vmatpush1.msra.mxu0 %v6206
    %6210 = vmatprep.subr.mxu0 %v6205
    %6211 = vmatpush1.msra.mxu0 %v6204
    %6212 = vmatprep.subr.mxu0 %v6203
    %6213 = vmatpush1.msra.mxu0 %v6202
    %6214 = vmatprep.subr.mxu0 %v6201
    %6215 = vmatpush1.msra.mxu0 %v6200
    %6216 = vmatprep.subr.mxu0 %v6199
    %6217 = vmatpush1.msra.mxu0 %v6198
    %6218 = vmatprep.subr.mxu0 %v6197
    %6219 = vmatpush1.msra.mxu0 %v6196
    %6220 = vmatprep.subr.mxu0 %v6195
    %6221 = vmatpush1.msra.mxu0 %v6194
    %6222 = vmatprep.subr.mxu0 %v6193
    %6223 = vmatpush1.msra.mxu0 %v6192
    %6224 = vmatprep.subr.mxu0 %v6191
    %6225 = vmatpush1.msra.mxu0 %v6190
    %6226 = vmatprep.subr.mxu0 %v6189
    %6227 = vmatpush1.msra.mxu0 %v6188
    %6228 = vmatprep.subr.mxu0 %v6187
    %6229 = vmatpush1.msra.mxu0 %v6186
    %6230 = vmatprep.subr.mxu0 %v6185
    %6231 = vmatpush1.msra.mxu0 %v6184
    %6232 = vmatprep.subr.mxu0 %v6183
    %6233 = vmatpush1.msra.mxu0 %v6182
    %6234 = vmatprep.subr.mxu0 %v6181
    %6235 = vmatpush1.msra.mxu0 %v6180
    %6236 = vmatprep.subr.mxu0 %v6179
    %6237 = vmatpush1.msra.mxu0 %v6178
    %6238 = vmatprep.subr.mxu0 %v6177
    %6239 = vmatpush1.msra.mxu0 %v6176
    %6240 = vmatprep.subr.mxu0 0.0
    %6241 = vmatpush2.msra.mxu0 0.0
    %6242 = vmatprep.subr.mxu0 0.0
    %6243 = vmatpush2.msra.mxu0 0.0
    %6244 = vmatprep.subr.mxu0 0.0
    %6245 = vmatpush2.msra.mxu0 0.0
    %6246 = vmatprep.subr.mxu0 0.0
    %6247 = vmatpush2.msra.mxu0 0.0
    %6248 = vmatprep.subr.mxu0 0.0
    %6249 = vmatpush2.msra.mxu0 0.0
    %6250 = vmatprep.subr.mxu0 0.0
    %6251 = vmatpush2.msra.mxu0 0.0
    %6252 = vmatprep.subr.mxu0 0.0
    %6253 = vmatpush2.msra.mxu0 0.0
    %6254 = vmatprep.subr.mxu0 0.0
    %6255 = vmatpush2.msra.mxu0 0.0
    %6256 = vmatprep.subr.mxu0 0.0
    %6257 = vmatpush2.msra.mxu0 0.0
    %6258 = vmatprep.subr.mxu0 0.0
    %6259 = vmatpush2.msra.mxu0 0.0
    %6260 = vmatprep.subr.mxu0 0.0
    %6261 = vmatpush2.msra.mxu0 0.0
    %6262 = vmatprep.subr.mxu0 0.0
    %6263 = vmatpush2.msra.mxu0 0.0
    %6264 = vmatprep.subr.mxu0 0.0
    %6265 = vmatpush2.msra.mxu0 0.0
    %6266 = vmatprep.subr.mxu0 0.0
    %6267 = vmatpush2.msra.mxu0 0.0
    %6268 = vmatprep.subr.mxu0 0.0
    %6269 = vmatpush2.msra.mxu0 0.0
    %6270 = vmatprep.subr.mxu0 0.0
    %6271 = vmatpush2.msra.mxu0 0.0
    %6272 = vmatprep.mubr.f32.mxu0 0.0
    %6273 = vmatmul.mubr.f32.gmra.mxu0 %v5264
    %v6274 = vpop.f32.mrf.mxu0
    %v6275 = vadd.f32 0.0, %v6274
    %v6276 = vpop.f32.mrf.mxu0
    %v6277 = vadd.f32 0.0, %v6276
    %6278 = vmatprep.mubr.f32.mxu0 0.0
    %6279 = vmatmul.mubr.f32.gmra.mxu0 %v5269
    %v6280 = vpop.f32.mrf.mxu0
    %v6281 = vadd.f32 0.0, %v6280
    %v6282 = vpop.f32.mrf.mxu0
    %v6283 = vadd.f32 0.0, %v6282
    %6284 = vdwg.mxu0
    %v6285 = vadd.f32 %v6171, %v6275
    %v6286 = vadd.f32 %v6172, %v6277
    %v6287 = vadd.f32 %v6173, %v6281
    %v6288 = vadd.f32 %v6174, %v6283
    %v6289 = vld [vmem:[#allocation13] sm:$0x3]
    %v6291 = vlaneseq
    %v6292 = vshrl.u32 %v6291, 7
    %v6293 = vsub.s32 0, %v6292
    %v6294 = vrot.slane %v6289, %v6293
    %v6295 = vlaneseq
    %v6296 = vshrl.u32 %v6295, 7
    %v6297 = vsub.s32 1, %v6296
    %v6298 = vrot.slane %v6289, %v6297
    %v6301 = vadd.f32 %v6285, %v6294
    %v6302 = vadd.f32 %v6286, %v6298
    %v6303 = vadd.f32 %v6287, %v6294
    %v6304 = vadd.f32 %v6288, %v6298
    %v6305 = vmax.f32 %v6301, 0.0
    %v6306 = vmax.f32 %v6302, 0.0
    %v6307 = vmax.f32 %v6303, 0.0
    %v6308 = vmax.f32 %v6304, 0.0
    %v6309 = vld [vmem:[#allocation15] sm:$0x1]
    %v6311 = vsel %vm5062, %v6309, 0
    %6313 = vmatprep.subr.mxu0 0.0
    %6314 = vmatpush1.msra.mxu0 0.0
    %6315 = vmatprep.subr.mxu0 0.0
    %6316 = vmatpush1.msra.mxu0 0.0
    %6317 = vmatprep.subr.mxu0 0.0
    %6318 = vmatpush1.msra.mxu0 0.0
    %6319 = vmatprep.subr.mxu0 0.0
    %6320 = vmatpush1.msra.mxu0 0.0
    %6321 = vmatprep.subr.mxu0 0.0
    %6322 = vmatpush1.msra.mxu0 0.0
    %6323 = vmatprep.subr.mxu0 0.0
    %6324 = vmatpush1.msra.mxu0 0.0
    %6325 = vmatprep.subr.mxu0 0.0
    %6326 = vmatpush1.msra.mxu0 0.0
    %6327 = vmatprep.subr.mxu0 0.0
    %6328 = vmatpush1.msra.mxu0 0.0
    %6329 = vmatprep.subr.mxu0 0.0
    %6330 = vmatpush1.msra.mxu0 0.0
    %6331 = vmatprep.subr.mxu0 0.0
    %6332 = vmatpush1.msra.mxu0 0.0
    %6333 = vmatprep.subr.mxu0 0.0
    %6334 = vmatpush1.msra.mxu0 0.0
    %6335 = vmatprep.subr.mxu0 0.0
    %6336 = vmatpush1.msra.mxu0 0.0
    %6337 = vmatprep.subr.mxu0 0.0
    %6338 = vmatpush1.msra.mxu0 0.0
    %6339 = vmatprep.subr.mxu0 0.0
    %6340 = vmatpush1.msra.mxu0 0.0
    %6341 = vmatprep.subr.mxu0 %v6308
    %6342 = vmatpush1.msra.mxu0 %v6307
    %6343 = vmatprep.subr.mxu0 %v6306
    %6344 = vmatpush1.msra.mxu0 %v6305
    %6345 = vmatprep.subr.mxu0 0.0
    %6346 = vmatpush2.msra.mxu0 0.0
    %6347 = vmatprep.subr.mxu0 0.0
    %6348 = vmatpush2.msra.mxu0 0.0
    %6349 = vmatprep.subr.mxu0 0.0
    %6350 = vmatpush2.msra.mxu0 0.0
    %6351 = vmatprep.subr.mxu0 0.0
    %6352 = vmatpush2.msra.mxu0 0.0
    %6353 = vmatprep.subr.mxu0 0.0
    %6354 = vmatpush2.msra.mxu0 0.0
    %6355 = vmatprep.subr.mxu0 0.0
    %6356 = vmatpush2.msra.mxu0 0.0
    %6357 = vmatprep.subr.mxu0 0.0
    %6358 = vmatpush2.msra.mxu0 0.0
    %6359 = vmatprep.subr.mxu0 0.0
    %6360 = vmatpush2.msra.mxu0 0.0
    %6361 = vmatprep.subr.mxu0 0.0
    %6362 = vmatpush2.msra.mxu0 0.0
    %6363 = vmatprep.subr.mxu0 0.0
    %6364 = vmatpush2.msra.mxu0 0.0
    %6365 = vmatprep.subr.mxu0 0.0
    %6366 = vmatpush2.msra.mxu0 0.0
    %6367 = vmatprep.subr.mxu0 0.0
    %6368 = vmatpush2.msra.mxu0 0.0
    %6369 = vmatprep.subr.mxu0 0.0
    %6370 = vmatpush2.msra.mxu0 0.0
    %6371 = vmatprep.subr.mxu0 0.0
    %6372 = vmatpush2.msra.mxu0 0.0
    %6373 = vmatprep.subr.mxu0 0.0
    %6374 = vmatpush2.msra.mxu0 0.0
    %6375 = vmatprep.subr.mxu0 0.0
    %6376 = vmatpush2.msra.mxu0 0.0
    %6377 = vmatprep.mubr.f32.mxu0 0.0
    %6378 = vmatmul.mubr.f32.gmra.mxu0 %v6311
    %v6379 = vpop.f32.mrf.mxu0
    %v6380 = vadd.f32 0.0, %v6379
    %v6381 = vpop.f32.mrf.mxu0
    %v6382 = vadd.f32 0.0, %v6381
    %6383 = vdwg.mxu0
    %v6384 = vld [vmem:[%s14] sm:$0xff]
    %v6385 = vld [vmem:[%s14 + $0x8] sm:$0xff]
    %v6386 = vld [vmem:[%s14 + $0x10] sm:$0xff]
    %v6387 = vld [vmem:[%s14 + $0x18] sm:$0xff]
    %v6388 = vld [vmem:[%s14 + $0x20] sm:$0xff]
    %v6389 = vld [vmem:[%s14 + $0x28] sm:$0xff]
    %v6390 = vld [vmem:[%s14 + $0x30] sm:$0xff]
    %v6391 = vld [vmem:[%s14 + $0x38] sm:$0xff]
    %v6392 = vld [vmem:[%s14 + $0x40] sm:$0xff]
    %v6393 = vld [vmem:[%s14 + $0x48] sm:$0xff]
    %v6394 = vld [vmem:[%s14 + $0x50] sm:$0xff]
    %v6395 = vld [vmem:[%s14 + $0x58] sm:$0xff]
    %v6396 = vld [vmem:[%s14 + $0x60] sm:$0xff]
    %v6397 = vld [vmem:[%s14 + $0x68] sm:$0xff]
    %v6398 = vld [vmem:[%s14 + $0x70] sm:$0xff]
    %v6399 = vld [vmem:[%s14 + $0x78] sm:$0xff]
    %v6400 = vld [vmem:[%s14 + $0x80] sm:$0xff]
    %v6401 = vld [vmem:[%s14 + $0x88] sm:$0xff]
    %v6402 = vld [vmem:[%s14 + $0x90] sm:$0xff]
    %v6403 = vld [vmem:[%s14 + $0x98] sm:$0xff]
    %v6404 = vld [vmem:[%s14 + $0xa0] sm:$0xff]
    %v6405 = vld [vmem:[%s14 + $0xa8] sm:$0xff]
    %v6406 = vld [vmem:[%s14 + $0xb0] sm:$0xff]
    %v6407 = vld [vmem:[%s14 + $0xb8] sm:$0xff]
    %v6408 = vld [vmem:[%s14 + $0xc0] sm:$0xff]
    %v6409 = vld [vmem:[%s14 + $0xc8] sm:$0xff]
    %v6410 = vld [vmem:[%s14 + $0xd0] sm:$0xff]
    %v6411 = vld [vmem:[%s14 + $0xd8] sm:$0xff]
    %v6412 = vld [vmem:[%s14 + $0xe0] sm:$0xff]
    %v6413 = vld [vmem:[%s14 + $0xe8] sm:$0xff]
    %v6414 = vld [vmem:[%s14 + $0xf0] sm:$0xff]
    %v6415 = vld [vmem:[%s14 + $0xf8] sm:$0xff]
    %v6416 = vld [vmem:[#allocation16] sm:$0x1]
    %6417 = vmatprep.subr.mxu0 0.0
    %6418 = vmatpush1.msra.mxu0 %v6399
    %6419 = vmatprep.subr.mxu0 0.0
    %6420 = vmatpush1.msra.mxu0 %v6398
    %6421 = vmatprep.subr.mxu0 0.0
    %6422 = vmatpush1.msra.mxu0 %v6397
    %6423 = vmatprep.subr.mxu0 0.0
    %6424 = vmatpush1.msra.mxu0 %v6396
    %6425 = vmatprep.subr.mxu0 0.0
    %6426 = vmatpush1.msra.mxu0 %v6395
    %6427 = vmatprep.subr.mxu0 0.0
    %6428 = vmatpush1.msra.mxu0 %v6394
    %6429 = vmatprep.subr.mxu0 0.0
    %6430 = vmatpush1.msra.mxu0 %v6393
    %6431 = vmatprep.subr.mxu0 0.0
    %6432 = vmatpush1.msra.mxu0 %v6392
    %6433 = vmatprep.subr.mxu0 0.0
    %6434 = vmatpush1.msra.mxu0 %v6391
    %6435 = vmatprep.subr.mxu0 0.0
    %6436 = vmatpush1.msra.mxu0 %v6390
    %6437 = vmatprep.subr.mxu0 0.0
    %6438 = vmatpush1.msra.mxu0 %v6389
    %6439 = vmatprep.subr.mxu0 0.0
    %6440 = vmatpush1.msra.mxu0 %v6388
    %6441 = vmatprep.subr.mxu0 0.0
    %6442 = vmatpush1.msra.mxu0 %v6387
    %6443 = vmatprep.subr.mxu0 0.0
    %6444 = vmatpush1.msra.mxu0 %v6386
    %6445 = vmatprep.subr.mxu0 0.0
    %6446 = vmatpush1.msra.mxu0 %v6385
    %6447 = vmatprep.subr.mxu0 0.0
    %6448 = vmatpush1.msra.mxu0 %v6384
    %6449 = vmatprep.subr.mxu0 0.0
    %6450 = vmatpush2.msra.mxu0 %v6415
    %6451 = vmatprep.subr.mxu0 0.0
    %6452 = vmatpush2.msra.mxu0 %v6414
    %6453 = vmatprep.subr.mxu0 0.0
    %6454 = vmatpush2.msra.mxu0 %v6413
    %6455 = vmatprep.subr.mxu0 0.0
    %6456 = vmatpush2.msra.mxu0 %v6412
    %6457 = vmatprep.subr.mxu0 0.0
    %6458 = vmatpush2.msra.mxu0 %v6411
    %6459 = vmatprep.subr.mxu0 0.0
    %6460 = vmatpush2.msra.mxu0 %v6410
    %6461 = vmatprep.subr.mxu0 0.0
    %6462 = vmatpush2.msra.mxu0 %v6409
    %6463 = vmatprep.subr.mxu0 0.0
    %6464 = vmatpush2.msra.mxu0 %v6408
    %6465 = vmatprep.subr.mxu0 0.0
    %6466 = vmatpush2.msra.mxu0 %v6407
    %6467 = vmatprep.subr.mxu0 0.0
    %6468 = vmatpush2.msra.mxu0 %v6406
    %6469 = vmatprep.subr.mxu0 0.0
    %6470 = vmatpush2.msra.mxu0 %v6405
    %6471 = vmatprep.subr.mxu0 0.0
    %6472 = vmatpush2.msra.mxu0 %v6404
    %6473 = vmatprep.subr.mxu0 0.0
    %6474 = vmatpush2.msra.mxu0 %v6403
    %6475 = vmatprep.subr.mxu0 0.0
    %6476 = vmatpush2.msra.mxu0 %v6402
    %6477 = vmatprep.subr.mxu0 0.0
    %6478 = vmatpush2.msra.mxu0 %v6401
    %6479 = vmatprep.subr.mxu0 0.0
    %6480 = vmatpush2.msra.mxu0 %v6400
    %6481 = vmatprep.mubr.f32.mxu0 %v6382
    %6482 = vmatmul.mubr.f32.gmra.mxu0 %v6380
    %v6483 = vpop.f32.mrf.mxu0
    %v6484 = vadd.f32 %v6416, %v6483
    %v6485 = vpop.f32.mrf.mxu0
    %6486 = vdwg.mxu0
    %vm6487 = vcmask 155648
    %6488 = vst.msk [vmem:[%s16] sm:$0x1] %vm6487, %v6484
    // Predicated region
    $region106: #{simple_cnn_forward.1} parent=1 // pred_check
      _
    $region107: #{simple_cnn_forward.1} parent=1 // pred_check_branch
      %6490 = sbr.rel (0) target = $region109
    $region108: #{simple_cnn_forward.1} parent=1 // pred_region
      _
    $region109: #{simple_cnn_forward.1} parent=1 // pred_fallthru
      _
    // Predicated region
    $region110: #{simple_cnn_forward.1} parent=1 // pred_check
      _
    $region111: #{simple_cnn_forward.1} parent=1 // pred_check_branch
      %6492 = sbr.rel (0) target = $region113
    $region112: #{simple_cnn_forward.1} parent=1 // pred_region
      _
    $region113: #{simple_cnn_forward.1} parent=1 // pred_fallthru
      _
    %6493 = vsyncpa [#allocation3], 1
    %6494 = vsyncpa [#allocation5], 1
    %6495 = vsyncpa [#allocation8], 1
    %6496 = vsyncpa [#allocation11], 1
    %6497 = vsyncpa [#allocation14], 1
    %6498 = vsyncpa [#allocation17], 1

</llo_original>
